<compile_context>
chip_gen: v5e
topology: v5e:2x2
jax: 0.10.0
libtpu: 0.0.40
codegen_flags: <defaults>
</compile_context>

<pallas_src>
import functools

import jax
import jax.numpy as jnp
from jax.experimental import pallas as pl
from jax.experimental.pallas import tpu as pltpu


# ----------------------------------------------------------------------------
# In-kernel building blocks (all operate on flat (C, H*W) f32 values)
# ----------------------------------------------------------------------------
def _instance_norm_relu_flat(y):
    # InstanceNorm2d(affine=False): per-channel mean/biased-var over H*W, eps=1e-5.
    mean = jnp.mean(y, axis=1, keepdims=True)
    var = jnp.mean(jnp.square(y - mean), axis=1, keepdims=True)
    y = (y - mean) * jax.lax.rsqrt(var + 1e-5)
    return jnp.maximum(y, 0.0)


def _conv3x3_same_flat(x, w9, b, mask_l, mask_r, H, W):
    """3x3 stride-1 'same' conv.  x: (Cin, H*W) flat; w9: (9, Cout, Cin) indexed
    ky*3+kx; b: (Cout, 1); masks: (1, H*W) killing wrapped columns."""
    Cin, L = x.shape
    Cout = w9.shape[1]
    Wp = W + 1  # zero guard so every tap is a contiguous flat-offset slice
    zpad = jnp.zeros((Cin, Wp), x.dtype)
    xp = jnp.concatenate([zpad, x, zpad], axis=1)  # (Cin, L + 2*Wp)

    acc = jnp.zeros((Cout, L), jnp.float32)
    for dx in (-1, 0, 1):
        part = jnp.zeros((Cout, L), jnp.float32)
        for dy in (-1, 0, 1):
            off = Wp + dy * W + dx
            part = part + jnp.dot(
                w9[(dy + 1) * 3 + (dx + 1)], xp[:, off:off + L],
                preferred_element_type=jnp.float32)
        if dx == -1:
            part = part * mask_l
        elif dx == 1:
            part = part * mask_r
        acc = acc + part
    return acc + b


def _deconv3x3_s2_flat(x, w9, b, mask_r, S, H, W):
    """ConvTranspose2d(k=3, s=2, p=1, output_padding=1) via sub-pixel phase
    decomposition.  x: (Cin, H*W); w9: (9, Cout, Cin) [PyTorch w[ci,co,ky,kx]
    transposed, index ky*3+kx]; S: (4L, 4L) 0/1 phase->row-major permutation.
    Returns (Cout, (2H)*(2W)) flat."""
    Cin, L = x.shape
    tail = jnp.zeros((Cin, 2 * W), x.dtype)
    xp = jnp.concatenate([x, tail], axis=1)  # bottom-row zero guard

    def tap(k, off):
        return jnp.dot(w9[k], xp[:, off:off + L],
                       preferred_element_type=jnp.float32)

    # out[2m,2n]   = w[1,1] x[m,n]
    # out[2m,2n+1] = w[1,2] x[m,n] + w[1,0] x[m,n+1]
    # out[2m+1,2n] = w[2,1] x[m,n] + w[0,1] x[m+1,n]
    # out[2m+1,2n+1] = w[2,2] x[m,n] + w[0,2] x[m+1,n]
    #                + w[2,0] x[m,n+1] + w[0,0] x[m+1,n+1]
    ee = tap(4, 0)
    eo = tap(5, 0) + mask_r * tap(3, 1)
    oe = tap(7, 0) + tap(1, W)
    oo = tap(8, 0) + tap(2, W) + mask_r * (tap(6, 1) + tap(0, W + 1))

    cat = jnp.concatenate([ee, eo, oe, oo], axis=1)         # (Cout, 4L) phase-major
    y = jnp.dot(cat, S, preferred_element_type=jnp.float32)  # row-major (2H,2W) flat
    return y + b


def _reflect_pad3_rows_flat(x, H, W):
    """ReflectionPad2d(3) on a flat (C, H*W) activation -> (C, (H+6)*(W+6))."""
    rows = []
    for r in range(H):
        s = r * W
        rows.append(jnp.concatenate(
            [x[:, s + 3:s + 4], x[:, s + 2:s + 3], x[:, s + 1:s + 2],
             x[:, s:s + W],
             x[:, s + W - 2:s + W - 1], x[:, s + W - 3:s + W - 2],
             x[:, s + W - 4:s + W - 3]],
            axis=1))                                         # (C, W+6)
    order = [3, 2, 1] + list(range(H)) + [H - 2, H - 3, H - 4]
    return jnp.concatenate([rows[r] for r in order], axis=1)


def _final_conv7_sigmoid_flat(x, w2, b, H, W):
    """ReflectionPad2d(3) + Conv2d(k=7) as one im2col matmul + bias + sigmoid.
    x: (Cin, H*W); w2: (Cout, 49*Cin); b: (Cout, 1).  Returns (Cout, H*W)."""
    Cin = x.shape[0]
    Wp = W + 6
    xp = _reflect_pad3_rows_flat(x, H, W)                    # (Cin, (H+6)*Wp)
    xp = jnp.concatenate([xp, jnp.zeros((Cin, Wp), x.dtype)], axis=1)  # slice guard
    Lw = H * Wp
    cols = jnp.concatenate(
        [xp[:, ky * Wp + kx: ky * Wp + kx + Lw]
         for ky in range(7) for kx in range(7)], axis=0)     # (49*Cin, H*Wp)
    y = jnp.dot(w2, cols, preferred_element_type=jnp.float32) + b   # (Cout, H*Wp)
    # crop the wide (stride W+6) rows back to the valid W columns (stride W)
    y = jnp.concatenate([y[:, m * Wp: m * Wp + W] for m in range(H)], axis=1)
    return jax.nn.sigmoid(y)


# ----------------------------------------------------------------------------
# Fused kernel
# ----------------------------------------------------------------------------
def _make_decoder_kernel(stages):
    def kernel(*refs):
        x_ref, o_ref = refs[0], refs[-1]
        crefs = refs[1:-1]
        y = x_ref[0].astype(jnp.float32)                     # (C0, H0*W0)
        i = 0
        for kind, H, W, _cin, _cout in stages:
            if kind == "conv":
                w, b, ml, mr = (crefs[i][...], crefs[i + 1][...],
                                crefs[i + 2][...], crefs[i + 3][...])
                i += 4
                y = _instance_norm_relu_flat(
                    _conv3x3_same_flat(y, w, b, ml, mr, H, W))
            elif kind == "deconv":
                w, b, mr, S = (crefs[i][...], crefs[i + 1][...],
                               crefs[i + 2][...], crefs[i + 3][...])
                i += 4
                y = _instance_norm_relu_flat(
                    _deconv3x3_s2_flat(y, w, b, mr, S, H, W))
            else:  # "final"
                w, b = crefs[i][...], crefs[i + 1][...]
                i += 2
                y = _final_conv7_sigmoid_flat(y, w, b, H, W)
        o_ref[0] = y.astype(o_ref.dtype)
    return kernel


# ----------------------------------------------------------------------------
# Host-side constants (masks / phase-interleave permutation)
# ----------------------------------------------------------------------------
def _col_masks(H, W):
    col = jnp.arange(H * W, dtype=jnp.int32) % W
    mask_l = (col != 0).astype(jnp.float32)[None, :]
    mask_r = (col != W - 1).astype(jnp.float32)[None, :]
    return mask_l, mask_r


def _interleave_matrix(H, W):
    # S[phase*L + p, q] = 1 iff q is the row-major position of sub-pixel phase
    # (a, c) at flat input position p in the (2H, 2W) upsampled image.
    L = H * W
    u = jnp.arange(4 * L, dtype=jnp.int32)
    phase, p = u // L, u % L
    a, c = phase // 2, phase % 2
    m, n = p // W, p % W
    tgt = (2 * m + a) * (2 * W) + (2 * n + c)
    return (tgt[:, None] == jnp.arange(4 * L, dtype=jnp.int32)[None, :]
            ).astype(jnp.float32)


# ----------------------------------------------------------------------------
# Parameters (PyTorch layouts) + fused forward
# ----------------------------------------------------------------------------
def init_mask_decoder_params(key, output_nc, n_downsampling, ngf):
    params = {}
    mult = 2 ** n_downsampling
    keys = jax.random.split(key, 2 * (n_downsampling + 2))
    ki = 0
    c = ngf * mult
    params["conv0_w"] = 0.1 * jax.random.normal(keys[ki], (c, c, 3, 3), jnp.float32); ki += 1
    params["conv0_b"] = 0.1 * jax.random.normal(keys[ki], (c,), jnp.float32); ki += 1
    for d in range(n_downsampling):
        cin, cout = ngf * mult, ngf * mult // 2
        params[f"deconv{d}_w"] = 0.1 * jax.random.normal(
            keys[ki], (cin, cout, 3, 3), jnp.float32); ki += 1
        params[f"deconv{d}_b"] = 0.1 * jax.random.normal(
            keys[ki], (cout,), jnp.float32); ki += 1
        mult //= 2
    c = ngf * mult
    params["final_w"] = 0.1 * jax.random.normal(
        keys[ki], (output_nc, c, 7, 7), jnp.float32); ki += 1
    params["final_b"] = 0.1 * jax.random.normal(
        keys[ki], (output_nc,), jnp.float32); ki += 1
    return params


@functools.partial(jax.jit, static_argnames=("n_downsampling",))
def mask_decoder_forward(params, features_nchw, n_downsampling=2):
    N, C0, H0, W0 = features_nchw.shape
    x_flat = features_nchw.reshape(N, C0, H0 * W0)           # NCHW, spatial flattened

    stages, inputs, in_specs = [], [], []
    in_specs.append(pl.BlockSpec((1, C0, H0 * W0), lambda n: (n, 0, 0)))

    def add(arr):
        inputs.append(arr)
        if arr.ndim == 3:
            in_specs.append(pl.BlockSpec(arr.shape, lambda n: (0, 0, 0)))
        else:
            in_specs.append(pl.BlockSpec(arr.shape, lambda n: (0, 0)))

    H, W, C = H0, W0, C0

    # decoder[0:3]: Conv2d(C, C, 3, pad=1) + InstanceNorm + ReLU
    w = params["conv0_w"]                                    # (Cout, Cin, 3, 3)
    add(jnp.transpose(w, (2, 3, 0, 1)).reshape(9, C, C))
    add(params["conv0_b"].reshape(C, 1))
    ml, mr = _col_masks(H, W)
    add(ml); add(mr)
    stages.append(("conv", H, W, C, C))

    # n_downsampling x (ConvTranspose2d s=2 + InstanceNorm + ReLU)
    for d in range(n_downsampling):
        Cout = C // 2
        w = params[f"deconv{d}_w"]                           # (Cin, Cout, 3, 3)
        add(jnp.transpose(w, (2, 3, 1, 0)).reshape(9, Cout, C))
        add(params[f"deconv{d}_b"].reshape(Cout, 1))
        add(_col_masks(H, W)[1])
        add(_interleave_matrix(H, W))
        stages.append(("deconv", H, W, C, Cout))
        H, W, C = 2 * H, 2 * W, Cout

    # final_block: ReflectionPad2d(3) + Conv2d(k=7) + Sigmoid
    out_nc = params["final_w"].shape[0]
    wf = params["final_w"]                                   # (Cout, Cin, 7, 7)
    add(jnp.transpose(wf, (0, 2, 3, 1)).reshape(out_nc, 49 * C))
    add(params["final_b"].reshape(out_nc, 1))
    stages.append(("final", H, W, C, out_nc))

    out_flat = pl.pallas_call(
        _make_decoder_kernel(tuple(stages)),
        out_shape=jax.ShapeDtypeStruct((N, out_nc, H * W), features_nchw.dtype),
        grid=(N,),
        in_specs=in_specs,
        out_specs=pl.BlockSpec((1, out_nc, H * W), lambda n: (n, 0, 0)),
        compiler_params=pltpu.CompilerParams(
            dimension_semantics=("parallel",),          # v7x: one sample per core
            vmem_limit_bytes=32 * 1024 * 1024,          # explicit budget (v7x-safe)
        ),
    )(x_flat, *inputs)
    return out_flat.reshape(N, out_nc, H, W)


# ----------------------------------------------------------------------------
# Pure-XLA reference (for correctness only)
# ----------------------------------------------------------------------------
@functools.partial(jax.jit, static_argnames=("n_downsampling",))
def _reference_forward(params, x, n_downsampling=2):
    dn = ("NCHW", "OIHW", "NCHW")

    def inorm_relu(y):
        mean = y.mean(axis=(2, 3), keepdims=True)
        var = ((y - mean) ** 2).mean(axis=(2, 3), keepdims=True)
        return jnp.maximum((y - mean) * jax.lax.rsqrt(var + 1e-5), 0.0)

    w, b = params["conv0_w"], params["conv0_b"]
    y = jax.lax.conv_general_dilated(x, w, (1, 1), ((1, 1), (1, 1)),
                                     dimension_numbers=dn) + b[None, :, None, None]
    y = inorm_relu(y)
    for d in range(n_downsampling):
        w, b = params[f"deconv{d}_w"], params[f"deconv{d}_b"]
        wflip = jnp.transpose(w[:, :, ::-1, ::-1], (1, 0, 2, 3))
        y = jax.lax.conv_general_dilated(y, wflip, (1, 1), ((1, 2), (1, 2)),
                                         lhs_dilation=(2, 2),
                                         dimension_numbers=dn) + b[None, :, None, None]
        y = inorm_relu(y)
    y = jnp.pad(y, ((0, 0), (0, 0), (3, 3), (3, 3)), mode="reflect")
    w, b = params["final_w"], params["final_b"]
    y = jax.lax.conv_general_dilated(y, w, (1, 1), ((0, 0), (0, 0)),
                                     dimension_numbers=dn) + b[None, :, None, None]
    return jax.nn.sigmoid(y)


if __name__ == "__main__":
    output_nc = 3
    n_downsampling = 2
    ngf = 8
    mult = 2 ** n_downsampling          # 4
    N, C, H, W = 2, ngf * mult, 8, 8    # features: (2, 32, 8, 8) NCHW

    root = jax.random.PRNGKey(0)
    k_params, k_feat = jax.random.split(root)
    params = init_mask_decoder_params(k_params, output_nc, n_downsampling, ngf)
    features = jax.random.normal(k_feat, (N, C, H, W), jnp.float32)

    image = mask_decoder_forward(params, features, n_downsampling=n_downsampling)
    image = jax.block_until_ready(image)

    expected = (N, output_nc, H * mult, W * mult)
    assert image.shape == expected, (image.shape, expected)
    assert bool(jnp.all(jnp.isfinite(image)))
    assert bool(jnp.all((image >= 0.0) & (image <= 1.0)))   # sigmoid output range

    ref = jax.block_until_ready(
        _reference_forward(params, features, n_downsampling=n_downsampling))
    max_err = float(jnp.max(jnp.abs(image - ref)))
    assert max_err < 5e-2, f"max abs error vs XLA reference: {max_err}"

    print("KERNEL_OK")
</pallas_src>

<mosaic_0001>
module attributes {stable_mosaic.version = 11 : i64} {
  func.func @kernel(%arg0: i32, %arg1: memref<1x32x64xf32, #tpu.memory_space<vmem>>, %arg2: memref<9x32x32xf32, #tpu.memory_space<vmem>>, %arg3: memref<32x1xf32, #tpu.memory_space<vmem>>, %arg4: memref<1x64xf32, #tpu.memory_space<vmem>>, %arg5: memref<1x64xf32, #tpu.memory_space<vmem>>, %arg6: memref<9x16x32xf32, #tpu.memory_space<vmem>>, %arg7: memref<16x1xf32, #tpu.memory_space<vmem>>, %arg8: memref<1x64xf32, #tpu.memory_space<vmem>>, %arg9: memref<256x256xf32, #tpu.memory_space<vmem>>, %arg10: memref<9x8x16xf32, #tpu.memory_space<vmem>>, %arg11: memref<8x1xf32, #tpu.memory_space<vmem>>, %arg12: memref<1x256xf32, #tpu.memory_space<vmem>>, %arg13: memref<1024x1024xf32, #tpu.memory_space<vmem>>, %arg14: memref<3x392xf32, #tpu.memory_space<vmem>>, %arg15: memref<3x1xf32, #tpu.memory_space<vmem>>, %arg16: memref<1x3x1024xf32, #tpu.memory_space<vmem>>) attributes {dimension_semantics = [#tpu.dimension_semantics<parallel>], iteration_bounds = array<i64: 2>, scalar_prefetch = 0 : i64, scratch_operands = 0 : i64, tpu.core_type = #tpu.core_type<tc>, window_params = [{transform_indices = @transform_0, window_bounds = array<i64: 1, 32, 64>}, {pipeline_mode = #tpu.pipeline_mode<synchronous>, transform_indices = @transform_1, window_bounds = array<i64: 9, 32, 32>}, {pipeline_mode = #tpu.pipeline_mode<synchronous>, transform_indices = @transform_2, window_bounds = array<i64: 32, 1>}, {pipeline_mode = #tpu.pipeline_mode<synchronous>, transform_indices = @transform_3, window_bounds = array<i64: 1, 64>}, {pipeline_mode = #tpu.pipeline_mode<synchronous>, transform_indices = @transform_4, window_bounds = array<i64: 1, 64>}, {pipeline_mode = #tpu.pipeline_mode<synchronous>, transform_indices = @transform_5, window_bounds = array<i64: 9, 16, 32>}, {pipeline_mode = #tpu.pipeline_mode<synchronous>, transform_indices = @transform_6, window_bounds = array<i64: 16, 1>}, {pipeline_mode = #tpu.pipeline_mode<synchronous>, transform_indices = @transform_7, window_bounds = array<i64: 1, 64>}, {pipeline_mode = #tpu.pipeline_mode<synchronous>, transform_indices = @transform_8, window_bounds = array<i64: 256, 256>}, {pipeline_mode = #tpu.pipeline_mode<synchronous>, transform_indices = @transform_9, window_bounds = array<i64: 9, 8, 16>}, {pipeline_mode = #tpu.pipeline_mode<synchronous>, transform_indices = @transform_10, window_bounds = array<i64: 8, 1>}, {pipeline_mode = #tpu.pipeline_mode<synchronous>, transform_indices = @transform_11, window_bounds = array<i64: 1, 256>}, {pipeline_mode = #tpu.pipeline_mode<synchronous>, transform_indices = @transform_12, window_bounds = array<i64: 1024, 1024>}, {pipeline_mode = #tpu.pipeline_mode<synchronous>, transform_indices = @transform_13, window_bounds = array<i64: 3, 392>}, {pipeline_mode = #tpu.pipeline_mode<synchronous>, transform_indices = @transform_14, window_bounds = array<i64: 3, 1>}, {transform_indices = @transform_15, window_bounds = array<i64: 1, 3, 1024>}]} {
    %c0 = arith.constant 0 : index
    %c0_0 = arith.constant 0 : index
    %c0_1 = arith.constant 0 : index
    %0 = vector.load %arg1[%c0, %c0_0, %c0_1] : memref<1x32x64xf32, #tpu.memory_space<vmem>>, vector<1x32x64xf32>
    %1 = vector.shape_cast %0 : vector<1x32x64xf32> to vector<32x64xf32>
    %c0_2 = arith.constant 0 : index
    %c0_3 = arith.constant 0 : index
    %c0_4 = arith.constant 0 : index
    %2 = vector.load %arg2[%c0_2, %c0_3, %c0_4] : memref<9x32x32xf32, #tpu.memory_space<vmem>>, vector<9x32x32xf32>
    %c0_5 = arith.constant 0 : index
    %c0_6 = arith.constant 0 : index
    %3 = vector.load %arg3[%c0_5, %c0_6] : memref<32x1xf32, #tpu.memory_space<vmem>>, vector<32x1xf32>
    %c0_7 = arith.constant 0 : index
    %c0_8 = arith.constant 0 : index
    %4 = vector.load %arg4[%c0_7, %c0_8] : memref<1x64xf32, #tpu.memory_space<vmem>>, vector<1x64xf32>
    %c0_9 = arith.constant 0 : index
    %c0_10 = arith.constant 0 : index
    %5 = vector.load %arg5[%c0_9, %c0_10] : memref<1x64xf32, #tpu.memory_space<vmem>>, vector<1x64xf32>
    %cst = arith.constant 0.000000e+00 : f32
    %6 = vector.broadcast %cst : f32 to vector<32x9xf32>
    %7 = tpu.concatenate %6, %1, %6 in 1 : vector<32x9xf32>, vector<32x64xf32>, vector<32x9xf32> -> vector<32x82xf32>
    %cst_11 = arith.constant 0.000000e+00 : f32
    %8 = vector.broadcast %cst_11 : f32 to vector<32x64xf32>
    %cst_12 = arith.constant 0.000000e+00 : f32
    %9 = vector.broadcast %cst_12 : f32 to vector<32x64xf32>
    %10 = vector.extract_strided_slice %2 {offsets = [0, 0, 0], sizes = [1, 32, 32], strides = [1, 1, 1]} : vector<9x32x32xf32> to vector<1x32x32xf32>
    %11 = vector.shape_cast %10 : vector<1x32x32xf32> to vector<32x32xf32>
    %12 = vector.extract_strided_slice %7 {offsets = [0, 0], sizes = [32, 64], strides = [1, 1]} : vector<32x82xf32> to vector<32x64xf32>
    %cst_13 = arith.constant dense<0.000000e+00> : vector<32x64xf32>
    %13 = tpu.matmul %11, %12, %cst_13 {dimension_numbers = #tpu.dot_dimension_numbers<[1], [0], [0], [1], [0, 0, 1, 1], [], []>} : vector<32x32xf32>, vector<32x64xf32>, vector<32x64xf32> -> vector<32x64xf32>
    %14 = arith.addf %9, %13 : vector<32x64xf32>
    %15 = vector.extract_strided_slice %2 {offsets = [3, 0, 0], sizes = [1, 32, 32], strides = [1, 1, 1]} : vector<9x32x32xf32> to vector<1x32x32xf32>
    %16 = vector.shape_cast %15 : vector<1x32x32xf32> to vector<32x32xf32>
    %17 = vector.extract_strided_slice %7 {offsets = [0, 8], sizes = [32, 64], strides = [1, 1]} : vector<32x82xf32> to vector<32x64xf32>
    %cst_14 = arith.constant dense<0.000000e+00> : vector<32x64xf32>
    %18 = tpu.matmul %16, %17, %cst_14 {dimension_numbers = #tpu.dot_dimension_numbers<[1], [0], [0], [1], [0, 0, 1, 1], [], []>} : vector<32x32xf32>, vector<32x64xf32>, vector<32x64xf32> -> vector<32x64xf32>
    %19 = arith.addf %14, %18 : vector<32x64xf32>
    %20 = vector.extract_strided_slice %2 {offsets = [6, 0, 0], sizes = [1, 32, 32], strides = [1, 1, 1]} : vector<9x32x32xf32> to vector<1x32x32xf32>
    %21 = vector.shape_cast %20 : vector<1x32x32xf32> to vector<32x32xf32>
    %22 = vector.extract_strided_slice %7 {offsets = [0, 16], sizes = [32, 64], strides = [1, 1]} : vector<32x82xf32> to vector<32x64xf32>
    %cst_15 = arith.constant dense<0.000000e+00> : vector<32x64xf32>
    %23 = tpu.matmul %21, %22, %cst_15 {dimension_numbers = #tpu.dot_dimension_numbers<[1], [0], [0], [1], [0, 0, 1, 1], [], []>} : vector<32x32xf32>, vector<32x64xf32>, vector<32x64xf32> -> vector<32x64xf32>
    %24 = arith.addf %19, %23 : vector<32x64xf32>
    %25 = vector.broadcast %4 : vector<1x64xf32> to vector<32x64xf32>
    %26 = arith.mulf %24, %25 : vector<32x64xf32>
    %27 = arith.addf %8, %26 : vector<32x64xf32>
    %cst_16 = arith.constant 0.000000e+00 : f32
    %28 = vector.broadcast %cst_16 : f32 to vector<32x64xf32>
    %29 = vector.extract_strided_slice %2 {offsets = [1, 0, 0], sizes = [1, 32, 32], strides = [1, 1, 1]} : vector<9x32x32xf32> to vector<1x32x32xf32>
    %30 = vector.shape_cast %29 : vector<1x32x32xf32> to vector<32x32xf32>
    %31 = vector.extract_strided_slice %7 {offsets = [0, 1], sizes = [32, 64], strides = [1, 1]} : vector<32x82xf32> to vector<32x64xf32>
    %cst_17 = arith.constant dense<0.000000e+00> : vector<32x64xf32>
    %32 = tpu.matmul %30, %31, %cst_17 {dimension_numbers = #tpu.dot_dimension_numbers<[1], [0], [0], [1], [0, 0, 1, 1], [], []>} : vector<32x32xf32>, vector<32x64xf32>, vector<32x64xf32> -> vector<32x64xf32>
    %33 = arith.addf %28, %32 : vector<32x64xf32>
    %34 = vector.extract_strided_slice %2 {offsets = [4, 0, 0], sizes = [1, 32, 32], strides = [1, 1, 1]} : vector<9x32x32xf32> to vector<1x32x32xf32>
    %35 = vector.shape_cast %34 : vector<1x32x32xf32> to vector<32x32xf32>
    %36 = vector.extract_strided_slice %7 {offsets = [0, 9], sizes = [32, 64], strides = [1, 1]} : vector<32x82xf32> to vector<32x64xf32>
    %cst_18 = arith.constant dense<0.000000e+00> : vector<32x64xf32>
    %37 = tpu.matmul %35, %36, %cst_18 {dimension_numbers = #tpu.dot_dimension_numbers<[1], [0], [0], [1], [0, 0, 1, 1], [], []>} : vector<32x32xf32>, vector<32x64xf32>, vector<32x64xf32> -> vector<32x64xf32>
    %38 = arith.addf %33, %37 : vector<32x64xf32>
    %39 = vector.extract_strided_slice %2 {offsets = [7, 0, 0], sizes = [1, 32, 32], strides = [1, 1, 1]} : vector<9x32x32xf32> to vector<1x32x32xf32>
    %40 = vector.shape_cast %39 : vector<1x32x32xf32> to vector<32x32xf32>
    %41 = vector.extract_strided_slice %7 {offsets = [0, 17], sizes = [32, 64], strides = [1, 1]} : vector<32x82xf32> to vector<32x64xf32>
    %cst_19 = arith.constant dense<0.000000e+00> : vector<32x64xf32>
    %42 = tpu.matmul %40, %41, %cst_19 {dimension_numbers = #tpu.dot_dimension_numbers<[1], [0], [0], [1], [0, 0, 1, 1], [], []>} : vector<32x32xf32>, vector<32x64xf32>, vector<32x64xf32> -> vector<32x64xf32>
    %43 = arith.addf %38, %42 : vector<32x64xf32>
    %44 = arith.addf %27, %43 : vector<32x64xf32>
    %cst_20 = arith.constant 0.000000e+00 : f32
    %45 = vector.broadcast %cst_20 : f32 to vector<32x64xf32>
    %46 = vector.extract_strided_slice %2 {offsets = [2, 0, 0], sizes = [1, 32, 32], strides = [1, 1, 1]} : vector<9x32x32xf32> to vector<1x32x32xf32>
    %47 = vector.shape_cast %46 : vector<1x32x32xf32> to vector<32x32xf32>
    %48 = vector.extract_strided_slice %7 {offsets = [0, 2], sizes = [32, 64], strides = [1, 1]} : vector<32x82xf32> to vector<32x64xf32>
    %cst_21 = arith.constant dense<0.000000e+00> : vector<32x64xf32>
    %49 = tpu.matmul %47, %48, %cst_21 {dimension_numbers = #tpu.dot_dimension_numbers<[1], [0], [0], [1], [0, 0, 1, 1], [], []>} : vector<32x32xf32>, vector<32x64xf32>, vector<32x64xf32> -> vector<32x64xf32>
    %50 = arith.addf %45, %49 : vector<32x64xf32>
    %51 = vector.extract_strided_slice %2 {offsets = [5, 0, 0], sizes = [1, 32, 32], strides = [1, 1, 1]} : vector<9x32x32xf32> to vector<1x32x32xf32>
    %52 = vector.shape_cast %51 : vector<1x32x32xf32> to vector<32x32xf32>
    %53 = vector.extract_strided_slice %7 {offsets = [0, 10], sizes = [32, 64], strides = [1, 1]} : vector<32x82xf32> to vector<32x64xf32>
    %cst_22 = arith.constant dense<0.000000e+00> : vector<32x64xf32>
    %54 = tpu.matmul %52, %53, %cst_22 {dimension_numbers = #tpu.dot_dimension_numbers<[1], [0], [0], [1], [0, 0, 1, 1], [], []>} : vector<32x32xf32>, vector<32x64xf32>, vector<32x64xf32> -> vector<32x64xf32>
    %55 = arith.addf %50, %54 : vector<32x64xf32>
    %56 = vector.extract_strided_slice %2 {offsets = [8, 0, 0], sizes = [1, 32, 32], strides = [1, 1, 1]} : vector<9x32x32xf32> to vector<1x32x32xf32>
    %57 = vector.shape_cast %56 : vector<1x32x32xf32> to vector<32x32xf32>
    %58 = vector.extract_strided_slice %7 {offsets = [0, 18], sizes = [32, 64], strides = [1, 1]} : vector<32x82xf32> to vector<32x64xf32>
    %cst_23 = arith.constant dense<0.000000e+00> : vector<32x64xf32>
    %59 = tpu.matmul %57, %58, %cst_23 {dimension_numbers = #tpu.dot_dimension_numbers<[1], [0], [0], [1], [0, 0, 1, 1], [], []>} : vector<32x32xf32>, vector<32x64xf32>, vector<32x64xf32> -> vector<32x64xf32>
    %60 = arith.addf %55, %59 : vector<32x64xf32>
    %61 = vector.broadcast %5 : vector<1x64xf32> to vector<32x64xf32>
    %62 = arith.mulf %60, %61 : vector<32x64xf32>
    %63 = arith.addf %44, %62 : vector<32x64xf32>
    %64 = vector.broadcast %3 : vector<32x1xf32> to vector<32x64xf32>
    %65 = arith.addf %63, %64 : vector<32x64xf32>
    %cst_24 = arith.constant dense<0.000000e+00> : vector<32xf32>
    %66 = vector.multi_reduction <add>, %65, %cst_24 [1] : vector<32x64xf32> to vector<32xf32>
    %67 = vector.shape_cast %66 : vector<32xf32> to vector<32x1xf32>
    %cst_25 = arith.constant 6.400000e+01 : f32
    %68 = vector.broadcast %cst_25 : f32 to vector<32x1xf32>
    %69 = arith.divf %67, %68 : vector<32x1xf32>
    %70 = vector.broadcast %69 : vector<32x1xf32> to vector<32x64xf32>
    %71 = arith.subf %65, %70 : vector<32x64xf32>
    %72 = arith.mulf %71, %71 : vector<32x64xf32>
    %cst_26 = arith.constant dense<0.000000e+00> : vector<32xf32>
    %73 = vector.multi_reduction <add>, %72, %cst_26 [1] : vector<32x64xf32> to vector<32xf32>
    %74 = vector.shape_cast %73 : vector<32xf32> to vector<32x1xf32>
    %cst_27 = arith.constant 6.400000e+01 : f32
    %75 = vector.broadcast %cst_27 : f32 to vector<32x1xf32>
    %76 = arith.divf %74, %75 : vector<32x1xf32>
    %77 = vector.broadcast %69 : vector<32x1xf32> to vector<32x64xf32>
    %78 = arith.subf %65, %77 : vector<32x64xf32>
    %cst_28 = arith.constant 9.99999974E-6 : f32
    %79 = vector.broadcast %cst_28 : f32 to vector<32x1xf32>
    %80 = arith.addf %76, %79 : vector<32x1xf32>
    %81 = math.rsqrt %80 : vector<32x1xf32>
    %82 = vector.broadcast %81 : vector<32x1xf32> to vector<32x64xf32>
    %83 = arith.mulf %78, %82 : vector<32x64xf32>
    %cst_29 = arith.constant 0.000000e+00 : f32
    %84 = vector.broadcast %cst_29 : f32 to vector<32x64xf32>
    %85 = arith.maximumf %83, %84 : vector<32x64xf32>
    %c0_30 = arith.constant 0 : index
    %c0_31 = arith.constant 0 : index
    %c0_32 = arith.constant 0 : index
    %86 = vector.load %arg6[%c0_30, %c0_31, %c0_32] : memref<9x16x32xf32, #tpu.memory_space<vmem>>, vector<9x16x32xf32>
    %c0_33 = arith.constant 0 : index
    %c0_34 = arith.constant 0 : index
    %87 = vector.load %arg7[%c0_33, %c0_34] : memref<16x1xf32, #tpu.memory_space<vmem>>, vector<16x1xf32>
    %c0_35 = arith.constant 0 : index
    %c0_36 = arith.constant 0 : index
    %88 = vector.load %arg8[%c0_35, %c0_36] : memref<1x64xf32, #tpu.memory_space<vmem>>, vector<1x64xf32>
    %c0_37 = arith.constant 0 : index
    %c0_38 = arith.constant 0 : index
    %89 = vector.load %arg9[%c0_37, %c0_38] : memref<256x256xf32, #tpu.memory_space<vmem>>, vector<256x256xf32>
    %cst_39 = arith.constant 0.000000e+00 : f32
    %90 = vector.broadcast %cst_39 : f32 to vector<32x16xf32>
    %91 = tpu.concatenate %85, %90 in 1 : vector<32x64xf32>, vector<32x16xf32> -> vector<32x80xf32>
    %92 = vector.extract_strided_slice %86 {offsets = [4, 0, 0], sizes = [1, 16, 32], strides = [1, 1, 1]} : vector<9x16x32xf32> to vector<1x16x32xf32>
    %93 = vector.shape_cast %92 : vector<1x16x32xf32> to vector<16x32xf32>
    %94 = vector.extract_strided_slice %91 {offsets = [0, 0], sizes = [32, 64], strides = [1, 1]} : vector<32x80xf32> to vector<32x64xf32>
    %cst_40 = arith.constant dense<0.000000e+00> : vector<16x64xf32>
    %95 = tpu.matmul %93, %94, %cst_40 {dimension_numbers = #tpu.dot_dimension_numbers<[1], [0], [0], [1], [0, 0, 1, 1], [], []>} : vector<16x32xf32>, vector<32x64xf32>, vector<16x64xf32> -> vector<16x64xf32>
    %96 = vector.extract_strided_slice %86 {offsets = [5, 0, 0], sizes = [1, 16, 32], strides = [1, 1, 1]} : vector<9x16x32xf32> to vector<1x16x32xf32>
    %97 = vector.shape_cast %96 : vector<1x16x32xf32> to vector<16x32xf32>
    %98 = vector.extract_strided_slice %91 {offsets = [0, 0], sizes = [32, 64], strides = [1, 1]} : vector<32x80xf32> to vector<32x64xf32>
    %cst_41 = arith.constant dense<0.000000e+00> : vector<16x64xf32>
    %99 = tpu.matmul %97, %98, %cst_41 {dimension_numbers = #tpu.dot_dimension_numbers<[1], [0], [0], [1], [0, 0, 1, 1], [], []>} : vector<16x32xf32>, vector<32x64xf32>, vector<16x64xf32> -> vector<16x64xf32>
    %100 = vector.extract_strided_slice %86 {offsets = [3, 0, 0], sizes = [1, 16, 32], strides = [1, 1, 1]} : vector<9x16x32xf32> to vector<1x16x32xf32>
    %101 = vector.shape_cast %100 : vector<1x16x32xf32> to vector<16x32xf32>
    %102 = vector.extract_strided_slice %91 {offsets = [0, 1], sizes = [32, 64], strides = [1, 1]} : vector<32x80xf32> to vector<32x64xf32>
    %cst_42 = arith.constant dense<0.000000e+00> : vector<16x64xf32>
    %103 = tpu.matmul %101, %102, %cst_42 {dimension_numbers = #tpu.dot_dimension_numbers<[1], [0], [0], [1], [0, 0, 1, 1], [], []>} : vector<16x32xf32>, vector<32x64xf32>, vector<16x64xf32> -> vector<16x64xf32>
    %104 = vector.broadcast %88 : vector<1x64xf32> to vector<16x64xf32>
    %105 = arith.mulf %104, %103 : vector<16x64xf32>
    %106 = arith.addf %99, %105 : vector<16x64xf32>
    %107 = vector.extract_strided_slice %86 {offsets = [7, 0, 0], sizes = [1, 16, 32], strides = [1, 1, 1]} : vector<9x16x32xf32> to vector<1x16x32xf32>
    %108 = vector.shape_cast %107 : vector<1x16x32xf32> to vector<16x32xf32>
    %109 = vector.extract_strided_slice %91 {offsets = [0, 0], sizes = [32, 64], strides = [1, 1]} : vector<32x80xf32> to vector<32x64xf32>
    %cst_43 = arith.constant dense<0.000000e+00> : vector<16x64xf32>
    %110 = tpu.matmul %108, %109, %cst_43 {dimension_numbers = #tpu.dot_dimension_numbers<[1], [0], [0], [1], [0, 0, 1, 1], [], []>} : vector<16x32xf32>, vector<32x64xf32>, vector<16x64xf32> -> vector<16x64xf32>
    %111 = vector.extract_strided_slice %86 {offsets = [1, 0, 0], sizes = [1, 16, 32], strides = [1, 1, 1]} : vector<9x16x32xf32> to vector<1x16x32xf32>
    %112 = vector.shape_cast %111 : vector<1x16x32xf32> to vector<16x32xf32>
    %113 = vector.extract_strided_slice %91 {offsets = [0, 8], sizes = [32, 64], strides = [1, 1]} : vector<32x80xf32> to vector<32x64xf32>
    %cst_44 = arith.constant dense<0.000000e+00> : vector<16x64xf32>
    %114 = tpu.matmul %112, %113, %cst_44 {dimension_numbers = #tpu.dot_dimension_numbers<[1], [0], [0], [1], [0, 0, 1, 1], [], []>} : vector<16x32xf32>, vector<32x64xf32>, vector<16x64xf32> -> vector<16x64xf32>
    %115 = arith.addf %110, %114 : vector<16x64xf32>
    %116 = vector.extract_strided_slice %86 {offsets = [8, 0, 0], sizes = [1, 16, 32], strides = [1, 1, 1]} : vector<9x16x32xf32> to vector<1x16x32xf32>
    %117 = vector.shape_cast %116 : vector<1x16x32xf32> to vector<16x32xf32>
    %118 = vector.extract_strided_slice %91 {offsets = [0, 0], sizes = [32, 64], strides = [1, 1]} : vector<32x80xf32> to vector<32x64xf32>
    %cst_45 = arith.constant dense<0.000000e+00> : vector<16x64xf32>
    %119 = tpu.matmul %117, %118, %cst_45 {dimension_numbers = #tpu.dot_dimension_numbers<[1], [0], [0], [1], [0, 0, 1, 1], [], []>} : vector<16x32xf32>, vector<32x64xf32>, vector<16x64xf32> -> vector<16x64xf32>
    %120 = vector.extract_strided_slice %86 {offsets = [2, 0, 0], sizes = [1, 16, 32], strides = [1, 1, 1]} : vector<9x16x32xf32> to vector<1x16x32xf32>
    %121 = vector.shape_cast %120 : vector<1x16x32xf32> to vector<16x32xf32>
    %122 = vector.extract_strided_slice %91 {offsets = [0, 8], sizes = [32, 64], strides = [1, 1]} : vector<32x80xf32> to vector<32x64xf32>
    %cst_46 = arith.constant dense<0.000000e+00> : vector<16x64xf32>
    %123 = tpu.matmul %121, %122, %cst_46 {dimension_numbers = #tpu.dot_dimension_numbers<[1], [0], [0], [1], [0, 0, 1, 1], [], []>} : vector<16x32xf32>, vector<32x64xf32>, vector<16x64xf32> -> vector<16x64xf32>
    %124 = arith.addf %119, %123 : vector<16x64xf32>
    %125 = vector.extract_strided_slice %86 {offsets = [6, 0, 0], sizes = [1, 16, 32], strides = [1, 1, 1]} : vector<9x16x32xf32> to vector<1x16x32xf32>
    %126 = vector.shape_cast %125 : vector<1x16x32xf32> to vector<16x32xf32>
    %127 = vector.extract_strided_slice %91 {offsets = [0, 1], sizes = [32, 64], strides = [1, 1]} : vector<32x80xf32> to vector<32x64xf32>
    %cst_47 = arith.constant dense<0.000000e+00> : vector<16x64xf32>
    %128 = tpu.matmul %126, %127, %cst_47 {dimension_numbers = #tpu.dot_dimension_numbers<[1], [0], [0], [1], [0, 0, 1, 1], [], []>} : vector<16x32xf32>, vector<32x64xf32>, vector<16x64xf32> -> vector<16x64xf32>
    %129 = vector.extract_strided_slice %86 {offsets = [0, 0, 0], sizes = [1, 16, 32], strides = [1, 1, 1]} : vector<9x16x32xf32> to vector<1x16x32xf32>
    %130 = vector.shape_cast %129 : vector<1x16x32xf32> to vector<16x32xf32>
    %131 = vector.extract_strided_slice %91 {offsets = [0, 9], sizes = [32, 64], strides = [1, 1]} : vector<32x80xf32> to vector<32x64xf32>
    %cst_48 = arith.constant dense<0.000000e+00> : vector<16x64xf32>
    %132 = tpu.matmul %130, %131, %cst_48 {dimension_numbers = #tpu.dot_dimension_numbers<[1], [0], [0], [1], [0, 0, 1, 1], [], []>} : vector<16x32xf32>, vector<32x64xf32>, vector<16x64xf32> -> vector<16x64xf32>
    %133 = arith.addf %128, %132 : vector<16x64xf32>
    %134 = vector.broadcast %88 : vector<1x64xf32> to vector<16x64xf32>
    %135 = arith.mulf %134, %133 : vector<16x64xf32>
    %136 = arith.addf %124, %135 : vector<16x64xf32>
    %137 = tpu.concatenate %95, %106, %115, %136 in 1 : vector<16x64xf32>, vector<16x64xf32>, vector<16x64xf32>, vector<16x64xf32> -> vector<16x256xf32>
    %cst_49 = arith.constant dense<0.000000e+00> : vector<16x256xf32>
    %138 = tpu.matmul %137, %89, %cst_49 {dimension_numbers = #tpu.dot_dimension_numbers<[1], [0], [0], [1], [0, 0, 1, 1], [], []>} : vector<16x256xf32>, vector<256x256xf32>, vector<16x256xf32> -> vector<16x256xf32>
    %139 = vector.broadcast %87 : vector<16x1xf32> to vector<16x256xf32>
    %140 = arith.addf %138, %139 : vector<16x256xf32>
    %cst_50 = arith.constant dense<0.000000e+00> : vector<16xf32>
    %141 = vector.multi_reduction <add>, %140, %cst_50 [1] : vector<16x256xf32> to vector<16xf32>
    %142 = vector.shape_cast %141 : vector<16xf32> to vector<16x1xf32>
    %cst_51 = arith.constant 2.560000e+02 : f32
    %143 = vector.broadcast %cst_51 : f32 to vector<16x1xf32>
    %144 = arith.divf %142, %143 : vector<16x1xf32>
    %145 = vector.broadcast %144 : vector<16x1xf32> to vector<16x256xf32>
    %146 = arith.subf %140, %145 : vector<16x256xf32>
    %147 = arith.mulf %146, %146 : vector<16x256xf32>
    %cst_52 = arith.constant dense<0.000000e+00> : vector<16xf32>
    %148 = vector.multi_reduction <add>, %147, %cst_52 [1] : vector<16x256xf32> to vector<16xf32>
    %149 = vector.shape_cast %148 : vector<16xf32> to vector<16x1xf32>
    %cst_53 = arith.constant 2.560000e+02 : f32
    %150 = vector.broadcast %cst_53 : f32 to vector<16x1xf32>
    %151 = arith.divf %149, %150 : vector<16x1xf32>
    %152 = vector.broadcast %144 : vector<16x1xf32> to vector<16x256xf32>
    %153 = arith.subf %140, %152 : vector<16x256xf32>
    %cst_54 = arith.constant 9.99999974E-6 : f32
    %154 = vector.broadcast %cst_54 : f32 to vector<16x1xf32>
    %155 = arith.addf %151, %154 : vector<16x1xf32>
    %156 = math.rsqrt %155 : vector<16x1xf32>
    %157 = vector.broadcast %156 : vector<16x1xf32> to vector<16x256xf32>
    %158 = arith.mulf %153, %157 : vector<16x256xf32>
    %cst_55 = arith.constant 0.000000e+00 : f32
    %159 = vector.broadcast %cst_55 : f32 to vector<16x256xf32>
    %160 = arith.maximumf %158, %159 : vector<16x256xf32>
    %c0_56 = arith.constant 0 : index
    %c0_57 = arith.constant 0 : index
    %c0_58 = arith.constant 0 : index
    %161 = vector.load %arg10[%c0_56, %c0_57, %c0_58] : memref<9x8x16xf32, #tpu.memory_space<vmem>>, vector<9x8x16xf32>
    %c0_59 = arith.constant 0 : index
    %c0_60 = arith.constant 0 : index
    %162 = vector.load %arg11[%c0_59, %c0_60] : memref<8x1xf32, #tpu.memory_space<vmem>>, vector<8x1xf32>
    %c0_61 = arith.constant 0 : index
    %c0_62 = arith.constant 0 : index
    %163 = vector.load %arg12[%c0_61, %c0_62] : memref<1x256xf32, #tpu.memory_space<vmem>>, vector<1x256xf32>
    %c0_63 = arith.constant 0 : index
    %c0_64 = arith.constant 0 : index
    %164 = vector.load %arg13[%c0_63, %c0_64] : memref<1024x1024xf32, #tpu.memory_space<vmem>>, vector<1024x1024xf32>
    %cst_65 = arith.constant 0.000000e+00 : f32
    %165 = vector.broadcast %cst_65 : f32 to vector<16x32xf32>
    %166 = tpu.concatenate %160, %165 in 1 : vector<16x256xf32>, vector<16x32xf32> -> vector<16x288xf32>
    %167 = vector.extract_strided_slice %161 {offsets = [4, 0, 0], sizes = [1, 8, 16], strides = [1, 1, 1]} : vector<9x8x16xf32> to vector<1x8x16xf32>
    %168 = vector.shape_cast %167 : vector<1x8x16xf32> to vector<8x16xf32>
    %169 = vector.extract_strided_slice %166 {offsets = [0, 0], sizes = [16, 256], strides = [1, 1]} : vector<16x288xf32> to vector<16x256xf32>
    %cst_66 = arith.constant dense<0.000000e+00> : vector<8x256xf32>
    %170 = tpu.matmul %168, %169, %cst_66 {dimension_numbers = #tpu.dot_dimension_numbers<[1], [0], [0], [1], [0, 0, 1, 1], [], []>} : vector<8x16xf32>, vector<16x256xf32>, vector<8x256xf32> -> vector<8x256xf32>
    %171 = vector.extract_strided_slice %161 {offsets = [5, 0, 0], sizes = [1, 8, 16], strides = [1, 1, 1]} : vector<9x8x16xf32> to vector<1x8x16xf32>
    %172 = vector.shape_cast %171 : vector<1x8x16xf32> to vector<8x16xf32>
    %173 = vector.extract_strided_slice %166 {offsets = [0, 0], sizes = [16, 256], strides = [1, 1]} : vector<16x288xf32> to vector<16x256xf32>
    %cst_67 = arith.constant dense<0.000000e+00> : vector<8x256xf32>
    %174 = tpu.matmul %172, %173, %cst_67 {dimension_numbers = #tpu.dot_dimension_numbers<[1], [0], [0], [1], [0, 0, 1, 1], [], []>} : vector<8x16xf32>, vector<16x256xf32>, vector<8x256xf32> -> vector<8x256xf32>
    %175 = vector.extract_strided_slice %161 {offsets = [3, 0, 0], sizes = [1, 8, 16], strides = [1, 1, 1]} : vector<9x8x16xf32> to vector<1x8x16xf32>
    %176 = vector.shape_cast %175 : vector<1x8x16xf32> to vector<8x16xf32>
    %177 = vector.extract_strided_slice %166 {offsets = [0, 1], sizes = [16, 256], strides = [1, 1]} : vector<16x288xf32> to vector<16x256xf32>
    %cst_68 = arith.constant dense<0.000000e+00> : vector<8x256xf32>
    %178 = tpu.matmul %176, %177, %cst_68 {dimension_numbers = #tpu.dot_dimension_numbers<[1], [0], [0], [1], [0, 0, 1, 1], [], []>} : vector<8x16xf32>, vector<16x256xf32>, vector<8x256xf32> -> vector<8x256xf32>
    %179 = vector.broadcast %163 : vector<1x256xf32> to vector<8x256xf32>
    %180 = arith.mulf %179, %178 : vector<8x256xf32>
    %181 = arith.addf %174, %180 : vector<8x256xf32>
    %182 = vector.extract_strided_slice %161 {offsets = [7, 0, 0], sizes = [1, 8, 16], strides = [1, 1, 1]} : vector<9x8x16xf32> to vector<1x8x16xf32>
    %183 = vector.shape_cast %182 : vector<1x8x16xf32> to vector<8x16xf32>
    %184 = vector.extract_strided_slice %166 {offsets = [0, 0], sizes = [16, 256], strides = [1, 1]} : vector<16x288xf32> to vector<16x256xf32>
    %cst_69 = arith.constant dense<0.000000e+00> : vector<8x256xf32>
    %185 = tpu.matmul %183, %184, %cst_69 {dimension_numbers = #tpu.dot_dimension_numbers<[1], [0], [0], [1], [0, 0, 1, 1], [], []>} : vector<8x16xf32>, vector<16x256xf32>, vector<8x256xf32> -> vector<8x256xf32>
    %186 = vector.extract_strided_slice %161 {offsets = [1, 0, 0], sizes = [1, 8, 16], strides = [1, 1, 1]} : vector<9x8x16xf32> to vector<1x8x16xf32>
    %187 = vector.shape_cast %186 : vector<1x8x16xf32> to vector<8x16xf32>
    %188 = vector.extract_strided_slice %166 {offsets = [0, 16], sizes = [16, 256], strides = [1, 1]} : vector<16x288xf32> to vector<16x256xf32>
    %cst_70 = arith.constant dense<0.000000e+00> : vector<8x256xf32>
    %189 = tpu.matmul %187, %188, %cst_70 {dimension_numbers = #tpu.dot_dimension_numbers<[1], [0], [0], [1], [0, 0, 1, 1], [], []>} : vector<8x16xf32>, vector<16x256xf32>, vector<8x256xf32> -> vector<8x256xf32>
    %190 = arith.addf %185, %189 : vector<8x256xf32>
    %191 = vector.extract_strided_slice %161 {offsets = [8, 0, 0], sizes = [1, 8, 16], strides = [1, 1, 1]} : vector<9x8x16xf32> to vector<1x8x16xf32>
    %192 = vector.shape_cast %191 : vector<1x8x16xf32> to vector<8x16xf32>
    %193 = vector.extract_strided_slice %166 {offsets = [0, 0], sizes = [16, 256], strides = [1, 1]} : vector<16x288xf32> to vector<16x256xf32>
    %cst_71 = arith.constant dense<0.000000e+00> : vector<8x256xf32>
    %194 = tpu.matmul %192, %193, %cst_71 {dimension_numbers = #tpu.dot_dimension_numbers<[1], [0], [0], [1], [0, 0, 1, 1], [], []>} : vector<8x16xf32>, vector<16x256xf32>, vector<8x256xf32> -> vector<8x256xf32>
    %195 = vector.extract_strided_slice %161 {offsets = [2, 0, 0], sizes = [1, 8, 16], strides = [1, 1, 1]} : vector<9x8x16xf32> to vector<1x8x16xf32>
    %196 = vector.shape_cast %195 : vector<1x8x16xf32> to vector<8x16xf32>
    %197 = vector.extract_strided_slice %166 {offsets = [0, 16], sizes = [16, 256], strides = [1, 1]} : vector<16x288xf32> to vector<16x256xf32>
    %cst_72 = arith.constant dense<0.000000e+00> : vector<8x256xf32>
    %198 = tpu.matmul %196, %197, %cst_72 {dimension_numbers = #tpu.dot_dimension_numbers<[1], [0], [0], [1], [0, 0, 1, 1], [], []>} : vector<8x16xf32>, vector<16x256xf32>, vector<8x256xf32> -> vector<8x256xf32>
    %199 = arith.addf %194, %198 : vector<8x256xf32>
    %200 = vector.extract_strided_slice %161 {offsets = [6, 0, 0], sizes = [1, 8, 16], strides = [1, 1, 1]} : vector<9x8x16xf32> to vector<1x8x16xf32>
    %201 = vector.shape_cast %200 : vector<1x8x16xf32> to vector<8x16xf32>
    %202 = vector.extract_strided_slice %166 {offsets = [0, 1], sizes = [16, 256], strides = [1, 1]} : vector<16x288xf32> to vector<16x256xf32>
    %cst_73 = arith.constant dense<0.000000e+00> : vector<8x256xf32>
    %203 = tpu.matmul %201, %202, %cst_73 {dimension_numbers = #tpu.dot_dimension_numbers<[1], [0], [0], [1], [0, 0, 1, 1], [], []>} : vector<8x16xf32>, vector<16x256xf32>, vector<8x256xf32> -> vector<8x256xf32>
    %204 = vector.extract_strided_slice %161 {offsets = [0, 0, 0], sizes = [1, 8, 16], strides = [1, 1, 1]} : vector<9x8x16xf32> to vector<1x8x16xf32>
    %205 = vector.shape_cast %204 : vector<1x8x16xf32> to vector<8x16xf32>
    %206 = vector.extract_strided_slice %166 {offsets = [0, 17], sizes = [16, 256], strides = [1, 1]} : vector<16x288xf32> to vector<16x256xf32>
    %cst_74 = arith.constant dense<0.000000e+00> : vector<8x256xf32>
    %207 = tpu.matmul %205, %206, %cst_74 {dimension_numbers = #tpu.dot_dimension_numbers<[1], [0], [0], [1], [0, 0, 1, 1], [], []>} : vector<8x16xf32>, vector<16x256xf32>, vector<8x256xf32> -> vector<8x256xf32>
    %208 = arith.addf %203, %207 : vector<8x256xf32>
    %209 = vector.broadcast %163 : vector<1x256xf32> to vector<8x256xf32>
    %210 = arith.mulf %209, %208 : vector<8x256xf32>
    %211 = arith.addf %199, %210 : vector<8x256xf32>
    %212 = tpu.concatenate %170, %181, %190, %211 in 1 : vector<8x256xf32>, vector<8x256xf32>, vector<8x256xf32>, vector<8x256xf32> -> vector<8x1024xf32>
    %cst_75 = arith.constant dense<0.000000e+00> : vector<8x1024xf32>
    %213 = tpu.matmul %212, %164, %cst_75 {dimension_numbers = #tpu.dot_dimension_numbers<[1], [0], [0], [1], [0, 0, 1, 1], [], []>} : vector<8x1024xf32>, vector<1024x1024xf32>, vector<8x1024xf32> -> vector<8x1024xf32>
    %214 = vector.broadcast %162 : vector<8x1xf32> to vector<8x1024xf32>
    %215 = arith.addf %213, %214 : vector<8x1024xf32>
    %cst_76 = arith.constant dense<0.000000e+00> : vector<8xf32>
    %216 = vector.multi_reduction <add>, %215, %cst_76 [1] : vector<8x1024xf32> to vector<8xf32>
    %217 = vector.shape_cast %216 : vector<8xf32> to vector<8x1xf32>
    %cst_77 = arith.constant 1.024000e+03 : f32
    %218 = vector.broadcast %cst_77 : f32 to vector<8x1xf32>
    %219 = arith.divf %217, %218 : vector<8x1xf32>
    %220 = vector.broadcast %219 : vector<8x1xf32> to vector<8x1024xf32>
    %221 = arith.subf %215, %220 : vector<8x1024xf32>
    %222 = arith.mulf %221, %221 : vector<8x1024xf32>
    %cst_78 = arith.constant dense<0.000000e+00> : vector<8xf32>
    %223 = vector.multi_reduction <add>, %222, %cst_78 [1] : vector<8x1024xf32> to vector<8xf32>
    %224 = vector.shape_cast %223 : vector<8xf32> to vector<8x1xf32>
    %cst_79 = arith.constant 1.024000e+03 : f32
    %225 = vector.broadcast %cst_79 : f32 to vector<8x1xf32>
    %226 = arith.divf %224, %225 : vector<8x1xf32>
    %227 = vector.broadcast %219 : vector<8x1xf32> to vector<8x1024xf32>
    %228 = arith.subf %215, %227 : vector<8x1024xf32>
    %cst_80 = arith.constant 9.99999974E-6 : f32
    %229 = vector.broadcast %cst_80 : f32 to vector<8x1xf32>
    %230 = arith.addf %226, %229 : vector<8x1xf32>
    %231 = math.rsqrt %230 : vector<8x1xf32>
    %232 = vector.broadcast %231 : vector<8x1xf32> to vector<8x1024xf32>
    %233 = arith.mulf %228, %232 : vector<8x1024xf32>
    %cst_81 = arith.constant 0.000000e+00 : f32
    %234 = vector.broadcast %cst_81 : f32 to vector<8x1024xf32>
    %235 = arith.maximumf %233, %234 : vector<8x1024xf32>
    %c0_82 = arith.constant 0 : index
    %c0_83 = arith.constant 0 : index
    %236 = vector.load %arg14[%c0_82, %c0_83] : memref<3x392xf32, #tpu.memory_space<vmem>>, vector<3x392xf32>
    %c0_84 = arith.constant 0 : index
    %c0_85 = arith.constant 0 : index
    %237 = vector.load %arg15[%c0_84, %c0_85] : memref<3x1xf32, #tpu.memory_space<vmem>>, vector<3x1xf32>
    %238 = vector.extract_strided_slice %235 {offsets = [0, 3], sizes = [8, 1], strides = [1, 1]} : vector<8x1024xf32> to vector<8x1xf32>
    %239 = vector.extract_strided_slice %235 {offsets = [0, 2], sizes = [8, 1], strides = [1, 1]} : vector<8x1024xf32> to vector<8x1xf32>
    %240 = vector.extract_strided_slice %235 {offsets = [0, 1], sizes = [8, 1], strides = [1, 1]} : vector<8x1024xf32> to vector<8x1xf32>
    %241 = vector.extract_strided_slice %235 {offsets = [0, 0], sizes = [8, 32], strides = [1, 1]} : vector<8x1024xf32> to vector<8x32xf32>
    %242 = vector.extract_strided_slice %235 {offsets = [0, 30], sizes = [8, 1], strides = [1, 1]} : vector<8x1024xf32> to vector<8x1xf32>
    %243 = vector.extract_strided_slice %235 {offsets = [0, 29], sizes = [8, 1], strides = [1, 1]} : vector<8x1024xf32> to vector<8x1xf32>
    %244 = vector.extract_strided_slice %235 {offsets = [0, 28], sizes = [8, 1], strides = [1, 1]} : vector<8x1024xf32> to vector<8x1xf32>
    %245 = tpu.concatenate %238, %239, %240, %241, %242, %243, %244 in 1 : vector<8x1xf32>, vector<8x1xf32>, vector<8x1xf32>, vector<8x32xf32>, vector<8x1xf32>, vector<8x1xf32>, vector<8x1xf32> -> vector<8x38xf32>
    %246 = vector.extract_strided_slice %235 {offsets = [0, 35], sizes = [8, 1], strides = [1, 1]} : vector<8x1024xf32> to vector<8x1xf32>
    %247 = vector.extract_strided_slice %235 {offsets = [0, 34], sizes = [8, 1], strides = [1, 1]} : vector<8x1024xf32> to vector<8x1xf32>
    %248 = vector.extract_strided_slice %235 {offsets = [0, 33], sizes = [8, 1], strides = [1, 1]} : vector<8x1024xf32> to vector<8x1xf32>
    %249 = vector.extract_strided_slice %235 {offsets = [0, 32], sizes = [8, 32], strides = [1, 1]} : vector<8x1024xf32> to vector<8x32xf32>
    %250 = vector.extract_strided_slice %235 {offsets = [0, 62], sizes = [8, 1], strides = [1, 1]} : vector<8x1024xf32> to vector<8x1xf32>
    %251 = vector.extract_strided_slice %235 {offsets = [0, 61], sizes = [8, 1], strides = [1, 1]} : vector<8x1024xf32> to vector<8x1xf32>
    %252 = vector.extract_strided_slice %235 {offsets = [0, 60], sizes = [8, 1], strides = [1, 1]} : vector<8x1024xf32> to vector<8x1xf32>
    %253 = tpu.concatenate %246, %247, %248, %249, %250, %251, %252 in 1 : vector<8x1xf32>, vector<8x1xf32>, vector<8x1xf32>, vector<8x32xf32>, vector<8x1xf32>, vector<8x1xf32>, vector<8x1xf32> -> vector<8x38xf32>
    %254 = vector.extract_strided_slice %235 {offsets = [0, 67], sizes = [8, 1], strides = [1, 1]} : vector<8x1024xf32> to vector<8x1xf32>
    %255 = vector.extract_strided_slice %235 {offsets = [0, 66], sizes = [8, 1], strides = [1, 1]} : vector<8x1024xf32> to vector<8x1xf32>
    %256 = vector.extract_strided_slice %235 {offsets = [0, 65], sizes = [8, 1], strides = [1, 1]} : vector<8x1024xf32> to vector<8x1xf32>
    %257 = vector.extract_strided_slice %235 {offsets = [0, 64], sizes = [8, 32], strides = [1, 1]} : vector<8x1024xf32> to vector<8x32xf32>
    %258 = vector.extract_strided_slice %235 {offsets = [0, 94], sizes = [8, 1], strides = [1, 1]} : vector<8x1024xf32> to vector<8x1xf32>
    %259 = vector.extract_strided_slice %235 {offsets = [0, 93], sizes = [8, 1], strides = [1, 1]} : vector<8x1024xf32> to vector<8x1xf32>
    %260 = vector.extract_strided_slice %235 {offsets = [0, 92], sizes = [8, 1], strides = [1, 1]} : vector<8x1024xf32> to vector<8x1xf32>
    %261 = tpu.concatenate %254, %255, %256, %257, %258, %259, %260 in 1 : vector<8x1xf32>, vector<8x1xf32>, vector<8x1xf32>, vector<8x32xf32>, vector<8x1xf32>, vector<8x1xf32>, vector<8x1xf32> -> vector<8x38xf32>
    %262 = vector.extract_strided_slice %235 {offsets = [0, 99], sizes = [8, 1], strides = [1, 1]} : vector<8x1024xf32> to vector<8x1xf32>
    %263 = vector.extract_strided_slice %235 {offsets = [0, 98], sizes = [8, 1], strides = [1, 1]} : vector<8x1024xf32> to vector<8x1xf32>
    %264 = vector.extract_strided_slice %235 {offsets = [0, 97], sizes = [8, 1], strides = [1, 1]} : vector<8x1024xf32> to vector<8x1xf32>
    %265 = vector.extract_strided_slice %235 {offsets = [0, 96], sizes = [8, 32], strides = [1, 1]} : vector<8x1024xf32> to vector<8x32xf32>
    %266 = vector.extract_strided_slice %235 {offsets = [0, 126], sizes = [8, 1], strides = [1, 1]} : vector<8x1024xf32> to vector<8x1xf32>
    %267 = vector.extract_strided_slice %235 {offsets = [0, 125], sizes = [8, 1], strides = [1, 1]} : vector<8x1024xf32> to vector<8x1xf32>
    %268 = vector.extract_strided_slice %235 {offsets = [0, 124], sizes = [8, 1], strides = [1, 1]} : vector<8x1024xf32> to vector<8x1xf32>
    %269 = tpu.concatenate %262, %263, %264, %265, %266, %267, %268 in 1 : vector<8x1xf32>, vector<8x1xf32>, vector<8x1xf32>, vector<8x32xf32>, vector<8x1xf32>, vector<8x1xf32>, vector<8x1xf32> -> vector<8x38xf32>
    %270 = vector.extract_strided_slice %235 {offsets = [0, 131], sizes = [8, 1], strides = [1, 1]} : vector<8x1024xf32> to vector<8x1xf32>
    %271 = vector.extract_strided_slice %235 {offsets = [0, 130], sizes = [8, 1], strides = [1, 1]} : vector<8x1024xf32> to vector<8x1xf32>
    %272 = vector.extract_strided_slice %235 {offsets = [0, 129], sizes = [8, 1], strides = [1, 1]} : vector<8x1024xf32> to vector<8x1xf32>
    %273 = vector.extract_strided_slice %235 {offsets = [0, 128], sizes = [8, 32], strides = [1, 1]} : vector<8x1024xf32> to vector<8x32xf32>
    %274 = vector.extract_strided_slice %235 {offsets = [0, 158], sizes = [8, 1], strides = [1, 1]} : vector<8x1024xf32> to vector<8x1xf32>
    %275 = vector.extract_strided_slice %235 {offsets = [0, 157], sizes = [8, 1], strides = [1, 1]} : vector<8x1024xf32> to vector<8x1xf32>
    %276 = vector.extract_strided_slice %235 {offsets = [0, 156], sizes = [8, 1], strides = [1, 1]} : vector<8x1024xf32> to vector<8x1xf32>
    %277 = tpu.concatenate %270, %271, %272, %273, %274, %275, %276 in 1 : vector<8x1xf32>, vector<8x1xf32>, vector<8x1xf32>, vector<8x32xf32>, vector<8x1xf32>, vector<8x1xf32>, vector<8x1xf32> -> vector<8x38xf32>
    %278 = vector.extract_strided_slice %235 {offsets = [0, 163], sizes = [8, 1], strides = [1, 1]} : vector<8x1024xf32> to vector<8x1xf32>
    %279 = vector.extract_strided_slice %235 {offsets = [0, 162], sizes = [8, 1], strides = [1, 1]} : vector<8x1024xf32> to vector<8x1xf32>
    %280 = vector.extract_strided_slice %235 {offsets = [0, 161], sizes = [8, 1], strides = [1, 1]} : vector<8x1024xf32> to vector<8x1xf32>
    %281 = vector.extract_strided_slice %235 {offsets = [0, 160], sizes = [8, 32], strides = [1, 1]} : vector<8x1024xf32> to vector<8x32xf32>
    %282 = vector.extract_strided_slice %235 {offsets = [0, 190], sizes = [8, 1], strides = [1, 1]} : vector<8x1024xf32> to vector<8x1xf32>
    %283 = vector.extract_strided_slice %235 {offsets = [0, 189], sizes = [8, 1], strides = [1, 1]} : vector<8x1024xf32> to vector<8x1xf32>
    %284 = vector.extract_strided_slice %235 {offsets = [0, 188], sizes = [8, 1], strides = [1, 1]} : vector<8x1024xf32> to vector<8x1xf32>
    %285 = tpu.concatenate %278, %279, %280, %281, %282, %283, %284 in 1 : vector<8x1xf32>, vector<8x1xf32>, vector<8x1xf32>, vector<8x32xf32>, vector<8x1xf32>, vector<8x1xf32>, vector<8x1xf32> -> vector<8x38xf32>
    %286 = vector.extract_strided_slice %235 {offsets = [0, 195], sizes = [8, 1], strides = [1, 1]} : vector<8x1024xf32> to vector<8x1xf32>
    %287 = vector.extract_strided_slice %235 {offsets = [0, 194], sizes = [8, 1], strides = [1, 1]} : vector<8x1024xf32> to vector<8x1xf32>
    %288 = vector.extract_strided_slice %235 {offsets = [0, 193], sizes = [8, 1], strides = [1, 1]} : vector<8x1024xf32> to vector<8x1xf32>
    %289 = vector.extract_strided_slice %235 {offsets = [0, 192], sizes = [8, 32], strides = [1, 1]} : vector<8x1024xf32> to vector<8x32xf32>
    %290 = vector.extract_strided_slice %235 {offsets = [0, 222], sizes = [8, 1], strides = [1, 1]} : vector<8x1024xf32> to vector<8x1xf32>
    %291 = vector.extract_strided_slice %235 {offsets = [0, 221], sizes = [8, 1], strides = [1, 1]} : vector<8x1024xf32> to vector<8x1xf32>
    %292 = vector.extract_strided_slice %235 {offsets = [0, 220], sizes = [8, 1], strides = [1, 1]} : vector<8x1024xf32> to vector<8x1xf32>
    %293 = tpu.concatenate %286, %287, %288, %289, %290, %291, %292 in 1 : vector<8x1xf32>, vector<8x1xf32>, vector<8x1xf32>, vector<8x32xf32>, vector<8x1xf32>, vector<8x1xf32>, vector<8x1xf32> -> vector<8x38xf32>
    %294 = vector.extract_strided_slice %235 {offsets = [0, 227], sizes = [8, 1], strides = [1, 1]} : vector<8x1024xf32> to vector<8x1xf32>
    %295 = vector.extract_strided_slice %235 {offsets = [0, 226], sizes = [8, 1], strides = [1, 1]} : vector<8x1024xf32> to vector<8x1xf32>
    %296 = vector.extract_strided_slice %235 {offsets = [0, 225], sizes = [8, 1], strides = [1, 1]} : vector<8x1024xf32> to vector<8x1xf32>
    %297 = vector.extract_strided_slice %235 {offsets = [0, 224], sizes = [8, 32], strides = [1, 1]} : vector<8x1024xf32> to vector<8x32xf32>
    %298 = vector.extract_strided_slice %235 {offsets = [0, 254], sizes = [8, 1], strides = [1, 1]} : vector<8x1024xf32> to vector<8x1xf32>
    %299 = vector.extract_strided_slice %235 {offsets = [0, 253], sizes = [8, 1], strides = [1, 1]} : vector<8x1024xf32> to vector<8x1xf32>
    %300 = vector.extract_strided_slice %235 {offsets = [0, 252], sizes = [8, 1], strides = [1, 1]} : vector<8x1024xf32> to vector<8x1xf32>
    %301 = tpu.concatenate %294, %295, %296, %297, %298, %299, %300 in 1 : vector<8x1xf32>, vector<8x1xf32>, vector<8x1xf32>, vector<8x32xf32>, vector<8x1xf32>, vector<8x1xf32>, vector<8x1xf32> -> vector<8x38xf32>
    %302 = vector.extract_strided_slice %235 {offsets = [0, 259], sizes = [8, 1], strides = [1, 1]} : vector<8x1024xf32> to vector<8x1xf32>
    %303 = vector.extract_strided_slice %235 {offsets = [0, 258], sizes = [8, 1], strides = [1, 1]} : vector<8x1024xf32> to vector<8x1xf32>
    %304 = vector.extract_strided_slice %235 {offsets = [0, 257], sizes = [8, 1], strides = [1, 1]} : vector<8x1024xf32> to vector<8x1xf32>
    %305 = vector.extract_strided_slice %235 {offsets = [0, 256], sizes = [8, 32], strides = [1, 1]} : vector<8x1024xf32> to vector<8x32xf32>
    %306 = vector.extract_strided_slice %235 {offsets = [0, 286], sizes = [8, 1], strides = [1, 1]} : vector<8x1024xf32> to vector<8x1xf32>
    %307 = vector.extract_strided_slice %235 {offsets = [0, 285], sizes = [8, 1], strides = [1, 1]} : vector<8x1024xf32> to vector<8x1xf32>
    %308 = vector.extract_strided_slice %235 {offsets = [0, 284], sizes = [8, 1], strides = [1, 1]} : vector<8x1024xf32> to vector<8x1xf32>
    %309 = tpu.concatenate %302, %303, %304, %305, %306, %307, %308 in 1 : vector<8x1xf32>, vector<8x1xf32>, vector<8x1xf32>, vector<8x32xf32>, vector<8x1xf32>, vector<8x1xf32>, vector<8x1xf32> -> vector<8x38xf32>
    %310 = vector.extract_strided_slice %235 {offsets = [0, 291], sizes = [8, 1], strides = [1, 1]} : vector<8x1024xf32> to vector<8x1xf32>
    %311 = vector.extract_strided_slice %235 {offsets = [0, 290], sizes = [8, 1], strides = [1, 1]} : vector<8x1024xf32> to vector<8x1xf32>
    %312 = vector.extract_strided_slice %235 {offsets = [0, 289], sizes = [8, 1], strides = [1, 1]} : vector<8x1024xf32> to vector<8x1xf32>
    %313 = vector.extract_strided_slice %235 {offsets = [0, 288], sizes = [8, 32], strides = [1, 1]} : vector<8x1024xf32> to vector<8x32xf32>
    %314 = vector.extract_strided_slice %235 {offsets = [0, 318], sizes = [8, 1], strides = [1, 1]} : vector<8x1024xf32> to vector<8x1xf32>
    %315 = vector.extract_strided_slice %235 {offsets = [0, 317], sizes = [8, 1], strides = [1, 1]} : vector<8x1024xf32> to vector<8x1xf32>
    %316 = vector.extract_strided_slice %235 {offsets = [0, 316], sizes = [8, 1], strides = [1, 1]} : vector<8x1024xf32> to vector<8x1xf32>
    %317 = tpu.concatenate %310, %311, %312, %313, %314, %315, %316 in 1 : vector<8x1xf32>, vector<8x1xf32>, vector<8x1xf32>, vector<8x32xf32>, vector<8x1xf32>, vector<8x1xf32>, vector<8x1xf32> -> vector<8x38xf32>
    %318 = vector.extract_strided_slice %235 {offsets = [0, 323], sizes = [8, 1], strides = [1, 1]} : vector<8x1024xf32> to vector<8x1xf32>
    %319 = vector.extract_strided_slice %235 {offsets = [0, 322], sizes = [8, 1], strides = [1, 1]} : vector<8x1024xf32> to vector<8x1xf32>
    %320 = vector.extract_strided_slice %235 {offsets = [0, 321], sizes = [8, 1], strides = [1, 1]} : vector<8x1024xf32> to vector<8x1xf32>
    %321 = vector.extract_strided_slice %235 {offsets = [0, 320], sizes = [8, 32], strides = [1, 1]} : vector<8x1024xf32> to vector<8x32xf32>
    %322 = vector.extract_strided_slice %235 {offsets = [0, 350], sizes = [8, 1], strides = [1, 1]} : vector<8x1024xf32> to vector<8x1xf32>
    %323 = vector.extract_strided_slice %235 {offsets = [0, 349], sizes = [8, 1], strides = [1, 1]} : vector<8x1024xf32> to vector<8x1xf32>
    %324 = vector.extract_strided_slice %235 {offsets = [0, 348], sizes = [8, 1], strides = [1, 1]} : vector<8x1024xf32> to vector<8x1xf32>
    %325 = tpu.concatenate %318, %319, %320, %321, %322, %323, %324 in 1 : vector<8x1xf32>, vector<8x1xf32>, vector<8x1xf32>, vector<8x32xf32>, vector<8x1xf32>, vector<8x1xf32>, vector<8x1xf32> -> vector<8x38xf32>
    %326 = vector.extract_strided_slice %235 {offsets = [0, 355], sizes = [8, 1], strides = [1, 1]} : vector<8x1024xf32> to vector<8x1xf32>
    %327 = vector.extract_strided_slice %235 {offsets = [0, 354], sizes = [8, 1], strides = [1, 1]} : vector<8x1024xf32> to vector<8x1xf32>
    %328 = vector.extract_strided_slice %235 {offsets = [0, 353], sizes = [8, 1], strides = [1, 1]} : vector<8x1024xf32> to vector<8x1xf32>
    %329 = vector.extract_strided_slice %235 {offsets = [0, 352], sizes = [8, 32], strides = [1, 1]} : vector<8x1024xf32> to vector<8x32xf32>
    %330 = vector.extract_strided_slice %235 {offsets = [0, 382], sizes = [8, 1], strides = [1, 1]} : vector<8x1024xf32> to vector<8x1xf32>
    %331 = vector.extract_strided_slice %235 {offsets = [0, 381], sizes = [8, 1], strides = [1, 1]} : vector<8x1024xf32> to vector<8x1xf32>
    %332 = vector.extract_strided_slice %235 {offsets = [0, 380], sizes = [8, 1], strides = [1, 1]} : vector<8x1024xf32> to vector<8x1xf32>
    %333 = tpu.concatenate %326, %327, %328, %329, %330, %331, %332 in 1 : vector<8x1xf32>, vector<8x1xf32>, vector<8x1xf32>, vector<8x32xf32>, vector<8x1xf32>, vector<8x1xf32>, vector<8x1xf32> -> vector<8x38xf32>
    %334 = vector.extract_strided_slice %235 {offsets = [0, 387], sizes = [8, 1], strides = [1, 1]} : vector<8x1024xf32> to vector<8x1xf32>
    %335 = vector.extract_strided_slice %235 {offsets = [0, 386], sizes = [8, 1], strides = [1, 1]} : vector<8x1024xf32> to vector<8x1xf32>
    %336 = vector.extract_strided_slice %235 {offsets = [0, 385], sizes = [8, 1], strides = [1, 1]} : vector<8x1024xf32> to vector<8x1xf32>
    %337 = vector.extract_strided_slice %235 {offsets = [0, 384], sizes = [8, 32], strides = [1, 1]} : vector<8x1024xf32> to vector<8x32xf32>
    %338 = vector.extract_strided_slice %235 {offsets = [0, 414], sizes = [8, 1], strides = [1, 1]} : vector<8x1024xf32> to vector<8x1xf32>
    %339 = vector.extract_strided_slice %235 {offsets = [0, 413], sizes = [8, 1], strides = [1, 1]} : vector<8x1024xf32> to vector<8x1xf32>
    %340 = vector.extract_strided_slice %235 {offsets = [0, 412], sizes = [8, 1], strides = [1, 1]} : vector<8x1024xf32> to vector<8x1xf32>
    %341 = tpu.concatenate %334, %335, %336, %337, %338, %339, %340 in 1 : vector<8x1xf32>, vector<8x1xf32>, vector<8x1xf32>, vector<8x32xf32>, vector<8x1xf32>, vector<8x1xf32>, vector<8x1xf32> -> vector<8x38xf32>
    %342 = vector.extract_strided_slice %235 {offsets = [0, 419], sizes = [8, 1], strides = [1, 1]} : vector<8x1024xf32> to vector<8x1xf32>
    %343 = vector.extract_strided_slice %235 {offsets = [0, 418], sizes = [8, 1], strides = [1, 1]} : vector<8x1024xf32> to vector<8x1xf32>
    %344 = vector.extract_strided_slice %235 {offsets = [0, 417], sizes = [8, 1], strides = [1, 1]} : vector<8x1024xf32> to vector<8x1xf32>
    %345 = vector.extract_strided_slice %235 {offsets = [0, 416], sizes = [8, 32], strides = [1, 1]} : vector<8x1024xf32> to vector<8x32xf32>
    %346 = vector.extract_strided_slice %235 {offsets = [0, 446], sizes = [8, 1], strides = [1, 1]} : vector<8x1024xf32> to vector<8x1xf32>
    %347 = vector.extract_strided_slice %235 {offsets = [0, 445], sizes = [8, 1], strides = [1, 1]} : vector<8x1024xf32> to vector<8x1xf32>
    %348 = vector.extract_strided_slice %235 {offsets = [0, 444], sizes = [8, 1], strides = [1, 1]} : vector<8x1024xf32> to vector<8x1xf32>
    %349 = tpu.concatenate %342, %343, %344, %345, %346, %347, %348 in 1 : vector<8x1xf32>, vector<8x1xf32>, vector<8x1xf32>, vector<8x32xf32>, vector<8x1xf32>, vector<8x1xf32>, vector<8x1xf32> -> vector<8x38xf32>
    %350 = vector.extract_strided_slice %235 {offsets = [0, 451], sizes = [8, 1], strides = [1, 1]} : vector<8x1024xf32> to vector<8x1xf32>
    %351 = vector.extract_strided_slice %235 {offsets = [0, 450], sizes = [8, 1], strides = [1, 1]} : vector<8x1024xf32> to vector<8x1xf32>
    %352 = vector.extract_strided_slice %235 {offsets = [0, 449], sizes = [8, 1], strides = [1, 1]} : vector<8x1024xf32> to vector<8x1xf32>
    %353 = vector.extract_strided_slice %235 {offsets = [0, 448], sizes = [8, 32], strides = [1, 1]} : vector<8x1024xf32> to vector<8x32xf32>
    %354 = vector.extract_strided_slice %235 {offsets = [0, 478], sizes = [8, 1], strides = [1, 1]} : vector<8x1024xf32> to vector<8x1xf32>
    %355 = vector.extract_strided_slice %235 {offsets = [0, 477], sizes = [8, 1], strides = [1, 1]} : vector<8x1024xf32> to vector<8x1xf32>
    %356 = vector.extract_strided_slice %235 {offsets = [0, 476], sizes = [8, 1], strides = [1, 1]} : vector<8x1024xf32> to vector<8x1xf32>
    %357 = tpu.concatenate %350, %351, %352, %353, %354, %355, %356 in 1 : vector<8x1xf32>, vector<8x1xf32>, vector<8x1xf32>, vector<8x32xf32>, vector<8x1xf32>, vector<8x1xf32>, vector<8x1xf32> -> vector<8x38xf32>
    %358 = vector.extract_strided_slice %235 {offsets = [0, 483], sizes = [8, 1], strides = [1, 1]} : vector<8x1024xf32> to vector<8x1xf32>
    %359 = vector.extract_strided_slice %235 {offsets = [0, 482], sizes = [8, 1], strides = [1, 1]} : vector<8x1024xf32> to vector<8x1xf32>
    %360 = vector.extract_strided_slice %235 {offsets = [0, 481], sizes = [8, 1], strides = [1, 1]} : vector<8x1024xf32> to vector<8x1xf32>
    %361 = vector.extract_strided_slice %235 {offsets = [0, 480], sizes = [8, 32], strides = [1, 1]} : vector<8x1024xf32> to vector<8x32xf32>
    %362 = vector.extract_strided_slice %235 {offsets = [0, 510], sizes = [8, 1], strides = [1, 1]} : vector<8x1024xf32> to vector<8x1xf32>
    %363 = vector.extract_strided_slice %235 {offsets = [0, 509], sizes = [8, 1], strides = [1, 1]} : vector<8x1024xf32> to vector<8x1xf32>
    %364 = vector.extract_strided_slice %235 {offsets = [0, 508], sizes = [8, 1], strides = [1, 1]} : vector<8x1024xf32> to vector<8x1xf32>
    %365 = tpu.concatenate %358, %359, %360, %361, %362, %363, %364 in 1 : vector<8x1xf32>, vector<8x1xf32>, vector<8x1xf32>, vector<8x32xf32>, vector<8x1xf32>, vector<8x1xf32>, vector<8x1xf32> -> vector<8x38xf32>
    %366 = vector.extract_strided_slice %235 {offsets = [0, 515], sizes = [8, 1], strides = [1, 1]} : vector<8x1024xf32> to vector<8x1xf32>
    %367 = vector.extract_strided_slice %235 {offsets = [0, 514], sizes = [8, 1], strides = [1, 1]} : vector<8x1024xf32> to vector<8x1xf32>
    %368 = vector.extract_strided_slice %235 {offsets = [0, 513], sizes = [8, 1], strides = [1, 1]} : vector<8x1024xf32> to vector<8x1xf32>
    %369 = vector.extract_strided_slice %235 {offsets = [0, 512], sizes = [8, 32], strides = [1, 1]} : vector<8x1024xf32> to vector<8x32xf32>
    %370 = vector.extract_strided_slice %235 {offsets = [0, 542], sizes = [8, 1], strides = [1, 1]} : vector<8x1024xf32> to vector<8x1xf32>
    %371 = vector.extract_strided_slice %235 {offsets = [0, 541], sizes = [8, 1], strides = [1, 1]} : vector<8x1024xf32> to vector<8x1xf32>
    %372 = vector.extract_strided_slice %235 {offsets = [0, 540], sizes = [8, 1], strides = [1, 1]} : vector<8x1024xf32> to vector<8x1xf32>
    %373 = tpu.concatenate %366, %367, %368, %369, %370, %371, %372 in 1 : vector<8x1xf32>, vector<8x1xf32>, vector<8x1xf32>, vector<8x32xf32>, vector<8x1xf32>, vector<8x1xf32>, vector<8x1xf32> -> vector<8x38xf32>
    %374 = vector.extract_strided_slice %235 {offsets = [0, 547], sizes = [8, 1], strides = [1, 1]} : vector<8x1024xf32> to vector<8x1xf32>
    %375 = vector.extract_strided_slice %235 {offsets = [0, 546], sizes = [8, 1], strides = [1, 1]} : vector<8x1024xf32> to vector<8x1xf32>
    %376 = vector.extract_strided_slice %235 {offsets = [0, 545], sizes = [8, 1], strides = [1, 1]} : vector<8x1024xf32> to vector<8x1xf32>
    %377 = vector.extract_strided_slice %235 {offsets = [0, 544], sizes = [8, 32], strides = [1, 1]} : vector<8x1024xf32> to vector<8x32xf32>
    %378 = vector.extract_strided_slice %235 {offsets = [0, 574], sizes = [8, 1], strides = [1, 1]} : vector<8x1024xf32> to vector<8x1xf32>
    %379 = vector.extract_strided_slice %235 {offsets = [0, 573], sizes = [8, 1], strides = [1, 1]} : vector<8x1024xf32> to vector<8x1xf32>
    %380 = vector.extract_strided_slice %235 {offsets = [0, 572], sizes = [8, 1], strides = [1, 1]} : vector<8x1024xf32> to vector<8x1xf32>
    %381 = tpu.concatenate %374, %375, %376, %377, %378, %379, %380 in 1 : vector<8x1xf32>, vector<8x1xf32>, vector<8x1xf32>, vector<8x32xf32>, vector<8x1xf32>, vector<8x1xf32>, vector<8x1xf32> -> vector<8x38xf32>
    %382 = vector.extract_strided_slice %235 {offsets = [0, 579], sizes = [8, 1], strides = [1, 1]} : vector<8x1024xf32> to vector<8x1xf32>
    %383 = vector.extract_strided_slice %235 {offsets = [0, 578], sizes = [8, 1], strides = [1, 1]} : vector<8x1024xf32> to vector<8x1xf32>
    %384 = vector.extract_strided_slice %235 {offsets = [0, 577], sizes = [8, 1], strides = [1, 1]} : vector<8x1024xf32> to vector<8x1xf32>
    %385 = vector.extract_strided_slice %235 {offsets = [0, 576], sizes = [8, 32], strides = [1, 1]} : vector<8x1024xf32> to vector<8x32xf32>
    %386 = vector.extract_strided_slice %235 {offsets = [0, 606], sizes = [8, 1], strides = [1, 1]} : vector<8x1024xf32> to vector<8x1xf32>
    %387 = vector.extract_strided_slice %235 {offsets = [0, 605], sizes = [8, 1], strides = [1, 1]} : vector<8x1024xf32> to vector<8x1xf32>
    %388 = vector.extract_strided_slice %235 {offsets = [0, 604], sizes = [8, 1], strides = [1, 1]} : vector<8x1024xf32> to vector<8x1xf32>
    %389 = tpu.concatenate %382, %383, %384, %385, %386, %387, %388 in 1 : vector<8x1xf32>, vector<8x1xf32>, vector<8x1xf32>, vector<8x32xf32>, vector<8x1xf32>, vector<8x1xf32>, vector<8x1xf32> -> vector<8x38xf32>
    %390 = vector.extract_strided_slice %235 {offsets = [0, 611], sizes = [8, 1], strides = [1, 1]} : vector<8x1024xf32> to vector<8x1xf32>
    %391 = vector.extract_strided_slice %235 {offsets = [0, 610], sizes = [8, 1], strides = [1, 1]} : vector<8x1024xf32> to vector<8x1xf32>
    %392 = vector.extract_strided_slice %235 {offsets = [0, 609], sizes = [8, 1], strides = [1, 1]} : vector<8x1024xf32> to vector<8x1xf32>
    %393 = vector.extract_strided_slice %235 {offsets = [0, 608], sizes = [8, 32], strides = [1, 1]} : vector<8x1024xf32> to vector<8x32xf32>
    %394 = vector.extract_strided_slice %235 {offsets = [0, 638], sizes = [8, 1], strides = [1, 1]} : vector<8x1024xf32> to vector<8x1xf32>
    %395 = vector.extract_strided_slice %235 {offsets = [0, 637], sizes = [8, 1], strides = [1, 1]} : vector<8x1024xf32> to vector<8x1xf32>
    %396 = vector.extract_strided_slice %235 {offsets = [0, 636], sizes = [8, 1], strides = [1, 1]} : vector<8x1024xf32> to vector<8x1xf32>
    %397 = tpu.concatenate %390, %391, %392, %393, %394, %395, %396 in 1 : vector<8x1xf32>, vector<8x1xf32>, vector<8x1xf32>, vector<8x32xf32>, vector<8x1xf32>, vector<8x1xf32>, vector<8x1xf32> -> vector<8x38xf32>
    %398 = vector.extract_strided_slice %235 {offsets = [0, 643], sizes = [8, 1], strides = [1, 1]} : vector<8x1024xf32> to vector<8x1xf32>
    %399 = vector.extract_strided_slice %235 {offsets = [0, 642], sizes = [8, 1], strides = [1, 1]} : vector<8x1024xf32> to vector<8x1xf32>
    %400 = vector.extract_strided_slice %235 {offsets = [0, 641], sizes = [8, 1], strides = [1, 1]} : vector<8x1024xf32> to vector<8x1xf32>
    %401 = vector.extract_strided_slice %235 {offsets = [0, 640], sizes = [8, 32], strides = [1, 1]} : vector<8x1024xf32> to vector<8x32xf32>
    %402 = vector.extract_strided_slice %235 {offsets = [0, 670], sizes = [8, 1], strides = [1, 1]} : vector<8x1024xf32> to vector<8x1xf32>
    %403 = vector.extract_strided_slice %235 {offsets = [0, 669], sizes = [8, 1], strides = [1, 1]} : vector<8x1024xf32> to vector<8x1xf32>
    %404 = vector.extract_strided_slice %235 {offsets = [0, 668], sizes = [8, 1], strides = [1, 1]} : vector<8x1024xf32> to vector<8x1xf32>
    %405 = tpu.concatenate %398, %399, %400, %401, %402, %403, %404 in 1 : vector<8x1xf32>, vector<8x1xf32>, vector<8x1xf32>, vector<8x32xf32>, vector<8x1xf32>, vector<8x1xf32>, vector<8x1xf32> -> vector<8x38xf32>
    %406 = vector.extract_strided_slice %235 {offsets = [0, 675], sizes = [8, 1], strides = [1, 1]} : vector<8x1024xf32> to vector<8x1xf32>
    %407 = vector.extract_strided_slice %235 {offsets = [0, 674], sizes = [8, 1], strides = [1, 1]} : vector<8x1024xf32> to vector<8x1xf32>
    %408 = vector.extract_strided_slice %235 {offsets = [0, 673], sizes = [8, 1], strides = [1, 1]} : vector<8x1024xf32> to vector<8x1xf32>
    %409 = vector.extract_strided_slice %235 {offsets = [0, 672], sizes = [8, 32], strides = [1, 1]} : vector<8x1024xf32> to vector<8x32xf32>
    %410 = vector.extract_strided_slice %235 {offsets = [0, 702], sizes = [8, 1], strides = [1, 1]} : vector<8x1024xf32> to vector<8x1xf32>
    %411 = vector.extract_strided_slice %235 {offsets = [0, 701], sizes = [8, 1], strides = [1, 1]} : vector<8x1024xf32> to vector<8x1xf32>
    %412 = vector.extract_strided_slice %235 {offsets = [0, 700], sizes = [8, 1], strides = [1, 1]} : vector<8x1024xf32> to vector<8x1xf32>
    %413 = tpu.concatenate %406, %407, %408, %409, %410, %411, %412 in 1 : vector<8x1xf32>, vector<8x1xf32>, vector<8x1xf32>, vector<8x32xf32>, vector<8x1xf32>, vector<8x1xf32>, vector<8x1xf32> -> vector<8x38xf32>
    %414 = vector.extract_strided_slice %235 {offsets = [0, 707], sizes = [8, 1], strides = [1, 1]} : vector<8x1024xf32> to vector<8x1xf32>
    %415 = vector.extract_strided_slice %235 {offsets = [0, 706], sizes = [8, 1], strides = [1, 1]} : vector<8x1024xf32> to vector<8x1xf32>
    %416 = vector.extract_strided_slice %235 {offsets = [0, 705], sizes = [8, 1], strides = [1, 1]} : vector<8x1024xf32> to vector<8x1xf32>
    %417 = vector.extract_strided_slice %235 {offsets = [0, 704], sizes = [8, 32], strides = [1, 1]} : vector<8x1024xf32> to vector<8x32xf32>
    %418 = vector.extract_strided_slice %235 {offsets = [0, 734], sizes = [8, 1], strides = [1, 1]} : vector<8x1024xf32> to vector<8x1xf32>
    %419 = vector.extract_strided_slice %235 {offsets = [0, 733], sizes = [8, 1], strides = [1, 1]} : vector<8x1024xf32> to vector<8x1xf32>
    %420 = vector.extract_strided_slice %235 {offsets = [0, 732], sizes = [8, 1], strides = [1, 1]} : vector<8x1024xf32> to vector<8x1xf32>
    %421 = tpu.concatenate %414, %415, %416, %417, %418, %419, %420 in 1 : vector<8x1xf32>, vector<8x1xf32>, vector<8x1xf32>, vector<8x32xf32>, vector<8x1xf32>, vector<8x1xf32>, vector<8x1xf32> -> vector<8x38xf32>
    %422 = vector.extract_strided_slice %235 {offsets = [0, 739], sizes = [8, 1], strides = [1, 1]} : vector<8x1024xf32> to vector<8x1xf32>
    %423 = vector.extract_strided_slice %235 {offsets = [0, 738], sizes = [8, 1], strides = [1, 1]} : vector<8x1024xf32> to vector<8x1xf32>
    %424 = vector.extract_strided_slice %235 {offsets = [0, 737], sizes = [8, 1], strides = [1, 1]} : vector<8x1024xf32> to vector<8x1xf32>
    %425 = vector.extract_strided_slice %235 {offsets = [0, 736], sizes = [8, 32], strides = [1, 1]} : vector<8x1024xf32> to vector<8x32xf32>
    %426 = vector.extract_strided_slice %235 {offsets = [0, 766], sizes = [8, 1], strides = [1, 1]} : vector<8x1024xf32> to vector<8x1xf32>
    %427 = vector.extract_strided_slice %235 {offsets = [0, 765], sizes = [8, 1], strides = [1, 1]} : vector<8x1024xf32> to vector<8x1xf32>
    %428 = vector.extract_strided_slice %235 {offsets = [0, 764], sizes = [8, 1], strides = [1, 1]} : vector<8x1024xf32> to vector<8x1xf32>
    %429 = tpu.concatenate %422, %423, %424, %425, %426, %427, %428 in 1 : vector<8x1xf32>, vector<8x1xf32>, vector<8x1xf32>, vector<8x32xf32>, vector<8x1xf32>, vector<8x1xf32>, vector<8x1xf32> -> vector<8x38xf32>
    %430 = vector.extract_strided_slice %235 {offsets = [0, 771], sizes = [8, 1], strides = [1, 1]} : vector<8x1024xf32> to vector<8x1xf32>
    %431 = vector.extract_strided_slice %235 {offsets = [0, 770], sizes = [8, 1], strides = [1, 1]} : vector<8x1024xf32> to vector<8x1xf32>
    %432 = vector.extract_strided_slice %235 {offsets = [0, 769], sizes = [8, 1], strides = [1, 1]} : vector<8x1024xf32> to vector<8x1xf32>
    %433 = vector.extract_strided_slice %235 {offsets = [0, 768], sizes = [8, 32], strides = [1, 1]} : vector<8x1024xf32> to vector<8x32xf32>
    %434 = vector.extract_strided_slice %235 {offsets = [0, 798], sizes = [8, 1], strides = [1, 1]} : vector<8x1024xf32> to vector<8x1xf32>
    %435 = vector.extract_strided_slice %235 {offsets = [0, 797], sizes = [8, 1], strides = [1, 1]} : vector<8x1024xf32> to vector<8x1xf32>
    %436 = vector.extract_strided_slice %235 {offsets = [0, 796], sizes = [8, 1], strides = [1, 1]} : vector<8x1024xf32> to vector<8x1xf32>
    %437 = tpu.concatenate %430, %431, %432, %433, %434, %435, %436 in 1 : vector<8x1xf32>, vector<8x1xf32>, vector<8x1xf32>, vector<8x32xf32>, vector<8x1xf32>, vector<8x1xf32>, vector<8x1xf32> -> vector<8x38xf32>
    %438 = vector.extract_strided_slice %235 {offsets = [0, 803], sizes = [8, 1], strides = [1, 1]} : vector<8x1024xf32> to vector<8x1xf32>
    %439 = vector.extract_strided_slice %235 {offsets = [0, 802], sizes = [8, 1], strides = [1, 1]} : vector<8x1024xf32> to vector<8x1xf32>
    %440 = vector.extract_strided_slice %235 {offsets = [0, 801], sizes = [8, 1], strides = [1, 1]} : vector<8x1024xf32> to vector<8x1xf32>
    %441 = vector.extract_strided_slice %235 {offsets = [0, 800], sizes = [8, 32], strides = [1, 1]} : vector<8x1024xf32> to vector<8x32xf32>
    %442 = vector.extract_strided_slice %235 {offsets = [0, 830], sizes = [8, 1], strides = [1, 1]} : vector<8x1024xf32> to vector<8x1xf32>
    %443 = vector.extract_strided_slice %235 {offsets = [0, 829], sizes = [8, 1], strides = [1, 1]} : vector<8x1024xf32> to vector<8x1xf32>
    %444 = vector.extract_strided_slice %235 {offsets = [0, 828], sizes = [8, 1], strides = [1, 1]} : vector<8x1024xf32> to vector<8x1xf32>
    %445 = tpu.concatenate %438, %439, %440, %441, %442, %443, %444 in 1 : vector<8x1xf32>, vector<8x1xf32>, vector<8x1xf32>, vector<8x32xf32>, vector<8x1xf32>, vector<8x1xf32>, vector<8x1xf32> -> vector<8x38xf32>
    %446 = vector.extract_strided_slice %235 {offsets = [0, 835], sizes = [8, 1], strides = [1, 1]} : vector<8x1024xf32> to vector<8x1xf32>
    %447 = vector.extract_strided_slice %235 {offsets = [0, 834], sizes = [8, 1], strides = [1, 1]} : vector<8x1024xf32> to vector<8x1xf32>
    %448 = vector.extract_strided_slice %235 {offsets = [0, 833], sizes = [8, 1], strides = [1, 1]} : vector<8x1024xf32> to vector<8x1xf32>
    %449 = vector.extract_strided_slice %235 {offsets = [0, 832], sizes = [8, 32], strides = [1, 1]} : vector<8x1024xf32> to vector<8x32xf32>
    %450 = vector.extract_strided_slice %235 {offsets = [0, 862], sizes = [8, 1], strides = [1, 1]} : vector<8x1024xf32> to vector<8x1xf32>
    %451 = vector.extract_strided_slice %235 {offsets = [0, 861], sizes = [8, 1], strides = [1, 1]} : vector<8x1024xf32> to vector<8x1xf32>
    %452 = vector.extract_strided_slice %235 {offsets = [0, 860], sizes = [8, 1], strides = [1, 1]} : vector<8x1024xf32> to vector<8x1xf32>
    %453 = tpu.concatenate %446, %447, %448, %449, %450, %451, %452 in 1 : vector<8x1xf32>, vector<8x1xf32>, vector<8x1xf32>, vector<8x32xf32>, vector<8x1xf32>, vector<8x1xf32>, vector<8x1xf32> -> vector<8x38xf32>
    %454 = vector.extract_strided_slice %235 {offsets = [0, 867], sizes = [8, 1], strides = [1, 1]} : vector<8x1024xf32> to vector<8x1xf32>
    %455 = vector.extract_strided_slice %235 {offsets = [0, 866], sizes = [8, 1], strides = [1, 1]} : vector<8x1024xf32> to vector<8x1xf32>
    %456 = vector.extract_strided_slice %235 {offsets = [0, 865], sizes = [8, 1], strides = [1, 1]} : vector<8x1024xf32> to vector<8x1xf32>
    %457 = vector.extract_strided_slice %235 {offsets = [0, 864], sizes = [8, 32], strides = [1, 1]} : vector<8x1024xf32> to vector<8x32xf32>
    %458 = vector.extract_strided_slice %235 {offsets = [0, 894], sizes = [8, 1], strides = [1, 1]} : vector<8x1024xf32> to vector<8x1xf32>
    %459 = vector.extract_strided_slice %235 {offsets = [0, 893], sizes = [8, 1], strides = [1, 1]} : vector<8x1024xf32> to vector<8x1xf32>
    %460 = vector.extract_strided_slice %235 {offsets = [0, 892], sizes = [8, 1], strides = [1, 1]} : vector<8x1024xf32> to vector<8x1xf32>
    %461 = tpu.concatenate %454, %455, %456, %457, %458, %459, %460 in 1 : vector<8x1xf32>, vector<8x1xf32>, vector<8x1xf32>, vector<8x32xf32>, vector<8x1xf32>, vector<8x1xf32>, vector<8x1xf32> -> vector<8x38xf32>
    %462 = vector.extract_strided_slice %235 {offsets = [0, 899], sizes = [8, 1], strides = [1, 1]} : vector<8x1024xf32> to vector<8x1xf32>
    %463 = vector.extract_strided_slice %235 {offsets = [0, 898], sizes = [8, 1], strides = [1, 1]} : vector<8x1024xf32> to vector<8x1xf32>
    %464 = vector.extract_strided_slice %235 {offsets = [0, 897], sizes = [8, 1], strides = [1, 1]} : vector<8x1024xf32> to vector<8x1xf32>
    %465 = vector.extract_strided_slice %235 {offsets = [0, 896], sizes = [8, 32], strides = [1, 1]} : vector<8x1024xf32> to vector<8x32xf32>
    %466 = vector.extract_strided_slice %235 {offsets = [0, 926], sizes = [8, 1], strides = [1, 1]} : vector<8x1024xf32> to vector<8x1xf32>
    %467 = vector.extract_strided_slice %235 {offsets = [0, 925], sizes = [8, 1], strides = [1, 1]} : vector<8x1024xf32> to vector<8x1xf32>
    %468 = vector.extract_strided_slice %235 {offsets = [0, 924], sizes = [8, 1], strides = [1, 1]} : vector<8x1024xf32> to vector<8x1xf32>
    %469 = tpu.concatenate %462, %463, %464, %465, %466, %467, %468 in 1 : vector<8x1xf32>, vector<8x1xf32>, vector<8x1xf32>, vector<8x32xf32>, vector<8x1xf32>, vector<8x1xf32>, vector<8x1xf32> -> vector<8x38xf32>
    %470 = vector.extract_strided_slice %235 {offsets = [0, 931], sizes = [8, 1], strides = [1, 1]} : vector<8x1024xf32> to vector<8x1xf32>
    %471 = vector.extract_strided_slice %235 {offsets = [0, 930], sizes = [8, 1], strides = [1, 1]} : vector<8x1024xf32> to vector<8x1xf32>
    %472 = vector.extract_strided_slice %235 {offsets = [0, 929], sizes = [8, 1], strides = [1, 1]} : vector<8x1024xf32> to vector<8x1xf32>
    %473 = vector.extract_strided_slice %235 {offsets = [0, 928], sizes = [8, 32], strides = [1, 1]} : vector<8x1024xf32> to vector<8x32xf32>
    %474 = vector.extract_strided_slice %235 {offsets = [0, 958], sizes = [8, 1], strides = [1, 1]} : vector<8x1024xf32> to vector<8x1xf32>
    %475 = vector.extract_strided_slice %235 {offsets = [0, 957], sizes = [8, 1], strides = [1, 1]} : vector<8x1024xf32> to vector<8x1xf32>
    %476 = vector.extract_strided_slice %235 {offsets = [0, 956], sizes = [8, 1], strides = [1, 1]} : vector<8x1024xf32> to vector<8x1xf32>
    %477 = tpu.concatenate %470, %471, %472, %473, %474, %475, %476 in 1 : vector<8x1xf32>, vector<8x1xf32>, vector<8x1xf32>, vector<8x32xf32>, vector<8x1xf32>, vector<8x1xf32>, vector<8x1xf32> -> vector<8x38xf32>
    %478 = vector.extract_strided_slice %235 {offsets = [0, 963], sizes = [8, 1], strides = [1, 1]} : vector<8x1024xf32> to vector<8x1xf32>
    %479 = vector.extract_strided_slice %235 {offsets = [0, 962], sizes = [8, 1], strides = [1, 1]} : vector<8x1024xf32> to vector<8x1xf32>
    %480 = vector.extract_strided_slice %235 {offsets = [0, 961], sizes = [8, 1], strides = [1, 1]} : vector<8x1024xf32> to vector<8x1xf32>
    %481 = vector.extract_strided_slice %235 {offsets = [0, 960], sizes = [8, 32], strides = [1, 1]} : vector<8x1024xf32> to vector<8x32xf32>
    %482 = vector.extract_strided_slice %235 {offsets = [0, 990], sizes = [8, 1], strides = [1, 1]} : vector<8x1024xf32> to vector<8x1xf32>
    %483 = vector.extract_strided_slice %235 {offsets = [0, 989], sizes = [8, 1], strides = [1, 1]} : vector<8x1024xf32> to vector<8x1xf32>
    %484 = vector.extract_strided_slice %235 {offsets = [0, 988], sizes = [8, 1], strides = [1, 1]} : vector<8x1024xf32> to vector<8x1xf32>
    %485 = tpu.concatenate %478, %479, %480, %481, %482, %483, %484 in 1 : vector<8x1xf32>, vector<8x1xf32>, vector<8x1xf32>, vector<8x32xf32>, vector<8x1xf32>, vector<8x1xf32>, vector<8x1xf32> -> vector<8x38xf32>
    %486 = vector.extract_strided_slice %235 {offsets = [0, 995], sizes = [8, 1], strides = [1, 1]} : vector<8x1024xf32> to vector<8x1xf32>
    %487 = vector.extract_strided_slice %235 {offsets = [0, 994], sizes = [8, 1], strides = [1, 1]} : vector<8x1024xf32> to vector<8x1xf32>
    %488 = vector.extract_strided_slice %235 {offsets = [0, 993], sizes = [8, 1], strides = [1, 1]} : vector<8x1024xf32> to vector<8x1xf32>
    %489 = vector.extract_strided_slice %235 {offsets = [0, 992], sizes = [8, 32], strides = [1, 1]} : vector<8x1024xf32> to vector<8x32xf32>
    %490 = vector.extract_strided_slice %235 {offsets = [0, 1022], sizes = [8, 1], strides = [1, 1]} : vector<8x1024xf32> to vector<8x1xf32>
    %491 = vector.extract_strided_slice %235 {offsets = [0, 1021], sizes = [8, 1], strides = [1, 1]} : vector<8x1024xf32> to vector<8x1xf32>
    %492 = vector.extract_strided_slice %235 {offsets = [0, 1020], sizes = [8, 1], strides = [1, 1]} : vector<8x1024xf32> to vector<8x1xf32>
    %493 = tpu.concatenate %486, %487, %488, %489, %490, %491, %492 in 1 : vector<8x1xf32>, vector<8x1xf32>, vector<8x1xf32>, vector<8x32xf32>, vector<8x1xf32>, vector<8x1xf32>, vector<8x1xf32> -> vector<8x38xf32>
    %494 = tpu.concatenate %269, %261, %253, %245, %253, %261, %269, %277, %285, %293, %301, %309, %317, %325, %333, %341 in 1 : vector<8x38xf32>, vector<8x38xf32>, vector<8x38xf32>, vector<8x38xf32>, vector<8x38xf32>, vector<8x38xf32>, vector<8x38xf32>, vector<8x38xf32>, vector<8x38xf32>, vector<8x38xf32>, vector<8x38xf32>, vector<8x38xf32>, vector<8x38xf32>, vector<8x38xf32>, vector<8x38xf32>, vector<8x38xf32> -> vector<8x608xf32>
    %495 = tpu.concatenate %349, %357, %365, %373, %381, %389, %397, %405, %413, %421, %429, %437, %445, %453, %461, %469 in 1 : vector<8x38xf32>, vector<8x38xf32>, vector<8x38xf32>, vector<8x38xf32>, vector<8x38xf32>, vector<8x38xf32>, vector<8x38xf32>, vector<8x38xf32>, vector<8x38xf32>, vector<8x38xf32>, vector<8x38xf32>, vector<8x38xf32>, vector<8x38xf32>, vector<8x38xf32>, vector<8x38xf32>, vector<8x38xf32> -> vector<8x608xf32>
    %496 = tpu.concatenate %477, %485, %493, %485, %477, %469 in 1 : vector<8x38xf32>, vector<8x38xf32>, vector<8x38xf32>, vector<8x38xf32>, vector<8x38xf32>, vector<8x38xf32> -> vector<8x228xf32>
    %497 = tpu.concatenate %494, %495, %496 in 1 : vector<8x608xf32>, vector<8x608xf32>, vector<8x228xf32> -> vector<8x1444xf32>
    %cst_86 = arith.constant 0.000000e+00 : f32
    %498 = vector.broadcast %cst_86 : f32 to vector<8x38xf32>
    %499 = tpu.concatenate %497, %498 in 1 : vector<8x1444xf32>, vector<8x38xf32> -> vector<8x1482xf32>
    %500 = vector.extract_strided_slice %499 {offsets = [0, 0], sizes = [8, 1216], strides = [1, 1]} : vector<8x1482xf32> to vector<8x1216xf32>
    %501 = vector.extract_strided_slice %499 {offsets = [0, 1], sizes = [8, 1216], strides = [1, 1]} : vector<8x1482xf32> to vector<8x1216xf32>
    %502 = vector.extract_strided_slice %499 {offsets = [0, 2], sizes = [8, 1216], strides = [1, 1]} : vector<8x1482xf32> to vector<8x1216xf32>
    %503 = vector.extract_strided_slice %499 {offsets = [0, 3], sizes = [8, 1216], strides = [1, 1]} : vector<8x1482xf32> to vector<8x1216xf32>
    %504 = vector.extract_strided_slice %499 {offsets = [0, 4], sizes = [8, 1216], strides = [1, 1]} : vector<8x1482xf32> to vector<8x1216xf32>
    %505 = vector.extract_strided_slice %499 {offsets = [0, 5], sizes = [8, 1216], strides = [1, 1]} : vector<8x1482xf32> to vector<8x1216xf32>
    %506 = vector.extract_strided_slice %499 {offsets = [0, 6], sizes = [8, 1216], strides = [1, 1]} : vector<8x1482xf32> to vector<8x1216xf32>
    %507 = vector.extract_strided_slice %499 {offsets = [0, 38], sizes = [8, 1216], strides = [1, 1]} : vector<8x1482xf32> to vector<8x1216xf32>
    %508 = vector.extract_strided_slice %499 {offsets = [0, 39], sizes = [8, 1216], strides = [1, 1]} : vector<8x1482xf32> to vector<8x1216xf32>
    %509 = vector.extract_strided_slice %499 {offsets = [0, 40], sizes = [8, 1216], strides = [1, 1]} : vector<8x1482xf32> to vector<8x1216xf32>
    %510 = vector.extract_strided_slice %499 {offsets = [0, 41], sizes = [8, 1216], strides = [1, 1]} : vector<8x1482xf32> to vector<8x1216xf32>
    %511 = vector.extract_strided_slice %499 {offsets = [0, 42], sizes = [8, 1216], strides = [1, 1]} : vector<8x1482xf32> to vector<8x1216xf32>
    %512 = vector.extract_strided_slice %499 {offsets = [0, 43], sizes = [8, 1216], strides = [1, 1]} : vector<8x1482xf32> to vector<8x1216xf32>
    %513 = vector.extract_strided_slice %499 {offsets = [0, 44], sizes = [8, 1216], strides = [1, 1]} : vector<8x1482xf32> to vector<8x1216xf32>
    %514 = vector.extract_strided_slice %499 {offsets = [0, 76], sizes = [8, 1216], strides = [1, 1]} : vector<8x1482xf32> to vector<8x1216xf32>
    %515 = vector.extract_strided_slice %499 {offsets = [0, 77], sizes = [8, 1216], strides = [1, 1]} : vector<8x1482xf32> to vector<8x1216xf32>
    %516 = vector.extract_strided_slice %499 {offsets = [0, 78], sizes = [8, 1216], strides = [1, 1]} : vector<8x1482xf32> to vector<8x1216xf32>
    %517 = vector.extract_strided_slice %499 {offsets = [0, 79], sizes = [8, 1216], strides = [1, 1]} : vector<8x1482xf32> to vector<8x1216xf32>
    %518 = vector.extract_strided_slice %499 {offsets = [0, 80], sizes = [8, 1216], strides = [1, 1]} : vector<8x1482xf32> to vector<8x1216xf32>
    %519 = vector.extract_strided_slice %499 {offsets = [0, 81], sizes = [8, 1216], strides = [1, 1]} : vector<8x1482xf32> to vector<8x1216xf32>
    %520 = vector.extract_strided_slice %499 {offsets = [0, 82], sizes = [8, 1216], strides = [1, 1]} : vector<8x1482xf32> to vector<8x1216xf32>
    %521 = vector.extract_strided_slice %499 {offsets = [0, 114], sizes = [8, 1216], strides = [1, 1]} : vector<8x1482xf32> to vector<8x1216xf32>
    %522 = vector.extract_strided_slice %499 {offsets = [0, 115], sizes = [8, 1216], strides = [1, 1]} : vector<8x1482xf32> to vector<8x1216xf32>
    %523 = vector.extract_strided_slice %499 {offsets = [0, 116], sizes = [8, 1216], strides = [1, 1]} : vector<8x1482xf32> to vector<8x1216xf32>
    %524 = vector.extract_strided_slice %499 {offsets = [0, 117], sizes = [8, 1216], strides = [1, 1]} : vector<8x1482xf32> to vector<8x1216xf32>
    %525 = vector.extract_strided_slice %499 {offsets = [0, 118], sizes = [8, 1216], strides = [1, 1]} : vector<8x1482xf32> to vector<8x1216xf32>
    %526 = vector.extract_strided_slice %499 {offsets = [0, 119], sizes = [8, 1216], strides = [1, 1]} : vector<8x1482xf32> to vector<8x1216xf32>
    %527 = vector.extract_strided_slice %499 {offsets = [0, 120], sizes = [8, 1216], strides = [1, 1]} : vector<8x1482xf32> to vector<8x1216xf32>
    %528 = vector.extract_strided_slice %499 {offsets = [0, 152], sizes = [8, 1216], strides = [1, 1]} : vector<8x1482xf32> to vector<8x1216xf32>
    %529 = vector.extract_strided_slice %499 {offsets = [0, 153], sizes = [8, 1216], strides = [1, 1]} : vector<8x1482xf32> to vector<8x1216xf32>
    %530 = vector.extract_strided_slice %499 {offsets = [0, 154], sizes = [8, 1216], strides = [1, 1]} : vector<8x1482xf32> to vector<8x1216xf32>
    %531 = vector.extract_strided_slice %499 {offsets = [0, 155], sizes = [8, 1216], strides = [1, 1]} : vector<8x1482xf32> to vector<8x1216xf32>
    %532 = vector.extract_strided_slice %499 {offsets = [0, 156], sizes = [8, 1216], strides = [1, 1]} : vector<8x1482xf32> to vector<8x1216xf32>
    %533 = vector.extract_strided_slice %499 {offsets = [0, 157], sizes = [8, 1216], strides = [1, 1]} : vector<8x1482xf32> to vector<8x1216xf32>
    %534 = vector.extract_strided_slice %499 {offsets = [0, 158], sizes = [8, 1216], strides = [1, 1]} : vector<8x1482xf32> to vector<8x1216xf32>
    %535 = vector.extract_strided_slice %499 {offsets = [0, 190], sizes = [8, 1216], strides = [1, 1]} : vector<8x1482xf32> to vector<8x1216xf32>
    %536 = vector.extract_strided_slice %499 {offsets = [0, 191], sizes = [8, 1216], strides = [1, 1]} : vector<8x1482xf32> to vector<8x1216xf32>
    %537 = vector.extract_strided_slice %499 {offsets = [0, 192], sizes = [8, 1216], strides = [1, 1]} : vector<8x1482xf32> to vector<8x1216xf32>
    %538 = vector.extract_strided_slice %499 {offsets = [0, 193], sizes = [8, 1216], strides = [1, 1]} : vector<8x1482xf32> to vector<8x1216xf32>
    %539 = vector.extract_strided_slice %499 {offsets = [0, 194], sizes = [8, 1216], strides = [1, 1]} : vector<8x1482xf32> to vector<8x1216xf32>
    %540 = vector.extract_strided_slice %499 {offsets = [0, 195], sizes = [8, 1216], strides = [1, 1]} : vector<8x1482xf32> to vector<8x1216xf32>
    %541 = vector.extract_strided_slice %499 {offsets = [0, 196], sizes = [8, 1216], strides = [1, 1]} : vector<8x1482xf32> to vector<8x1216xf32>
    %542 = vector.extract_strided_slice %499 {offsets = [0, 228], sizes = [8, 1216], strides = [1, 1]} : vector<8x1482xf32> to vector<8x1216xf32>
    %543 = vector.extract_strided_slice %499 {offsets = [0, 229], sizes = [8, 1216], strides = [1, 1]} : vector<8x1482xf32> to vector<8x1216xf32>
    %544 = vector.extract_strided_slice %499 {offsets = [0, 230], sizes = [8, 1216], strides = [1, 1]} : vector<8x1482xf32> to vector<8x1216xf32>
    %545 = vector.extract_strided_slice %499 {offsets = [0, 231], sizes = [8, 1216], strides = [1, 1]} : vector<8x1482xf32> to vector<8x1216xf32>
    %546 = vector.extract_strided_slice %499 {offsets = [0, 232], sizes = [8, 1216], strides = [1, 1]} : vector<8x1482xf32> to vector<8x1216xf32>
    %547 = vector.extract_strided_slice %499 {offsets = [0, 233], sizes = [8, 1216], strides = [1, 1]} : vector<8x1482xf32> to vector<8x1216xf32>
    %548 = vector.extract_strided_slice %499 {offsets = [0, 234], sizes = [8, 1216], strides = [1, 1]} : vector<8x1482xf32> to vector<8x1216xf32>
    %549 = tpu.concatenate %500, %501, %502, %503, %504, %505, %506, %507, %508, %509, %510, %511, %512, %513, %514, %515 in 0 : vector<8x1216xf32>, vector<8x1216xf32>, vector<8x1216xf32>, vector<8x1216xf32>, vector<8x1216xf32>, vector<8x1216xf32>, vector<8x1216xf32>, vector<8x1216xf32>, vector<8x1216xf32>, vector<8x1216xf32>, vector<8x1216xf32>, vector<8x1216xf32>, vector<8x1216xf32>, vector<8x1216xf32>, vector<8x1216xf32>, vector<8x1216xf32> -> vector<128x1216xf32>
    %550 = tpu.concatenate %516, %517, %518, %519, %520, %521, %522, %523, %524, %525, %526, %527, %528, %529, %530, %531 in 0 : vector<8x1216xf32>, vector<8x1216xf32>, vector<8x1216xf32>, vector<8x1216xf32>, vector<8x1216xf32>, vector<8x1216xf32>, vector<8x1216xf32>, vector<8x1216xf32>, vector<8x1216xf32>, vector<8x1216xf32>, vector<8x1216xf32>, vector<8x1216xf32>, vector<8x1216xf32>, vector<8x1216xf32>, vector<8x1216xf32>, vector<8x1216xf32> -> vector<128x1216xf32>
    %551 = tpu.concatenate %532, %533, %534, %535, %536, %537, %538, %539, %540, %541, %542, %543, %544, %545, %546, %547 in 0 : vector<8x1216xf32>, vector<8x1216xf32>, vector<8x1216xf32>, vector<8x1216xf32>, vector<8x1216xf32>, vector<8x1216xf32>, vector<8x1216xf32>, vector<8x1216xf32>, vector<8x1216xf32>, vector<8x1216xf32>, vector<8x1216xf32>, vector<8x1216xf32>, vector<8x1216xf32>, vector<8x1216xf32>, vector<8x1216xf32>, vector<8x1216xf32> -> vector<128x1216xf32>
    %552 = tpu.concatenate %549, %550, %551, %548 in 0 : vector<128x1216xf32>, vector<128x1216xf32>, vector<128x1216xf32>, vector<8x1216xf32> -> vector<392x1216xf32>
    %cst_87 = arith.constant dense<0.000000e+00> : vector<3x1216xf32>
    %553 = tpu.matmul %236, %552, %cst_87 {dimension_numbers = #tpu.dot_dimension_numbers<[1], [0], [0], [1], [0, 0, 1, 1], [], []>} : vector<3x392xf32>, vector<392x1216xf32>, vector<3x1216xf32> -> vector<3x1216xf32>
    %554 = vector.broadcast %237 : vector<3x1xf32> to vector<3x1216xf32>
    %555 = arith.addf %553, %554 : vector<3x1216xf32>
    %556 = vector.extract_strided_slice %555 {offsets = [0, 0], sizes = [3, 32], strides = [1, 1]} : vector<3x1216xf32> to vector<3x32xf32>
    %557 = vector.extract_strided_slice %555 {offsets = [0, 38], sizes = [3, 32], strides = [1, 1]} : vector<3x1216xf32> to vector<3x32xf32>
    %558 = vector.extract_strided_slice %555 {offsets = [0, 76], sizes = [3, 32], strides = [1, 1]} : vector<3x1216xf32> to vector<3x32xf32>
    %559 = vector.extract_strided_slice %555 {offsets = [0, 114], sizes = [3, 32], strides = [1, 1]} : vector<3x1216xf32> to vector<3x32xf32>
    %560 = vector.extract_strided_slice %555 {offsets = [0, 152], sizes = [3, 32], strides = [1, 1]} : vector<3x1216xf32> to vector<3x32xf32>
    %561 = vector.extract_strided_slice %555 {offsets = [0, 190], sizes = [3, 32], strides = [1, 1]} : vector<3x1216xf32> to vector<3x32xf32>
    %562 = vector.extract_strided_slice %555 {offsets = [0, 228], sizes = [3, 32], strides = [1, 1]} : vector<3x1216xf32> to vector<3x32xf32>
    %563 = vector.extract_strided_slice %555 {offsets = [0, 266], sizes = [3, 32], strides = [1, 1]} : vector<3x1216xf32> to vector<3x32xf32>
    %564 = vector.extract_strided_slice %555 {offsets = [0, 304], sizes = [3, 32], strides = [1, 1]} : vector<3x1216xf32> to vector<3x32xf32>
    %565 = vector.extract_strided_slice %555 {offsets = [0, 342], sizes = [3, 32], strides = [1, 1]} : vector<3x1216xf32> to vector<3x32xf32>
    %566 = vector.extract_strided_slice %555 {offsets = [0, 380], sizes = [3, 32], strides = [1, 1]} : vector<3x1216xf32> to vector<3x32xf32>
    %567 = vector.extract_strided_slice %555 {offsets = [0, 418], sizes = [3, 32], strides = [1, 1]} : vector<3x1216xf32> to vector<3x32xf32>
    %568 = vector.extract_strided_slice %555 {offsets = [0, 456], sizes = [3, 32], strides = [1, 1]} : vector<3x1216xf32> to vector<3x32xf32>
    %569 = vector.extract_strided_slice %555 {offsets = [0, 494], sizes = [3, 32], strides = [1, 1]} : vector<3x1216xf32> to vector<3x32xf32>
    %570 = vector.extract_strided_slice %555 {offsets = [0, 532], sizes = [3, 32], strides = [1, 1]} : vector<3x1216xf32> to vector<3x32xf32>
    %571 = vector.extract_strided_slice %555 {offsets = [0, 570], sizes = [3, 32], strides = [1, 1]} : vector<3x1216xf32> to vector<3x32xf32>
    %572 = vector.extract_strided_slice %555 {offsets = [0, 608], sizes = [3, 32], strides = [1, 1]} : vector<3x1216xf32> to vector<3x32xf32>
    %573 = vector.extract_strided_slice %555 {offsets = [0, 646], sizes = [3, 32], strides = [1, 1]} : vector<3x1216xf32> to vector<3x32xf32>
    %574 = vector.extract_strided_slice %555 {offsets = [0, 684], sizes = [3, 32], strides = [1, 1]} : vector<3x1216xf32> to vector<3x32xf32>
    %575 = vector.extract_strided_slice %555 {offsets = [0, 722], sizes = [3, 32], strides = [1, 1]} : vector<3x1216xf32> to vector<3x32xf32>
    %576 = vector.extract_strided_slice %555 {offsets = [0, 760], sizes = [3, 32], strides = [1, 1]} : vector<3x1216xf32> to vector<3x32xf32>
    %577 = vector.extract_strided_slice %555 {offsets = [0, 798], sizes = [3, 32], strides = [1, 1]} : vector<3x1216xf32> to vector<3x32xf32>
    %578 = vector.extract_strided_slice %555 {offsets = [0, 836], sizes = [3, 32], strides = [1, 1]} : vector<3x1216xf32> to vector<3x32xf32>
    %579 = vector.extract_strided_slice %555 {offsets = [0, 874], sizes = [3, 32], strides = [1, 1]} : vector<3x1216xf32> to vector<3x32xf32>
    %580 = vector.extract_strided_slice %555 {offsets = [0, 912], sizes = [3, 32], strides = [1, 1]} : vector<3x1216xf32> to vector<3x32xf32>
    %581 = vector.extract_strided_slice %555 {offsets = [0, 950], sizes = [3, 32], strides = [1, 1]} : vector<3x1216xf32> to vector<3x32xf32>
    %582 = vector.extract_strided_slice %555 {offsets = [0, 988], sizes = [3, 32], strides = [1, 1]} : vector<3x1216xf32> to vector<3x32xf32>
    %583 = vector.extract_strided_slice %555 {offsets = [0, 1026], sizes = [3, 32], strides = [1, 1]} : vector<3x1216xf32> to vector<3x32xf32>
    %584 = vector.extract_strided_slice %555 {offsets = [0, 1064], sizes = [3, 32], strides = [1, 1]} : vector<3x1216xf32> to vector<3x32xf32>
    %585 = vector.extract_strided_slice %555 {offsets = [0, 1102], sizes = [3, 32], strides = [1, 1]} : vector<3x1216xf32> to vector<3x32xf32>
    %586 = vector.extract_strided_slice %555 {offsets = [0, 1140], sizes = [3, 32], strides = [1, 1]} : vector<3x1216xf32> to vector<3x32xf32>
    %587 = vector.extract_strided_slice %555 {offsets = [0, 1178], sizes = [3, 32], strides = [1, 1]} : vector<3x1216xf32> to vector<3x32xf32>
    %588 = tpu.concatenate %556, %557, %558, %559, %560, %561, %562, %563, %564, %565, %566, %567, %568, %569, %570, %571 in 1 : vector<3x32xf32>, vector<3x32xf32>, vector<3x32xf32>, vector<3x32xf32>, vector<3x32xf32>, vector<3x32xf32>, vector<3x32xf32>, vector<3x32xf32>, vector<3x32xf32>, vector<3x32xf32>, vector<3x32xf32>, vector<3x32xf32>, vector<3x32xf32>, vector<3x32xf32>, vector<3x32xf32>, vector<3x32xf32> -> vector<3x512xf32>
    %589 = tpu.concatenate %572, %573, %574, %575, %576, %577, %578, %579, %580, %581, %582, %583, %584, %585, %586, %587 in 1 : vector<3x32xf32>, vector<3x32xf32>, vector<3x32xf32>, vector<3x32xf32>, vector<3x32xf32>, vector<3x32xf32>, vector<3x32xf32>, vector<3x32xf32>, vector<3x32xf32>, vector<3x32xf32>, vector<3x32xf32>, vector<3x32xf32>, vector<3x32xf32>, vector<3x32xf32>, vector<3x32xf32>, vector<3x32xf32> -> vector<3x512xf32>
    %590 = tpu.concatenate %588, %589 in 1 : vector<3x512xf32>, vector<3x512xf32> -> vector<3x1024xf32>
    %591 = arith.negf %590 : vector<3x1024xf32>
    %592 = math.exp %591 : vector<3x1024xf32>
    %cst_88 = arith.constant 1.000000e+00 : f32
    %593 = vector.broadcast %cst_88 : f32 to vector<3x1024xf32>
    %594 = arith.addf %593, %592 : vector<3x1024xf32>
    %595 = arith.divf %593, %594 : vector<3x1024xf32>
    %c0_89 = arith.constant 0 : index
    %c0_90 = arith.constant 0 : index
    %c0_91 = arith.constant 0 : index
    %596 = vector.load %arg16[%c0_89, %c0_90, %c0_91] : memref<1x3x1024xf32, #tpu.memory_space<vmem>>, vector<1x3x1024xf32>
    %597 = vector.shape_cast %596 : vector<1x3x1024xf32> to vector<3x1024xf32>
    %598 = vector.shape_cast %595 : vector<3x1024xf32> to vector<1x3x1024xf32>
    tpu.vector_store %arg16[%c0_89, %c0_90, %c0_91], %598 {strides = array<i32>} : memref<1x3x1024xf32, #tpu.memory_space<vmem>>, vector<1x3x1024xf32>,
    return
  }
  func.func @transform_0(%arg0: i32) -> (i32, i32, i32) {
    %c0_i32 = arith.constant 0 : i32
    %c0_i32_0 = arith.constant 0 : i32
    %c0_i32_1 = arith.constant 0 : i32
    return %arg0, %c0_i32, %c0_i32_0 : i32, i32, i32
  }
  func.func @transform_1(%arg0: i32) -> (i32, i32, i32) {
    %c0_i32 = arith.constant 0 : i32
    %c0_i32_0 = arith.constant 0 : i32
    %c0_i32_1 = arith.constant 0 : i32
    %c0_i32_2 = arith.constant 0 : i32
    return %c0_i32, %c0_i32_0, %c0_i32_1 : i32, i32, i32
  }
  func.func @transform_2(%arg0: i32) -> (i32, i32) {
    %c0_i32 = arith.constant 0 : i32
    %c0_i32_0 = arith.constant 0 : i32
    %c0_i32_1 = arith.constant 0 : i32
    return %c0_i32, %c0_i32_0 : i32, i32
  }
  func.func @transform_3(%arg0: i32) -> (i32, i32) {
    %c0_i32 = arith.constant 0 : i32
    %c0_i32_0 = arith.constant 0 : i32
    %c0_i32_1 = arith.constant 0 : i32
    return %c0_i32, %c0_i32_0 : i32, i32
  }
  func.func @transform_4(%arg0: i32) -> (i32, i32) {
    %c0_i32 = arith.constant 0 : i32
    %c0_i32_0 = arith.constant 0 : i32
    %c0_i32_1 = arith.constant 0 : i32
    return %c0_i32, %c0_i32_0 : i32, i32
  }
  func.func @transform_5(%arg0: i32) -> (i32, i32, i32) {
    %c0_i32 = arith.constant 0 : i32
    %c0_i32_0 = arith.constant 0 : i32
    %c0_i32_1 = arith.constant 0 : i32
    %c0_i32_2 = arith.constant 0 : i32
    return %c0_i32, %c0_i32_0, %c0_i32_1 : i32, i32, i32
  }
  func.func @transform_6(%arg0: i32) -> (i32, i32) {
    %c0_i32 = arith.constant 0 : i32
    %c0_i32_0 = arith.constant 0 : i32
    %c0_i32_1 = arith.constant 0 : i32
    return %c0_i32, %c0_i32_0 : i32, i32
  }
  func.func @transform_7(%arg0: i32) -> (i32, i32) {
    %c0_i32 = arith.constant 0 : i32
    %c0_i32_0 = arith.constant 0 : i32
    %c0_i32_1 = arith.constant 0 : i32
    return %c0_i32, %c0_i32_0 : i32, i32
  }
  func.func @transform_8(%arg0: i32) -> (i32, i32) {
    %c0_i32 = arith.constant 0 : i32
    %c0_i32_0 = arith.constant 0 : i32
    %c0_i32_1 = arith.constant 0 : i32
    return %c0_i32, %c0_i32_0 : i32, i32
  }
  func.func @transform_9(%arg0: i32) -> (i32, i32, i32) {
    %c0_i32 = arith.constant 0 : i32
    %c0_i32_0 = arith.constant 0 : i32
    %c0_i32_1 = arith.constant 0 : i32
    %c0_i32_2 = arith.constant 0 : i32
    return %c0_i32, %c0_i32_0, %c0_i32_1 : i32, i32, i32
  }
  func.func @transform_10(%arg0: i32) -> (i32, i32) {
    %c0_i32 = arith.constant 0 : i32
    %c0_i32_0 = arith.constant 0 : i32
    %c0_i32_1 = arith.constant 0 : i32
    return %c0_i32, %c0_i32_0 : i32, i32
  }
  func.func @transform_11(%arg0: i32) -> (i32, i32) {
    %c0_i32 = arith.constant 0 : i32
    %c0_i32_0 = arith.constant 0 : i32
    %c0_i32_1 = arith.constant 0 : i32
    return %c0_i32, %c0_i32_0 : i32, i32
  }
  func.func @transform_12(%arg0: i32) -> (i32, i32) {
    %c0_i32 = arith.constant 0 : i32
    %c0_i32_0 = arith.constant 0 : i32
    %c0_i32_1 = arith.constant 0 : i32
    return %c0_i32, %c0_i32_0 : i32, i32
  }
  func.func @transform_13(%arg0: i32) -> (i32, i32) {
    %c0_i32 = arith.constant 0 : i32
    %c0_i32_0 = arith.constant 0 : i32
    %c0_i32_1 = arith.constant 0 : i32
    return %c0_i32, %c0_i32_0 : i32, i32
  }
  func.func @transform_14(%arg0: i32) -> (i32, i32) {
    %c0_i32 = arith.constant 0 : i32
    %c0_i32_0 = arith.constant 0 : i32
    %c0_i32_1 = arith.constant 0 : i32
    return %c0_i32, %c0_i32_0 : i32, i32
  }
  func.func @transform_15(%arg0: i32) -> (i32, i32, i32) {
    %c0_i32 = arith.constant 0 : i32
    %c0_i32_0 = arith.constant 0 : i32
    %c0_i32_1 = arith.constant 0 : i32
    return %arg0, %c0_i32, %c0_i32_0 : i32, i32, i32
  }
}

</mosaic_0001>

<llo_original>
// kernel: mask_decoder_forward.1
$region0: #{mask_decoder_forward.1}
  #allocation0 [shape = 'u32[]', space=smem, size = 0x4, offset = 0x4, fixed_abs, tag = 'smem constant byte address 0x4 - core index']
  #allocation1 [shape = 'u32[72,128]{1,0:T(1,128)}', space=vmem, size = 0x9000, scoped, tag = 'internal scratch']
  %s0 = inlined_call_operand.vmem [shape: f32[2,32,64], index: 0, kind: input, shape index: {}]
  %s1 = inlined_call_operand.vmem [shape: f32[9,32,32], index: 1, kind: input, shape index: {}]
  %s2 = inlined_call_operand.vmem [shape: f32[32,1], index: 2, kind: input, shape index: {}]
  %s3 = inlined_call_operand.vmem [shape: f32[1,64], index: 3, kind: input, shape index: {}]
  %s4 = inlined_call_operand.vmem [shape: f32[1,64], index: 4, kind: input, shape index: {}, may-alias: {4,7}]
  %s5 = inlined_call_operand.vmem [shape: f32[9,16,32], index: 5, kind: input, shape index: {}]
  %s6 = inlined_call_operand.vmem [shape: f32[16,1], index: 6, kind: input, shape index: {}]
  %s7 = inlined_call_operand.vmem [shape: f32[1,64], index: 7, kind: input, shape index: {}, may-alias: {4,7}]
  %s8 = inlined_call_operand.vmem [shape: f32[256,256], index: 8, kind: input, shape index: {}]
  %s9 = inlined_call_operand.vmem [shape: f32[9,8,16], index: 9, kind: input, shape index: {}]
  %s10 = inlined_call_operand.vmem [shape: f32[8,1], index: 10, kind: input, shape index: {}]
  %s11 = inlined_call_operand.vmem [shape: f32[1,256], index: 11, kind: input, shape index: {}]
  %s12 = inlined_call_operand.vmem [shape: f32[1024,1024], index: 12, kind: input, shape index: {}]
  %s13 = inlined_call_operand.vmem [shape: f32[3,392], index: 13, kind: input, shape index: {}]
  %s14 = inlined_call_operand.vmem [shape: f32[3,1], index: 14, kind: input, shape index: {}]
  %s15 = inlined_call_operand.vmem [shape: f32[2,3,1024], index: 15, kind: output, shape index: {}]
  %s16 = sld [smem:[#allocation0]]
  $region93: #{mask_decoder_forward.1} parent=0
    _
  %s18 = ssub.s32 1, %s16
  %s19 = scalar_select 0, %s18, %s16
  loop: start=0, step=1, limit=4
  $region2: #{mask_decoder_forward.1} parent=0 // loop_pre_header
    _
  $region3: #{mask_decoder_forward.1} parent=0 // loop_header
    %s21 = sphi 0, %s25
    %p22 = scmp.ge.s32.totalorder %s21, 4
    %s31 = sphi 0, %s33
    %s34 = sphi 0, %s31
    %s35 = sphi 0, %s34
    %s51 = sphi 0, %s35
    %s55 = sphi 0, %s55
    %s57 = sphi 0, %s55
    %s58 = sphi 0, %s57
    %s72 = sphi 0, %s58
    %s76 = sphi 0, %s76
    %s78 = sphi 0, %s76
    %s79 = sphi 0, %s78
    %s93 = sphi 0, %s79
    %s97 = sphi 0, %s97
    %s99 = sphi 0, %s97
    %s100 = sphi 0, %s99
    %s114 = sphi 0, %s100
    %s118 = sphi 0, %s118
    %s120 = sphi 0, %s118
    %s121 = sphi 0, %s120
    %s135 = sphi 0, %s121
    %s139 = sphi 0, %s139
    %s141 = sphi 0, %s139
    %s142 = sphi 0, %s141
    %s156 = sphi 0, %s142
    %s160 = sphi 0, %s160
    %s162 = sphi 0, %s160
    %s163 = sphi 0, %s162
    %s177 = sphi 0, %s163
    %s181 = sphi 0, %s181
    %s183 = sphi 0, %s181
    %s184 = sphi 0, %s183
    %s198 = sphi 0, %s184
    %s202 = sphi 0, %s202
    %s204 = sphi 0, %s202
    %s205 = sphi 0, %s204
    %s219 = sphi 0, %s205
    %s223 = sphi 0, %s223
    %s225 = sphi 0, %s223
    %s226 = sphi 0, %s225
    %s240 = sphi 0, %s226
    %s244 = sphi 0, %s244
    %s246 = sphi 0, %s244
    %s247 = sphi 0, %s246
    %s261 = sphi 0, %s247
    %s265 = sphi 0, %s265
    %s267 = sphi 0, %s265
    %s268 = sphi 0, %s267
    %s282 = sphi 0, %s268
    %s286 = sphi 0, %s286
    %s288 = sphi 0, %s286
    %s289 = sphi 0, %s288
    %s303 = sphi 0, %s289
    %s307 = sphi 0, %s307
    %s309 = sphi 0, %s307
    %s310 = sphi 0, %s309
    %s324 = sphi 0, %s310
    %s328 = sphi 0, %s328
    %s330 = sphi 0, %s328
    %s331 = sphi 0, %s330
    %s345 = sphi 0, %s331
    %s351 = sphi 0, %s353
    %s354 = sphi 0, %s351
    %s355 = sphi 0, %s354
    %s371 = sphi 0, %s355
  $region4: #{mask_decoder_forward.1} parent=0 // loop_header_branch
    %24 = sbr.rel (%p22) target = $region8
  $region5: #{mask_decoder_forward.1} parent=0 // loop_body
    %s26 = ssub.s32 %s21, 1
    %s27 = ssub.s32 %s21, 2
    %s28 = sadd.s32 %s21, 1
    %s29 = ssub.s32 %s21, %s28
    %p30 = scmp.eq.s32.totalorder %s29, 0
    %s32 = sadd.s32 %s31, 1
    %s33 = scalar_select %p30, %s31, %s32
    %p36 = pneg %p30
    %p37 = scmp.eq.s32.totalorder %s21, 1
    %p38 = por %p36, %p37
    %p39 = scmp.ne.s32.totalorder %s31, %s34
    %p40 = scmp.eq.s32.totalorder %s21, 0
    %p41 = por %p39, %p40
    %p42 = scmp.ne.s32.totalorder %s31, %s34
    %p43 = scmp.eq.s32.totalorder %s26, 1
    %p44 = por %p42, %p43
    %p45 = scmp.ne.s32.totalorder %s34, %s35
    %p46 = scmp.eq.s32.totalorder %s26, 0
    %p47 = por %p45, %p46
    %p48 = scmp.ne.s32.totalorder %s34, %s35
    %p49 = scmp.eq.s32.totalorder %s27, 1
    %p50 = por %p48, %p49
    %p52 = scmp.ne.s32.totalorder %s35, %s51
    %p53 = scmp.eq.s32.totalorder %s27, 0
    %p54 = por %p52, %p53
    %s56 = sadd.s32 %s55, 1
    %p59 = scmp.eq.s32.totalorder %s21, 1
    %p60 = scmp.ne.s32.totalorder %s55, %s57
    %p61 = scmp.eq.s32.totalorder %s21, 0
    %p62 = por %p60, %p61
    %p63 = scmp.ne.s32.totalorder %s55, %s57
    %p64 = scmp.eq.s32.totalorder %s26, 1
    %p65 = por %p63, %p64
    %p66 = scmp.ne.s32.totalorder %s57, %s58
    %p67 = scmp.eq.s32.totalorder %s26, 0
    %p68 = por %p66, %p67
    %p69 = scmp.ne.s32.totalorder %s57, %s58
    %p70 = scmp.eq.s32.totalorder %s27, 1
    %p71 = por %p69, %p70
    %p73 = scmp.ne.s32.totalorder %s58, %s72
    %p74 = scmp.eq.s32.totalorder %s27, 0
    %p75 = por %p73, %p74
    %s77 = sadd.s32 %s76, 1
    %p80 = scmp.eq.s32.totalorder %s21, 1
    %p81 = scmp.ne.s32.totalorder %s76, %s78
    %p82 = scmp.eq.s32.totalorder %s21, 0
    %p83 = por %p81, %p82
    %p84 = scmp.ne.s32.totalorder %s76, %s78
    %p85 = scmp.eq.s32.totalorder %s26, 1
    %p86 = por %p84, %p85
    %p87 = scmp.ne.s32.totalorder %s78, %s79
    %p88 = scmp.eq.s32.totalorder %s26, 0
    %p89 = por %p87, %p88
    %p90 = scmp.ne.s32.totalorder %s78, %s79
    %p91 = scmp.eq.s32.totalorder %s27, 1
    %p92 = por %p90, %p91
    %p94 = scmp.ne.s32.totalorder %s79, %s93
    %p95 = scmp.eq.s32.totalorder %s27, 0
    %p96 = por %p94, %p95
    %s98 = sadd.s32 %s97, 1
    %p101 = scmp.eq.s32.totalorder %s21, 1
    %p102 = scmp.ne.s32.totalorder %s97, %s99
    %p103 = scmp.eq.s32.totalorder %s21, 0
    %p104 = por %p102, %p103
    %p105 = scmp.ne.s32.totalorder %s97, %s99
    %p106 = scmp.eq.s32.totalorder %s26, 1
    %p107 = por %p105, %p106
    %p108 = scmp.ne.s32.totalorder %s99, %s100
    %p109 = scmp.eq.s32.totalorder %s26, 0
    %p110 = por %p108, %p109
    %p111 = scmp.ne.s32.totalorder %s99, %s100
    %p112 = scmp.eq.s32.totalorder %s27, 1
    %p113 = por %p111, %p112
    %p115 = scmp.ne.s32.totalorder %s100, %s114
    %p116 = scmp.eq.s32.totalorder %s27, 0
    %p117 = por %p115, %p116
    %s119 = sadd.s32 %s118, 1
    %p122 = scmp.eq.s32.totalorder %s21, 1
    %p123 = scmp.ne.s32.totalorder %s118, %s120
    %p124 = scmp.eq.s32.totalorder %s21, 0
    %p125 = por %p123, %p124
    %p126 = scmp.ne.s32.totalorder %s118, %s120
    %p127 = scmp.eq.s32.totalorder %s26, 1
    %p128 = por %p126, %p127
    %p129 = scmp.ne.s32.totalorder %s120, %s121
    %p130 = scmp.eq.s32.totalorder %s26, 0
    %p131 = por %p129, %p130
    %p132 = scmp.ne.s32.totalorder %s120, %s121
    %p133 = scmp.eq.s32.totalorder %s27, 1
    %p134 = por %p132, %p133
    %p136 = scmp.ne.s32.totalorder %s121, %s135
    %p137 = scmp.eq.s32.totalorder %s27, 0
    %p138 = por %p136, %p137
    %s140 = sadd.s32 %s139, 1
    %p143 = scmp.eq.s32.totalorder %s21, 1
    %p144 = scmp.ne.s32.totalorder %s139, %s141
    %p145 = scmp.eq.s32.totalorder %s21, 0
    %p146 = por %p144, %p145
    %p147 = scmp.ne.s32.totalorder %s139, %s141
    %p148 = scmp.eq.s32.totalorder %s26, 1
    %p149 = por %p147, %p148
    %p150 = scmp.ne.s32.totalorder %s141, %s142
    %p151 = scmp.eq.s32.totalorder %s26, 0
    %p152 = por %p150, %p151
    %p153 = scmp.ne.s32.totalorder %s141, %s142
    %p154 = scmp.eq.s32.totalorder %s27, 1
    %p155 = por %p153, %p154
    %p157 = scmp.ne.s32.totalorder %s142, %s156
    %p158 = scmp.eq.s32.totalorder %s27, 0
    %p159 = por %p157, %p158
    %s161 = sadd.s32 %s160, 1
    %p164 = scmp.eq.s32.totalorder %s21, 1
    %p165 = scmp.ne.s32.totalorder %s160, %s162
    %p166 = scmp.eq.s32.totalorder %s21, 0
    %p167 = por %p165, %p166
    %p168 = scmp.ne.s32.totalorder %s160, %s162
    %p169 = scmp.eq.s32.totalorder %s26, 1
    %p170 = por %p168, %p169
    %p171 = scmp.ne.s32.totalorder %s162, %s163
    %p172 = scmp.eq.s32.totalorder %s26, 0
    %p173 = por %p171, %p172
    %p174 = scmp.ne.s32.totalorder %s162, %s163
    %p175 = scmp.eq.s32.totalorder %s27, 1
    %p176 = por %p174, %p175
    %p178 = scmp.ne.s32.totalorder %s163, %s177
    %p179 = scmp.eq.s32.totalorder %s27, 0
    %p180 = por %p178, %p179
    %s182 = sadd.s32 %s181, 1
    %p185 = scmp.eq.s32.totalorder %s21, 1
    %p186 = scmp.ne.s32.totalorder %s181, %s183
    %p187 = scmp.eq.s32.totalorder %s21, 0
    %p188 = por %p186, %p187
    %p189 = scmp.ne.s32.totalorder %s181, %s183
    %p190 = scmp.eq.s32.totalorder %s26, 1
    %p191 = por %p189, %p190
    %p192 = scmp.ne.s32.totalorder %s183, %s184
    %p193 = scmp.eq.s32.totalorder %s26, 0
    %p194 = por %p192, %p193
    %p195 = scmp.ne.s32.totalorder %s183, %s184
    %p196 = scmp.eq.s32.totalorder %s27, 1
    %p197 = por %p195, %p196
    %p199 = scmp.ne.s32.totalorder %s184, %s198
    %p200 = scmp.eq.s32.totalorder %s27, 0
    %p201 = por %p199, %p200
    %s203 = sadd.s32 %s202, 1
    %p206 = scmp.eq.s32.totalorder %s21, 1
    %p207 = scmp.ne.s32.totalorder %s202, %s204
    %p208 = scmp.eq.s32.totalorder %s21, 0
    %p209 = por %p207, %p208
    %p210 = scmp.ne.s32.totalorder %s202, %s204
    %p211 = scmp.eq.s32.totalorder %s26, 1
    %p212 = por %p210, %p211
    %p213 = scmp.ne.s32.totalorder %s204, %s205
    %p214 = scmp.eq.s32.totalorder %s26, 0
    %p215 = por %p213, %p214
    %p216 = scmp.ne.s32.totalorder %s204, %s205
    %p217 = scmp.eq.s32.totalorder %s27, 1
    %p218 = por %p216, %p217
    %p220 = scmp.ne.s32.totalorder %s205, %s219
    %p221 = scmp.eq.s32.totalorder %s27, 0
    %p222 = por %p220, %p221
    %s224 = sadd.s32 %s223, 1
    %p227 = scmp.eq.s32.totalorder %s21, 1
    %p228 = scmp.ne.s32.totalorder %s223, %s225
    %p229 = scmp.eq.s32.totalorder %s21, 0
    %p230 = por %p228, %p229
    %p231 = scmp.ne.s32.totalorder %s223, %s225
    %p232 = scmp.eq.s32.totalorder %s26, 1
    %p233 = por %p231, %p232
    %p234 = scmp.ne.s32.totalorder %s225, %s226
    %p235 = scmp.eq.s32.totalorder %s26, 0
    %p236 = por %p234, %p235
    %p237 = scmp.ne.s32.totalorder %s225, %s226
    %p238 = scmp.eq.s32.totalorder %s27, 1
    %p239 = por %p237, %p238
    %p241 = scmp.ne.s32.totalorder %s226, %s240
    %p242 = scmp.eq.s32.totalorder %s27, 0
    %p243 = por %p241, %p242
    %s245 = sadd.s32 %s244, 1
    %p248 = scmp.eq.s32.totalorder %s21, 1
    %p249 = scmp.ne.s32.totalorder %s244, %s246
    %p250 = scmp.eq.s32.totalorder %s21, 0
    %p251 = por %p249, %p250
    %p252 = scmp.ne.s32.totalorder %s244, %s246
    %p253 = scmp.eq.s32.totalorder %s26, 1
    %p254 = por %p252, %p253
    %p255 = scmp.ne.s32.totalorder %s246, %s247
    %p256 = scmp.eq.s32.totalorder %s26, 0
    %p257 = por %p255, %p256
    %p258 = scmp.ne.s32.totalorder %s246, %s247
    %p259 = scmp.eq.s32.totalorder %s27, 1
    %p260 = por %p258, %p259
    %p262 = scmp.ne.s32.totalorder %s247, %s261
    %p263 = scmp.eq.s32.totalorder %s27, 0
    %p264 = por %p262, %p263
    %s266 = sadd.s32 %s265, 1
    %p269 = scmp.eq.s32.totalorder %s21, 1
    %p270 = scmp.ne.s32.totalorder %s265, %s267
    %p271 = scmp.eq.s32.totalorder %s21, 0
    %p272 = por %p270, %p271
    %p273 = scmp.ne.s32.totalorder %s265, %s267
    %p274 = scmp.eq.s32.totalorder %s26, 1
    %p275 = por %p273, %p274
    %p276 = scmp.ne.s32.totalorder %s267, %s268
    %p277 = scmp.eq.s32.totalorder %s26, 0
    %p278 = por %p276, %p277
    %p279 = scmp.ne.s32.totalorder %s267, %s268
    %p280 = scmp.eq.s32.totalorder %s27, 1
    %p281 = por %p279, %p280
    %p283 = scmp.ne.s32.totalorder %s268, %s282
    %p284 = scmp.eq.s32.totalorder %s27, 0
    %p285 = por %p283, %p284
    %s287 = sadd.s32 %s286, 1
    %p290 = scmp.eq.s32.totalorder %s21, 1
    %p291 = scmp.ne.s32.totalorder %s286, %s288
    %p292 = scmp.eq.s32.totalorder %s21, 0
    %p293 = por %p291, %p292
    %p294 = scmp.ne.s32.totalorder %s286, %s288
    %p295 = scmp.eq.s32.totalorder %s26, 1
    %p296 = por %p294, %p295
    %p297 = scmp.ne.s32.totalorder %s288, %s289
    %p298 = scmp.eq.s32.totalorder %s26, 0
    %p299 = por %p297, %p298
    %p300 = scmp.ne.s32.totalorder %s288, %s289
    %p301 = scmp.eq.s32.totalorder %s27, 1
    %p302 = por %p300, %p301
    %p304 = scmp.ne.s32.totalorder %s289, %s303
    %p305 = scmp.eq.s32.totalorder %s27, 0
    %p306 = por %p304, %p305
    %s308 = sadd.s32 %s307, 1
    %p311 = scmp.eq.s32.totalorder %s21, 1
    %p312 = scmp.ne.s32.totalorder %s307, %s309
    %p313 = scmp.eq.s32.totalorder %s21, 0
    %p314 = por %p312, %p313
    %p315 = scmp.ne.s32.totalorder %s307, %s309
    %p316 = scmp.eq.s32.totalorder %s26, 1
    %p317 = por %p315, %p316
    %p318 = scmp.ne.s32.totalorder %s309, %s310
    %p319 = scmp.eq.s32.totalorder %s26, 0
    %p320 = por %p318, %p319
    %p321 = scmp.ne.s32.totalorder %s309, %s310
    %p322 = scmp.eq.s32.totalorder %s27, 1
    %p323 = por %p321, %p322
    %p325 = scmp.ne.s32.totalorder %s310, %s324
    %p326 = scmp.eq.s32.totalorder %s27, 0
    %p327 = por %p325, %p326
    %s329 = sadd.s32 %s328, 1
    %p332 = scmp.eq.s32.totalorder %s21, 1
    %p333 = scmp.ne.s32.totalorder %s328, %s330
    %p334 = scmp.eq.s32.totalorder %s21, 0
    %p335 = por %p333, %p334
    %p336 = scmp.ne.s32.totalorder %s328, %s330
    %p337 = scmp.eq.s32.totalorder %s26, 1
    %p338 = por %p336, %p337
    %p339 = scmp.ne.s32.totalorder %s330, %s331
    %p340 = scmp.eq.s32.totalorder %s26, 0
    %p341 = por %p339, %p340
    %p342 = scmp.ne.s32.totalorder %s330, %s331
    %p343 = scmp.eq.s32.totalorder %s27, 1
    %p344 = por %p342, %p343
    %p346 = scmp.ne.s32.totalorder %s331, %s345
    %p347 = scmp.eq.s32.totalorder %s27, 0
    %p348 = por %p346, %p347
    %s349 = ssub.s32 %s21, %s28
    %p350 = scmp.eq.s32.totalorder %s349, 0
    %s352 = sadd.s32 %s351, 1
    %s353 = scalar_select %p350, %s351, %s352
    %p356 = pneg %p350
    %p357 = scmp.eq.s32.totalorder %s21, 1
    %p358 = por %p356, %p357
    %p359 = scmp.ne.s32.totalorder %s351, %s354
    %p360 = scmp.eq.s32.totalorder %s21, 0
    %p361 = por %p359, %p360
    %p362 = scmp.ne.s32.totalorder %s351, %s354
    %p363 = scmp.eq.s32.totalorder %s26, 1
    %p364 = por %p362, %p363
    %p365 = scmp.ne.s32.totalorder %s354, %s355
    %p366 = scmp.eq.s32.totalorder %s26, 0
    %p367 = por %p365, %p366
    %p368 = scmp.ne.s32.totalorder %s354, %s355
    %p369 = scmp.eq.s32.totalorder %s27, 1
    %p370 = por %p368, %p369
    %p372 = scmp.ne.s32.totalorder %s355, %s371
    %p373 = scmp.eq.s32.totalorder %s27, 0
    %p374 = por %p372, %p373
    %p375 = scmp.le.s32.totalorder 1, %s21
    %p376 = scmp.lt.s32.totalorder %s21, 3
    %p377 = pnand %p375, %p376
    %p378 = pneg %p377
    // Predicated region
    $region9: #{mask_decoder_forward.1} parent=5 // pred_check
      _
    $region10: #{mask_decoder_forward.1} parent=5 // pred_check_branch
      %380 = sbr.rel (%p377) target = $region12
    $region11: #{mask_decoder_forward.1} parent=5 // pred_region
      %s381 = ssub.s32 %s21, 1
      // Predicated region
      $region13: #{mask_decoder_forward.1} parent=11 // pred_check
        %p382 = pneg %p68
      $region14: #{mask_decoder_forward.1} parent=11 // pred_check_branch
        %384 = sbr.rel (%p382) target = $region16
      $region15: #{mask_decoder_forward.1} parent=11 // pred_region
        _
      $region16: #{mask_decoder_forward.1} parent=11 // pred_fallthru
        _
      // Predicated region
      $region17: #{mask_decoder_forward.1} parent=11 // pred_check
        %p385 = pneg %p89
      $region18: #{mask_decoder_forward.1} parent=11 // pred_check_branch
        %387 = sbr.rel (%p385) target = $region20
      $region19: #{mask_decoder_forward.1} parent=11 // pred_region
        _
      $region20: #{mask_decoder_forward.1} parent=11 // pred_fallthru
        _
      // Predicated region
      $region21: #{mask_decoder_forward.1} parent=11 // pred_check
        %p388 = pneg %p110
      $region22: #{mask_decoder_forward.1} parent=11 // pred_check_branch
        %390 = sbr.rel (%p388) target = $region24
      $region23: #{mask_decoder_forward.1} parent=11 // pred_region
        _
      $region24: #{mask_decoder_forward.1} parent=11 // pred_fallthru
        _
      // Predicated region
      $region25: #{mask_decoder_forward.1} parent=11 // pred_check
        %p391 = pneg %p131
      $region26: #{mask_decoder_forward.1} parent=11 // pred_check_branch
        %393 = sbr.rel (%p391) target = $region28
      $region27: #{mask_decoder_forward.1} parent=11 // pred_region
        _
      $region28: #{mask_decoder_forward.1} parent=11 // pred_fallthru
        _
      // Predicated region
      $region29: #{mask_decoder_forward.1} parent=11 // pred_check
        %p394 = pneg %p152
      $region30: #{mask_decoder_forward.1} parent=11 // pred_check_branch
        %396 = sbr.rel (%p394) target = $region32
      $region31: #{mask_decoder_forward.1} parent=11 // pred_region
        _
      $region32: #{mask_decoder_forward.1} parent=11 // pred_fallthru
        _
      // Predicated region
      $region33: #{mask_decoder_forward.1} parent=11 // pred_check
        %p397 = pneg %p173
      $region34: #{mask_decoder_forward.1} parent=11 // pred_check_branch
        %399 = sbr.rel (%p397) target = $region36
      $region35: #{mask_decoder_forward.1} parent=11 // pred_region
        _
      $region36: #{mask_decoder_forward.1} parent=11 // pred_fallthru
        _
      // Predicated region
      $region37: #{mask_decoder_forward.1} parent=11 // pred_check
        %p400 = pneg %p194
      $region38: #{mask_decoder_forward.1} parent=11 // pred_check_branch
        %402 = sbr.rel (%p400) target = $region40
      $region39: #{mask_decoder_forward.1} parent=11 // pred_region
        _
      $region40: #{mask_decoder_forward.1} parent=11 // pred_fallthru
        _
      // Predicated region
      $region41: #{mask_decoder_forward.1} parent=11 // pred_check
        %p403 = pneg %p215
      $region42: #{mask_decoder_forward.1} parent=11 // pred_check_branch
        %405 = sbr.rel (%p403) target = $region44
      $region43: #{mask_decoder_forward.1} parent=11 // pred_region
        _
      $region44: #{mask_decoder_forward.1} parent=11 // pred_fallthru
        _
      // Predicated region
      $region45: #{mask_decoder_forward.1} parent=11 // pred_check
        %p406 = pneg %p236
      $region46: #{mask_decoder_forward.1} parent=11 // pred_check_branch
        %408 = sbr.rel (%p406) target = $region48
      $region47: #{mask_decoder_forward.1} parent=11 // pred_region
        _
      $region48: #{mask_decoder_forward.1} parent=11 // pred_fallthru
        _
      // Predicated region
      $region49: #{mask_decoder_forward.1} parent=11 // pred_check
        %p409 = pneg %p257
      $region50: #{mask_decoder_forward.1} parent=11 // pred_check_branch
        %411 = sbr.rel (%p409) target = $region52
      $region51: #{mask_decoder_forward.1} parent=11 // pred_region
        _
      $region52: #{mask_decoder_forward.1} parent=11 // pred_fallthru
        _
      // Predicated region
      $region53: #{mask_decoder_forward.1} parent=11 // pred_check
        %p412 = pneg %p278
      $region54: #{mask_decoder_forward.1} parent=11 // pred_check_branch
        %414 = sbr.rel (%p412) target = $region56
      $region55: #{mask_decoder_forward.1} parent=11 // pred_region
        _
      $region56: #{mask_decoder_forward.1} parent=11 // pred_fallthru
        _
      // Predicated region
      $region57: #{mask_decoder_forward.1} parent=11 // pred_check
        %p415 = pneg %p299
      $region58: #{mask_decoder_forward.1} parent=11 // pred_check_branch
        %417 = sbr.rel (%p415) target = $region60
      $region59: #{mask_decoder_forward.1} parent=11 // pred_region
        _
      $region60: #{mask_decoder_forward.1} parent=11 // pred_fallthru
        _
      // Predicated region
      $region61: #{mask_decoder_forward.1} parent=11 // pred_check
        %p418 = pneg %p320
      $region62: #{mask_decoder_forward.1} parent=11 // pred_check_branch
        %420 = sbr.rel (%p418) target = $region64
      $region63: #{mask_decoder_forward.1} parent=11 // pred_region
        _
      $region64: #{mask_decoder_forward.1} parent=11 // pred_fallthru
        _
      // Predicated region
      $region65: #{mask_decoder_forward.1} parent=11 // pred_check
        %p421 = pneg %p341
      $region66: #{mask_decoder_forward.1} parent=11 // pred_check_branch
        %423 = sbr.rel (%p421) target = $region68
      $region67: #{mask_decoder_forward.1} parent=11 // pred_region
        _
      $region68: #{mask_decoder_forward.1} parent=11 // pred_fallthru
        _
    $region12: #{mask_decoder_forward.1} parent=5 // pred_fallthru
      _
    %p424 = scmp.lt.s32.totalorder %s21, 2
    // Predicated region
    $region69: #{mask_decoder_forward.1} parent=5 // pred_check
      %p425 = pneg %p424
    $region70: #{mask_decoder_forward.1} parent=5 // pred_check_branch
      %427 = sbr.rel (%p425) target = $region72
    $region71: #{mask_decoder_forward.1} parent=5 // pred_region
      // Predicated region
      $region73: #{mask_decoder_forward.1} parent=71 // pred_check
        %p428 = pneg %p41
      $region74: #{mask_decoder_forward.1} parent=71 // pred_check_branch
        %430 = sbr.rel (%p428) target = $region76
      $region75: #{mask_decoder_forward.1} parent=71 // pred_region
        %p431 = scmp.lt.s32.totalorder %s21, 1
        %s432 = scalar_select %p431, %s21, 1
        %s433 = smul.addr %s432, 4
        %s434 = smul.addr %s433, 8
        %s435 = scalar_lea.vmem %s0, %s434
      $region76: #{mask_decoder_forward.1} parent=71 // pred_fallthru
        _
    $region72: #{mask_decoder_forward.1} parent=5 // pred_fallthru
      _
    %p436 = scmp.le.s32.totalorder 1, %s21
    %p437 = scmp.lt.s32.totalorder %s21, 3
    %p438 = pnand %p436, %p437
    %p439 = pneg %p438
    // Predicated region
    $region77: #{mask_decoder_forward.1} parent=5 // pred_check
      _
    $region78: #{mask_decoder_forward.1} parent=5 // pred_check_branch
      %441 = sbr.rel (%p438) target = $region80
    $region79: #{mask_decoder_forward.1} parent=5 // pred_region
      %s442 = ssub.s32 %s21, 1
      %p443 = scmp.lt.s32.totalorder %s26, 1
      %s444 = scalar_select %p443, %s26, 1
      %s445 = smul.addr %s444, 4
      %s446 = smul.addr %s445, 8
      %s447 = scalar_lea.vmem %s0, %s446
      %p448 = pneg %p47
      %p449 = pneg %p44
      %p450 = pneg %p68
      %p451 = pneg %p65
      %p452 = pneg %p89
      %p453 = pneg %p86
      %p454 = pneg %p110
      %p455 = pneg %p107
      %p456 = pneg %p131
      %p457 = pneg %p128
      %p458 = pneg %p152
      %p459 = pneg %p149
      %p460 = pneg %p173
      %p461 = pneg %p170
      %p462 = pneg %p194
      %p463 = pneg %p191
      %p464 = pneg %p215
      %p465 = pneg %p212
      %p466 = pneg %p236
      %p467 = pneg %p233
      %p468 = pneg %p257
      %p469 = pneg %p254
      %p470 = pneg %p278
      %p471 = pneg %p275
      %p472 = pneg %p299
      %p473 = pneg %p296
      %p474 = pneg %p320
      %p475 = pneg %p317
      %p476 = pneg %p341
      %p477 = pneg %p338
      %p478 = pneg %p367
      %p479 = pneg %p364
      %p480 = scmp.lt.s32.totalorder %s26, 1
      %s481 = scalar_select %p480, %s26, 1
      %s482 = smul.addr %s481, 8
      %s483 = smul.addr %s482, 4
      %s484 = scalar_lea.vmem %s15, %s483
      %p485 = scmp.lt.s32.totalorder %s26, 1
      %s486 = scalar_select %p485, %s26, 1
      %s487 = smul.addr %s486, 4
      %s488 = smul.addr %s487, 8
      %s489 = scalar_lea.vmem %s0, %s488
      %p490 = scmp.lt.s32.totalorder %s26, 1
      %s491 = scalar_select %p490, %s26, 1
      %s492 = smul.addr %s491, 8
      %s493 = smul.addr %s492, 4
      %s494 = scalar_lea.vmem %s15, %s493
      %v495 = vld [vmem:[%s489] sm:$0xff]
      %v496 = vld [vmem:[%s489 + $0x8] sm:$0xff]
      %v497 = vld [vmem:[%s489 + $0x10] sm:$0xff]
      %v498 = vld [vmem:[%s489 + $0x18] sm:$0xff]
      %v499 = vld [vmem:[%s1] sm:$0xff]
      %v500 = vld [vmem:[%s1 + $0x8] sm:$0xff]
      %v501 = vld [vmem:[%s1 + $0x10] sm:$0xff]
      %v502 = vld [vmem:[%s1 + $0x18] sm:$0xff]
      %v503 = vld [vmem:[%s1 + $0x20] sm:$0xff]
      %v504 = vld [vmem:[%s1 + $0x28] sm:$0xff]
      %v505 = vld [vmem:[%s1 + $0x30] sm:$0xff]
      %v506 = vld [vmem:[%s1 + $0x38] sm:$0xff]
      %v507 = vld [vmem:[%s1 + $0x40] sm:$0xff]
      %v508 = vld [vmem:[%s1 + $0x48] sm:$0xff]
      %v509 = vld [vmem:[%s1 + $0x50] sm:$0xff]
      %v510 = vld [vmem:[%s1 + $0x58] sm:$0xff]
      %v511 = vld [vmem:[%s1 + $0x60] sm:$0xff]
      %v512 = vld [vmem:[%s1 + $0x68] sm:$0xff]
      %v513 = vld [vmem:[%s1 + $0x70] sm:$0xff]
      %v514 = vld [vmem:[%s1 + $0x78] sm:$0xff]
      %v515 = vld [vmem:[%s1 + $0x80] sm:$0xff]
      %v516 = vld [vmem:[%s1 + $0x88] sm:$0xff]
      %v517 = vld [vmem:[%s1 + $0x90] sm:$0xff]
      %v518 = vld [vmem:[%s1 + $0x98] sm:$0xff]
      %v519 = vld [vmem:[%s1 + $0xa0] sm:$0xff]
      %v520 = vld [vmem:[%s1 + $0xa8] sm:$0xff]
      %v521 = vld [vmem:[%s1 + $0xb0] sm:$0xff]
      %v522 = vld [vmem:[%s1 + $0xb8] sm:$0xff]
      %v523 = vld [vmem:[%s1 + $0xc0] sm:$0xff]
      %v524 = vld [vmem:[%s1 + $0xc8] sm:$0xff]
      %v525 = vld [vmem:[%s1 + $0xd0] sm:$0xff]
      %v526 = vld [vmem:[%s1 + $0xd8] sm:$0xff]
      %v527 = vld [vmem:[%s1 + $0xe0] sm:$0xff]
      %v528 = vld [vmem:[%s1 + $0xe8] sm:$0xff]
      %v529 = vld [vmem:[%s1 + $0xf0] sm:$0xff]
      %v530 = vld [vmem:[%s1 + $0xf8] sm:$0xff]
      %v531 = vld [vmem:[%s1 + $0x100] sm:$0xff]
      %v532 = vld [vmem:[%s1 + $0x108] sm:$0xff]
      %v533 = vld [vmem:[%s1 + $0x110] sm:$0xff]
      %v534 = vld [vmem:[%s1 + $0x118] sm:$0xff]
      %v535 = vld [vmem:[%s2] sm:$0xff]
      %v536 = vld [vmem:[%s2 + $0x8] sm:$0xff]
      %v537 = vld [vmem:[%s2 + $0x10] sm:$0xff]
      %v538 = vld [vmem:[%s2 + $0x18] sm:$0xff]
      %v539 = vld [vmem:[%s3] sm:$0x1]
      %v540 = vld [vmem:[%s4] sm:$0x1]
      %545 = vrot.lane.b32.xlu0 %v495, 9
      %v546 = vpop.permute.xlu0 %545
      %547 = vrot.lane.b32.xlu0 %v496, 9
      %v548 = vpop.permute.xlu0 %547
      %549 = vrot.lane.b32.xlu0 %v497, 9
      %v550 = vpop.permute.xlu0 %549
      %551 = vrot.lane.b32.xlu0 %v498, 9
      %v552 = vpop.permute.xlu0 %551
      %vm557 = vcmask 72704
      %v558 = vsel %vm557, 0.0, %v546
      %v559 = vsel %vm557, 0.0, %v548
      %v560 = vsel %vm557, 0.0, %v550
      %v561 = vsel %vm557, 0.0, %v552
      %vm562 = vcmask 596992
      %v563 = vsel %vm562, %v558, 0.0
      %v564 = vsel %vm562, %v559, 0.0
      %v565 = vsel %vm562, %v560, 0.0
      %v566 = vsel %vm562, %v561, 0.0
      %571 = vrot.lane.b32.xlu0 %v563, 120
      %v572 = vpop.permute.xlu0 %571
      %573 = vrot.lane.b32.xlu0 %v564, 120
      %v574 = vpop.permute.xlu0 %573
      %575 = vrot.lane.b32.xlu0 %v565, 120
      %v576 = vpop.permute.xlu0 %575
      %577 = vrot.lane.b32.xlu0 %v566, 120
      %v578 = vpop.permute.xlu0 %577
      %vm583 = vcmask 261120
      %v585 = vsel %vm583, %v511, 0
      %v588 = vsel %vm583, %v512, 0
      %v591 = vsel %vm583, %v513, 0
      %v594 = vsel %vm583, %v514, 0
      %596 = vmatpush.msra.mxu0 0.0
      %597 = vmatpush.msra.mxu0 0.0
      %598 = vmatpush.msra.mxu0 0.0
      %599 = vmatpush.msra.mxu0 0.0
      %600 = vmatpush.msra.mxu0 0.0
      %601 = vmatpush.msra.mxu0 0.0
      %602 = vmatpush.msra.mxu0 0.0
      %603 = vmatpush.msra.mxu0 0.0
      %604 = vmatpush.msra.mxu0 0.0
      %605 = vmatpush.msra.mxu0 0.0
      %606 = vmatpush.msra.mxu0 0.0
      %607 = vmatpush.msra.mxu0 0.0
      %608 = vmatpush.msra.mxu0 %v578
      %609 = vmatpush.msra.mxu0 %v576
      %610 = vmatpush.msra.mxu0 %v574
      %611 = vmatpush.msra.mxu0 %v572
      %612 = vmatmul.f32.gmra.mxu0 %v585
      %v613 = vpop.f32.mrf.mxu0
      %v614 = vadd.f32 0.0, %v613
      %615 = vmatmul.f32.gmra.mxu0 %v588
      %v616 = vpop.f32.mrf.mxu0
      %v617 = vadd.f32 0.0, %v616
      %618 = vmatmul.f32.gmra.mxu0 %v591
      %v619 = vpop.f32.mrf.mxu0
      %v620 = vadd.f32 0.0, %v619
      %621 = vmatmul.f32.gmra.mxu0 %v594
      %v622 = vpop.f32.mrf.mxu0
      %v623 = vadd.f32 0.0, %v622
      %624 = vdwg.mxu0
      %v626 = vsel %vm583, %v499, 0
      %v629 = vsel %vm583, %v500, 0
      %v632 = vsel %vm583, %v501, 0
      %v635 = vsel %vm583, %v502, 0
      %637 = vmatpush.msra.mxu0 0.0
      %638 = vmatpush.msra.mxu0 0.0
      %639 = vmatpush.msra.mxu0 0.0
      %640 = vmatpush.msra.mxu0 0.0
      %641 = vmatpush.msra.mxu0 0.0
      %642 = vmatpush.msra.mxu0 0.0
      %643 = vmatpush.msra.mxu0 0.0
      %644 = vmatpush.msra.mxu0 0.0
      %645 = vmatpush.msra.mxu0 0.0
      %646 = vmatpush.msra.mxu0 0.0
      %647 = vmatpush.msra.mxu0 0.0
      %648 = vmatpush.msra.mxu0 0.0
      %649 = vmatpush.msra.mxu0 %v566
      %650 = vmatpush.msra.mxu0 %v565
      %651 = vmatpush.msra.mxu0 %v564
      %652 = vmatpush.msra.mxu0 %v563
      %653 = vmatmul.f32.gmra.mxu0 %v626
      %v654 = vpop.f32.mrf.mxu0
      %v655 = vadd.f32 %v614, %v654
      %656 = vmatmul.f32.gmra.mxu0 %v629
      %v657 = vpop.f32.mrf.mxu0
      %v658 = vadd.f32 %v617, %v657
      %659 = vmatmul.f32.gmra.mxu0 %v632
      %v660 = vpop.f32.mrf.mxu0
      %v661 = vadd.f32 %v620, %v660
      %662 = vmatmul.f32.gmra.mxu0 %v635
      %v663 = vpop.f32.mrf.mxu0
      %v664 = vadd.f32 %v623, %v663
      %665 = vdwg.mxu0
      %666 = vrot.lane.b32.xlu0 %v563, 112
      %v667 = vpop.permute.xlu0 %666
      %668 = vrot.lane.b32.xlu0 %v564, 112
      %v669 = vpop.permute.xlu0 %668
      %670 = vrot.lane.b32.xlu0 %v565, 112
      %v671 = vpop.permute.xlu0 %670
      %672 = vrot.lane.b32.xlu0 %v566, 112
      %v673 = vpop.permute.xlu0 %672
      %v679 = vsel %vm583, %v523, 0
      %v682 = vsel %vm583, %v524, 0
      %v685 = vsel %vm583, %v525, 0
      %v688 = vsel %vm583, %v526, 0
      %690 = vmatpush.msra.mxu0 0.0
      %691 = vmatpush.msra.mxu0 0.0
      %692 = vmatpush.msra.mxu0 0.0
      %693 = vmatpush.msra.mxu0 0.0
      %694 = vmatpush.msra.mxu0 0.0
      %695 = vmatpush.msra.mxu0 0.0
      %696 = vmatpush.msra.mxu0 0.0
      %697 = vmatpush.msra.mxu0 0.0
      %698 = vmatpush.msra.mxu0 0.0
      %699 = vmatpush.msra.mxu0 0.0
      %700 = vmatpush.msra.mxu0 0.0
      %701 = vmatpush.msra.mxu0 0.0
      %702 = vmatpush.msra.mxu0 %v673
      %703 = vmatpush.msra.mxu0 %v671
      %704 = vmatpush.msra.mxu0 %v669
      %705 = vmatpush.msra.mxu0 %v667
      %706 = vmatmul.f32.gmra.mxu0 %v679
      %v707 = vpop.f32.mrf.mxu0
      %v708 = vadd.f32 0.0, %v707
      %709 = vmatmul.f32.gmra.mxu0 %v682
      %v710 = vpop.f32.mrf.mxu0
      %v711 = vadd.f32 0.0, %v710
      %712 = vmatmul.f32.gmra.mxu0 %v685
      %v713 = vpop.f32.mrf.mxu0
      %v714 = vadd.f32 0.0, %v713
      %715 = vmatmul.f32.gmra.mxu0 %v688
      %v716 = vpop.f32.mrf.mxu0
      %v717 = vadd.f32 0.0, %v716
      %718 = vdwg.mxu0
      %v719 = vadd.f32 %v655, %v708
      %v720 = vadd.f32 %v658, %v711
      %v721 = vadd.f32 %v661, %v714
      %v722 = vadd.f32 %v664, %v717
      %v724 = vperm.slane %v539, 0
      %v726 = vmul.f32 %v719, %v724
      %v727 = vmul.f32 %v720, %v724
      %v728 = vmul.f32 %v721, %v724
      %v729 = vmul.f32 %v722, %v724
      %v730 = vadd.f32 %v726, 0.0
      %v731 = vadd.f32 %v727, 0.0
      %v732 = vadd.f32 %v728, 0.0
      %v733 = vadd.f32 %v729, 0.0
      %734 = vrot.lane.b32.xlu0 %v563, 119
      %v735 = vpop.permute.xlu0 %734
      %736 = vrot.lane.b32.xlu0 %v564, 119
      %v737 = vpop.permute.xlu0 %736
      %738 = vrot.lane.b32.xlu0 %v565, 119
      %v739 = vpop.permute.xlu0 %738
      %740 = vrot.lane.b32.xlu0 %v566, 119
      %v741 = vpop.permute.xlu0 %740
      %v747 = vsel %vm583, %v515, 0
      %v750 = vsel %vm583, %v516, 0
      %v753 = vsel %vm583, %v517, 0
      %v756 = vsel %vm583, %v518, 0
      %758 = vmatpush.msra.mxu0 0.0
      %759 = vmatpush.msra.mxu0 0.0
      %760 = vmatpush.msra.mxu0 0.0
      %761 = vmatpush.msra.mxu0 0.0
      %762 = vmatpush.msra.mxu0 0.0
      %763 = vmatpush.msra.mxu0 0.0
      %764 = vmatpush.msra.mxu0 0.0
      %765 = vmatpush.msra.mxu0 0.0
      %766 = vmatpush.msra.mxu0 0.0
      %767 = vmatpush.msra.mxu0 0.0
      %768 = vmatpush.msra.mxu0 0.0
      %769 = vmatpush.msra.mxu0 0.0
      %770 = vmatpush.msra.mxu0 %v741
      %771 = vmatpush.msra.mxu0 %v739
      %772 = vmatpush.msra.mxu0 %v737
      %773 = vmatpush.msra.mxu0 %v735
      %774 = vmatmul.f32.gmra.mxu0 %v747
      %v775 = vpop.f32.mrf.mxu0
      %v776 = vadd.f32 0.0, %v775
      %777 = vmatmul.f32.gmra.mxu0 %v750
      %v778 = vpop.f32.mrf.mxu0
      %v779 = vadd.f32 0.0, %v778
      %780 = vmatmul.f32.gmra.mxu0 %v753
      %v781 = vpop.f32.mrf.mxu0
      %v782 = vadd.f32 0.0, %v781
      %783 = vmatmul.f32.gmra.mxu0 %v756
      %v784 = vpop.f32.mrf.mxu0
      %v785 = vadd.f32 0.0, %v784
      %786 = vdwg.mxu0
      %787 = vrot.lane.b32.xlu0 %v563, 127
      %v788 = vpop.permute.xlu0 %787
      %789 = vrot.lane.b32.xlu0 %v564, 127
      %v790 = vpop.permute.xlu0 %789
      %791 = vrot.lane.b32.xlu0 %v565, 127
      %v792 = vpop.permute.xlu0 %791
      %793 = vrot.lane.b32.xlu0 %v566, 127
      %v794 = vpop.permute.xlu0 %793
      %v800 = vsel %vm583, %v503, 0
      %v803 = vsel %vm583, %v504, 0
      %v806 = vsel %vm583, %v505, 0
      %v809 = vsel %vm583, %v506, 0
      %811 = vmatpush.msra.mxu0 0.0
      %812 = vmatpush.msra.mxu0 0.0
      %813 = vmatpush.msra.mxu0 0.0
      %814 = vmatpush.msra.mxu0 0.0
      %815 = vmatpush.msra.mxu0 0.0
      %816 = vmatpush.msra.mxu0 0.0
      %817 = vmatpush.msra.mxu0 0.0
      %818 = vmatpush.msra.mxu0 0.0
      %819 = vmatpush.msra.mxu0 0.0
      %820 = vmatpush.msra.mxu0 0.0
      %821 = vmatpush.msra.mxu0 0.0
      %822 = vmatpush.msra.mxu0 0.0
      %823 = vmatpush.msra.mxu0 %v794
      %824 = vmatpush.msra.mxu0 %v792
      %825 = vmatpush.msra.mxu0 %v790
      %826 = vmatpush.msra.mxu0 %v788
      %827 = vmatmul.f32.gmra.mxu0 %v800
      %v828 = vpop.f32.mrf.mxu0
      %v829 = vadd.f32 %v776, %v828
      %830 = vmatmul.f32.gmra.mxu0 %v803
      %v831 = vpop.f32.mrf.mxu0
      %v832 = vadd.f32 %v779, %v831
      %833 = vmatmul.f32.gmra.mxu0 %v806
      %v834 = vpop.f32.mrf.mxu0
      %v835 = vadd.f32 %v782, %v834
      %836 = vmatmul.f32.gmra.mxu0 %v809
      %v837 = vpop.f32.mrf.mxu0
      %v838 = vadd.f32 %v785, %v837
      %839 = vdwg.mxu0
      %840 = vrot.lane.b32.xlu0 %v563, 111
      %v841 = vpop.permute.xlu0 %840
      %842 = vrot.lane.b32.xlu0 %v564, 111
      %v843 = vpop.permute.xlu0 %842
      %844 = vrot.lane.b32.xlu0 %v565, 111
      %v845 = vpop.permute.xlu0 %844
      %846 = vrot.lane.b32.xlu0 %v566, 111
      %v847 = vpop.permute.xlu0 %846
      %v853 = vsel %vm583, %v527, 0
      %v856 = vsel %vm583, %v528, 0
      %v859 = vsel %vm583, %v529, 0
      %v862 = vsel %vm583, %v530, 0
      %864 = vmatpush.msra.mxu0 0.0
      %865 = vmatpush.msra.mxu0 0.0
      %866 = vmatpush.msra.mxu0 0.0
      %867 = vmatpush.msra.mxu0 0.0
      %868 = vmatpush.msra.mxu0 0.0
      %869 = vmatpush.msra.mxu0 0.0
      %870 = vmatpush.msra.mxu0 0.0
      %871 = vmatpush.msra.mxu0 0.0
      %872 = vmatpush.msra.mxu0 0.0
      %873 = vmatpush.msra.mxu0 0.0
      %874 = vmatpush.msra.mxu0 0.0
      %875 = vmatpush.msra.mxu0 0.0
      %876 = vmatpush.msra.mxu0 %v847
      %877 = vmatpush.msra.mxu0 %v845
      %878 = vmatpush.msra.mxu0 %v843
      %879 = vmatpush.msra.mxu0 %v841
      %880 = vmatmul.f32.gmra.mxu0 %v853
      %v881 = vpop.f32.mrf.mxu0
      %v882 = vadd.f32 0.0, %v881
      %883 = vmatmul.f32.gmra.mxu0 %v856
      %v884 = vpop.f32.mrf.mxu0
      %v885 = vadd.f32 0.0, %v884
      %886 = vmatmul.f32.gmra.mxu0 %v859
      %v887 = vpop.f32.mrf.mxu0
      %v888 = vadd.f32 0.0, %v887
      %889 = vmatmul.f32.gmra.mxu0 %v862
      %v890 = vpop.f32.mrf.mxu0
      %v891 = vadd.f32 0.0, %v890
      %892 = vdwg.mxu0
      %v893 = vadd.f32 %v829, %v882
      %v894 = vadd.f32 %v832, %v885
      %v895 = vadd.f32 %v835, %v888
      %v896 = vadd.f32 %v838, %v891
      %v897 = vadd.f32 %v730, %v893
      %v898 = vadd.f32 %v731, %v894
      %v899 = vadd.f32 %v732, %v895
      %v900 = vadd.f32 %v733, %v896
      %901 = vrot.lane.b32.xlu0 %v563, 118
      %v902 = vpop.permute.xlu0 %901
      %903 = vrot.lane.b32.xlu0 %v564, 118
      %v904 = vpop.permute.xlu0 %903
      %905 = vrot.lane.b32.xlu0 %v565, 118
      %v906 = vpop.permute.xlu0 %905
      %907 = vrot.lane.b32.xlu0 %v566, 118
      %v908 = vpop.permute.xlu0 %907
      %v914 = vsel %vm583, %v519, 0
      %v917 = vsel %vm583, %v520, 0
      %v920 = vsel %vm583, %v521, 0
      %v923 = vsel %vm583, %v522, 0
      %925 = vmatpush.msra.mxu0 0.0
      %926 = vmatpush.msra.mxu0 0.0
      %927 = vmatpush.msra.mxu0 0.0
      %928 = vmatpush.msra.mxu0 0.0
      %929 = vmatpush.msra.mxu0 0.0
      %930 = vmatpush.msra.mxu0 0.0
      %931 = vmatpush.msra.mxu0 0.0
      %932 = vmatpush.msra.mxu0 0.0
      %933 = vmatpush.msra.mxu0 0.0
      %934 = vmatpush.msra.mxu0 0.0
      %935 = vmatpush.msra.mxu0 0.0
      %936 = vmatpush.msra.mxu0 0.0
      %937 = vmatpush.msra.mxu0 %v908
      %938 = vmatpush.msra.mxu0 %v906
      %939 = vmatpush.msra.mxu0 %v904
      %940 = vmatpush.msra.mxu0 %v902
      %941 = vmatmul.f32.gmra.mxu0 %v914
      %v942 = vpop.f32.mrf.mxu0
      %v943 = vadd.f32 0.0, %v942
      %944 = vmatmul.f32.gmra.mxu0 %v917
      %v945 = vpop.f32.mrf.mxu0
      %v946 = vadd.f32 0.0, %v945
      %947 = vmatmul.f32.gmra.mxu0 %v920
      %v948 = vpop.f32.mrf.mxu0
      %v949 = vadd.f32 0.0, %v948
      %950 = vmatmul.f32.gmra.mxu0 %v923
      %v951 = vpop.f32.mrf.mxu0
      %v952 = vadd.f32 0.0, %v951
      %953 = vdwg.mxu0
      %954 = vrot.lane.b32.xlu0 %v563, 126
      %v955 = vpop.permute.xlu0 %954
      %956 = vrot.lane.b32.xlu0 %v564, 126
      %v957 = vpop.permute.xlu0 %956
      %958 = vrot.lane.b32.xlu0 %v565, 126
      %v959 = vpop.permute.xlu0 %958
      %960 = vrot.lane.b32.xlu0 %v566, 126
      %v961 = vpop.permute.xlu0 %960
      %v967 = vsel %vm583, %v507, 0
      %v970 = vsel %vm583, %v508, 0
      %v973 = vsel %vm583, %v509, 0
      %v976 = vsel %vm583, %v510, 0
      %978 = vmatpush.msra.mxu0 0.0
      %979 = vmatpush.msra.mxu0 0.0
      %980 = vmatpush.msra.mxu0 0.0
      %981 = vmatpush.msra.mxu0 0.0
      %982 = vmatpush.msra.mxu0 0.0
      %983 = vmatpush.msra.mxu0 0.0
      %984 = vmatpush.msra.mxu0 0.0
      %985 = vmatpush.msra.mxu0 0.0
      %986 = vmatpush.msra.mxu0 0.0
      %987 = vmatpush.msra.mxu0 0.0
      %988 = vmatpush.msra.mxu0 0.0
      %989 = vmatpush.msra.mxu0 0.0
      %990 = vmatpush.msra.mxu0 %v961
      %991 = vmatpush.msra.mxu0 %v959
      %992 = vmatpush.msra.mxu0 %v957
      %993 = vmatpush.msra.mxu0 %v955
      %994 = vmatmul.f32.gmra.mxu0 %v967
      %v995 = vpop.f32.mrf.mxu0
      %v996 = vadd.f32 %v943, %v995
      %997 = vmatmul.f32.gmra.mxu0 %v970
      %v998 = vpop.f32.mrf.mxu0
      %v999 = vadd.f32 %v946, %v998
      %1000 = vmatmul.f32.gmra.mxu0 %v973
      %v1001 = vpop.f32.mrf.mxu0
      %v1002 = vadd.f32 %v949, %v1001
      %1003 = vmatmul.f32.gmra.mxu0 %v976
      %v1004 = vpop.f32.mrf.mxu0
      %v1005 = vadd.f32 %v952, %v1004
      %1006 = vdwg.mxu0
      %1007 = vrot.lane.b32.xlu0 %v563, 110
      %v1008 = vpop.permute.xlu0 %1007
      %1009 = vrot.lane.b32.xlu0 %v564, 110
      %v1010 = vpop.permute.xlu0 %1009
      %1011 = vrot.lane.b32.xlu0 %v565, 110
      %v1012 = vpop.permute.xlu0 %1011
      %1013 = vrot.lane.b32.xlu0 %v566, 110
      %v1014 = vpop.permute.xlu0 %1013
      %v1020 = vsel %vm583, %v531, 0
      %v1023 = vsel %vm583, %v532, 0
      %v1026 = vsel %vm583, %v533, 0
      %v1029 = vsel %vm583, %v534, 0
      %1031 = vmatpush.msra.mxu0 0.0
      %1032 = vmatpush.msra.mxu0 0.0
      %1033 = vmatpush.msra.mxu0 0.0
      %1034 = vmatpush.msra.mxu0 0.0
      %1035 = vmatpush.msra.mxu0 0.0
      %1036 = vmatpush.msra.mxu0 0.0
      %1037 = vmatpush.msra.mxu0 0.0
      %1038 = vmatpush.msra.mxu0 0.0
      %1039 = vmatpush.msra.mxu0 0.0
      %1040 = vmatpush.msra.mxu0 0.0
      %1041 = vmatpush.msra.mxu0 0.0
      %1042 = vmatpush.msra.mxu0 0.0
      %1043 = vmatpush.msra.mxu0 %v1014
      %1044 = vmatpush.msra.mxu0 %v1012
      %1045 = vmatpush.msra.mxu0 %v1010
      %1046 = vmatpush.msra.mxu0 %v1008
      %1047 = vmatmul.f32.gmra.mxu0 %v1020
      %v1048 = vpop.f32.mrf.mxu0
      %v1049 = vadd.f32 0.0, %v1048
      %1050 = vmatmul.f32.gmra.mxu0 %v1023
      %v1051 = vpop.f32.mrf.mxu0
      %v1052 = vadd.f32 0.0, %v1051
      %1053 = vmatmul.f32.gmra.mxu0 %v1026
      %v1054 = vpop.f32.mrf.mxu0
      %v1055 = vadd.f32 0.0, %v1054
      %1056 = vmatmul.f32.gmra.mxu0 %v1029
      %v1057 = vpop.f32.mrf.mxu0
      %v1058 = vadd.f32 0.0, %v1057
      %1059 = vdwg.mxu0
      %v1060 = vadd.f32 %v996, %v1049
      %v1061 = vadd.f32 %v999, %v1052
      %v1062 = vadd.f32 %v1002, %v1055
      %v1063 = vadd.f32 %v1005, %v1058
      %v1065 = vperm.slane %v540, 0
      %v1067 = vmul.f32 %v1060, %v1065
      %v1068 = vmul.f32 %v1061, %v1065
      %v1069 = vmul.f32 %v1062, %v1065
      %v1070 = vmul.f32 %v1063, %v1065
      %v1071 = vadd.f32 %v897, %v1067
      %v1072 = vadd.f32 %v898, %v1068
      %v1073 = vadd.f32 %v899, %v1069
      %v1074 = vadd.f32 %v900, %v1070
      %1076 = vset.pattern.permute.xlu0 0
      %1077 = vperm.xlu0 %1076, %v535
      %v1078 = vpop.permute.xlu0 %1077
      %1081 = vset.pattern.permute.xlu0 0
      %1082 = vperm.xlu0 %1081, %v536
      %v1083 = vpop.permute.xlu0 %1082
      %1086 = vset.pattern.permute.xlu0 0
      %1087 = vperm.xlu0 %1086, %v537
      %v1088 = vpop.permute.xlu0 %1087
      %1091 = vset.pattern.permute.xlu0 0
      %1092 = vperm.xlu0 %1091, %v538
      %v1093 = vpop.permute.xlu0 %1092
      %v1095 = vadd.f32 %v1071, %v1078
      %v1096 = vadd.f32 %v1072, %v1083
      %v1097 = vadd.f32 %v1073, %v1088
      %v1098 = vadd.f32 %v1074, %v1093
      %vm1099 = vcmask 523264
      %v1100 = vsel %vm1099, %v1095, 0.0
      %1101 = vadd.xlane.f32.xlu0 %v1100
      %v1102 = vpop.xlane.xlu0 %1101
      %v1103 = vsel %vm1099, %v1096, 0.0
      %1104 = vadd.xlane.f32.xlu0 %v1103
      %v1105 = vpop.xlane.xlu0 %1104
      %v1106 = vsel %vm1099, %v1097, 0.0
      %1107 = vadd.xlane.f32.xlu0 %v1106
      %v1108 = vpop.xlane.xlu0 %1107
      %v1109 = vsel %vm1099, %v1098, 0.0
      %1110 = vadd.xlane.f32.xlu0 %v1109
      %v1111 = vpop.xlane.xlu0 %1110
      %v1112 = vrcp.pop 64.0
      %v1113 = vmul.f32 64.0, %v1112
      %v1114 = vsub.f32 1.0, %v1113
      %v1115 = vmul.f32 %v1112, %v1114
      %v1116 = vadd.f32 %v1112, %v1115
      %vm1117 = vweird.f32 %v1112
      %v1118 = vsel %vm1117, %v1112, %v1116
      %v1119 = vmul.f32 %v1102, %v1118
      %v1120 = vmul.f32 %v1105, %v1118
      %v1121 = vmul.f32 %v1108, %v1118
      %v1122 = vmul.f32 %v1111, %v1118
      %v1123 = vsub.f32 %v1095, %v1119
      %v1124 = vsub.f32 %v1096, %v1120
      %v1125 = vsub.f32 %v1097, %v1121
      %v1126 = vsub.f32 %v1098, %v1122
      %v1127 = vmul.f32 %v1123, %v1123
      %v1128 = vmul.f32 %v1124, %v1124
      %v1129 = vmul.f32 %v1125, %v1125
      %v1130 = vmul.f32 %v1126, %v1126
      %v1131 = vsel %vm1099, %v1127, 0.0
      %1132 = vadd.xlane.f32.xlu0 %v1131
      %v1133 = vpop.xlane.xlu0 %1132
      %v1134 = vsel %vm1099, %v1128, 0.0
      %1135 = vadd.xlane.f32.xlu0 %v1134
      %v1136 = vpop.xlane.xlu0 %1135
      %v1137 = vsel %vm1099, %v1129, 0.0
      %1138 = vadd.xlane.f32.xlu0 %v1137
      %v1139 = vpop.xlane.xlu0 %1138
      %v1140 = vsel %vm1099, %v1130, 0.0
      %1141 = vadd.xlane.f32.xlu0 %v1140
      %v1142 = vpop.xlane.xlu0 %1141
      %v1143 = vmul.f32 %v1133, %v1118
      %v1144 = vmul.f32 %v1136, %v1118
      %v1145 = vmul.f32 %v1139, %v1118
      %v1146 = vmul.f32 %v1142, %v1118
      %v1147 = vadd.f32 %v1143, 1e-05
      %v1148 = vadd.f32 %v1144, 1e-05
      %v1149 = vadd.f32 %v1145, 1e-05
      %v1150 = vadd.f32 %v1146, 1e-05
      %v1151 = vrsqrt.pop %v1147
      %v1152 = vmul.f32 %v1151, %v1147
      %v1153 = vmul.f32 %v1152, %v1151
      %v1154 = vmul.f32 0.5, %v1153
      %v1155 = vsub.f32 1.5, %v1154
      %v1156 = vmul.f32 %v1151, %v1155
      %vm1157 = vweird.f32 %v1147
      %vm1158 = vweird.f32 %v1151
      %vm1159 = vmor %vm1157, %vm1158
      %v1160 = vsel %vm1159, %v1151, %v1156
      %v1161 = vrsqrt.pop %v1148
      %v1162 = vmul.f32 %v1161, %v1148
      %v1163 = vmul.f32 %v1162, %v1161
      %v1164 = vmul.f32 0.5, %v1163
      %v1165 = vsub.f32 1.5, %v1164
      %v1166 = vmul.f32 %v1161, %v1165
      %vm1167 = vweird.f32 %v1148
      %vm1168 = vweird.f32 %v1161
      %vm1169 = vmor %vm1167, %vm1168
      %v1170 = vsel %vm1169, %v1161, %v1166
      %v1171 = vrsqrt.pop %v1149
      %v1172 = vmul.f32 %v1171, %v1149
      %v1173 = vmul.f32 %v1172, %v1171
      %v1174 = vmul.f32 0.5, %v1173
      %v1175 = vsub.f32 1.5, %v1174
      %v1176 = vmul.f32 %v1171, %v1175
      %vm1177 = vweird.f32 %v1149
      %vm1178 = vweird.f32 %v1171
      %vm1179 = vmor %vm1177, %vm1178
      %v1180 = vsel %vm1179, %v1171, %v1176
      %v1181 = vrsqrt.pop %v1150
      %v1182 = vmul.f32 %v1181, %v1150
      %v1183 = vmul.f32 %v1182, %v1181
      %v1184 = vmul.f32 0.5, %v1183
      %v1185 = vsub.f32 1.5, %v1184
      %v1186 = vmul.f32 %v1181, %v1185
      %vm1187 = vweird.f32 %v1150
      %vm1188 = vweird.f32 %v1181
      %vm1189 = vmor %vm1187, %vm1188
      %v1190 = vsel %vm1189, %v1181, %v1186
      %v1191 = vmul.f32 %v1123, %v1160
      %v1192 = vmul.f32 %v1124, %v1170
      %v1193 = vmul.f32 %v1125, %v1180
      %v1194 = vmul.f32 %v1126, %v1190
      %v1195 = vmax.f32 %v1191, 0.0
      %v1196 = vmax.f32 %v1192, 0.0
      %v1197 = vmax.f32 %v1193, 0.0
      %v1198 = vmax.f32 %v1194, 0.0
      %v1199 = vld [vmem:[%s5] sm:$0xff]
      %v1200 = vld [vmem:[%s5 + $0x8] sm:$0xff]
      %v1201 = vld [vmem:[%s5 + $0x10] sm:$0xff]
      %v1202 = vld [vmem:[%s5 + $0x18] sm:$0xff]
      %v1203 = vld [vmem:[%s5 + $0x20] sm:$0xff]
      %v1204 = vld [vmem:[%s5 + $0x28] sm:$0xff]
      %v1205 = vld [vmem:[%s5 + $0x30] sm:$0xff]
      %v1206 = vld [vmem:[%s5 + $0x38] sm:$0xff]
      %v1207 = vld [vmem:[%s5 + $0x40] sm:$0xff]
      %v1208 = vld [vmem:[%s5 + $0x48] sm:$0xff]
      %v1209 = vld [vmem:[%s5 + $0x50] sm:$0xff]
      %v1210 = vld [vmem:[%s5 + $0x58] sm:$0xff]
      %v1211 = vld [vmem:[%s5 + $0x60] sm:$0xff]
      %v1212 = vld [vmem:[%s5 + $0x68] sm:$0xff]
      %v1213 = vld [vmem:[%s5 + $0x70] sm:$0xff]
      %v1214 = vld [vmem:[%s5 + $0x78] sm:$0xff]
      %v1215 = vld [vmem:[%s5 + $0x80] sm:$0xff]
      %v1216 = vld [vmem:[%s5 + $0x88] sm:$0xff]
      %v1217 = vld [vmem:[%s6] sm:$0xff]
      %v1218 = vld [vmem:[%s6 + $0x8] sm:$0xff]
      %v1219 = vld [vmem:[%s7] sm:$0x1]
      %v1220 = vld [vmem:[%s8] sm:$0xff]
      %v1221 = vld [vmem:[%s8 + $0x8] sm:$0xff]
      %v1222 = vld [vmem:[%s8 + $0x10] sm:$0xff]
      %v1223 = vld [vmem:[%s8 + $0x18] sm:$0xff]
      %v1224 = vld [vmem:[%s8 + $0x20] sm:$0xff]
      %v1225 = vld [vmem:[%s8 + $0x28] sm:$0xff]
      %v1226 = vld [vmem:[%s8 + $0x30] sm:$0xff]
      %v1227 = vld [vmem:[%s8 + $0x38] sm:$0xff]
      %v1228 = vld [vmem:[%s8 + $0x40] sm:$0xff]
      %v1229 = vld [vmem:[%s8 + $0x48] sm:$0xff]
      %v1230 = vld [vmem:[%s8 + $0x50] sm:$0xff]
      %v1231 = vld [vmem:[%s8 + $0x58] sm:$0xff]
      %v1232 = vld [vmem:[%s8 + $0x60] sm:$0xff]
      %v1233 = vld [vmem:[%s8 + $0x68] sm:$0xff]
      %v1234 = vld [vmem:[%s8 + $0x70] sm:$0xff]
      %v1235 = vld [vmem:[%s8 + $0x78] sm:$0xff]
      %v1236 = vld [vmem:[%s8 + $0x80] sm:$0xff]
      %v1237 = vld [vmem:[%s8 + $0x88] sm:$0xff]
      %v1238 = vld [vmem:[%s8 + $0x90] sm:$0xff]
      %v1239 = vld [vmem:[%s8 + $0x98] sm:$0xff]
      %v1240 = vld [vmem:[%s8 + $0xa0] sm:$0xff]
      %v1241 = vld [vmem:[%s8 + $0xa8] sm:$0xff]
      %v1242 = vld [vmem:[%s8 + $0xb0] sm:$0xff]
      %v1243 = vld [vmem:[%s8 + $0xb8] sm:$0xff]
      %v1244 = vld [vmem:[%s8 + $0xc0] sm:$0xff]
      %v1245 = vld [vmem:[%s8 + $0xc8] sm:$0xff]
      %v1246 = vld [vmem:[%s8 + $0xd0] sm:$0xff]
      %v1247 = vld [vmem:[%s8 + $0xd8] sm:$0xff]
      %v1248 = vld [vmem:[%s8 + $0xe0] sm:$0xff]
      %v1249 = vld [vmem:[%s8 + $0xe8] sm:$0xff]
      %v1250 = vld [vmem:[%s8 + $0xf0] sm:$0xff]
      %v1251 = vld [vmem:[%s8 + $0xf8] sm:$0xff]
      %v1252 = vld [vmem:[%s8 + $0x100] sm:$0xff]
      %v1253 = vld [vmem:[%s8 + $0x108] sm:$0xff]
      %v1254 = vld [vmem:[%s8 + $0x110] sm:$0xff]
      %v1255 = vld [vmem:[%s8 + $0x118] sm:$0xff]
      %v1256 = vld [vmem:[%s8 + $0x120] sm:$0xff]
      %v1257 = vld [vmem:[%s8 + $0x128] sm:$0xff]
      %v1258 = vld [vmem:[%s8 + $0x130] sm:$0xff]
      %v1259 = vld [vmem:[%s8 + $0x138] sm:$0xff]
      %v1260 = vld [vmem:[%s8 + $0x140] sm:$0xff]
      %v1261 = vld [vmem:[%s8 + $0x148] sm:$0xff]
      %v1262 = vld [vmem:[%s8 + $0x150] sm:$0xff]
      %v1263 = vld [vmem:[%s8 + $0x158] sm:$0xff]
      %v1264 = vld [vmem:[%s8 + $0x160] sm:$0xff]
      %v1265 = vld [vmem:[%s8 + $0x168] sm:$0xff]
      %v1266 = vld [vmem:[%s8 + $0x170] sm:$0xff]
      %v1267 = vld [vmem:[%s8 + $0x178] sm:$0xff]
      %v1268 = vld [vmem:[%s8 + $0x180] sm:$0xff]
      %v1269 = vld [vmem:[%s8 + $0x188] sm:$0xff]
      %v1270 = vld [vmem:[%s8 + $0x190] sm:$0xff]
      %v1271 = vld [vmem:[%s8 + $0x198] sm:$0xff]
      %v1272 = vld [vmem:[%s8 + $0x1a0] sm:$0xff]
      %v1273 = vld [vmem:[%s8 + $0x1a8] sm:$0xff]
      %v1274 = vld [vmem:[%s8 + $0x1b0] sm:$0xff]
      %v1275 = vld [vmem:[%s8 + $0x1b8] sm:$0xff]
      %v1276 = vld [vmem:[%s8 + $0x1c0] sm:$0xff]
      %v1277 = vld [vmem:[%s8 + $0x1c8] sm:$0xff]
      %v1278 = vld [vmem:[%s8 + $0x1d0] sm:$0xff]
      %v1279 = vld [vmem:[%s8 + $0x1d8] sm:$0xff]
      %v1280 = vld [vmem:[%s8 + $0x1e0] sm:$0xff]
      %v1281 = vld [vmem:[%s8 + $0x1e8] sm:$0xff]
      %v1282 = vld [vmem:[%s8 + $0x1f0] sm:$0xff]
      %v1283 = vld [vmem:[%s8 + $0x1f8] sm:$0xff]
      %v1284 = vsel %vm1099, %v1195, 0.0
      %v1285 = vsel %vm1099, %v1196, 0.0
      %v1286 = vsel %vm1099, %v1197, 0.0
      %v1287 = vsel %vm1099, %v1198, 0.0
      %v1289 = vsel %vm583, %v1207, 0
      %v1292 = vsel %vm583, %v1208, 0
      %1294 = vmatpush.msra.mxu0 0.0
      %1295 = vmatpush.msra.mxu0 0.0
      %1296 = vmatpush.msra.mxu0 0.0
      %1297 = vmatpush.msra.mxu0 0.0
      %1298 = vmatpush.msra.mxu0 0.0
      %1299 = vmatpush.msra.mxu0 0.0
      %1300 = vmatpush.msra.mxu0 0.0
      %1301 = vmatpush.msra.mxu0 0.0
      %1302 = vmatpush.msra.mxu0 0.0
      %1303 = vmatpush.msra.mxu0 0.0
      %1304 = vmatpush.msra.mxu0 0.0
      %1305 = vmatpush.msra.mxu0 0.0
      %1306 = vmatpush.msra.mxu0 %v1287
      %1307 = vmatpush.msra.mxu0 %v1286
      %1308 = vmatpush.msra.mxu0 %v1285
      %1309 = vmatpush.msra.mxu0 %v1284
      %1310 = vmatmul.f32.gmra.mxu0 %v1289
      %v1311 = vpop.f32.mrf.mxu0
      %v1312 = vadd.f32 0.0, %v1311
      %1313 = vmatmul.f32.gmra.mxu0 %v1292
      %v1314 = vpop.f32.mrf.mxu0
      %v1315 = vadd.f32 0.0, %v1314
      %1316 = vdwg.mxu0
      %1321 = vrot.lane.b32.xlu0 %v1284, 127
      %v1322 = vpop.permute.xlu0 %1321
      %1323 = vrot.lane.b32.xlu0 %v1285, 127
      %v1324 = vpop.permute.xlu0 %1323
      %1325 = vrot.lane.b32.xlu0 %v1286, 127
      %v1326 = vpop.permute.xlu0 %1325
      %1327 = vrot.lane.b32.xlu0 %v1287, 127
      %v1328 = vpop.permute.xlu0 %1327
      %v1334 = vsel %vm583, %v1205, 0
      %v1337 = vsel %vm583, %v1206, 0
      %1339 = vmatpush.msra.mxu0 0.0
      %1340 = vmatpush.msra.mxu0 0.0
      %1341 = vmatpush.msra.mxu0 0.0
      %1342 = vmatpush.msra.mxu0 0.0
      %1343 = vmatpush.msra.mxu0 0.0
      %1344 = vmatpush.msra.mxu0 0.0
      %1345 = vmatpush.msra.mxu0 0.0
      %1346 = vmatpush.msra.mxu0 0.0
      %1347 = vmatpush.msra.mxu0 0.0
      %1348 = vmatpush.msra.mxu0 0.0
      %1349 = vmatpush.msra.mxu0 0.0
      %1350 = vmatpush.msra.mxu0 0.0
      %1351 = vmatpush.msra.mxu0 %v1328
      %1352 = vmatpush.msra.mxu0 %v1326
      %1353 = vmatpush.msra.mxu0 %v1324
      %1354 = vmatpush.msra.mxu0 %v1322
      %1355 = vmatmul.f32.gmra.mxu0 %v1334
      %v1356 = vpop.f32.mrf.mxu0
      %v1357 = vadd.f32 0.0, %v1356
      %1358 = vmatmul.f32.gmra.mxu0 %v1337
      %v1359 = vpop.f32.mrf.mxu0
      %v1360 = vadd.f32 0.0, %v1359
      %1361 = vdwg.mxu0
      %v1363 = vperm.slane %v1219, 0
      %v1365 = vmul.f32 %v1363, %v1357
      %v1366 = vmul.f32 %v1363, %v1360
      %v1368 = vsel %vm583, %v1209, 0
      %v1371 = vsel %vm583, %v1210, 0
      %1373 = vmatpush.msra.mxu0 0.0
      %1374 = vmatpush.msra.mxu0 0.0
      %1375 = vmatpush.msra.mxu0 0.0
      %1376 = vmatpush.msra.mxu0 0.0
      %1377 = vmatpush.msra.mxu0 0.0
      %1378 = vmatpush.msra.mxu0 0.0
      %1379 = vmatpush.msra.mxu0 0.0
      %1380 = vmatpush.msra.mxu0 0.0
      %1381 = vmatpush.msra.mxu0 0.0
      %1382 = vmatpush.msra.mxu0 0.0
      %1383 = vmatpush.msra.mxu0 0.0
      %1384 = vmatpush.msra.mxu0 0.0
      %1385 = vmatpush.msra.mxu0 %v1287
      %1386 = vmatpush.msra.mxu0 %v1286
      %1387 = vmatpush.msra.mxu0 %v1285
      %1388 = vmatpush.msra.mxu0 %v1284
      %1389 = vmatmul.f32.gmra.mxu0 %v1368
      %v1390 = vpop.f32.mrf.mxu0
      %v1391 = vadd.f32 %v1365, %v1390
      %1392 = vmatmul.f32.gmra.mxu0 %v1371
      %v1393 = vpop.f32.mrf.mxu0
      %v1394 = vadd.f32 %v1366, %v1393
      %1395 = vdwg.mxu0
      %1396 = vrot.lane.b32.xlu0 %v1284, 120
      %v1397 = vpop.permute.xlu0 %1396
      %1398 = vrot.lane.b32.xlu0 %v1285, 120
      %v1399 = vpop.permute.xlu0 %1398
      %1400 = vrot.lane.b32.xlu0 %v1286, 120
      %v1401 = vpop.permute.xlu0 %1400
      %1402 = vrot.lane.b32.xlu0 %v1287, 120
      %v1403 = vpop.permute.xlu0 %1402
      %v1409 = vsel %vm583, %v1201, 0
      %v1412 = vsel %vm583, %v1202, 0
      %1414 = vmatpush.msra.mxu0 0.0
      %1415 = vmatpush.msra.mxu0 0.0
      %1416 = vmatpush.msra.mxu0 0.0
      %1417 = vmatpush.msra.mxu0 0.0
      %1418 = vmatpush.msra.mxu0 0.0
      %1419 = vmatpush.msra.mxu0 0.0
      %1420 = vmatpush.msra.mxu0 0.0
      %1421 = vmatpush.msra.mxu0 0.0
      %1422 = vmatpush.msra.mxu0 0.0
      %1423 = vmatpush.msra.mxu0 0.0
      %1424 = vmatpush.msra.mxu0 0.0
      %1425 = vmatpush.msra.mxu0 0.0
      %1426 = vmatpush.msra.mxu0 %v1403
      %1427 = vmatpush.msra.mxu0 %v1401
      %1428 = vmatpush.msra.mxu0 %v1399
      %1429 = vmatpush.msra.mxu0 %v1397
      %1430 = vmatmul.f32.gmra.mxu0 %v1409
      %v1431 = vpop.f32.mrf.mxu0
      %v1432 = vadd.f32 0.0, %v1431
      %1433 = vmatmul.f32.gmra.mxu0 %v1412
      %v1434 = vpop.f32.mrf.mxu0
      %v1435 = vadd.f32 0.0, %v1434
      %1436 = vdwg.mxu0
      %v1438 = vsel %vm583, %v1213, 0
      %v1441 = vsel %vm583, %v1214, 0
      %1443 = vmatpush.msra.mxu0 0.0
      %1444 = vmatpush.msra.mxu0 0.0
      %1445 = vmatpush.msra.mxu0 0.0
      %1446 = vmatpush.msra.mxu0 0.0
      %1447 = vmatpush.msra.mxu0 0.0
      %1448 = vmatpush.msra.mxu0 0.0
      %1449 = vmatpush.msra.mxu0 0.0
      %1450 = vmatpush.msra.mxu0 0.0
      %1451 = vmatpush.msra.mxu0 0.0
      %1452 = vmatpush.msra.mxu0 0.0
      %1453 = vmatpush.msra.mxu0 0.0
      %1454 = vmatpush.msra.mxu0 0.0
      %1455 = vmatpush.msra.mxu0 %v1287
      %1456 = vmatpush.msra.mxu0 %v1286
      %1457 = vmatpush.msra.mxu0 %v1285
      %1458 = vmatpush.msra.mxu0 %v1284
      %1459 = vmatmul.f32.gmra.mxu0 %v1438
      %v1460 = vpop.f32.mrf.mxu0
      %v1461 = vadd.f32 %v1432, %v1460
      %1462 = vmatmul.f32.gmra.mxu0 %v1441
      %v1463 = vpop.f32.mrf.mxu0
      %v1464 = vadd.f32 %v1435, %v1463
      %1465 = vdwg.mxu0
      %v1467 = vsel %vm583, %v1203, 0
      %v1470 = vsel %vm583, %v1204, 0
      %1472 = vmatpush.msra.mxu0 0.0
      %1473 = vmatpush.msra.mxu0 0.0
      %1474 = vmatpush.msra.mxu0 0.0
      %1475 = vmatpush.msra.mxu0 0.0
      %1476 = vmatpush.msra.mxu0 0.0
      %1477 = vmatpush.msra.mxu0 0.0
      %1478 = vmatpush.msra.mxu0 0.0
      %1479 = vmatpush.msra.mxu0 0.0
      %1480 = vmatpush.msra.mxu0 0.0
      %1481 = vmatpush.msra.mxu0 0.0
      %1482 = vmatpush.msra.mxu0 0.0
      %1483 = vmatpush.msra.mxu0 0.0
      %1484 = vmatpush.msra.mxu0 %v1403
      %1485 = vmatpush.msra.mxu0 %v1401
      %1486 = vmatpush.msra.mxu0 %v1399
      %1487 = vmatpush.msra.mxu0 %v1397
      %1488 = vmatmul.f32.gmra.mxu0 %v1467
      %v1489 = vpop.f32.mrf.mxu0
      %v1490 = vadd.f32 0.0, %v1489
      %1491 = vmatmul.f32.gmra.mxu0 %v1470
      %v1492 = vpop.f32.mrf.mxu0
      %v1493 = vadd.f32 0.0, %v1492
      %1494 = vdwg.mxu0
      %v1496 = vsel %vm583, %v1215, 0
      %v1499 = vsel %vm583, %v1216, 0
      %1501 = vmatpush.msra.mxu0 0.0
      %1502 = vmatpush.msra.mxu0 0.0
      %1503 = vmatpush.msra.mxu0 0.0
      %1504 = vmatpush.msra.mxu0 0.0
      %1505 = vmatpush.msra.mxu0 0.0
      %1506 = vmatpush.msra.mxu0 0.0
      %1507 = vmatpush.msra.mxu0 0.0
      %1508 = vmatpush.msra.mxu0 0.0
      %1509 = vmatpush.msra.mxu0 0.0
      %1510 = vmatpush.msra.mxu0 0.0
      %1511 = vmatpush.msra.mxu0 0.0
      %1512 = vmatpush.msra.mxu0 0.0
      %1513 = vmatpush.msra.mxu0 %v1287
      %1514 = vmatpush.msra.mxu0 %v1286
      %1515 = vmatpush.msra.mxu0 %v1285
      %1516 = vmatpush.msra.mxu0 %v1284
      %1517 = vmatmul.f32.gmra.mxu0 %v1496
      %v1518 = vpop.f32.mrf.mxu0
      %v1519 = vadd.f32 %v1490, %v1518
      %1520 = vmatmul.f32.gmra.mxu0 %v1499
      %v1521 = vpop.f32.mrf.mxu0
      %v1522 = vadd.f32 %v1493, %v1521
      %1523 = vdwg.mxu0
      %1524 = vrot.lane.b32.xlu0 %v1284, 119
      %v1525 = vpop.permute.xlu0 %1524
      %1526 = vrot.lane.b32.xlu0 %v1285, 119
      %v1527 = vpop.permute.xlu0 %1526
      %1528 = vrot.lane.b32.xlu0 %v1286, 119
      %v1529 = vpop.permute.xlu0 %1528
      %1530 = vrot.lane.b32.xlu0 %v1287, 119
      %v1531 = vpop.permute.xlu0 %1530
      %v1537 = vsel %vm583, %v1199, 0
      %v1540 = vsel %vm583, %v1200, 0
      %1542 = vmatpush.msra.mxu0 0.0
      %1543 = vmatpush.msra.mxu0 0.0
      %1544 = vmatpush.msra.mxu0 0.0
      %1545 = vmatpush.msra.mxu0 0.0
      %1546 = vmatpush.msra.mxu0 0.0
      %1547 = vmatpush.msra.mxu0 0.0
      %1548 = vmatpush.msra.mxu0 0.0
      %1549 = vmatpush.msra.mxu0 0.0
      %1550 = vmatpush.msra.mxu0 0.0
      %1551 = vmatpush.msra.mxu0 0.0
      %1552 = vmatpush.msra.mxu0 0.0
      %1553 = vmatpush.msra.mxu0 0.0
      %1554 = vmatpush.msra.mxu0 %v1531
      %1555 = vmatpush.msra.mxu0 %v1529
      %1556 = vmatpush.msra.mxu0 %v1527
      %1557 = vmatpush.msra.mxu0 %v1525
      %1558 = vmatmul.f32.gmra.mxu0 %v1537
      %v1559 = vpop.f32.mrf.mxu0
      %v1560 = vadd.f32 0.0, %v1559
      %1561 = vmatmul.f32.gmra.mxu0 %v1540
      %v1562 = vpop.f32.mrf.mxu0
      %v1563 = vadd.f32 0.0, %v1562
      %1564 = vdwg.mxu0
      %v1566 = vsel %vm583, %v1211, 0
      %v1569 = vsel %vm583, %v1212, 0
      %1571 = vmatpush.msra.mxu0 0.0
      %1572 = vmatpush.msra.mxu0 0.0
      %1573 = vmatpush.msra.mxu0 0.0
      %1574 = vmatpush.msra.mxu0 0.0
      %1575 = vmatpush.msra.mxu0 0.0
      %1576 = vmatpush.msra.mxu0 0.0
      %1577 = vmatpush.msra.mxu0 0.0
      %1578 = vmatpush.msra.mxu0 0.0
      %1579 = vmatpush.msra.mxu0 0.0
      %1580 = vmatpush.msra.mxu0 0.0
      %1581 = vmatpush.msra.mxu0 0.0
      %1582 = vmatpush.msra.mxu0 0.0
      %1583 = vmatpush.msra.mxu0 %v1328
      %1584 = vmatpush.msra.mxu0 %v1326
      %1585 = vmatpush.msra.mxu0 %v1324
      %1586 = vmatpush.msra.mxu0 %v1322
      %1587 = vmatmul.f32.gmra.mxu0 %v1566
      %v1588 = vpop.f32.mrf.mxu0
      %v1589 = vadd.f32 %v1560, %v1588
      %1590 = vmatmul.f32.gmra.mxu0 %v1569
      %v1591 = vpop.f32.mrf.mxu0
      %v1592 = vadd.f32 %v1563, %v1591
      %1593 = vdwg.mxu0
      %v1594 = vmul.f32 %v1363, %v1589
      %v1595 = vmul.f32 %v1363, %v1592
      %v1596 = vadd.f32 %v1519, %v1594
      %v1597 = vadd.f32 %v1522, %v1595
      %1600 = vrot.lane.b32.xlu0 %v1391, 64
      %v1601 = vpop.permute.xlu0 %1600
      %1602 = vrot.lane.b32.xlu0 %v1394, 64
      %v1603 = vpop.permute.xlu0 %1602
      %1608 = vrot.lane.b32.xlu0 %v1596, 64
      %v1609 = vpop.permute.xlu0 %1608
      %1610 = vrot.lane.b32.xlu0 %v1597, 64
      %v1611 = vpop.permute.xlu0 %1610
      %v1614 = vsel %vm1099, %v1312, %v1601
      %v1615 = vsel %vm1099, %v1315, %v1603
      %v1616 = vsel %vm1099, %v1461, %v1609
      %v1617 = vsel %vm1099, %v1464, %v1611
      %1619 = vset.pattern.permute.xlu0 0
      %1620 = vperm.xlu0 %1619, %v1217
      %v1621 = vpop.permute.xlu0 %1620
      %1624 = vset.pattern.permute.xlu0 0
      %1625 = vperm.xlu0 %1624, %v1218
      %v1626 = vpop.permute.xlu0 %1625
      %1628 = vmatpush.msra.mxu0 %v1250
      %1629 = vmatpush.msra.mxu0 %v1248
      %1630 = vmatpush.msra.mxu0 %v1246
      %1631 = vmatpush.msra.mxu0 %v1244
      %1632 = vmatpush.msra.mxu0 %v1242
      %1633 = vmatpush.msra.mxu0 %v1240
      %1634 = vmatpush.msra.mxu0 %v1238
      %1635 = vmatpush.msra.mxu0 %v1236
      %1636 = vmatpush.msra.mxu0 %v1234
      %1637 = vmatpush.msra.mxu0 %v1232
      %1638 = vmatpush.msra.mxu0 %v1230
      %1639 = vmatpush.msra.mxu0 %v1228
      %1640 = vmatpush.msra.mxu0 %v1226
      %1641 = vmatpush.msra.mxu0 %v1224
      %1642 = vmatpush.msra.mxu0 %v1222
      %1643 = vmatpush.msra.mxu0 %v1220
      %1644 = vmatmul.f32.gmra.mxu0 %v1614
      %v1645 = vpop.f32.mrf.mxu0
      %v1646 = vadd.f32 %v1621, %v1645
      %1647 = vmatmul.f32.gmra.mxu0 %v1615
      %v1648 = vpop.f32.mrf.mxu0
      %v1649 = vadd.f32 %v1626, %v1648
      %1650 = vdwg.mxu0
      %1651 = vmatpush.msra.mxu0 %v1282
      %1652 = vmatpush.msra.mxu0 %v1280
      %1653 = vmatpush.msra.mxu0 %v1278
      %1654 = vmatpush.msra.mxu0 %v1276
      %1655 = vmatpush.msra.mxu0 %v1274
      %1656 = vmatpush.msra.mxu0 %v1272
      %1657 = vmatpush.msra.mxu0 %v1270
      %1658 = vmatpush.msra.mxu0 %v1268
      %1659 = vmatpush.msra.mxu0 %v1266
      %1660 = vmatpush.msra.mxu0 %v1264
      %1661 = vmatpush.msra.mxu0 %v1262
      %1662 = vmatpush.msra.mxu0 %v1260
      %1663 = vmatpush.msra.mxu0 %v1258
      %1664 = vmatpush.msra.mxu0 %v1256
      %1665 = vmatpush.msra.mxu0 %v1254
      %1666 = vmatpush.msra.mxu0 %v1252
      %1667 = vmatmul.f32.gmra.mxu0 %v1616
      %v1668 = vpop.f32.mrf.mxu0
      %v1669 = vadd.f32 %v1646, %v1668
      %1670 = vmatmul.f32.gmra.mxu0 %v1617
      %v1671 = vpop.f32.mrf.mxu0
      %v1672 = vadd.f32 %v1649, %v1671
      %1673 = vdwg.mxu0
      %1674 = vmatpush.msra.mxu0 %v1251
      %1675 = vmatpush.msra.mxu0 %v1249
      %1676 = vmatpush.msra.mxu0 %v1247
      %1677 = vmatpush.msra.mxu0 %v1245
      %1678 = vmatpush.msra.mxu0 %v1243
      %1679 = vmatpush.msra.mxu0 %v1241
      %1680 = vmatpush.msra.mxu0 %v1239
      %1681 = vmatpush.msra.mxu0 %v1237
      %1682 = vmatpush.msra.mxu0 %v1235
      %1683 = vmatpush.msra.mxu0 %v1233
      %1684 = vmatpush.msra.mxu0 %v1231
      %1685 = vmatpush.msra.mxu0 %v1229
      %1686 = vmatpush.msra.mxu0 %v1227
      %1687 = vmatpush.msra.mxu0 %v1225
      %1688 = vmatpush.msra.mxu0 %v1223
      %1689 = vmatpush.msra.mxu0 %v1221
      %1690 = vmatmul.f32.gmra.mxu0 %v1614
      %v1691 = vpop.f32.mrf.mxu0
      %v1692 = vadd.f32 %v1621, %v1691
      %1693 = vmatmul.f32.gmra.mxu0 %v1615
      %v1694 = vpop.f32.mrf.mxu0
      %v1695 = vadd.f32 %v1626, %v1694
      %1696 = vdwg.mxu0
      %1697 = vmatpush.msra.mxu0 %v1283
      %1698 = vmatpush.msra.mxu0 %v1281
      %1699 = vmatpush.msra.mxu0 %v1279
      %1700 = vmatpush.msra.mxu0 %v1277
      %1701 = vmatpush.msra.mxu0 %v1275
      %1702 = vmatpush.msra.mxu0 %v1273
      %1703 = vmatpush.msra.mxu0 %v1271
      %1704 = vmatpush.msra.mxu0 %v1269
      %1705 = vmatpush.msra.mxu0 %v1267
      %1706 = vmatpush.msra.mxu0 %v1265
      %1707 = vmatpush.msra.mxu0 %v1263
      %1708 = vmatpush.msra.mxu0 %v1261
      %1709 = vmatpush.msra.mxu0 %v1259
      %1710 = vmatpush.msra.mxu0 %v1257
      %1711 = vmatpush.msra.mxu0 %v1255
      %1712 = vmatpush.msra.mxu0 %v1253
      %1713 = vmatmul.f32.gmra.mxu0 %v1616
      %v1714 = vpop.f32.mrf.mxu0
      %v1715 = vadd.f32 %v1692, %v1714
      %1716 = vmatmul.f32.gmra.mxu0 %v1617
      %v1717 = vpop.f32.mrf.mxu0
      %v1718 = vadd.f32 %v1695, %v1717
      %1719 = vdwg.mxu0
      %v1720 = vadd.f32 %v1669, %v1715
      %1721 = vadd.xlane.f32.xlu0 %v1720
      %v1722 = vpop.xlane.xlu0 %1721
      %v1723 = vadd.f32 %v1672, %v1718
      %1724 = vadd.xlane.f32.xlu0 %v1723
      %v1725 = vpop.xlane.xlu0 %1724
      %v1726 = vrcp.pop 256.0
      %v1727 = vmul.f32 256.0, %v1726
      %v1728 = vsub.f32 1.0, %v1727
      %v1729 = vmul.f32 %v1726, %v1728
      %v1730 = vadd.f32 %v1726, %v1729
      %vm1731 = vweird.f32 %v1726
      %v1732 = vsel %vm1731, %v1726, %v1730
      %v1733 = vmul.f32 %v1722, %v1732
      %v1734 = vmul.f32 %v1725, %v1732
      %v1735 = vsub.f32 %v1669, %v1733
      %v1736 = vsub.f32 %v1715, %v1733
      %v1737 = vsub.f32 %v1672, %v1734
      %v1738 = vsub.f32 %v1718, %v1734
      %v1739 = vmul.f32 %v1735, %v1735
      %v1740 = vmul.f32 %v1736, %v1736
      %v1741 = vmul.f32 %v1737, %v1737
      %v1742 = vmul.f32 %v1738, %v1738
      %v1743 = vadd.f32 %v1739, %v1740
      %1744 = vadd.xlane.f32.xlu0 %v1743
      %v1745 = vpop.xlane.xlu0 %1744
      %v1746 = vadd.f32 %v1741, %v1742
      %1747 = vadd.xlane.f32.xlu0 %v1746
      %v1748 = vpop.xlane.xlu0 %1747
      %v1749 = vmul.f32 %v1745, %v1732
      %v1750 = vmul.f32 %v1748, %v1732
      %v1751 = vadd.f32 %v1749, 1e-05
      %v1752 = vadd.f32 %v1750, 1e-05
      %v1753 = vrsqrt.pop %v1751
      %v1754 = vmul.f32 %v1753, %v1751
      %v1755 = vmul.f32 %v1754, %v1753
      %v1756 = vmul.f32 0.5, %v1755
      %v1757 = vsub.f32 1.5, %v1756
      %v1758 = vmul.f32 %v1753, %v1757
      %vm1759 = vweird.f32 %v1751
      %vm1760 = vweird.f32 %v1753
      %vm1761 = vmor %vm1759, %vm1760
      %v1762 = vsel %vm1761, %v1753, %v1758
      %v1763 = vrsqrt.pop %v1752
      %v1764 = vmul.f32 %v1763, %v1752
      %v1765 = vmul.f32 %v1764, %v1763
      %v1766 = vmul.f32 0.5, %v1765
      %v1767 = vsub.f32 1.5, %v1766
      %v1768 = vmul.f32 %v1763, %v1767
      %vm1769 = vweird.f32 %v1752
      %vm1770 = vweird.f32 %v1763
      %vm1771 = vmor %vm1769, %vm1770
      %v1772 = vsel %vm1771, %v1763, %v1768
      %v1773 = vmul.f32 %v1735, %v1762
      %v1774 = vmul.f32 %v1736, %v1762
      %v1775 = vmul.f32 %v1737, %v1772
      %v1776 = vmul.f32 %v1738, %v1772
      %v1777 = vmax.f32 %v1773, 0.0
      %v1778 = vmax.f32 %v1774, 0.0
      %v1779 = vmax.f32 %v1775, 0.0
      %v1780 = vmax.f32 %v1776, 0.0
      %v1781 = vld [vmem:[%s9] sm:$0xff]
      %v1782 = vld [vmem:[%s9 + $0x8] sm:$0xff]
      %v1783 = vld [vmem:[%s9 + $0x10] sm:$0xff]
      %v1784 = vld [vmem:[%s9 + $0x18] sm:$0xff]
      %v1785 = vld [vmem:[%s9 + $0x20] sm:$0xff]
      %v1786 = vld [vmem:[%s9 + $0x28] sm:$0xff]
      %v1787 = vld [vmem:[%s9 + $0x30] sm:$0xff]
      %v1788 = vld [vmem:[%s9 + $0x38] sm:$0xff]
      %v1789 = vld [vmem:[%s9 + $0x40] sm:$0xff]
      %v1790 = vld [vmem:[%s10] sm:$0xff]
      %v1791 = vld [vmem:[%s11] sm:$0x3]
      %v1792 = vld [vmem:[%s12] sm:$0xff]
      %v1793 = vld [vmem:[%s12 + $0x8] sm:$0xff]
      %v1794 = vld [vmem:[%s12 + $0x10] sm:$0xff]
      %v1795 = vld [vmem:[%s12 + $0x18] sm:$0xff]
      %v1796 = vld [vmem:[%s12 + $0x20] sm:$0xff]
      %v1797 = vld [vmem:[%s12 + $0x28] sm:$0xff]
      %v1798 = vld [vmem:[%s12 + $0x30] sm:$0xff]
      %v1799 = vld [vmem:[%s12 + $0x38] sm:$0xff]
      %v1800 = vld [vmem:[%s12 + $0x40] sm:$0xff]
      %v1801 = vld [vmem:[%s12 + $0x48] sm:$0xff]
      %v1802 = vld [vmem:[%s12 + $0x50] sm:$0xff]
      %v1803 = vld [vmem:[%s12 + $0x58] sm:$0xff]
      %v1804 = vld [vmem:[%s12 + $0x60] sm:$0xff]
      %v1805 = vld [vmem:[%s12 + $0x68] sm:$0xff]
      %v1806 = vld [vmem:[%s12 + $0x70] sm:$0xff]
      %v1807 = vld [vmem:[%s12 + $0x78] sm:$0xff]
      %v1808 = vld [vmem:[%s12 + $0x80] sm:$0xff]
      %v1809 = vld [vmem:[%s12 + $0x88] sm:$0xff]
      %v1810 = vld [vmem:[%s12 + $0x90] sm:$0xff]
      %v1811 = vld [vmem:[%s12 + $0x98] sm:$0xff]
      %v1812 = vld [vmem:[%s12 + $0xa0] sm:$0xff]
      %v1813 = vld [vmem:[%s12 + $0xa8] sm:$0xff]
      %v1814 = vld [vmem:[%s12 + $0xb0] sm:$0xff]
      %v1815 = vld [vmem:[%s12 + $0xb8] sm:$0xff]
      %v1816 = vld [vmem:[%s12 + $0xc0] sm:$0xff]
      %v1817 = vld [vmem:[%s12 + $0xc8] sm:$0xff]
      %v1818 = vld [vmem:[%s12 + $0xd0] sm:$0xff]
      %v1819 = vld [vmem:[%s12 + $0xd8] sm:$0xff]
      %v1820 = vld [vmem:[%s12 + $0xe0] sm:$0xff]
      %v1821 = vld [vmem:[%s12 + $0xe8] sm:$0xff]
      %v1822 = vld [vmem:[%s12 + $0xf0] sm:$0xff]
      %v1823 = vld [vmem:[%s12 + $0xf8] sm:$0xff]
      %v1824 = vld [vmem:[%s12 + $0x100] sm:$0xff]
      %v1825 = vld [vmem:[%s12 + $0x108] sm:$0xff]
      %v1826 = vld [vmem:[%s12 + $0x110] sm:$0xff]
      %v1827 = vld [vmem:[%s12 + $0x118] sm:$0xff]
      %v1828 = vld [vmem:[%s12 + $0x120] sm:$0xff]
      %v1829 = vld [vmem:[%s12 + $0x128] sm:$0xff]
      %v1830 = vld [vmem:[%s12 + $0x130] sm:$0xff]
      %v1831 = vld [vmem:[%s12 + $0x138] sm:$0xff]
      %v1832 = vld [vmem:[%s12 + $0x140] sm:$0xff]
      %v1833 = vld [vmem:[%s12 + $0x148] sm:$0xff]
      %v1834 = vld [vmem:[%s12 + $0x150] sm:$0xff]
      %v1835 = vld [vmem:[%s12 + $0x158] sm:$0xff]
      %v1836 = vld [vmem:[%s12 + $0x160] sm:$0xff]
      %v1837 = vld [vmem:[%s12 + $0x168] sm:$0xff]
      %v1838 = vld [vmem:[%s12 + $0x170] sm:$0xff]
      %v1839 = vld [vmem:[%s12 + $0x178] sm:$0xff]
      %v1840 = vld [vmem:[%s12 + $0x180] sm:$0xff]
      %v1841 = vld [vmem:[%s12 + $0x188] sm:$0xff]
      %v1842 = vld [vmem:[%s12 + $0x190] sm:$0xff]
      %v1843 = vld [vmem:[%s12 + $0x198] sm:$0xff]
      %v1844 = vld [vmem:[%s12 + $0x1a0] sm:$0xff]
      %v1845 = vld [vmem:[%s12 + $0x1a8] sm:$0xff]
      %v1846 = vld [vmem:[%s12 + $0x1b0] sm:$0xff]
      %v1847 = vld [vmem:[%s12 + $0x1b8] sm:$0xff]
      %v1848 = vld [vmem:[%s12 + $0x1c0] sm:$0xff]
      %v1849 = vld [vmem:[%s12 + $0x1c8] sm:$0xff]
      %v1850 = vld [vmem:[%s12 + $0x1d0] sm:$0xff]
      %v1851 = vld [vmem:[%s12 + $0x1d8] sm:$0xff]
      %v1852 = vld [vmem:[%s12 + $0x1e0] sm:$0xff]
      %v1853 = vld [vmem:[%s12 + $0x1e8] sm:$0xff]
      %v1854 = vld [vmem:[%s12 + $0x1f0] sm:$0xff]
      %v1855 = vld [vmem:[%s12 + $0x1f8] sm:$0xff]
      %v1856 = vld [vmem:[%s12 + $0x200] sm:$0xff]
      %v1857 = vld [vmem:[%s12 + $0x208] sm:$0xff]
      %v1858 = vld [vmem:[%s12 + $0x210] sm:$0xff]
      %v1859 = vld [vmem:[%s12 + $0x218] sm:$0xff]
      %v1860 = vld [vmem:[%s12 + $0x220] sm:$0xff]
      %v1861 = vld [vmem:[%s12 + $0x228] sm:$0xff]
      %v1862 = vld [vmem:[%s12 + $0x230] sm:$0xff]
      %v1863 = vld [vmem:[%s12 + $0x238] sm:$0xff]
      %v1864 = vld [vmem:[%s12 + $0x240] sm:$0xff]
      %v1865 = vld [vmem:[%s12 + $0x248] sm:$0xff]
      %v1866 = vld [vmem:[%s12 + $0x250] sm:$0xff]
      %v1867 = vld [vmem:[%s12 + $0x258] sm:$0xff]
      %v1868 = vld [vmem:[%s12 + $0x260] sm:$0xff]
      %v1869 = vld [vmem:[%s12 + $0x268] sm:$0xff]
      %v1870 = vld [vmem:[%s12 + $0x270] sm:$0xff]
      %v1871 = vld [vmem:[%s12 + $0x278] sm:$0xff]
      %v1872 = vld [vmem:[%s12 + $0x280] sm:$0xff]
      %v1873 = vld [vmem:[%s12 + $0x288] sm:$0xff]
      %v1874 = vld [vmem:[%s12 + $0x290] sm:$0xff]
      %v1875 = vld [vmem:[%s12 + $0x298] sm:$0xff]
      %v1876 = vld [vmem:[%s12 + $0x2a0] sm:$0xff]
      %v1877 = vld [vmem:[%s12 + $0x2a8] sm:$0xff]
      %v1878 = vld [vmem:[%s12 + $0x2b0] sm:$0xff]
      %v1879 = vld [vmem:[%s12 + $0x2b8] sm:$0xff]
      %v1880 = vld [vmem:[%s12 + $0x2c0] sm:$0xff]
      %v1881 = vld [vmem:[%s12 + $0x2c8] sm:$0xff]
      %v1882 = vld [vmem:[%s12 + $0x2d0] sm:$0xff]
      %v1883 = vld [vmem:[%s12 + $0x2d8] sm:$0xff]
      %v1884 = vld [vmem:[%s12 + $0x2e0] sm:$0xff]
      %v1885 = vld [vmem:[%s12 + $0x2e8] sm:$0xff]
      %v1886 = vld [vmem:[%s12 + $0x2f0] sm:$0xff]
      %v1887 = vld [vmem:[%s12 + $0x2f8] sm:$0xff]
      %v1888 = vld [vmem:[%s12 + $0x300] sm:$0xff]
      %v1889 = vld [vmem:[%s12 + $0x308] sm:$0xff]
      %v1890 = vld [vmem:[%s12 + $0x310] sm:$0xff]
      %v1891 = vld [vmem:[%s12 + $0x318] sm:$0xff]
      %v1892 = vld [vmem:[%s12 + $0x320] sm:$0xff]
      %v1893 = vld [vmem:[%s12 + $0x328] sm:$0xff]
      %v1894 = vld [vmem:[%s12 + $0x330] sm:$0xff]
      %v1895 = vld [vmem:[%s12 + $0x338] sm:$0xff]
      %v1896 = vld [vmem:[%s12 + $0x340] sm:$0xff]
      %v1897 = vld [vmem:[%s12 + $0x348] sm:$0xff]
      %v1898 = vld [vmem:[%s12 + $0x350] sm:$0xff]
      %v1899 = vld [vmem:[%s12 + $0x358] sm:$0xff]
      %v1900 = vld [vmem:[%s12 + $0x360] sm:$0xff]
      %v1901 = vld [vmem:[%s12 + $0x368] sm:$0xff]
      %v1902 = vld [vmem:[%s12 + $0x370] sm:$0xff]
      %v1903 = vld [vmem:[%s12 + $0x378] sm:$0xff]
      %v1904 = vld [vmem:[%s12 + $0x380] sm:$0xff]
      %v1905 = vld [vmem:[%s12 + $0x388] sm:$0xff]
      %v1906 = vld [vmem:[%s12 + $0x390] sm:$0xff]
      %v1907 = vld [vmem:[%s12 + $0x398] sm:$0xff]
      %v1908 = vld [vmem:[%s12 + $0x3a0] sm:$0xff]
      %v1909 = vld [vmem:[%s12 + $0x3a8] sm:$0xff]
      %v1910 = vld [vmem:[%s12 + $0x3b0] sm:$0xff]
      %v1911 = vld [vmem:[%s12 + $0x3b8] sm:$0xff]
      %v1912 = vld [vmem:[%s12 + $0x3c0] sm:$0xff]
      %v1913 = vld [vmem:[%s12 + $0x3c8] sm:$0xff]
      %v1914 = vld [vmem:[%s12 + $0x3d0] sm:$0xff]
      %v1915 = vld [vmem:[%s12 + $0x3d8] sm:$0xff]
      %v1916 = vld [vmem:[%s12 + $0x3e0] sm:$0xff]
      %v1917 = vld [vmem:[%s12 + $0x3e8] sm:$0xff]
      %v1918 = vld [vmem:[%s12 + $0x3f0] sm:$0xff]
      %v1919 = vld [vmem:[%s12 + $0x3f8] sm:$0xff]
      %v1920 = vld [vmem:[%s12 + $0x400] sm:$0xff]
      %v1921 = vld [vmem:[%s12 + $0x408] sm:$0xff]
      %v1922 = vld [vmem:[%s12 + $0x410] sm:$0xff]
      %v1923 = vld [vmem:[%s12 + $0x418] sm:$0xff]
      %v1924 = vld [vmem:[%s12 + $0x420] sm:$0xff]
      %v1925 = vld [vmem:[%s12 + $0x428] sm:$0xff]
      %v1926 = vld [vmem:[%s12 + $0x430] sm:$0xff]
      %v1927 = vld [vmem:[%s12 + $0x438] sm:$0xff]
      %v1928 = vld [vmem:[%s12 + $0x440] sm:$0xff]
      %v1929 = vld [vmem:[%s12 + $0x448] sm:$0xff]
      %v1930 = vld [vmem:[%s12 + $0x450] sm:$0xff]
      %v1931 = vld [vmem:[%s12 + $0x458] sm:$0xff]
      %v1932 = vld [vmem:[%s12 + $0x460] sm:$0xff]
      %v1933 = vld [vmem:[%s12 + $0x468] sm:$0xff]
      %v1934 = vld [vmem:[%s12 + $0x470] sm:$0xff]
      %v1935 = vld [vmem:[%s12 + $0x478] sm:$0xff]
      %v1936 = vld [vmem:[%s12 + $0x480] sm:$0xff]
      %v1937 = vld [vmem:[%s12 + $0x488] sm:$0xff]
      %v1938 = vld [vmem:[%s12 + $0x490] sm:$0xff]
      %v1939 = vld [vmem:[%s12 + $0x498] sm:$0xff]
      %v1940 = vld [vmem:[%s12 + $0x4a0] sm:$0xff]
      %v1941 = vld [vmem:[%s12 + $0x4a8] sm:$0xff]
      %v1942 = vld [vmem:[%s12 + $0x4b0] sm:$0xff]
      %v1943 = vld [vmem:[%s12 + $0x4b8] sm:$0xff]
      %v1944 = vld [vmem:[%s12 + $0x4c0] sm:$0xff]
      %v1945 = vld [vmem:[%s12 + $0x4c8] sm:$0xff]
      %v1946 = vld [vmem:[%s12 + $0x4d0] sm:$0xff]
      %v1947 = vld [vmem:[%s12 + $0x4d8] sm:$0xff]
      %v1948 = vld [vmem:[%s12 + $0x4e0] sm:$0xff]
      %v1949 = vld [vmem:[%s12 + $0x4e8] sm:$0xff]
      %v1950 = vld [vmem:[%s12 + $0x4f0] sm:$0xff]
      %v1951 = vld [vmem:[%s12 + $0x4f8] sm:$0xff]
      %v1952 = vld [vmem:[%s12 + $0x500] sm:$0xff]
      %v1953 = vld [vmem:[%s12 + $0x508] sm:$0xff]
      %v1954 = vld [vmem:[%s12 + $0x510] sm:$0xff]
      %v1955 = vld [vmem:[%s12 + $0x518] sm:$0xff]
      %v1956 = vld [vmem:[%s12 + $0x520] sm:$0xff]
      %v1957 = vld [vmem:[%s12 + $0x528] sm:$0xff]
      %v1958 = vld [vmem:[%s12 + $0x530] sm:$0xff]
      %v1959 = vld [vmem:[%s12 + $0x538] sm:$0xff]
      %v1960 = vld [vmem:[%s12 + $0x540] sm:$0xff]
      %v1961 = vld [vmem:[%s12 + $0x548] sm:$0xff]
      %v1962 = vld [vmem:[%s12 + $0x550] sm:$0xff]
      %v1963 = vld [vmem:[%s12 + $0x558] sm:$0xff]
      %v1964 = vld [vmem:[%s12 + $0x560] sm:$0xff]
      %v1965 = vld [vmem:[%s12 + $0x568] sm:$0xff]
      %v1966 = vld [vmem:[%s12 + $0x570] sm:$0xff]
      %v1967 = vld [vmem:[%s12 + $0x578] sm:$0xff]
      %v1968 = vld [vmem:[%s12 + $0x580] sm:$0xff]
      %v1969 = vld [vmem:[%s12 + $0x588] sm:$0xff]
      %v1970 = vld [vmem:[%s12 + $0x590] sm:$0xff]
      %v1971 = vld [vmem:[%s12 + $0x598] sm:$0xff]
      %v1972 = vld [vmem:[%s12 + $0x5a0] sm:$0xff]
      %v1973 = vld [vmem:[%s12 + $0x5a8] sm:$0xff]
      %v1974 = vld [vmem:[%s12 + $0x5b0] sm:$0xff]
      %v1975 = vld [vmem:[%s12 + $0x5b8] sm:$0xff]
      %v1976 = vld [vmem:[%s12 + $0x5c0] sm:$0xff]
      %v1977 = vld [vmem:[%s12 + $0x5c8] sm:$0xff]
      %v1978 = vld [vmem:[%s12 + $0x5d0] sm:$0xff]
      %v1979 = vld [vmem:[%s12 + $0x5d8] sm:$0xff]
      %v1980 = vld [vmem:[%s12 + $0x5e0] sm:$0xff]
      %v1981 = vld [vmem:[%s12 + $0x5e8] sm:$0xff]
      %v1982 = vld [vmem:[%s12 + $0x5f0] sm:$0xff]
      %v1983 = vld [vmem:[%s12 + $0x5f8] sm:$0xff]
      %v1984 = vld [vmem:[%s12 + $0x600] sm:$0xff]
      %v1985 = vld [vmem:[%s12 + $0x608] sm:$0xff]
      %v1986 = vld [vmem:[%s12 + $0x610] sm:$0xff]
      %v1987 = vld [vmem:[%s12 + $0x618] sm:$0xff]
      %v1988 = vld [vmem:[%s12 + $0x620] sm:$0xff]
      %v1989 = vld [vmem:[%s12 + $0x628] sm:$0xff]
      %v1990 = vld [vmem:[%s12 + $0x630] sm:$0xff]
      %v1991 = vld [vmem:[%s12 + $0x638] sm:$0xff]
      %v1992 = vld [vmem:[%s12 + $0x640] sm:$0xff]
      %v1993 = vld [vmem:[%s12 + $0x648] sm:$0xff]
      %v1994 = vld [vmem:[%s12 + $0x650] sm:$0xff]
      %v1995 = vld [vmem:[%s12 + $0x658] sm:$0xff]
      %v1996 = vld [vmem:[%s12 + $0x660] sm:$0xff]
      %v1997 = vld [vmem:[%s12 + $0x668] sm:$0xff]
      %v1998 = vld [vmem:[%s12 + $0x670] sm:$0xff]
      %v1999 = vld [vmem:[%s12 + $0x678] sm:$0xff]
      %v2000 = vld [vmem:[%s12 + $0x680] sm:$0xff]
      %v2001 = vld [vmem:[%s12 + $0x688] sm:$0xff]
      %v2002 = vld [vmem:[%s12 + $0x690] sm:$0xff]
      %v2003 = vld [vmem:[%s12 + $0x698] sm:$0xff]
      %v2004 = vld [vmem:[%s12 + $0x6a0] sm:$0xff]
      %v2005 = vld [vmem:[%s12 + $0x6a8] sm:$0xff]
      %v2006 = vld [vmem:[%s12 + $0x6b0] sm:$0xff]
      %v2007 = vld [vmem:[%s12 + $0x6b8] sm:$0xff]
      %v2008 = vld [vmem:[%s12 + $0x6c0] sm:$0xff]
      %v2009 = vld [vmem:[%s12 + $0x6c8] sm:$0xff]
      %v2010 = vld [vmem:[%s12 + $0x6d0] sm:$0xff]
      %v2011 = vld [vmem:[%s12 + $0x6d8] sm:$0xff]
      %v2012 = vld [vmem:[%s12 + $0x6e0] sm:$0xff]
      %v2013 = vld [vmem:[%s12 + $0x6e8] sm:$0xff]
      %v2014 = vld [vmem:[%s12 + $0x6f0] sm:$0xff]
      %v2015 = vld [vmem:[%s12 + $0x6f8] sm:$0xff]
      %v2016 = vld [vmem:[%s12 + $0x700] sm:$0xff]
      %v2017 = vld [vmem:[%s12 + $0x708] sm:$0xff]
      %v2018 = vld [vmem:[%s12 + $0x710] sm:$0xff]
      %v2019 = vld [vmem:[%s12 + $0x718] sm:$0xff]
      %v2020 = vld [vmem:[%s12 + $0x720] sm:$0xff]
      %v2021 = vld [vmem:[%s12 + $0x728] sm:$0xff]
      %v2022 = vld [vmem:[%s12 + $0x730] sm:$0xff]
      %v2023 = vld [vmem:[%s12 + $0x738] sm:$0xff]
      %v2024 = vld [vmem:[%s12 + $0x740] sm:$0xff]
      %v2025 = vld [vmem:[%s12 + $0x748] sm:$0xff]
      %v2026 = vld [vmem:[%s12 + $0x750] sm:$0xff]
      %v2027 = vld [vmem:[%s12 + $0x758] sm:$0xff]
      %v2028 = vld [vmem:[%s12 + $0x760] sm:$0xff]
      %v2029 = vld [vmem:[%s12 + $0x768] sm:$0xff]
      %v2030 = vld [vmem:[%s12 + $0x770] sm:$0xff]
      %v2031 = vld [vmem:[%s12 + $0x778] sm:$0xff]
      %v2032 = vld [vmem:[%s12 + $0x780] sm:$0xff]
      %v2033 = vld [vmem:[%s12 + $0x788] sm:$0xff]
      %v2034 = vld [vmem:[%s12 + $0x790] sm:$0xff]
      %v2035 = vld [vmem:[%s12 + $0x798] sm:$0xff]
      %v2036 = vld [vmem:[%s12 + $0x7a0] sm:$0xff]
      %v2037 = vld [vmem:[%s12 + $0x7a8] sm:$0xff]
      %v2038 = vld [vmem:[%s12 + $0x7b0] sm:$0xff]
      %v2039 = vld [vmem:[%s12 + $0x7b8] sm:$0xff]
      %v2040 = vld [vmem:[%s12 + $0x7c0] sm:$0xff]
      %v2041 = vld [vmem:[%s12 + $0x7c8] sm:$0xff]
      %v2042 = vld [vmem:[%s12 + $0x7d0] sm:$0xff]
      %v2043 = vld [vmem:[%s12 + $0x7d8] sm:$0xff]
      %v2044 = vld [vmem:[%s12 + $0x7e0] sm:$0xff]
      %v2045 = vld [vmem:[%s12 + $0x7e8] sm:$0xff]
      %v2046 = vld [vmem:[%s12 + $0x7f0] sm:$0xff]
      %v2047 = vld [vmem:[%s12 + $0x7f8] sm:$0xff]
      %v2048 = vld [vmem:[%s12 + $0x800] sm:$0xff]
      %v2049 = vld [vmem:[%s12 + $0x808] sm:$0xff]
      %v2050 = vld [vmem:[%s12 + $0x810] sm:$0xff]
      %v2051 = vld [vmem:[%s12 + $0x818] sm:$0xff]
      %v2052 = vld [vmem:[%s12 + $0x820] sm:$0xff]
      %v2053 = vld [vmem:[%s12 + $0x828] sm:$0xff]
      %v2054 = vld [vmem:[%s12 + $0x830] sm:$0xff]
      %v2055 = vld [vmem:[%s12 + $0x838] sm:$0xff]
      %v2056 = vld [vmem:[%s12 + $0x840] sm:$0xff]
      %v2057 = vld [vmem:[%s12 + $0x848] sm:$0xff]
      %v2058 = vld [vmem:[%s12 + $0x850] sm:$0xff]
      %v2059 = vld [vmem:[%s12 + $0x858] sm:$0xff]
      %v2060 = vld [vmem:[%s12 + $0x860] sm:$0xff]
      %v2061 = vld [vmem:[%s12 + $0x868] sm:$0xff]
      %v2062 = vld [vmem:[%s12 + $0x870] sm:$0xff]
      %v2063 = vld [vmem:[%s12 + $0x878] sm:$0xff]
      %v2064 = vld [vmem:[%s12 + $0x880] sm:$0xff]
      %v2065 = vld [vmem:[%s12 + $0x888] sm:$0xff]
      %v2066 = vld [vmem:[%s12 + $0x890] sm:$0xff]
      %v2067 = vld [vmem:[%s12 + $0x898] sm:$0xff]
      %v2068 = vld [vmem:[%s12 + $0x8a0] sm:$0xff]
      %v2069 = vld [vmem:[%s12 + $0x8a8] sm:$0xff]
      %v2070 = vld [vmem:[%s12 + $0x8b0] sm:$0xff]
      %v2071 = vld [vmem:[%s12 + $0x8b8] sm:$0xff]
      %v2072 = vld [vmem:[%s12 + $0x8c0] sm:$0xff]
      %v2073 = vld [vmem:[%s12 + $0x8c8] sm:$0xff]
      %v2074 = vld [vmem:[%s12 + $0x8d0] sm:$0xff]
      %v2075 = vld [vmem:[%s12 + $0x8d8] sm:$0xff]
      %v2076 = vld [vmem:[%s12 + $0x8e0] sm:$0xff]
      %v2077 = vld [vmem:[%s12 + $0x8e8] sm:$0xff]
      %v2078 = vld [vmem:[%s12 + $0x8f0] sm:$0xff]
      %v2079 = vld [vmem:[%s12 + $0x8f8] sm:$0xff]
      %v2080 = vld [vmem:[%s12 + $0x900] sm:$0xff]
      %v2081 = vld [vmem:[%s12 + $0x908] sm:$0xff]
      %v2082 = vld [vmem:[%s12 + $0x910] sm:$0xff]
      %v2083 = vld [vmem:[%s12 + $0x918] sm:$0xff]
      %v2084 = vld [vmem:[%s12 + $0x920] sm:$0xff]
      %v2085 = vld [vmem:[%s12 + $0x928] sm:$0xff]
      %v2086 = vld [vmem:[%s12 + $0x930] sm:$0xff]
      %v2087 = vld [vmem:[%s12 + $0x938] sm:$0xff]
      %v2088 = vld [vmem:[%s12 + $0x940] sm:$0xff]
      %v2089 = vld [vmem:[%s12 + $0x948] sm:$0xff]
      %v2090 = vld [vmem:[%s12 + $0x950] sm:$0xff]
      %v2091 = vld [vmem:[%s12 + $0x958] sm:$0xff]
      %v2092 = vld [vmem:[%s12 + $0x960] sm:$0xff]
      %v2093 = vld [vmem:[%s12 + $0x968] sm:$0xff]
      %v2094 = vld [vmem:[%s12 + $0x970] sm:$0xff]
      %v2095 = vld [vmem:[%s12 + $0x978] sm:$0xff]
      %v2096 = vld [vmem:[%s12 + $0x980] sm:$0xff]
      %v2097 = vld [vmem:[%s12 + $0x988] sm:$0xff]
      %v2098 = vld [vmem:[%s12 + $0x990] sm:$0xff]
      %v2099 = vld [vmem:[%s12 + $0x998] sm:$0xff]
      %v2100 = vld [vmem:[%s12 + $0x9a0] sm:$0xff]
      %v2101 = vld [vmem:[%s12 + $0x9a8] sm:$0xff]
      %v2102 = vld [vmem:[%s12 + $0x9b0] sm:$0xff]
      %v2103 = vld [vmem:[%s12 + $0x9b8] sm:$0xff]
      %v2104 = vld [vmem:[%s12 + $0x9c0] sm:$0xff]
      %v2105 = vld [vmem:[%s12 + $0x9c8] sm:$0xff]
      %v2106 = vld [vmem:[%s12 + $0x9d0] sm:$0xff]
      %v2107 = vld [vmem:[%s12 + $0x9d8] sm:$0xff]
      %v2108 = vld [vmem:[%s12 + $0x9e0] sm:$0xff]
      %v2109 = vld [vmem:[%s12 + $0x9e8] sm:$0xff]
      %v2110 = vld [vmem:[%s12 + $0x9f0] sm:$0xff]
      %v2111 = vld [vmem:[%s12 + $0x9f8] sm:$0xff]
      %v2112 = vld [vmem:[%s12 + $0xa00] sm:$0xff]
      %v2113 = vld [vmem:[%s12 + $0xa08] sm:$0xff]
      %v2114 = vld [vmem:[%s12 + $0xa10] sm:$0xff]
      %v2115 = vld [vmem:[%s12 + $0xa18] sm:$0xff]
      %v2116 = vld [vmem:[%s12 + $0xa20] sm:$0xff]
      %v2117 = vld [vmem:[%s12 + $0xa28] sm:$0xff]
      %v2118 = vld [vmem:[%s12 + $0xa30] sm:$0xff]
      %v2119 = vld [vmem:[%s12 + $0xa38] sm:$0xff]
      %v2120 = vld [vmem:[%s12 + $0xa40] sm:$0xff]
      %v2121 = vld [vmem:[%s12 + $0xa48] sm:$0xff]
      %v2122 = vld [vmem:[%s12 + $0xa50] sm:$0xff]
      %v2123 = vld [vmem:[%s12 + $0xa58] sm:$0xff]
      %v2124 = vld [vmem:[%s12 + $0xa60] sm:$0xff]
      %v2125 = vld [vmem:[%s12 + $0xa68] sm:$0xff]
      %v2126 = vld [vmem:[%s12 + $0xa70] sm:$0xff]
      %v2127 = vld [vmem:[%s12 + $0xa78] sm:$0xff]
      %v2128 = vld [vmem:[%s12 + $0xa80] sm:$0xff]
      %v2129 = vld [vmem:[%s12 + $0xa88] sm:$0xff]
      %v2130 = vld [vmem:[%s12 + $0xa90] sm:$0xff]
      %v2131 = vld [vmem:[%s12 + $0xa98] sm:$0xff]
      %v2132 = vld [vmem:[%s12 + $0xaa0] sm:$0xff]
      %v2133 = vld [vmem:[%s12 + $0xaa8] sm:$0xff]
      %v2134 = vld [vmem:[%s12 + $0xab0] sm:$0xff]
      %v2135 = vld [vmem:[%s12 + $0xab8] sm:$0xff]
      %v2136 = vld [vmem:[%s12 + $0xac0] sm:$0xff]
      %v2137 = vld [vmem:[%s12 + $0xac8] sm:$0xff]
      %v2138 = vld [vmem:[%s12 + $0xad0] sm:$0xff]
      %v2139 = vld [vmem:[%s12 + $0xad8] sm:$0xff]
      %v2140 = vld [vmem:[%s12 + $0xae0] sm:$0xff]
      %v2141 = vld [vmem:[%s12 + $0xae8] sm:$0xff]
      %v2142 = vld [vmem:[%s12 + $0xaf0] sm:$0xff]
      %v2143 = vld [vmem:[%s12 + $0xaf8] sm:$0xff]
      %v2144 = vld [vmem:[%s12 + $0xb00] sm:$0xff]
      %v2145 = vld [vmem:[%s12 + $0xb08] sm:$0xff]
      %v2146 = vld [vmem:[%s12 + $0xb10] sm:$0xff]
      %v2147 = vld [vmem:[%s12 + $0xb18] sm:$0xff]
      %v2148 = vld [vmem:[%s12 + $0xb20] sm:$0xff]
      %v2149 = vld [vmem:[%s12 + $0xb28] sm:$0xff]
      %v2150 = vld [vmem:[%s12 + $0xb30] sm:$0xff]
      %v2151 = vld [vmem:[%s12 + $0xb38] sm:$0xff]
      %v2152 = vld [vmem:[%s12 + $0xb40] sm:$0xff]
      %v2153 = vld [vmem:[%s12 + $0xb48] sm:$0xff]
      %v2154 = vld [vmem:[%s12 + $0xb50] sm:$0xff]
      %v2155 = vld [vmem:[%s12 + $0xb58] sm:$0xff]
      %v2156 = vld [vmem:[%s12 + $0xb60] sm:$0xff]
      %v2157 = vld [vmem:[%s12 + $0xb68] sm:$0xff]
      %v2158 = vld [vmem:[%s12 + $0xb70] sm:$0xff]
      %v2159 = vld [vmem:[%s12 + $0xb78] sm:$0xff]
      %v2160 = vld [vmem:[%s12 + $0xb80] sm:$0xff]
      %v2161 = vld [vmem:[%s12 + $0xb88] sm:$0xff]
      %v2162 = vld [vmem:[%s12 + $0xb90] sm:$0xff]
      %v2163 = vld [vmem:[%s12 + $0xb98] sm:$0xff]
      %v2164 = vld [vmem:[%s12 + $0xba0] sm:$0xff]
      %v2165 = vld [vmem:[%s12 + $0xba8] sm:$0xff]
      %v2166 = vld [vmem:[%s12 + $0xbb0] sm:$0xff]
      %v2167 = vld [vmem:[%s12 + $0xbb8] sm:$0xff]
      %v2168 = vld [vmem:[%s12 + $0xbc0] sm:$0xff]
      %v2169 = vld [vmem:[%s12 + $0xbc8] sm:$0xff]
      %v2170 = vld [vmem:[%s12 + $0xbd0] sm:$0xff]
      %v2171 = vld [vmem:[%s12 + $0xbd8] sm:$0xff]
      %v2172 = vld [vmem:[%s12 + $0xbe0] sm:$0xff]
      %v2173 = vld [vmem:[%s12 + $0xbe8] sm:$0xff]
      %v2174 = vld [vmem:[%s12 + $0xbf0] sm:$0xff]
      %v2175 = vld [vmem:[%s12 + $0xbf8] sm:$0xff]
      %v2176 = vld [vmem:[%s12 + $0xc00] sm:$0xff]
      %v2177 = vld [vmem:[%s12 + $0xc08] sm:$0xff]
      %v2178 = vld [vmem:[%s12 + $0xc10] sm:$0xff]
      %v2179 = vld [vmem:[%s12 + $0xc18] sm:$0xff]
      %v2180 = vld [vmem:[%s12 + $0xc20] sm:$0xff]
      %v2181 = vld [vmem:[%s12 + $0xc28] sm:$0xff]
      %v2182 = vld [vmem:[%s12 + $0xc30] sm:$0xff]
      %v2183 = vld [vmem:[%s12 + $0xc38] sm:$0xff]
      %v2184 = vld [vmem:[%s12 + $0xc40] sm:$0xff]
      %v2185 = vld [vmem:[%s12 + $0xc48] sm:$0xff]
      %v2186 = vld [vmem:[%s12 + $0xc50] sm:$0xff]
      %v2187 = vld [vmem:[%s12 + $0xc58] sm:$0xff]
      %v2188 = vld [vmem:[%s12 + $0xc60] sm:$0xff]
      %v2189 = vld [vmem:[%s12 + $0xc68] sm:$0xff]
      %v2190 = vld [vmem:[%s12 + $0xc70] sm:$0xff]
      %v2191 = vld [vmem:[%s12 + $0xc78] sm:$0xff]
      %v2192 = vld [vmem:[%s12 + $0xc80] sm:$0xff]
      %v2193 = vld [vmem:[%s12 + $0xc88] sm:$0xff]
      %v2194 = vld [vmem:[%s12 + $0xc90] sm:$0xff]
      %v2195 = vld [vmem:[%s12 + $0xc98] sm:$0xff]
      %v2196 = vld [vmem:[%s12 + $0xca0] sm:$0xff]
      %v2197 = vld [vmem:[%s12 + $0xca8] sm:$0xff]
      %v2198 = vld [vmem:[%s12 + $0xcb0] sm:$0xff]
      %v2199 = vld [vmem:[%s12 + $0xcb8] sm:$0xff]
      %v2200 = vld [vmem:[%s12 + $0xcc0] sm:$0xff]
      %v2201 = vld [vmem:[%s12 + $0xcc8] sm:$0xff]
      %v2202 = vld [vmem:[%s12 + $0xcd0] sm:$0xff]
      %v2203 = vld [vmem:[%s12 + $0xcd8] sm:$0xff]
      %v2204 = vld [vmem:[%s12 + $0xce0] sm:$0xff]
      %v2205 = vld [vmem:[%s12 + $0xce8] sm:$0xff]
      %v2206 = vld [vmem:[%s12 + $0xcf0] sm:$0xff]
      %v2207 = vld [vmem:[%s12 + $0xcf8] sm:$0xff]
      %v2208 = vld [vmem:[%s12 + $0xd00] sm:$0xff]
      %v2209 = vld [vmem:[%s12 + $0xd08] sm:$0xff]
      %v2210 = vld [vmem:[%s12 + $0xd10] sm:$0xff]
      %v2211 = vld [vmem:[%s12 + $0xd18] sm:$0xff]
      %v2212 = vld [vmem:[%s12 + $0xd20] sm:$0xff]
      %v2213 = vld [vmem:[%s12 + $0xd28] sm:$0xff]
      %v2214 = vld [vmem:[%s12 + $0xd30] sm:$0xff]
      %v2215 = vld [vmem:[%s12 + $0xd38] sm:$0xff]
      %v2216 = vld [vmem:[%s12 + $0xd40] sm:$0xff]
      %v2217 = vld [vmem:[%s12 + $0xd48] sm:$0xff]
      %v2218 = vld [vmem:[%s12 + $0xd50] sm:$0xff]
      %v2219 = vld [vmem:[%s12 + $0xd58] sm:$0xff]
      %v2220 = vld [vmem:[%s12 + $0xd60] sm:$0xff]
      %v2221 = vld [vmem:[%s12 + $0xd68] sm:$0xff]
      %v2222 = vld [vmem:[%s12 + $0xd70] sm:$0xff]
      %v2223 = vld [vmem:[%s12 + $0xd78] sm:$0xff]
      %v2224 = vld [vmem:[%s12 + $0xd80] sm:$0xff]
      %v2225 = vld [vmem:[%s12 + $0xd88] sm:$0xff]
      %v2226 = vld [vmem:[%s12 + $0xd90] sm:$0xff]
      %v2227 = vld [vmem:[%s12 + $0xd98] sm:$0xff]
      %v2228 = vld [vmem:[%s12 + $0xda0] sm:$0xff]
      %v2229 = vld [vmem:[%s12 + $0xda8] sm:$0xff]
      %v2230 = vld [vmem:[%s12 + $0xdb0] sm:$0xff]
      %v2231 = vld [vmem:[%s12 + $0xdb8] sm:$0xff]
      %v2232 = vld [vmem:[%s12 + $0xdc0] sm:$0xff]
      %v2233 = vld [vmem:[%s12 + $0xdc8] sm:$0xff]
      %v2234 = vld [vmem:[%s12 + $0xdd0] sm:$0xff]
      %v2235 = vld [vmem:[%s12 + $0xdd8] sm:$0xff]
      %v2236 = vld [vmem:[%s12 + $0xde0] sm:$0xff]
      %v2237 = vld [vmem:[%s12 + $0xde8] sm:$0xff]
      %v2238 = vld [vmem:[%s12 + $0xdf0] sm:$0xff]
      %v2239 = vld [vmem:[%s12 + $0xdf8] sm:$0xff]
      %v2240 = vld [vmem:[%s12 + $0xe00] sm:$0xff]
      %v2241 = vld [vmem:[%s12 + $0xe08] sm:$0xff]
      %v2242 = vld [vmem:[%s12 + $0xe10] sm:$0xff]
      %v2243 = vld [vmem:[%s12 + $0xe18] sm:$0xff]
      %v2244 = vld [vmem:[%s12 + $0xe20] sm:$0xff]
      %v2245 = vld [vmem:[%s12 + $0xe28] sm:$0xff]
      %v2246 = vld [vmem:[%s12 + $0xe30] sm:$0xff]
      %v2247 = vld [vmem:[%s12 + $0xe38] sm:$0xff]
      %v2248 = vld [vmem:[%s12 + $0xe40] sm:$0xff]
      %v2249 = vld [vmem:[%s12 + $0xe48] sm:$0xff]
      %v2250 = vld [vmem:[%s12 + $0xe50] sm:$0xff]
      %v2251 = vld [vmem:[%s12 + $0xe58] sm:$0xff]
      %v2252 = vld [vmem:[%s12 + $0xe60] sm:$0xff]
      %v2253 = vld [vmem:[%s12 + $0xe68] sm:$0xff]
      %v2254 = vld [vmem:[%s12 + $0xe70] sm:$0xff]
      %v2255 = vld [vmem:[%s12 + $0xe78] sm:$0xff]
      %v2256 = vld [vmem:[%s12 + $0xe80] sm:$0xff]
      %v2257 = vld [vmem:[%s12 + $0xe88] sm:$0xff]
      %v2258 = vld [vmem:[%s12 + $0xe90] sm:$0xff]
      %v2259 = vld [vmem:[%s12 + $0xe98] sm:$0xff]
      %v2260 = vld [vmem:[%s12 + $0xea0] sm:$0xff]
      %v2261 = vld [vmem:[%s12 + $0xea8] sm:$0xff]
      %v2262 = vld [vmem:[%s12 + $0xeb0] sm:$0xff]
      %v2263 = vld [vmem:[%s12 + $0xeb8] sm:$0xff]
      %v2264 = vld [vmem:[%s12 + $0xec0] sm:$0xff]
      %v2265 = vld [vmem:[%s12 + $0xec8] sm:$0xff]
      %v2266 = vld [vmem:[%s12 + $0xed0] sm:$0xff]
      %v2267 = vld [vmem:[%s12 + $0xed8] sm:$0xff]
      %v2268 = vld [vmem:[%s12 + $0xee0] sm:$0xff]
      %v2269 = vld [vmem:[%s12 + $0xee8] sm:$0xff]
      %v2270 = vld [vmem:[%s12 + $0xef0] sm:$0xff]
      %v2271 = vld [vmem:[%s12 + $0xef8] sm:$0xff]
      %v2272 = vld [vmem:[%s12 + $0xf00] sm:$0xff]
      %v2273 = vld [vmem:[%s12 + $0xf08] sm:$0xff]
      %v2274 = vld [vmem:[%s12 + $0xf10] sm:$0xff]
      %v2275 = vld [vmem:[%s12 + $0xf18] sm:$0xff]
      %v2276 = vld [vmem:[%s12 + $0xf20] sm:$0xff]
      %v2277 = vld [vmem:[%s12 + $0xf28] sm:$0xff]
      %v2278 = vld [vmem:[%s12 + $0xf30] sm:$0xff]
      %v2279 = vld [vmem:[%s12 + $0xf38] sm:$0xff]
      %v2280 = vld [vmem:[%s12 + $0xf40] sm:$0xff]
      %v2281 = vld [vmem:[%s12 + $0xf48] sm:$0xff]
      %v2282 = vld [vmem:[%s12 + $0xf50] sm:$0xff]
      %v2283 = vld [vmem:[%s12 + $0xf58] sm:$0xff]
      %v2284 = vld [vmem:[%s12 + $0xf60] sm:$0xff]
      %v2285 = vld [vmem:[%s12 + $0xf68] sm:$0xff]
      %v2286 = vld [vmem:[%s12 + $0xf70] sm:$0xff]
      %v2287 = vld [vmem:[%s12 + $0xf78] sm:$0xff]
      %v2288 = vld [vmem:[%s12 + $0xf80] sm:$0xff]
      %v2289 = vld [vmem:[%s12 + $0xf88] sm:$0xff]
      %v2290 = vld [vmem:[%s12 + $0xf90] sm:$0xff]
      %v2291 = vld [vmem:[%s12 + $0xf98] sm:$0xff]
      %v2292 = vld [vmem:[%s12 + $0xfa0] sm:$0xff]
      %v2293 = vld [vmem:[%s12 + $0xfa8] sm:$0xff]
      %v2294 = vld [vmem:[%s12 + $0xfb0] sm:$0xff]
      %v2295 = vld [vmem:[%s12 + $0xfb8] sm:$0xff]
      %v2296 = vld [vmem:[%s12 + $0xfc0] sm:$0xff]
      %v2297 = vld [vmem:[%s12 + $0xfc8] sm:$0xff]
      %v2298 = vld [vmem:[%s12 + $0xfd0] sm:$0xff]
      %v2299 = vld [vmem:[%s12 + $0xfd8] sm:$0xff]
      %v2300 = vld [vmem:[%s12 + $0xfe0] sm:$0xff]
      %v2301 = vld [vmem:[%s12 + $0xfe8] sm:$0xff]
      %v2302 = vld [vmem:[%s12 + $0xff0] sm:$0xff]
      %v2303 = vld [vmem:[%s12 + $0xff8] sm:$0xff]
      %v2304 = vld [vmem:[%s12 + $0x1000] sm:$0xff]
      %v2305 = vld [vmem:[%s12 + $0x1008] sm:$0xff]
      %v2306 = vld [vmem:[%s12 + $0x1010] sm:$0xff]
      %v2307 = vld [vmem:[%s12 + $0x1018] sm:$0xff]
      %v2308 = vld [vmem:[%s12 + $0x1020] sm:$0xff]
      %v2309 = vld [vmem:[%s12 + $0x1028] sm:$0xff]
      %v2310 = vld [vmem:[%s12 + $0x1030] sm:$0xff]
      %v2311 = vld [vmem:[%s12 + $0x1038] sm:$0xff]
      %v2312 = vld [vmem:[%s12 + $0x1040] sm:$0xff]
      %v2313 = vld [vmem:[%s12 + $0x1048] sm:$0xff]
      %v2314 = vld [vmem:[%s12 + $0x1050] sm:$0xff]
      %v2315 = vld [vmem:[%s12 + $0x1058] sm:$0xff]
      %v2316 = vld [vmem:[%s12 + $0x1060] sm:$0xff]
      %v2317 = vld [vmem:[%s12 + $0x1068] sm:$0xff]
      %v2318 = vld [vmem:[%s12 + $0x1070] sm:$0xff]
      %v2319 = vld [vmem:[%s12 + $0x1078] sm:$0xff]
      %v2320 = vld [vmem:[%s12 + $0x1080] sm:$0xff]
      %v2321 = vld [vmem:[%s12 + $0x1088] sm:$0xff]
      %v2322 = vld [vmem:[%s12 + $0x1090] sm:$0xff]
      %v2323 = vld [vmem:[%s12 + $0x1098] sm:$0xff]
      %v2324 = vld [vmem:[%s12 + $0x10a0] sm:$0xff]
      %v2325 = vld [vmem:[%s12 + $0x10a8] sm:$0xff]
      %v2326 = vld [vmem:[%s12 + $0x10b0] sm:$0xff]
      %v2327 = vld [vmem:[%s12 + $0x10b8] sm:$0xff]
      %v2328 = vld [vmem:[%s12 + $0x10c0] sm:$0xff]
      %v2329 = vld [vmem:[%s12 + $0x10c8] sm:$0xff]
      %v2330 = vld [vmem:[%s12 + $0x10d0] sm:$0xff]
      %v2331 = vld [vmem:[%s12 + $0x10d8] sm:$0xff]
      %v2332 = vld [vmem:[%s12 + $0x10e0] sm:$0xff]
      %v2333 = vld [vmem:[%s12 + $0x10e8] sm:$0xff]
      %v2334 = vld [vmem:[%s12 + $0x10f0] sm:$0xff]
      %v2335 = vld [vmem:[%s12 + $0x10f8] sm:$0xff]
      %v2336 = vld [vmem:[%s12 + $0x1100] sm:$0xff]
      %v2337 = vld [vmem:[%s12 + $0x1108] sm:$0xff]
      %v2338 = vld [vmem:[%s12 + $0x1110] sm:$0xff]
      %v2339 = vld [vmem:[%s12 + $0x1118] sm:$0xff]
      %v2340 = vld [vmem:[%s12 + $0x1120] sm:$0xff]
      %v2341 = vld [vmem:[%s12 + $0x1128] sm:$0xff]
      %v2342 = vld [vmem:[%s12 + $0x1130] sm:$0xff]
      %v2343 = vld [vmem:[%s12 + $0x1138] sm:$0xff]
      %v2344 = vld [vmem:[%s12 + $0x1140] sm:$0xff]
      %v2345 = vld [vmem:[%s12 + $0x1148] sm:$0xff]
      %v2346 = vld [vmem:[%s12 + $0x1150] sm:$0xff]
      %v2347 = vld [vmem:[%s12 + $0x1158] sm:$0xff]
      %v2348 = vld [vmem:[%s12 + $0x1160] sm:$0xff]
      %v2349 = vld [vmem:[%s12 + $0x1168] sm:$0xff]
      %v2350 = vld [vmem:[%s12 + $0x1170] sm:$0xff]
      %v2351 = vld [vmem:[%s12 + $0x1178] sm:$0xff]
      %v2352 = vld [vmem:[%s12 + $0x1180] sm:$0xff]
      %v2353 = vld [vmem:[%s12 + $0x1188] sm:$0xff]
      %v2354 = vld [vmem:[%s12 + $0x1190] sm:$0xff]
      %v2355 = vld [vmem:[%s12 + $0x1198] sm:$0xff]
      %v2356 = vld [vmem:[%s12 + $0x11a0] sm:$0xff]
      %v2357 = vld [vmem:[%s12 + $0x11a8] sm:$0xff]
      %v2358 = vld [vmem:[%s12 + $0x11b0] sm:$0xff]
      %v2359 = vld [vmem:[%s12 + $0x11b8] sm:$0xff]
      %v2360 = vld [vmem:[%s12 + $0x11c0] sm:$0xff]
      %v2361 = vld [vmem:[%s12 + $0x11c8] sm:$0xff]
      %v2362 = vld [vmem:[%s12 + $0x11d0] sm:$0xff]
      %v2363 = vld [vmem:[%s12 + $0x11d8] sm:$0xff]
      %v2364 = vld [vmem:[%s12 + $0x11e0] sm:$0xff]
      %v2365 = vld [vmem:[%s12 + $0x11e8] sm:$0xff]
      %v2366 = vld [vmem:[%s12 + $0x11f0] sm:$0xff]
      %v2367 = vld [vmem:[%s12 + $0x11f8] sm:$0xff]
      %v2368 = vld [vmem:[%s12 + $0x1200] sm:$0xff]
      %v2369 = vld [vmem:[%s12 + $0x1208] sm:$0xff]
      %v2370 = vld [vmem:[%s12 + $0x1210] sm:$0xff]
      %v2371 = vld [vmem:[%s12 + $0x1218] sm:$0xff]
      %v2372 = vld [vmem:[%s12 + $0x1220] sm:$0xff]
      %v2373 = vld [vmem:[%s12 + $0x1228] sm:$0xff]
      %v2374 = vld [vmem:[%s12 + $0x1230] sm:$0xff]
      %v2375 = vld [vmem:[%s12 + $0x1238] sm:$0xff]
      %v2376 = vld [vmem:[%s12 + $0x1240] sm:$0xff]
      %v2377 = vld [vmem:[%s12 + $0x1248] sm:$0xff]
      %v2378 = vld [vmem:[%s12 + $0x1250] sm:$0xff]
      %v2379 = vld [vmem:[%s12 + $0x1258] sm:$0xff]
      %v2380 = vld [vmem:[%s12 + $0x1260] sm:$0xff]
      %v2381 = vld [vmem:[%s12 + $0x1268] sm:$0xff]
      %v2382 = vld [vmem:[%s12 + $0x1270] sm:$0xff]
      %v2383 = vld [vmem:[%s12 + $0x1278] sm:$0xff]
      %v2384 = vld [vmem:[%s12 + $0x1280] sm:$0xff]
      %v2385 = vld [vmem:[%s12 + $0x1288] sm:$0xff]
      %v2386 = vld [vmem:[%s12 + $0x1290] sm:$0xff]
      %v2387 = vld [vmem:[%s12 + $0x1298] sm:$0xff]
      %v2388 = vld [vmem:[%s12 + $0x12a0] sm:$0xff]
      %v2389 = vld [vmem:[%s12 + $0x12a8] sm:$0xff]
      %v2390 = vld [vmem:[%s12 + $0x12b0] sm:$0xff]
      %v2391 = vld [vmem:[%s12 + $0x12b8] sm:$0xff]
      %v2392 = vld [vmem:[%s12 + $0x12c0] sm:$0xff]
      %v2393 = vld [vmem:[%s12 + $0x12c8] sm:$0xff]
      %v2394 = vld [vmem:[%s12 + $0x12d0] sm:$0xff]
      %v2395 = vld [vmem:[%s12 + $0x12d8] sm:$0xff]
      %v2396 = vld [vmem:[%s12 + $0x12e0] sm:$0xff]
      %v2397 = vld [vmem:[%s12 + $0x12e8] sm:$0xff]
      %v2398 = vld [vmem:[%s12 + $0x12f0] sm:$0xff]
      %v2399 = vld [vmem:[%s12 + $0x12f8] sm:$0xff]
      %v2400 = vld [vmem:[%s12 + $0x1300] sm:$0xff]
      %v2401 = vld [vmem:[%s12 + $0x1308] sm:$0xff]
      %v2402 = vld [vmem:[%s12 + $0x1310] sm:$0xff]
      %v2403 = vld [vmem:[%s12 + $0x1318] sm:$0xff]
      %v2404 = vld [vmem:[%s12 + $0x1320] sm:$0xff]
      %v2405 = vld [vmem:[%s12 + $0x1328] sm:$0xff]
      %v2406 = vld [vmem:[%s12 + $0x1330] sm:$0xff]
      %v2407 = vld [vmem:[%s12 + $0x1338] sm:$0xff]
      %v2408 = vld [vmem:[%s12 + $0x1340] sm:$0xff]
      %v2409 = vld [vmem:[%s12 + $0x1348] sm:$0xff]
      %v2410 = vld [vmem:[%s12 + $0x1350] sm:$0xff]
      %v2411 = vld [vmem:[%s12 + $0x1358] sm:$0xff]
      %v2412 = vld [vmem:[%s12 + $0x1360] sm:$0xff]
      %v2413 = vld [vmem:[%s12 + $0x1368] sm:$0xff]
      %v2414 = vld [vmem:[%s12 + $0x1370] sm:$0xff]
      %v2415 = vld [vmem:[%s12 + $0x1378] sm:$0xff]
      %v2416 = vld [vmem:[%s12 + $0x1380] sm:$0xff]
      %v2417 = vld [vmem:[%s12 + $0x1388] sm:$0xff]
      %v2418 = vld [vmem:[%s12 + $0x1390] sm:$0xff]
      %v2419 = vld [vmem:[%s12 + $0x1398] sm:$0xff]
      %v2420 = vld [vmem:[%s12 + $0x13a0] sm:$0xff]
      %v2421 = vld [vmem:[%s12 + $0x13a8] sm:$0xff]
      %v2422 = vld [vmem:[%s12 + $0x13b0] sm:$0xff]
      %v2423 = vld [vmem:[%s12 + $0x13b8] sm:$0xff]
      %v2424 = vld [vmem:[%s12 + $0x13c0] sm:$0xff]
      %v2425 = vld [vmem:[%s12 + $0x13c8] sm:$0xff]
      %v2426 = vld [vmem:[%s12 + $0x13d0] sm:$0xff]
      %v2427 = vld [vmem:[%s12 + $0x13d8] sm:$0xff]
      %v2428 = vld [vmem:[%s12 + $0x13e0] sm:$0xff]
      %v2429 = vld [vmem:[%s12 + $0x13e8] sm:$0xff]
      %v2430 = vld [vmem:[%s12 + $0x13f0] sm:$0xff]
      %v2431 = vld [vmem:[%s12 + $0x13f8] sm:$0xff]
      %v2432 = vld [vmem:[%s12 + $0x1400] sm:$0xff]
      %v2433 = vld [vmem:[%s12 + $0x1408] sm:$0xff]
      %v2434 = vld [vmem:[%s12 + $0x1410] sm:$0xff]
      %v2435 = vld [vmem:[%s12 + $0x1418] sm:$0xff]
      %v2436 = vld [vmem:[%s12 + $0x1420] sm:$0xff]
      %v2437 = vld [vmem:[%s12 + $0x1428] sm:$0xff]
      %v2438 = vld [vmem:[%s12 + $0x1430] sm:$0xff]
      %v2439 = vld [vmem:[%s12 + $0x1438] sm:$0xff]
      %v2440 = vld [vmem:[%s12 + $0x1440] sm:$0xff]
      %v2441 = vld [vmem:[%s12 + $0x1448] sm:$0xff]
      %v2442 = vld [vmem:[%s12 + $0x1450] sm:$0xff]
      %v2443 = vld [vmem:[%s12 + $0x1458] sm:$0xff]
      %v2444 = vld [vmem:[%s12 + $0x1460] sm:$0xff]
      %v2445 = vld [vmem:[%s12 + $0x1468] sm:$0xff]
      %v2446 = vld [vmem:[%s12 + $0x1470] sm:$0xff]
      %v2447 = vld [vmem:[%s12 + $0x1478] sm:$0xff]
      %v2448 = vld [vmem:[%s12 + $0x1480] sm:$0xff]
      %v2449 = vld [vmem:[%s12 + $0x1488] sm:$0xff]
      %v2450 = vld [vmem:[%s12 + $0x1490] sm:$0xff]
      %v2451 = vld [vmem:[%s12 + $0x1498] sm:$0xff]
      %v2452 = vld [vmem:[%s12 + $0x14a0] sm:$0xff]
      %v2453 = vld [vmem:[%s12 + $0x14a8] sm:$0xff]
      %v2454 = vld [vmem:[%s12 + $0x14b0] sm:$0xff]
      %v2455 = vld [vmem:[%s12 + $0x14b8] sm:$0xff]
      %v2456 = vld [vmem:[%s12 + $0x14c0] sm:$0xff]
      %v2457 = vld [vmem:[%s12 + $0x14c8] sm:$0xff]
      %v2458 = vld [vmem:[%s12 + $0x14d0] sm:$0xff]
      %v2459 = vld [vmem:[%s12 + $0x14d8] sm:$0xff]
      %v2460 = vld [vmem:[%s12 + $0x14e0] sm:$0xff]
      %v2461 = vld [vmem:[%s12 + $0x14e8] sm:$0xff]
      %v2462 = vld [vmem:[%s12 + $0x14f0] sm:$0xff]
      %v2463 = vld [vmem:[%s12 + $0x14f8] sm:$0xff]
      %v2464 = vld [vmem:[%s12 + $0x1500] sm:$0xff]
      %v2465 = vld [vmem:[%s12 + $0x1508] sm:$0xff]
      %v2466 = vld [vmem:[%s12 + $0x1510] sm:$0xff]
      %v2467 = vld [vmem:[%s12 + $0x1518] sm:$0xff]
      %v2468 = vld [vmem:[%s12 + $0x1520] sm:$0xff]
      %v2469 = vld [vmem:[%s12 + $0x1528] sm:$0xff]
      %v2470 = vld [vmem:[%s12 + $0x1530] sm:$0xff]
      %v2471 = vld [vmem:[%s12 + $0x1538] sm:$0xff]
      %v2472 = vld [vmem:[%s12 + $0x1540] sm:$0xff]
      %v2473 = vld [vmem:[%s12 + $0x1548] sm:$0xff]
      %v2474 = vld [vmem:[%s12 + $0x1550] sm:$0xff]
      %v2475 = vld [vmem:[%s12 + $0x1558] sm:$0xff]
      %v2476 = vld [vmem:[%s12 + $0x1560] sm:$0xff]
      %v2477 = vld [vmem:[%s12 + $0x1568] sm:$0xff]
      %v2478 = vld [vmem:[%s12 + $0x1570] sm:$0xff]
      %v2479 = vld [vmem:[%s12 + $0x1578] sm:$0xff]
      %v2480 = vld [vmem:[%s12 + $0x1580] sm:$0xff]
      %v2481 = vld [vmem:[%s12 + $0x1588] sm:$0xff]
      %v2482 = vld [vmem:[%s12 + $0x1590] sm:$0xff]
      %v2483 = vld [vmem:[%s12 + $0x1598] sm:$0xff]
      %v2484 = vld [vmem:[%s12 + $0x15a0] sm:$0xff]
      %v2485 = vld [vmem:[%s12 + $0x15a8] sm:$0xff]
      %v2486 = vld [vmem:[%s12 + $0x15b0] sm:$0xff]
      %v2487 = vld [vmem:[%s12 + $0x15b8] sm:$0xff]
      %v2488 = vld [vmem:[%s12 + $0x15c0] sm:$0xff]
      %v2489 = vld [vmem:[%s12 + $0x15c8] sm:$0xff]
      %v2490 = vld [vmem:[%s12 + $0x15d0] sm:$0xff]
      %v2491 = vld [vmem:[%s12 + $0x15d8] sm:$0xff]
      %v2492 = vld [vmem:[%s12 + $0x15e0] sm:$0xff]
      %v2493 = vld [vmem:[%s12 + $0x15e8] sm:$0xff]
      %v2494 = vld [vmem:[%s12 + $0x15f0] sm:$0xff]
      %v2495 = vld [vmem:[%s12 + $0x15f8] sm:$0xff]
      %v2496 = vld [vmem:[%s12 + $0x1600] sm:$0xff]
      %v2497 = vld [vmem:[%s12 + $0x1608] sm:$0xff]
      %v2498 = vld [vmem:[%s12 + $0x1610] sm:$0xff]
      %v2499 = vld [vmem:[%s12 + $0x1618] sm:$0xff]
      %v2500 = vld [vmem:[%s12 + $0x1620] sm:$0xff]
      %v2501 = vld [vmem:[%s12 + $0x1628] sm:$0xff]
      %v2502 = vld [vmem:[%s12 + $0x1630] sm:$0xff]
      %v2503 = vld [vmem:[%s12 + $0x1638] sm:$0xff]
      %v2504 = vld [vmem:[%s12 + $0x1640] sm:$0xff]
      %v2505 = vld [vmem:[%s12 + $0x1648] sm:$0xff]
      %v2506 = vld [vmem:[%s12 + $0x1650] sm:$0xff]
      %v2507 = vld [vmem:[%s12 + $0x1658] sm:$0xff]
      %v2508 = vld [vmem:[%s12 + $0x1660] sm:$0xff]
      %v2509 = vld [vmem:[%s12 + $0x1668] sm:$0xff]
      %v2510 = vld [vmem:[%s12 + $0x1670] sm:$0xff]
      %v2511 = vld [vmem:[%s12 + $0x1678] sm:$0xff]
      %v2512 = vld [vmem:[%s12 + $0x1680] sm:$0xff]
      %v2513 = vld [vmem:[%s12 + $0x1688] sm:$0xff]
      %v2514 = vld [vmem:[%s12 + $0x1690] sm:$0xff]
      %v2515 = vld [vmem:[%s12 + $0x1698] sm:$0xff]
      %v2516 = vld [vmem:[%s12 + $0x16a0] sm:$0xff]
      %v2517 = vld [vmem:[%s12 + $0x16a8] sm:$0xff]
      %v2518 = vld [vmem:[%s12 + $0x16b0] sm:$0xff]
      %v2519 = vld [vmem:[%s12 + $0x16b8] sm:$0xff]
      %v2520 = vld [vmem:[%s12 + $0x16c0] sm:$0xff]
      %v2521 = vld [vmem:[%s12 + $0x16c8] sm:$0xff]
      %v2522 = vld [vmem:[%s12 + $0x16d0] sm:$0xff]
      %v2523 = vld [vmem:[%s12 + $0x16d8] sm:$0xff]
      %v2524 = vld [vmem:[%s12 + $0x16e0] sm:$0xff]
      %v2525 = vld [vmem:[%s12 + $0x16e8] sm:$0xff]
      %v2526 = vld [vmem:[%s12 + $0x16f0] sm:$0xff]
      %v2527 = vld [vmem:[%s12 + $0x16f8] sm:$0xff]
      %v2528 = vld [vmem:[%s12 + $0x1700] sm:$0xff]
      %v2529 = vld [vmem:[%s12 + $0x1708] sm:$0xff]
      %v2530 = vld [vmem:[%s12 + $0x1710] sm:$0xff]
      %v2531 = vld [vmem:[%s12 + $0x1718] sm:$0xff]
      %v2532 = vld [vmem:[%s12 + $0x1720] sm:$0xff]
      %v2533 = vld [vmem:[%s12 + $0x1728] sm:$0xff]
      %v2534 = vld [vmem:[%s12 + $0x1730] sm:$0xff]
      %v2535 = vld [vmem:[%s12 + $0x1738] sm:$0xff]
      %v2536 = vld [vmem:[%s12 + $0x1740] sm:$0xff]
      %v2537 = vld [vmem:[%s12 + $0x1748] sm:$0xff]
      %v2538 = vld [vmem:[%s12 + $0x1750] sm:$0xff]
      %v2539 = vld [vmem:[%s12 + $0x1758] sm:$0xff]
      %v2540 = vld [vmem:[%s12 + $0x1760] sm:$0xff]
      %v2541 = vld [vmem:[%s12 + $0x1768] sm:$0xff]
      %v2542 = vld [vmem:[%s12 + $0x1770] sm:$0xff]
      %v2543 = vld [vmem:[%s12 + $0x1778] sm:$0xff]
      %v2544 = vld [vmem:[%s12 + $0x1780] sm:$0xff]
      %v2545 = vld [vmem:[%s12 + $0x1788] sm:$0xff]
      %v2546 = vld [vmem:[%s12 + $0x1790] sm:$0xff]
      %v2547 = vld [vmem:[%s12 + $0x1798] sm:$0xff]
      %v2548 = vld [vmem:[%s12 + $0x17a0] sm:$0xff]
      %v2549 = vld [vmem:[%s12 + $0x17a8] sm:$0xff]
      %v2550 = vld [vmem:[%s12 + $0x17b0] sm:$0xff]
      %v2551 = vld [vmem:[%s12 + $0x17b8] sm:$0xff]
      %v2552 = vld [vmem:[%s12 + $0x17c0] sm:$0xff]
      %v2553 = vld [vmem:[%s12 + $0x17c8] sm:$0xff]
      %v2554 = vld [vmem:[%s12 + $0x17d0] sm:$0xff]
      %v2555 = vld [vmem:[%s12 + $0x17d8] sm:$0xff]
      %v2556 = vld [vmem:[%s12 + $0x17e0] sm:$0xff]
      %v2557 = vld [vmem:[%s12 + $0x17e8] sm:$0xff]
      %v2558 = vld [vmem:[%s12 + $0x17f0] sm:$0xff]
      %v2559 = vld [vmem:[%s12 + $0x17f8] sm:$0xff]
      %v2560 = vld [vmem:[%s12 + $0x1800] sm:$0xff]
      %v2561 = vld [vmem:[%s12 + $0x1808] sm:$0xff]
      %v2562 = vld [vmem:[%s12 + $0x1810] sm:$0xff]
      %v2563 = vld [vmem:[%s12 + $0x1818] sm:$0xff]
      %v2564 = vld [vmem:[%s12 + $0x1820] sm:$0xff]
      %v2565 = vld [vmem:[%s12 + $0x1828] sm:$0xff]
      %v2566 = vld [vmem:[%s12 + $0x1830] sm:$0xff]
      %v2567 = vld [vmem:[%s12 + $0x1838] sm:$0xff]
      %v2568 = vld [vmem:[%s12 + $0x1840] sm:$0xff]
      %v2569 = vld [vmem:[%s12 + $0x1848] sm:$0xff]
      %v2570 = vld [vmem:[%s12 + $0x1850] sm:$0xff]
      %v2571 = vld [vmem:[%s12 + $0x1858] sm:$0xff]
      %v2572 = vld [vmem:[%s12 + $0x1860] sm:$0xff]
      %v2573 = vld [vmem:[%s12 + $0x1868] sm:$0xff]
      %v2574 = vld [vmem:[%s12 + $0x1870] sm:$0xff]
      %v2575 = vld [vmem:[%s12 + $0x1878] sm:$0xff]
      %v2576 = vld [vmem:[%s12 + $0x1880] sm:$0xff]
      %v2577 = vld [vmem:[%s12 + $0x1888] sm:$0xff]
      %v2578 = vld [vmem:[%s12 + $0x1890] sm:$0xff]
      %v2579 = vld [vmem:[%s12 + $0x1898] sm:$0xff]
      %v2580 = vld [vmem:[%s12 + $0x18a0] sm:$0xff]
      %v2581 = vld [vmem:[%s12 + $0x18a8] sm:$0xff]
      %v2582 = vld [vmem:[%s12 + $0x18b0] sm:$0xff]
      %v2583 = vld [vmem:[%s12 + $0x18b8] sm:$0xff]
      %v2584 = vld [vmem:[%s12 + $0x18c0] sm:$0xff]
      %v2585 = vld [vmem:[%s12 + $0x18c8] sm:$0xff]
      %v2586 = vld [vmem:[%s12 + $0x18d0] sm:$0xff]
      %v2587 = vld [vmem:[%s12 + $0x18d8] sm:$0xff]
      %v2588 = vld [vmem:[%s12 + $0x18e0] sm:$0xff]
      %v2589 = vld [vmem:[%s12 + $0x18e8] sm:$0xff]
      %v2590 = vld [vmem:[%s12 + $0x18f0] sm:$0xff]
      %v2591 = vld [vmem:[%s12 + $0x18f8] sm:$0xff]
      %v2592 = vld [vmem:[%s12 + $0x1900] sm:$0xff]
      %v2593 = vld [vmem:[%s12 + $0x1908] sm:$0xff]
      %v2594 = vld [vmem:[%s12 + $0x1910] sm:$0xff]
      %v2595 = vld [vmem:[%s12 + $0x1918] sm:$0xff]
      %v2596 = vld [vmem:[%s12 + $0x1920] sm:$0xff]
      %v2597 = vld [vmem:[%s12 + $0x1928] sm:$0xff]
      %v2598 = vld [vmem:[%s12 + $0x1930] sm:$0xff]
      %v2599 = vld [vmem:[%s12 + $0x1938] sm:$0xff]
      %v2600 = vld [vmem:[%s12 + $0x1940] sm:$0xff]
      %v2601 = vld [vmem:[%s12 + $0x1948] sm:$0xff]
      %v2602 = vld [vmem:[%s12 + $0x1950] sm:$0xff]
      %v2603 = vld [vmem:[%s12 + $0x1958] sm:$0xff]
      %v2604 = vld [vmem:[%s12 + $0x1960] sm:$0xff]
      %v2605 = vld [vmem:[%s12 + $0x1968] sm:$0xff]
      %v2606 = vld [vmem:[%s12 + $0x1970] sm:$0xff]
      %v2607 = vld [vmem:[%s12 + $0x1978] sm:$0xff]
      %v2608 = vld [vmem:[%s12 + $0x1980] sm:$0xff]
      %v2609 = vld [vmem:[%s12 + $0x1988] sm:$0xff]
      %v2610 = vld [vmem:[%s12 + $0x1990] sm:$0xff]
      %v2611 = vld [vmem:[%s12 + $0x1998] sm:$0xff]
      %v2612 = vld [vmem:[%s12 + $0x19a0] sm:$0xff]
      %v2613 = vld [vmem:[%s12 + $0x19a8] sm:$0xff]
      %v2614 = vld [vmem:[%s12 + $0x19b0] sm:$0xff]
      %v2615 = vld [vmem:[%s12 + $0x19b8] sm:$0xff]
      %v2616 = vld [vmem:[%s12 + $0x19c0] sm:$0xff]
      %v2617 = vld [vmem:[%s12 + $0x19c8] sm:$0xff]
      %v2618 = vld [vmem:[%s12 + $0x19d0] sm:$0xff]
      %v2619 = vld [vmem:[%s12 + $0x19d8] sm:$0xff]
      %v2620 = vld [vmem:[%s12 + $0x19e0] sm:$0xff]
      %v2621 = vld [vmem:[%s12 + $0x19e8] sm:$0xff]
      %v2622 = vld [vmem:[%s12 + $0x19f0] sm:$0xff]
      %v2623 = vld [vmem:[%s12 + $0x19f8] sm:$0xff]
      %v2624 = vld [vmem:[%s12 + $0x1a00] sm:$0xff]
      %v2625 = vld [vmem:[%s12 + $0x1a08] sm:$0xff]
      %v2626 = vld [vmem:[%s12 + $0x1a10] sm:$0xff]
      %v2627 = vld [vmem:[%s12 + $0x1a18] sm:$0xff]
      %v2628 = vld [vmem:[%s12 + $0x1a20] sm:$0xff]
      %v2629 = vld [vmem:[%s12 + $0x1a28] sm:$0xff]
      %v2630 = vld [vmem:[%s12 + $0x1a30] sm:$0xff]
      %v2631 = vld [vmem:[%s12 + $0x1a38] sm:$0xff]
      %v2632 = vld [vmem:[%s12 + $0x1a40] sm:$0xff]
      %v2633 = vld [vmem:[%s12 + $0x1a48] sm:$0xff]
      %v2634 = vld [vmem:[%s12 + $0x1a50] sm:$0xff]
      %v2635 = vld [vmem:[%s12 + $0x1a58] sm:$0xff]
      %v2636 = vld [vmem:[%s12 + $0x1a60] sm:$0xff]
      %v2637 = vld [vmem:[%s12 + $0x1a68] sm:$0xff]
      %v2638 = vld [vmem:[%s12 + $0x1a70] sm:$0xff]
      %v2639 = vld [vmem:[%s12 + $0x1a78] sm:$0xff]
      %v2640 = vld [vmem:[%s12 + $0x1a80] sm:$0xff]
      %v2641 = vld [vmem:[%s12 + $0x1a88] sm:$0xff]
      %v2642 = vld [vmem:[%s12 + $0x1a90] sm:$0xff]
      %v2643 = vld [vmem:[%s12 + $0x1a98] sm:$0xff]
      %v2644 = vld [vmem:[%s12 + $0x1aa0] sm:$0xff]
      %v2645 = vld [vmem:[%s12 + $0x1aa8] sm:$0xff]
      %v2646 = vld [vmem:[%s12 + $0x1ab0] sm:$0xff]
      %v2647 = vld [vmem:[%s12 + $0x1ab8] sm:$0xff]
      %v2648 = vld [vmem:[%s12 + $0x1ac0] sm:$0xff]
      %v2649 = vld [vmem:[%s12 + $0x1ac8] sm:$0xff]
      %v2650 = vld [vmem:[%s12 + $0x1ad0] sm:$0xff]
      %v2651 = vld [vmem:[%s12 + $0x1ad8] sm:$0xff]
      %v2652 = vld [vmem:[%s12 + $0x1ae0] sm:$0xff]
      %v2653 = vld [vmem:[%s12 + $0x1ae8] sm:$0xff]
      %v2654 = vld [vmem:[%s12 + $0x1af0] sm:$0xff]
      %v2655 = vld [vmem:[%s12 + $0x1af8] sm:$0xff]
      %v2656 = vld [vmem:[%s12 + $0x1b00] sm:$0xff]
      %v2657 = vld [vmem:[%s12 + $0x1b08] sm:$0xff]
      %v2658 = vld [vmem:[%s12 + $0x1b10] sm:$0xff]
      %v2659 = vld [vmem:[%s12 + $0x1b18] sm:$0xff]
      %v2660 = vld [vmem:[%s12 + $0x1b20] sm:$0xff]
      %v2661 = vld [vmem:[%s12 + $0x1b28] sm:$0xff]
      %v2662 = vld [vmem:[%s12 + $0x1b30] sm:$0xff]
      %v2663 = vld [vmem:[%s12 + $0x1b38] sm:$0xff]
      %v2664 = vld [vmem:[%s12 + $0x1b40] sm:$0xff]
      %v2665 = vld [vmem:[%s12 + $0x1b48] sm:$0xff]
      %v2666 = vld [vmem:[%s12 + $0x1b50] sm:$0xff]
      %v2667 = vld [vmem:[%s12 + $0x1b58] sm:$0xff]
      %v2668 = vld [vmem:[%s12 + $0x1b60] sm:$0xff]
      %v2669 = vld [vmem:[%s12 + $0x1b68] sm:$0xff]
      %v2670 = vld [vmem:[%s12 + $0x1b70] sm:$0xff]
      %v2671 = vld [vmem:[%s12 + $0x1b78] sm:$0xff]
      %v2672 = vld [vmem:[%s12 + $0x1b80] sm:$0xff]
      %v2673 = vld [vmem:[%s12 + $0x1b88] sm:$0xff]
      %v2674 = vld [vmem:[%s12 + $0x1b90] sm:$0xff]
      %v2675 = vld [vmem:[%s12 + $0x1b98] sm:$0xff]
      %v2676 = vld [vmem:[%s12 + $0x1ba0] sm:$0xff]
      %v2677 = vld [vmem:[%s12 + $0x1ba8] sm:$0xff]
      %v2678 = vld [vmem:[%s12 + $0x1bb0] sm:$0xff]
      %v2679 = vld [vmem:[%s12 + $0x1bb8] sm:$0xff]
      %v2680 = vld [vmem:[%s12 + $0x1bc0] sm:$0xff]
      %v2681 = vld [vmem:[%s12 + $0x1bc8] sm:$0xff]
      %v2682 = vld [vmem:[%s12 + $0x1bd0] sm:$0xff]
      %v2683 = vld [vmem:[%s12 + $0x1bd8] sm:$0xff]
      %v2684 = vld [vmem:[%s12 + $0x1be0] sm:$0xff]
      %v2685 = vld [vmem:[%s12 + $0x1be8] sm:$0xff]
      %v2686 = vld [vmem:[%s12 + $0x1bf0] sm:$0xff]
      %v2687 = vld [vmem:[%s12 + $0x1bf8] sm:$0xff]
      %v2688 = vld [vmem:[%s12 + $0x1c00] sm:$0xff]
      %v2689 = vld [vmem:[%s12 + $0x1c08] sm:$0xff]
      %v2690 = vld [vmem:[%s12 + $0x1c10] sm:$0xff]
      %v2691 = vld [vmem:[%s12 + $0x1c18] sm:$0xff]
      %v2692 = vld [vmem:[%s12 + $0x1c20] sm:$0xff]
      %v2693 = vld [vmem:[%s12 + $0x1c28] sm:$0xff]
      %v2694 = vld [vmem:[%s12 + $0x1c30] sm:$0xff]
      %v2695 = vld [vmem:[%s12 + $0x1c38] sm:$0xff]
      %v2696 = vld [vmem:[%s12 + $0x1c40] sm:$0xff]
      %v2697 = vld [vmem:[%s12 + $0x1c48] sm:$0xff]
      %v2698 = vld [vmem:[%s12 + $0x1c50] sm:$0xff]
      %v2699 = vld [vmem:[%s12 + $0x1c58] sm:$0xff]
      %v2700 = vld [vmem:[%s12 + $0x1c60] sm:$0xff]
      %v2701 = vld [vmem:[%s12 + $0x1c68] sm:$0xff]
      %v2702 = vld [vmem:[%s12 + $0x1c70] sm:$0xff]
      %v2703 = vld [vmem:[%s12 + $0x1c78] sm:$0xff]
      %v2704 = vld [vmem:[%s12 + $0x1c80] sm:$0xff]
      %v2705 = vld [vmem:[%s12 + $0x1c88] sm:$0xff]
      %v2706 = vld [vmem:[%s12 + $0x1c90] sm:$0xff]
      %v2707 = vld [vmem:[%s12 + $0x1c98] sm:$0xff]
      %v2708 = vld [vmem:[%s12 + $0x1ca0] sm:$0xff]
      %v2709 = vld [vmem:[%s12 + $0x1ca8] sm:$0xff]
      %v2710 = vld [vmem:[%s12 + $0x1cb0] sm:$0xff]
      %v2711 = vld [vmem:[%s12 + $0x1cb8] sm:$0xff]
      %v2712 = vld [vmem:[%s12 + $0x1cc0] sm:$0xff]
      %v2713 = vld [vmem:[%s12 + $0x1cc8] sm:$0xff]
      %v2714 = vld [vmem:[%s12 + $0x1cd0] sm:$0xff]
      %v2715 = vld [vmem:[%s12 + $0x1cd8] sm:$0xff]
      %v2716 = vld [vmem:[%s12 + $0x1ce0] sm:$0xff]
      %v2717 = vld [vmem:[%s12 + $0x1ce8] sm:$0xff]
      %v2718 = vld [vmem:[%s12 + $0x1cf0] sm:$0xff]
      %v2719 = vld [vmem:[%s12 + $0x1cf8] sm:$0xff]
      %v2720 = vld [vmem:[%s12 + $0x1d00] sm:$0xff]
      %v2721 = vld [vmem:[%s12 + $0x1d08] sm:$0xff]
      %v2722 = vld [vmem:[%s12 + $0x1d10] sm:$0xff]
      %v2723 = vld [vmem:[%s12 + $0x1d18] sm:$0xff]
      %v2724 = vld [vmem:[%s12 + $0x1d20] sm:$0xff]
      %v2725 = vld [vmem:[%s12 + $0x1d28] sm:$0xff]
      %v2726 = vld [vmem:[%s12 + $0x1d30] sm:$0xff]
      %v2727 = vld [vmem:[%s12 + $0x1d38] sm:$0xff]
      %v2728 = vld [vmem:[%s12 + $0x1d40] sm:$0xff]
      %v2729 = vld [vmem:[%s12 + $0x1d48] sm:$0xff]
      %v2730 = vld [vmem:[%s12 + $0x1d50] sm:$0xff]
      %v2731 = vld [vmem:[%s12 + $0x1d58] sm:$0xff]
      %v2732 = vld [vmem:[%s12 + $0x1d60] sm:$0xff]
      %v2733 = vld [vmem:[%s12 + $0x1d68] sm:$0xff]
      %v2734 = vld [vmem:[%s12 + $0x1d70] sm:$0xff]
      %v2735 = vld [vmem:[%s12 + $0x1d78] sm:$0xff]
      %v2736 = vld [vmem:[%s12 + $0x1d80] sm:$0xff]
      %v2737 = vld [vmem:[%s12 + $0x1d88] sm:$0xff]
      %v2738 = vld [vmem:[%s12 + $0x1d90] sm:$0xff]
      %v2739 = vld [vmem:[%s12 + $0x1d98] sm:$0xff]
      %v2740 = vld [vmem:[%s12 + $0x1da0] sm:$0xff]
      %v2741 = vld [vmem:[%s12 + $0x1da8] sm:$0xff]
      %v2742 = vld [vmem:[%s12 + $0x1db0] sm:$0xff]
      %v2743 = vld [vmem:[%s12 + $0x1db8] sm:$0xff]
      %v2744 = vld [vmem:[%s12 + $0x1dc0] sm:$0xff]
      %v2745 = vld [vmem:[%s12 + $0x1dc8] sm:$0xff]
      %v2746 = vld [vmem:[%s12 + $0x1dd0] sm:$0xff]
      %v2747 = vld [vmem:[%s12 + $0x1dd8] sm:$0xff]
      %v2748 = vld [vmem:[%s12 + $0x1de0] sm:$0xff]
      %v2749 = vld [vmem:[%s12 + $0x1de8] sm:$0xff]
      %v2750 = vld [vmem:[%s12 + $0x1df0] sm:$0xff]
      %v2751 = vld [vmem:[%s12 + $0x1df8] sm:$0xff]
      %v2752 = vld [vmem:[%s12 + $0x1e00] sm:$0xff]
      %v2753 = vld [vmem:[%s12 + $0x1e08] sm:$0xff]
      %v2754 = vld [vmem:[%s12 + $0x1e10] sm:$0xff]
      %v2755 = vld [vmem:[%s12 + $0x1e18] sm:$0xff]
      %v2756 = vld [vmem:[%s12 + $0x1e20] sm:$0xff]
      %v2757 = vld [vmem:[%s12 + $0x1e28] sm:$0xff]
      %v2758 = vld [vmem:[%s12 + $0x1e30] sm:$0xff]
      %v2759 = vld [vmem:[%s12 + $0x1e38] sm:$0xff]
      %v2760 = vld [vmem:[%s12 + $0x1e40] sm:$0xff]
      %v2761 = vld [vmem:[%s12 + $0x1e48] sm:$0xff]
      %v2762 = vld [vmem:[%s12 + $0x1e50] sm:$0xff]
      %v2763 = vld [vmem:[%s12 + $0x1e58] sm:$0xff]
      %v2764 = vld [vmem:[%s12 + $0x1e60] sm:$0xff]
      %v2765 = vld [vmem:[%s12 + $0x1e68] sm:$0xff]
      %v2766 = vld [vmem:[%s12 + $0x1e70] sm:$0xff]
      %v2767 = vld [vmem:[%s12 + $0x1e78] sm:$0xff]
      %v2768 = vld [vmem:[%s12 + $0x1e80] sm:$0xff]
      %v2769 = vld [vmem:[%s12 + $0x1e88] sm:$0xff]
      %v2770 = vld [vmem:[%s12 + $0x1e90] sm:$0xff]
      %v2771 = vld [vmem:[%s12 + $0x1e98] sm:$0xff]
      %v2772 = vld [vmem:[%s12 + $0x1ea0] sm:$0xff]
      %v2773 = vld [vmem:[%s12 + $0x1ea8] sm:$0xff]
      %v2774 = vld [vmem:[%s12 + $0x1eb0] sm:$0xff]
      %v2775 = vld [vmem:[%s12 + $0x1eb8] sm:$0xff]
      %v2776 = vld [vmem:[%s12 + $0x1ec0] sm:$0xff]
      %v2777 = vld [vmem:[%s12 + $0x1ec8] sm:$0xff]
      %v2778 = vld [vmem:[%s12 + $0x1ed0] sm:$0xff]
      %v2779 = vld [vmem:[%s12 + $0x1ed8] sm:$0xff]
      %v2780 = vld [vmem:[%s12 + $0x1ee0] sm:$0xff]
      %v2781 = vld [vmem:[%s12 + $0x1ee8] sm:$0xff]
      %v2782 = vld [vmem:[%s12 + $0x1ef0] sm:$0xff]
      %v2783 = vld [vmem:[%s12 + $0x1ef8] sm:$0xff]
      %v2784 = vld [vmem:[%s12 + $0x1f00] sm:$0xff]
      %v2785 = vld [vmem:[%s12 + $0x1f08] sm:$0xff]
      %v2786 = vld [vmem:[%s12 + $0x1f10] sm:$0xff]
      %v2787 = vld [vmem:[%s12 + $0x1f18] sm:$0xff]
      %v2788 = vld [vmem:[%s12 + $0x1f20] sm:$0xff]
      %v2789 = vld [vmem:[%s12 + $0x1f28] sm:$0xff]
      %v2790 = vld [vmem:[%s12 + $0x1f30] sm:$0xff]
      %v2791 = vld [vmem:[%s12 + $0x1f38] sm:$0xff]
      %v2792 = vld [vmem:[%s12 + $0x1f40] sm:$0xff]
      %v2793 = vld [vmem:[%s12 + $0x1f48] sm:$0xff]
      %v2794 = vld [vmem:[%s12 + $0x1f50] sm:$0xff]
      %v2795 = vld [vmem:[%s12 + $0x1f58] sm:$0xff]
      %v2796 = vld [vmem:[%s12 + $0x1f60] sm:$0xff]
      %v2797 = vld [vmem:[%s12 + $0x1f68] sm:$0xff]
      %v2798 = vld [vmem:[%s12 + $0x1f70] sm:$0xff]
      %v2799 = vld [vmem:[%s12 + $0x1f78] sm:$0xff]
      %v2800 = vld [vmem:[%s12 + $0x1f80] sm:$0xff]
      %v2801 = vld [vmem:[%s12 + $0x1f88] sm:$0xff]
      %v2802 = vld [vmem:[%s12 + $0x1f90] sm:$0xff]
      %v2803 = vld [vmem:[%s12 + $0x1f98] sm:$0xff]
      %v2804 = vld [vmem:[%s12 + $0x1fa0] sm:$0xff]
      %v2805 = vld [vmem:[%s12 + $0x1fa8] sm:$0xff]
      %v2806 = vld [vmem:[%s12 + $0x1fb0] sm:$0xff]
      %v2807 = vld [vmem:[%s12 + $0x1fb8] sm:$0xff]
      %v2808 = vld [vmem:[%s12 + $0x1fc0] sm:$0xff]
      %v2809 = vld [vmem:[%s12 + $0x1fc8] sm:$0xff]
      %v2810 = vld [vmem:[%s12 + $0x1fd0] sm:$0xff]
      %v2811 = vld [vmem:[%s12 + $0x1fd8] sm:$0xff]
      %v2812 = vld [vmem:[%s12 + $0x1fe0] sm:$0xff]
      %v2813 = vld [vmem:[%s12 + $0x1fe8] sm:$0xff]
      %v2814 = vld [vmem:[%s12 + $0x1ff0] sm:$0xff]
      %v2815 = vld [vmem:[%s12 + $0x1ff8] sm:$0xff]
      %vm2816 = vcmask 130048
      %v2818 = vsel %vm2816, %v1785, 0
      %2820 = vmatpush.msra.mxu0 0.0
      %2821 = vmatpush.msra.mxu0 0.0
      %2822 = vmatpush.msra.mxu0 0.0
      %2823 = vmatpush.msra.mxu0 0.0
      %2824 = vmatpush.msra.mxu0 0.0
      %2825 = vmatpush.msra.mxu0 0.0
      %2826 = vmatpush.msra.mxu0 0.0
      %2827 = vmatpush.msra.mxu0 0.0
      %2828 = vmatpush.msra.mxu0 0.0
      %2829 = vmatpush.msra.mxu0 0.0
      %2830 = vmatpush.msra.mxu0 0.0
      %2831 = vmatpush.msra.mxu0 0.0
      %2832 = vmatpush.msra.mxu0 0.0
      %2833 = vmatpush.msra.mxu0 0.0
      %2834 = vmatpush.msra.mxu0 %v1779
      %2835 = vmatpush.msra.mxu0 %v1777
      %2836 = vmatmul.f32.gmra.mxu0 %v2818
      %v2837 = vpop.f32.mrf.mxu0
      %v2838 = vadd.f32 0.0, %v2837
      %2839 = vdwg.mxu0
      %2840 = vmatpush.msra.mxu0 0.0
      %2841 = vmatpush.msra.mxu0 0.0
      %2842 = vmatpush.msra.mxu0 0.0
      %2843 = vmatpush.msra.mxu0 0.0
      %2844 = vmatpush.msra.mxu0 0.0
      %2845 = vmatpush.msra.mxu0 0.0
      %2846 = vmatpush.msra.mxu0 0.0
      %2847 = vmatpush.msra.mxu0 0.0
      %2848 = vmatpush.msra.mxu0 0.0
      %2849 = vmatpush.msra.mxu0 0.0
      %2850 = vmatpush.msra.mxu0 0.0
      %2851 = vmatpush.msra.mxu0 0.0
      %2852 = vmatpush.msra.mxu0 0.0
      %2853 = vmatpush.msra.mxu0 0.0
      %2854 = vmatpush.msra.mxu0 %v1780
      %2855 = vmatpush.msra.mxu0 %v1778
      %2856 = vmatmul.f32.gmra.mxu0 %v2818
      %v2857 = vpop.f32.mrf.mxu0
      %v2858 = vadd.f32 0.0, %v2857
      %2859 = vdwg.mxu0
      %2865 = vrot.lane.b32.xlu0 %v1777, 127
      %v2866 = vpop.permute.xlu0 %2865
      %2867 = vrot.lane.b32.xlu0 %v1778, 127
      %v2868 = vpop.permute.xlu0 %2867
      %2869 = vrot.lane.b32.xlu0 0.0, 127
      %v2870 = vpop.permute.xlu0 %2869
      %2871 = vrot.lane.b32.xlu0 %v1779, 127
      %v2872 = vpop.permute.xlu0 %2871
      %2873 = vrot.lane.b32.xlu0 %v1780, 127
      %v2874 = vpop.permute.xlu0 %2873
      %vm2875 = vcmask 1039360
      %v2876 = vsel %vm2875, %v2866, %v2868
      %v2877 = vsel %vm2875, %v2868, %v2870
      %v2878 = vsel %vm2875, %v2872, %v2874
      %v2879 = vsel %vm2875, %v2874, %v2870
      %v2885 = vsel %vm2816, %v1784, 0
      %2887 = vmatpush.msra.mxu0 0.0
      %2888 = vmatpush.msra.mxu0 0.0
      %2889 = vmatpush.msra.mxu0 0.0
      %2890 = vmatpush.msra.mxu0 0.0
      %2891 = vmatpush.msra.mxu0 0.0
      %2892 = vmatpush.msra.mxu0 0.0
      %2893 = vmatpush.msra.mxu0 0.0
      %2894 = vmatpush.msra.mxu0 0.0
      %2895 = vmatpush.msra.mxu0 0.0
      %2896 = vmatpush.msra.mxu0 0.0
      %2897 = vmatpush.msra.mxu0 0.0
      %2898 = vmatpush.msra.mxu0 0.0
      %2899 = vmatpush.msra.mxu0 0.0
      %2900 = vmatpush.msra.mxu0 0.0
      %2901 = vmatpush.msra.mxu0 %v2878
      %2902 = vmatpush.msra.mxu0 %v2876
      %2903 = vmatmul.f32.gmra.mxu0 %v2885
      %v2904 = vpop.f32.mrf.mxu0
      %v2905 = vadd.f32 0.0, %v2904
      %2906 = vdwg.mxu0
      %2907 = vmatpush.msra.mxu0 0.0
      %2908 = vmatpush.msra.mxu0 0.0
      %2909 = vmatpush.msra.mxu0 0.0
      %2910 = vmatpush.msra.mxu0 0.0
      %2911 = vmatpush.msra.mxu0 0.0
      %2912 = vmatpush.msra.mxu0 0.0
      %2913 = vmatpush.msra.mxu0 0.0
      %2914 = vmatpush.msra.mxu0 0.0
      %2915 = vmatpush.msra.mxu0 0.0
      %2916 = vmatpush.msra.mxu0 0.0
      %2917 = vmatpush.msra.mxu0 0.0
      %2918 = vmatpush.msra.mxu0 0.0
      %2919 = vmatpush.msra.mxu0 0.0
      %2920 = vmatpush.msra.mxu0 0.0
      %2921 = vmatpush.msra.mxu0 %v2879
      %2922 = vmatpush.msra.mxu0 %v2877
      %2923 = vmatmul.f32.gmra.mxu0 %v2885
      %v2924 = vpop.f32.mrf.mxu0
      %v2925 = vadd.f32 0.0, %v2924
      %2926 = vdwg.mxu0
      %v2928 = vperm.slane %v1791, 0
      %v2929 = vperm.slane %v1791, 1
      %v2932 = vmul.f32 %v2928, %v2905
      %v2933 = vmul.f32 %v2929, %v2925
      %v2935 = vsel %vm2816, %v1786, 0
      %2937 = vmatpush.msra.mxu0 0.0
      %2938 = vmatpush.msra.mxu0 0.0
      %2939 = vmatpush.msra.mxu0 0.0
      %2940 = vmatpush.msra.mxu0 0.0
      %2941 = vmatpush.msra.mxu0 0.0
      %2942 = vmatpush.msra.mxu0 0.0
      %2943 = vmatpush.msra.mxu0 0.0
      %2944 = vmatpush.msra.mxu0 0.0
      %2945 = vmatpush.msra.mxu0 0.0
      %2946 = vmatpush.msra.mxu0 0.0
      %2947 = vmatpush.msra.mxu0 0.0
      %2948 = vmatpush.msra.mxu0 0.0
      %2949 = vmatpush.msra.mxu0 0.0
      %2950 = vmatpush.msra.mxu0 0.0
      %2951 = vmatpush.msra.mxu0 %v1779
      %2952 = vmatpush.msra.mxu0 %v1777
      %2953 = vmatmul.f32.gmra.mxu0 %v2935
      %v2954 = vpop.f32.mrf.mxu0
      %v2955 = vadd.f32 %v2932, %v2954
      %2956 = vdwg.mxu0
      %2957 = vmatpush.msra.mxu0 0.0
      %2958 = vmatpush.msra.mxu0 0.0
      %2959 = vmatpush.msra.mxu0 0.0
      %2960 = vmatpush.msra.mxu0 0.0
      %2961 = vmatpush.msra.mxu0 0.0
      %2962 = vmatpush.msra.mxu0 0.0
      %2963 = vmatpush.msra.mxu0 0.0
      %2964 = vmatpush.msra.mxu0 0.0
      %2965 = vmatpush.msra.mxu0 0.0
      %2966 = vmatpush.msra.mxu0 0.0
      %2967 = vmatpush.msra.mxu0 0.0
      %2968 = vmatpush.msra.mxu0 0.0
      %2969 = vmatpush.msra.mxu0 0.0
      %2970 = vmatpush.msra.mxu0 0.0
      %2971 = vmatpush.msra.mxu0 %v1780
      %2972 = vmatpush.msra.mxu0 %v1778
      %2973 = vmatmul.f32.gmra.mxu0 %v2935
      %v2974 = vpop.f32.mrf.mxu0
      %v2975 = vadd.f32 %v2933, %v2974
      %2976 = vdwg.mxu0
      %2977 = vrot.lane.b32.xlu0 %v1777, 112
      %v2978 = vpop.permute.xlu0 %2977
      %2979 = vrot.lane.b32.xlu0 %v1778, 112
      %v2980 = vpop.permute.xlu0 %2979
      %2981 = vrot.lane.b32.xlu0 0.0, 112
      %v2982 = vpop.permute.xlu0 %2981
      %2983 = vrot.lane.b32.xlu0 %v1779, 112
      %v2984 = vpop.permute.xlu0 %2983
      %2985 = vrot.lane.b32.xlu0 %v1780, 112
      %v2986 = vpop.permute.xlu0 %2985
      %vm2987 = vcmask 916480
      %v2988 = vsel %vm2987, %v2978, %v2980
      %v2989 = vsel %vm2987, %v2980, %v2982
      %v2990 = vsel %vm2987, %v2984, %v2986
      %v2991 = vsel %vm2987, %v2986, %v2982
      %v2997 = vsel %vm2816, %v1782, 0
      %2999 = vmatpush.msra.mxu0 0.0
      %3000 = vmatpush.msra.mxu0 0.0
      %3001 = vmatpush.msra.mxu0 0.0
      %3002 = vmatpush.msra.mxu0 0.0
      %3003 = vmatpush.msra.mxu0 0.0
      %3004 = vmatpush.msra.mxu0 0.0
      %3005 = vmatpush.msra.mxu0 0.0
      %3006 = vmatpush.msra.mxu0 0.0
      %3007 = vmatpush.msra.mxu0 0.0
      %3008 = vmatpush.msra.mxu0 0.0
      %3009 = vmatpush.msra.mxu0 0.0
      %3010 = vmatpush.msra.mxu0 0.0
      %3011 = vmatpush.msra.mxu0 0.0
      %3012 = vmatpush.msra.mxu0 0.0
      %3013 = vmatpush.msra.mxu0 %v2990
      %3014 = vmatpush.msra.mxu0 %v2988
      %3015 = vmatmul.f32.gmra.mxu0 %v2997
      %v3016 = vpop.f32.mrf.mxu0
      %v3017 = vadd.f32 0.0, %v3016
      %3018 = vdwg.mxu0
      %3019 = vmatpush.msra.mxu0 0.0
      %3020 = vmatpush.msra.mxu0 0.0
      %3021 = vmatpush.msra.mxu0 0.0
      %3022 = vmatpush.msra.mxu0 0.0
      %3023 = vmatpush.msra.mxu0 0.0
      %3024 = vmatpush.msra.mxu0 0.0
      %3025 = vmatpush.msra.mxu0 0.0
      %3026 = vmatpush.msra.mxu0 0.0
      %3027 = vmatpush.msra.mxu0 0.0
      %3028 = vmatpush.msra.mxu0 0.0
      %3029 = vmatpush.msra.mxu0 0.0
      %3030 = vmatpush.msra.mxu0 0.0
      %3031 = vmatpush.msra.mxu0 0.0
      %3032 = vmatpush.msra.mxu0 0.0
      %3033 = vmatpush.msra.mxu0 %v2991
      %3034 = vmatpush.msra.mxu0 %v2989
      %3035 = vmatmul.f32.gmra.mxu0 %v2997
      %v3036 = vpop.f32.mrf.mxu0
      %v3037 = vadd.f32 0.0, %v3036
      %3038 = vdwg.mxu0
      %v3040 = vsel %vm2816, %v1788, 0
      %3042 = vmatpush.msra.mxu0 0.0
      %3043 = vmatpush.msra.mxu0 0.0
      %3044 = vmatpush.msra.mxu0 0.0
      %3045 = vmatpush.msra.mxu0 0.0
      %3046 = vmatpush.msra.mxu0 0.0
      %3047 = vmatpush.msra.mxu0 0.0
      %3048 = vmatpush.msra.mxu0 0.0
      %3049 = vmatpush.msra.mxu0 0.0
      %3050 = vmatpush.msra.mxu0 0.0
      %3051 = vmatpush.msra.mxu0 0.0
      %3052 = vmatpush.msra.mxu0 0.0
      %3053 = vmatpush.msra.mxu0 0.0
      %3054 = vmatpush.msra.mxu0 0.0
      %3055 = vmatpush.msra.mxu0 0.0
      %3056 = vmatpush.msra.mxu0 %v1779
      %3057 = vmatpush.msra.mxu0 %v1777
      %3058 = vmatmul.f32.gmra.mxu0 %v3040
      %v3059 = vpop.f32.mrf.mxu0
      %v3060 = vadd.f32 %v3017, %v3059
      %3061 = vdwg.mxu0
      %3062 = vmatpush.msra.mxu0 0.0
      %3063 = vmatpush.msra.mxu0 0.0
      %3064 = vmatpush.msra.mxu0 0.0
      %3065 = vmatpush.msra.mxu0 0.0
      %3066 = vmatpush.msra.mxu0 0.0
      %3067 = vmatpush.msra.mxu0 0.0
      %3068 = vmatpush.msra.mxu0 0.0
      %3069 = vmatpush.msra.mxu0 0.0
      %3070 = vmatpush.msra.mxu0 0.0
      %3071 = vmatpush.msra.mxu0 0.0
      %3072 = vmatpush.msra.mxu0 0.0
      %3073 = vmatpush.msra.mxu0 0.0
      %3074 = vmatpush.msra.mxu0 0.0
      %3075 = vmatpush.msra.mxu0 0.0
      %3076 = vmatpush.msra.mxu0 %v1780
      %3077 = vmatpush.msra.mxu0 %v1778
      %3078 = vmatmul.f32.gmra.mxu0 %v3040
      %v3079 = vpop.f32.mrf.mxu0
      %v3080 = vadd.f32 %v3037, %v3079
      %3081 = vdwg.mxu0
      %v3083 = vsel %vm2816, %v1783, 0
      %3085 = vmatpush.msra.mxu0 0.0
      %3086 = vmatpush.msra.mxu0 0.0
      %3087 = vmatpush.msra.mxu0 0.0
      %3088 = vmatpush.msra.mxu0 0.0
      %3089 = vmatpush.msra.mxu0 0.0
      %3090 = vmatpush.msra.mxu0 0.0
      %3091 = vmatpush.msra.mxu0 0.0
      %3092 = vmatpush.msra.mxu0 0.0
      %3093 = vmatpush.msra.mxu0 0.0
      %3094 = vmatpush.msra.mxu0 0.0
      %3095 = vmatpush.msra.mxu0 0.0
      %3096 = vmatpush.msra.mxu0 0.0
      %3097 = vmatpush.msra.mxu0 0.0
      %3098 = vmatpush.msra.mxu0 0.0
      %3099 = vmatpush.msra.mxu0 %v2990
      %3100 = vmatpush.msra.mxu0 %v2988
      %3101 = vmatmul.f32.gmra.mxu0 %v3083
      %v3102 = vpop.f32.mrf.mxu0
      %v3103 = vadd.f32 0.0, %v3102
      %3104 = vdwg.mxu0
      %3105 = vmatpush.msra.mxu0 0.0
      %3106 = vmatpush.msra.mxu0 0.0
      %3107 = vmatpush.msra.mxu0 0.0
      %3108 = vmatpush.msra.mxu0 0.0
      %3109 = vmatpush.msra.mxu0 0.0
      %3110 = vmatpush.msra.mxu0 0.0
      %3111 = vmatpush.msra.mxu0 0.0
      %3112 = vmatpush.msra.mxu0 0.0
      %3113 = vmatpush.msra.mxu0 0.0
      %3114 = vmatpush.msra.mxu0 0.0
      %3115 = vmatpush.msra.mxu0 0.0
      %3116 = vmatpush.msra.mxu0 0.0
      %3117 = vmatpush.msra.mxu0 0.0
      %3118 = vmatpush.msra.mxu0 0.0
      %3119 = vmatpush.msra.mxu0 %v2991
      %3120 = vmatpush.msra.mxu0 %v2989
      %3121 = vmatmul.f32.gmra.mxu0 %v3083
      %v3122 = vpop.f32.mrf.mxu0
      %v3123 = vadd.f32 0.0, %v3122
      %3124 = vdwg.mxu0
      %v3126 = vsel %vm2816, %v1789, 0
      %3128 = vmatpush.msra.mxu0 0.0
      %3129 = vmatpush.msra.mxu0 0.0
      %3130 = vmatpush.msra.mxu0 0.0
      %3131 = vmatpush.msra.mxu0 0.0
      %3132 = vmatpush.msra.mxu0 0.0
      %3133 = vmatpush.msra.mxu0 0.0
      %3134 = vmatpush.msra.mxu0 0.0
      %3135 = vmatpush.msra.mxu0 0.0
      %3136 = vmatpush.msra.mxu0 0.0
      %3137 = vmatpush.msra.mxu0 0.0
      %3138 = vmatpush.msra.mxu0 0.0
      %3139 = vmatpush.msra.mxu0 0.0
      %3140 = vmatpush.msra.mxu0 0.0
      %3141 = vmatpush.msra.mxu0 0.0
      %3142 = vmatpush.msra.mxu0 %v1779
      %3143 = vmatpush.msra.mxu0 %v1777
      %3144 = vmatmul.f32.gmra.mxu0 %v3126
      %v3145 = vpop.f32.mrf.mxu0
      %v3146 = vadd.f32 %v3103, %v3145
      %3147 = vdwg.mxu0
      %3148 = vmatpush.msra.mxu0 0.0
      %3149 = vmatpush.msra.mxu0 0.0
      %3150 = vmatpush.msra.mxu0 0.0
      %3151 = vmatpush.msra.mxu0 0.0
      %3152 = vmatpush.msra.mxu0 0.0
      %3153 = vmatpush.msra.mxu0 0.0
      %3154 = vmatpush.msra.mxu0 0.0
      %3155 = vmatpush.msra.mxu0 0.0
      %3156 = vmatpush.msra.mxu0 0.0
      %3157 = vmatpush.msra.mxu0 0.0
      %3158 = vmatpush.msra.mxu0 0.0
      %3159 = vmatpush.msra.mxu0 0.0
      %3160 = vmatpush.msra.mxu0 0.0
      %3161 = vmatpush.msra.mxu0 0.0
      %3162 = vmatpush.msra.mxu0 %v1780
      %3163 = vmatpush.msra.mxu0 %v1778
      %3164 = vmatmul.f32.gmra.mxu0 %v3126
      %v3165 = vpop.f32.mrf.mxu0
      %v3166 = vadd.f32 %v3123, %v3165
      %3167 = vdwg.mxu0
      %3168 = vrot.lane.b32.xlu0 %v1777, 111
      %v3169 = vpop.permute.xlu0 %3168
      %3170 = vrot.lane.b32.xlu0 %v1778, 111
      %v3171 = vpop.permute.xlu0 %3170
      %3172 = vrot.lane.b32.xlu0 0.0, 111
      %v3173 = vpop.permute.xlu0 %3172
      %3174 = vrot.lane.b32.xlu0 %v1779, 111
      %v3175 = vpop.permute.xlu0 %3174
      %3176 = vrot.lane.b32.xlu0 %v1780, 111
      %v3177 = vpop.permute.xlu0 %3176
      %vm3178 = vcmask 908288
      %v3179 = vsel %vm3178, %v3169, %v3171
      %v3180 = vsel %vm3178, %v3171, %v3173
      %v3181 = vsel %vm3178, %v3175, %v3177
      %v3182 = vsel %vm3178, %v3177, %v3173
      %v3188 = vsel %vm2816, %v1781, 0
      %3190 = vmatpush.msra.mxu0 0.0
      %3191 = vmatpush.msra.mxu0 0.0
      %3192 = vmatpush.msra.mxu0 0.0
      %3193 = vmatpush.msra.mxu0 0.0
      %3194 = vmatpush.msra.mxu0 0.0
      %3195 = vmatpush.msra.mxu0 0.0
      %3196 = vmatpush.msra.mxu0 0.0
      %3197 = vmatpush.msra.mxu0 0.0
      %3198 = vmatpush.msra.mxu0 0.0
      %3199 = vmatpush.msra.mxu0 0.0
      %3200 = vmatpush.msra.mxu0 0.0
      %3201 = vmatpush.msra.mxu0 0.0
      %3202 = vmatpush.msra.mxu0 0.0
      %3203 = vmatpush.msra.mxu0 0.0
      %3204 = vmatpush.msra.mxu0 %v3181
      %3205 = vmatpush.msra.mxu0 %v3179
      %3206 = vmatmul.f32.gmra.mxu0 %v3188
      %v3207 = vpop.f32.mrf.mxu0
      %v3208 = vadd.f32 0.0, %v3207
      %3209 = vdwg.mxu0
      %3210 = vmatpush.msra.mxu0 0.0
      %3211 = vmatpush.msra.mxu0 0.0
      %3212 = vmatpush.msra.mxu0 0.0
      %3213 = vmatpush.msra.mxu0 0.0
      %3214 = vmatpush.msra.mxu0 0.0
      %3215 = vmatpush.msra.mxu0 0.0
      %3216 = vmatpush.msra.mxu0 0.0
      %3217 = vmatpush.msra.mxu0 0.0
      %3218 = vmatpush.msra.mxu0 0.0
      %3219 = vmatpush.msra.mxu0 0.0
      %3220 = vmatpush.msra.mxu0 0.0
      %3221 = vmatpush.msra.mxu0 0.0
      %3222 = vmatpush.msra.mxu0 0.0
      %3223 = vmatpush.msra.mxu0 0.0
      %3224 = vmatpush.msra.mxu0 %v3182
      %3225 = vmatpush.msra.mxu0 %v3180
      %3226 = vmatmul.f32.gmra.mxu0 %v3188
      %v3227 = vpop.f32.mrf.mxu0
      %v3228 = vadd.f32 0.0, %v3227
      %3229 = vdwg.mxu0
      %v3231 = vsel %vm2816, %v1787, 0
      %3233 = vmatpush.msra.mxu0 0.0
      %3234 = vmatpush.msra.mxu0 0.0
      %3235 = vmatpush.msra.mxu0 0.0
      %3236 = vmatpush.msra.mxu0 0.0
      %3237 = vmatpush.msra.mxu0 0.0
      %3238 = vmatpush.msra.mxu0 0.0
      %3239 = vmatpush.msra.mxu0 0.0
      %3240 = vmatpush.msra.mxu0 0.0
      %3241 = vmatpush.msra.mxu0 0.0
      %3242 = vmatpush.msra.mxu0 0.0
      %3243 = vmatpush.msra.mxu0 0.0
      %3244 = vmatpush.msra.mxu0 0.0
      %3245 = vmatpush.msra.mxu0 0.0
      %3246 = vmatpush.msra.mxu0 0.0
      %3247 = vmatpush.msra.mxu0 %v2878
      %3248 = vmatpush.msra.mxu0 %v2876
      %3249 = vmatmul.f32.gmra.mxu0 %v3231
      %v3250 = vpop.f32.mrf.mxu0
      %v3251 = vadd.f32 %v3208, %v3250
      %3252 = vdwg.mxu0
      %3253 = vmatpush.msra.mxu0 0.0
      %3254 = vmatpush.msra.mxu0 0.0
      %3255 = vmatpush.msra.mxu0 0.0
      %3256 = vmatpush.msra.mxu0 0.0
      %3257 = vmatpush.msra.mxu0 0.0
      %3258 = vmatpush.msra.mxu0 0.0
      %3259 = vmatpush.msra.mxu0 0.0
      %3260 = vmatpush.msra.mxu0 0.0
      %3261 = vmatpush.msra.mxu0 0.0
      %3262 = vmatpush.msra.mxu0 0.0
      %3263 = vmatpush.msra.mxu0 0.0
      %3264 = vmatpush.msra.mxu0 0.0
      %3265 = vmatpush.msra.mxu0 0.0
      %3266 = vmatpush.msra.mxu0 0.0
      %3267 = vmatpush.msra.mxu0 %v2879
      %3268 = vmatpush.msra.mxu0 %v2877
      %3269 = vmatmul.f32.gmra.mxu0 %v3231
      %v3270 = vpop.f32.mrf.mxu0
      %v3271 = vadd.f32 %v3228, %v3270
      %3272 = vdwg.mxu0
      %v3273 = vmul.f32 %v2928, %v3251
      %v3274 = vmul.f32 %v2929, %v3271
      %v3275 = vadd.f32 %v3146, %v3273
      %v3276 = vadd.f32 %v3166, %v3274
      %3278 = vset.pattern.permute.xlu0 0
      %3279 = vperm.xlu0 %3278, %v1790
      %v3280 = vpop.permute.xlu0 %3279
      %3282 = vmatpush.msra.mxu0 %v1912
      %3283 = vmatpush.msra.mxu0 %v1904
      %3284 = vmatpush.msra.mxu0 %v1896
      %3285 = vmatpush.msra.mxu0 %v1888
      %3286 = vmatpush.msra.mxu0 %v1880
      %3287 = vmatpush.msra.mxu0 %v1872
      %3288 = vmatpush.msra.mxu0 %v1864
      %3289 = vmatpush.msra.mxu0 %v1856
      %3290 = vmatpush.msra.mxu0 %v1848
      %3291 = vmatpush.msra.mxu0 %v1840
      %3292 = vmatpush.msra.mxu0 %v1832
      %3293 = vmatpush.msra.mxu0 %v1824
      %3294 = vmatpush.msra.mxu0 %v1816
      %3295 = vmatpush.msra.mxu0 %v1808
      %3296 = vmatpush.msra.mxu0 %v1800
      %3297 = vmatpush.msra.mxu0 %v1792
      %3298 = vmatmul.f32.gmra.mxu0 %v2838
      %v3299 = vpop.f32.mrf.mxu0
      %v3300 = vadd.f32 %v3280, %v3299
      %3301 = vdwg.mxu0
      %3302 = vmatpush.msra.mxu0 %v2040
      %3303 = vmatpush.msra.mxu0 %v2032
      %3304 = vmatpush.msra.mxu0 %v2024
      %3305 = vmatpush.msra.mxu0 %v2016
      %3306 = vmatpush.msra.mxu0 %v2008
      %3307 = vmatpush.msra.mxu0 %v2000
      %3308 = vmatpush.msra.mxu0 %v1992
      %3309 = vmatpush.msra.mxu0 %v1984
      %3310 = vmatpush.msra.mxu0 %v1976
      %3311 = vmatpush.msra.mxu0 %v1968
      %3312 = vmatpush.msra.mxu0 %v1960
      %3313 = vmatpush.msra.mxu0 %v1952
      %3314 = vmatpush.msra.mxu0 %v1944
      %3315 = vmatpush.msra.mxu0 %v1936
      %3316 = vmatpush.msra.mxu0 %v1928
      %3317 = vmatpush.msra.mxu0 %v1920
      %3318 = vmatmul.f32.gmra.mxu0 %v2858
      %v3319 = vpop.f32.mrf.mxu0
      %v3320 = vadd.f32 %v3300, %v3319
      %3321 = vdwg.mxu0
      %3322 = vmatpush.msra.mxu0 %v2168
      %3323 = vmatpush.msra.mxu0 %v2160
      %3324 = vmatpush.msra.mxu0 %v2152
      %3325 = vmatpush.msra.mxu0 %v2144
      %3326 = vmatpush.msra.mxu0 %v2136
      %3327 = vmatpush.msra.mxu0 %v2128
      %3328 = vmatpush.msra.mxu0 %v2120
      %3329 = vmatpush.msra.mxu0 %v2112
      %3330 = vmatpush.msra.mxu0 %v2104
      %3331 = vmatpush.msra.mxu0 %v2096
      %3332 = vmatpush.msra.mxu0 %v2088
      %3333 = vmatpush.msra.mxu0 %v2080
      %3334 = vmatpush.msra.mxu0 %v2072
      %3335 = vmatpush.msra.mxu0 %v2064
      %3336 = vmatpush.msra.mxu0 %v2056
      %3337 = vmatpush.msra.mxu0 %v2048
      %3338 = vmatmul.f32.gmra.mxu0 %v2955
      %v3339 = vpop.f32.mrf.mxu0
      %v3340 = vadd.f32 %v3320, %v3339
      %3341 = vdwg.mxu0
      %3342 = vmatpush.msra.mxu0 %v2296
      %3343 = vmatpush.msra.mxu0 %v2288
      %3344 = vmatpush.msra.mxu0 %v2280
      %3345 = vmatpush.msra.mxu0 %v2272
      %3346 = vmatpush.msra.mxu0 %v2264
      %3347 = vmatpush.msra.mxu0 %v2256
      %3348 = vmatpush.msra.mxu0 %v2248
      %3349 = vmatpush.msra.mxu0 %v2240
      %3350 = vmatpush.msra.mxu0 %v2232
      %3351 = vmatpush.msra.mxu0 %v2224
      %3352 = vmatpush.msra.mxu0 %v2216
      %3353 = vmatpush.msra.mxu0 %v2208
      %3354 = vmatpush.msra.mxu0 %v2200
      %3355 = vmatpush.msra.mxu0 %v2192
      %3356 = vmatpush.msra.mxu0 %v2184
      %3357 = vmatpush.msra.mxu0 %v2176
      %3358 = vmatmul.f32.gmra.mxu0 %v2975
      %v3359 = vpop.f32.mrf.mxu0
      %v3360 = vadd.f32 %v3340, %v3359
      %3361 = vdwg.mxu0
      %3362 = vmatpush.msra.mxu0 %v2424
      %3363 = vmatpush.msra.mxu0 %v2416
      %3364 = vmatpush.msra.mxu0 %v2408
      %3365 = vmatpush.msra.mxu0 %v2400
      %3366 = vmatpush.msra.mxu0 %v2392
      %3367 = vmatpush.msra.mxu0 %v2384
      %3368 = vmatpush.msra.mxu0 %v2376
      %3369 = vmatpush.msra.mxu0 %v2368
      %3370 = vmatpush.msra.mxu0 %v2360
      %3371 = vmatpush.msra.mxu0 %v2352
      %3372 = vmatpush.msra.mxu0 %v2344
      %3373 = vmatpush.msra.mxu0 %v2336
      %3374 = vmatpush.msra.mxu0 %v2328
      %3375 = vmatpush.msra.mxu0 %v2320
      %3376 = vmatpush.msra.mxu0 %v2312
      %3377 = vmatpush.msra.mxu0 %v2304
      %3378 = vmatmul.f32.gmra.mxu0 %v3060
      %v3379 = vpop.f32.mrf.mxu0
      %v3380 = vadd.f32 %v3360, %v3379
      %3381 = vdwg.mxu0
      %3382 = vmatpush.msra.mxu0 %v2552
      %3383 = vmatpush.msra.mxu0 %v2544
      %3384 = vmatpush.msra.mxu0 %v2536
      %3385 = vmatpush.msra.mxu0 %v2528
      %3386 = vmatpush.msra.mxu0 %v2520
      %3387 = vmatpush.msra.mxu0 %v2512
      %3388 = vmatpush.msra.mxu0 %v2504
      %3389 = vmatpush.msra.mxu0 %v2496
      %3390 = vmatpush.msra.mxu0 %v2488
      %3391 = vmatpush.msra.mxu0 %v2480
      %3392 = vmatpush.msra.mxu0 %v2472
      %3393 = vmatpush.msra.mxu0 %v2464
      %3394 = vmatpush.msra.mxu0 %v2456
      %3395 = vmatpush.msra.mxu0 %v2448
      %3396 = vmatpush.msra.mxu0 %v2440
      %3397 = vmatpush.msra.mxu0 %v2432
      %3398 = vmatmul.f32.gmra.mxu0 %v3080
      %v3399 = vpop.f32.mrf.mxu0
      %v3400 = vadd.f32 %v3380, %v3399
      %3401 = vdwg.mxu0
      %3402 = vmatpush.msra.mxu0 %v2680
      %3403 = vmatpush.msra.mxu0 %v2672
      %3404 = vmatpush.msra.mxu0 %v2664
      %3405 = vmatpush.msra.mxu0 %v2656
      %3406 = vmatpush.msra.mxu0 %v2648
      %3407 = vmatpush.msra.mxu0 %v2640
      %3408 = vmatpush.msra.mxu0 %v2632
      %3409 = vmatpush.msra.mxu0 %v2624
      %3410 = vmatpush.msra.mxu0 %v2616
      %3411 = vmatpush.msra.mxu0 %v2608
      %3412 = vmatpush.msra.mxu0 %v2600
      %3413 = vmatpush.msra.mxu0 %v2592
      %3414 = vmatpush.msra.mxu0 %v2584
      %3415 = vmatpush.msra.mxu0 %v2576
      %3416 = vmatpush.msra.mxu0 %v2568
      %3417 = vmatpush.msra.mxu0 %v2560
      %3418 = vmatmul.f32.gmra.mxu0 %v3275
      %v3419 = vpop.f32.mrf.mxu0
      %v3420 = vadd.f32 %v3400, %v3419
      %3421 = vdwg.mxu0
      %3422 = vmatpush.msra.mxu0 %v2808
      %3423 = vmatpush.msra.mxu0 %v2800
      %3424 = vmatpush.msra.mxu0 %v2792
      %3425 = vmatpush.msra.mxu0 %v2784
      %3426 = vmatpush.msra.mxu0 %v2776
      %3427 = vmatpush.msra.mxu0 %v2768
      %3428 = vmatpush.msra.mxu0 %v2760
      %3429 = vmatpush.msra.mxu0 %v2752
      %3430 = vmatpush.msra.mxu0 %v2744
      %3431 = vmatpush.msra.mxu0 %v2736
      %3432 = vmatpush.msra.mxu0 %v2728
      %3433 = vmatpush.msra.mxu0 %v2720
      %3434 = vmatpush.msra.mxu0 %v2712
      %3435 = vmatpush.msra.mxu0 %v2704
      %3436 = vmatpush.msra.mxu0 %v2696
      %3437 = vmatpush.msra.mxu0 %v2688
      %3438 = vmatmul.f32.gmra.mxu0 %v3276
      %v3439 = vpop.f32.mrf.mxu0
      %v3440 = vadd.f32 %v3420, %v3439
      %3441 = vdwg.mxu0
      %3442 = vmatpush.msra.mxu0 %v1913
      %3443 = vmatpush.msra.mxu0 %v1905
      %3444 = vmatpush.msra.mxu0 %v1897
      %3445 = vmatpush.msra.mxu0 %v1889
      %3446 = vmatpush.msra.mxu0 %v1881
      %3447 = vmatpush.msra.mxu0 %v1873
      %3448 = vmatpush.msra.mxu0 %v1865
      %3449 = vmatpush.msra.mxu0 %v1857
      %3450 = vmatpush.msra.mxu0 %v1849
      %3451 = vmatpush.msra.mxu0 %v1841
      %3452 = vmatpush.msra.mxu0 %v1833
      %3453 = vmatpush.msra.mxu0 %v1825
      %3454 = vmatpush.msra.mxu0 %v1817
      %3455 = vmatpush.msra.mxu0 %v1809
      %3456 = vmatpush.msra.mxu0 %v1801
      %3457 = vmatpush.msra.mxu0 %v1793
      %3458 = vmatmul.f32.gmra.mxu0 %v2838
      %v3459 = vpop.f32.mrf.mxu0
      %v3460 = vadd.f32 %v3280, %v3459
      %3461 = vdwg.mxu0
      %3462 = vmatpush.msra.mxu0 %v2041
      %3463 = vmatpush.msra.mxu0 %v2033
      %3464 = vmatpush.msra.mxu0 %v2025
      %3465 = vmatpush.msra.mxu0 %v2017
      %3466 = vmatpush.msra.mxu0 %v2009
      %3467 = vmatpush.msra.mxu0 %v2001
      %3468 = vmatpush.msra.mxu0 %v1993
      %3469 = vmatpush.msra.mxu0 %v1985
      %3470 = vmatpush.msra.mxu0 %v1977
      %3471 = vmatpush.msra.mxu0 %v1969
      %3472 = vmatpush.msra.mxu0 %v1961
      %3473 = vmatpush.msra.mxu0 %v1953
      %3474 = vmatpush.msra.mxu0 %v1945
      %3475 = vmatpush.msra.mxu0 %v1937
      %3476 = vmatpush.msra.mxu0 %v1929
      %3477 = vmatpush.msra.mxu0 %v1921
      %3478 = vmatmul.f32.gmra.mxu0 %v2858
      %v3479 = vpop.f32.mrf.mxu0
      %v3480 = vadd.f32 %v3460, %v3479
      %3481 = vdwg.mxu0
      %3482 = vmatpush.msra.mxu0 %v2169
      %3483 = vmatpush.msra.mxu0 %v2161
      %3484 = vmatpush.msra.mxu0 %v2153
      %3485 = vmatpush.msra.mxu0 %v2145
      %3486 = vmatpush.msra.mxu0 %v2137
      %3487 = vmatpush.msra.mxu0 %v2129
      %3488 = vmatpush.msra.mxu0 %v2121
      %3489 = vmatpush.msra.mxu0 %v2113
      %3490 = vmatpush.msra.mxu0 %v2105
      %3491 = vmatpush.msra.mxu0 %v2097
      %3492 = vmatpush.msra.mxu0 %v2089
      %3493 = vmatpush.msra.mxu0 %v2081
      %3494 = vmatpush.msra.mxu0 %v2073
      %3495 = vmatpush.msra.mxu0 %v2065
      %3496 = vmatpush.msra.mxu0 %v2057
      %3497 = vmatpush.msra.mxu0 %v2049
      %3498 = vmatmul.f32.gmra.mxu0 %v2955
      %v3499 = vpop.f32.mrf.mxu0
      %v3500 = vadd.f32 %v3480, %v3499
      %3501 = vdwg.mxu0
      %3502 = vmatpush.msra.mxu0 %v2297
      %3503 = vmatpush.msra.mxu0 %v2289
      %3504 = vmatpush.msra.mxu0 %v2281
      %3505 = vmatpush.msra.mxu0 %v2273
      %3506 = vmatpush.msra.mxu0 %v2265
      %3507 = vmatpush.msra.mxu0 %v2257
      %3508 = vmatpush.msra.mxu0 %v2249
      %3509 = vmatpush.msra.mxu0 %v2241
      %3510 = vmatpush.msra.mxu0 %v2233
      %3511 = vmatpush.msra.mxu0 %v2225
      %3512 = vmatpush.msra.mxu0 %v2217
      %3513 = vmatpush.msra.mxu0 %v2209
      %3514 = vmatpush.msra.mxu0 %v2201
      %3515 = vmatpush.msra.mxu0 %v2193
      %3516 = vmatpush.msra.mxu0 %v2185
      %3517 = vmatpush.msra.mxu0 %v2177
      %3518 = vmatmul.f32.gmra.mxu0 %v2975
      %v3519 = vpop.f32.mrf.mxu0
      %v3520 = vadd.f32 %v3500, %v3519
      %3521 = vdwg.mxu0
      %3522 = vmatpush.msra.mxu0 %v2425
      %3523 = vmatpush.msra.mxu0 %v2417
      %3524 = vmatpush.msra.mxu0 %v2409
      %3525 = vmatpush.msra.mxu0 %v2401
      %3526 = vmatpush.msra.mxu0 %v2393
      %3527 = vmatpush.msra.mxu0 %v2385
      %3528 = vmatpush.msra.mxu0 %v2377
      %3529 = vmatpush.msra.mxu0 %v2369
      %3530 = vmatpush.msra.mxu0 %v2361
      %3531 = vmatpush.msra.mxu0 %v2353
      %3532 = vmatpush.msra.mxu0 %v2345
      %3533 = vmatpush.msra.mxu0 %v2337
      %3534 = vmatpush.msra.mxu0 %v2329
      %3535 = vmatpush.msra.mxu0 %v2321
      %3536 = vmatpush.msra.mxu0 %v2313
      %3537 = vmatpush.msra.mxu0 %v2305
      %3538 = vmatmul.f32.gmra.mxu0 %v3060
      %v3539 = vpop.f32.mrf.mxu0
      %v3540 = vadd.f32 %v3520, %v3539
      %3541 = vdwg.mxu0
      %3542 = vmatpush.msra.mxu0 %v2553
      %3543 = vmatpush.msra.mxu0 %v2545
      %3544 = vmatpush.msra.mxu0 %v2537
      %3545 = vmatpush.msra.mxu0 %v2529
      %3546 = vmatpush.msra.mxu0 %v2521
      %3547 = vmatpush.msra.mxu0 %v2513
      %3548 = vmatpush.msra.mxu0 %v2505
      %3549 = vmatpush.msra.mxu0 %v2497
      %3550 = vmatpush.msra.mxu0 %v2489
      %3551 = vmatpush.msra.mxu0 %v2481
      %3552 = vmatpush.msra.mxu0 %v2473
      %3553 = vmatpush.msra.mxu0 %v2465
      %3554 = vmatpush.msra.mxu0 %v2457
      %3555 = vmatpush.msra.mxu0 %v2449
      %3556 = vmatpush.msra.mxu0 %v2441
      %3557 = vmatpush.msra.mxu0 %v2433
      %3558 = vmatmul.f32.gmra.mxu0 %v3080
      %v3559 = vpop.f32.mrf.mxu0
      %v3560 = vadd.f32 %v3540, %v3559
      %3561 = vdwg.mxu0
      %3562 = vmatpush.msra.mxu0 %v2681
      %3563 = vmatpush.msra.mxu0 %v2673
      %3564 = vmatpush.msra.mxu0 %v2665
      %3565 = vmatpush.msra.mxu0 %v2657
      %3566 = vmatpush.msra.mxu0 %v2649
      %3567 = vmatpush.msra.mxu0 %v2641
      %3568 = vmatpush.msra.mxu0 %v2633
      %3569 = vmatpush.msra.mxu0 %v2625
      %3570 = vmatpush.msra.mxu0 %v2617
      %3571 = vmatpush.msra.mxu0 %v2609
      %3572 = vmatpush.msra.mxu0 %v2601
      %3573 = vmatpush.msra.mxu0 %v2593
      %3574 = vmatpush.msra.mxu0 %v2585
      %3575 = vmatpush.msra.mxu0 %v2577
      %3576 = vmatpush.msra.mxu0 %v2569
      %3577 = vmatpush.msra.mxu0 %v2561
      %3578 = vmatmul.f32.gmra.mxu0 %v3275
      %v3579 = vpop.f32.mrf.mxu0
      %v3580 = vadd.f32 %v3560, %v3579
      %3581 = vdwg.mxu0
      %3582 = vmatpush.msra.mxu0 %v2809
      %3583 = vmatpush.msra.mxu0 %v2801
      %3584 = vmatpush.msra.mxu0 %v2793
      %3585 = vmatpush.msra.mxu0 %v2785
      %3586 = vmatpush.msra.mxu0 %v2777
      %3587 = vmatpush.msra.mxu0 %v2769
      %3588 = vmatpush.msra.mxu0 %v2761
      %3589 = vmatpush.msra.mxu0 %v2753
      %3590 = vmatpush.msra.mxu0 %v2745
      %3591 = vmatpush.msra.mxu0 %v2737
      %3592 = vmatpush.msra.mxu0 %v2729
      %3593 = vmatpush.msra.mxu0 %v2721
      %3594 = vmatpush.msra.mxu0 %v2713
      %3595 = vmatpush.msra.mxu0 %v2705
      %3596 = vmatpush.msra.mxu0 %v2697
      %3597 = vmatpush.msra.mxu0 %v2689
      %3598 = vmatmul.f32.gmra.mxu0 %v3276
      %v3599 = vpop.f32.mrf.mxu0
      %v3600 = vadd.f32 %v3580, %v3599
      %3601 = vdwg.mxu0
      %3602 = vmatpush.msra.mxu0 %v1914
      %3603 = vmatpush.msra.mxu0 %v1906
      %3604 = vmatpush.msra.mxu0 %v1898
      %3605 = vmatpush.msra.mxu0 %v1890
      %3606 = vmatpush.msra.mxu0 %v1882
      %3607 = vmatpush.msra.mxu0 %v1874
      %3608 = vmatpush.msra.mxu0 %v1866
      %3609 = vmatpush.msra.mxu0 %v1858
      %3610 = vmatpush.msra.mxu0 %v1850
      %3611 = vmatpush.msra.mxu0 %v1842
      %3612 = vmatpush.msra.mxu0 %v1834
      %3613 = vmatpush.msra.mxu0 %v1826
      %3614 = vmatpush.msra.mxu0 %v1818
      %3615 = vmatpush.msra.mxu0 %v1810
      %3616 = vmatpush.msra.mxu0 %v1802
      %3617 = vmatpush.msra.mxu0 %v1794
      %3618 = vmatmul.f32.gmra.mxu0 %v2838
      %v3619 = vpop.f32.mrf.mxu0
      %v3620 = vadd.f32 %v3280, %v3619
      %3621 = vdwg.mxu0
      %3622 = vmatpush.msra.mxu0 %v2042
      %3623 = vmatpush.msra.mxu0 %v2034
      %3624 = vmatpush.msra.mxu0 %v2026
      %3625 = vmatpush.msra.mxu0 %v2018
      %3626 = vmatpush.msra.mxu0 %v2010
      %3627 = vmatpush.msra.mxu0 %v2002
      %3628 = vmatpush.msra.mxu0 %v1994
      %3629 = vmatpush.msra.mxu0 %v1986
      %3630 = vmatpush.msra.mxu0 %v1978
      %3631 = vmatpush.msra.mxu0 %v1970
      %3632 = vmatpush.msra.mxu0 %v1962
      %3633 = vmatpush.msra.mxu0 %v1954
      %3634 = vmatpush.msra.mxu0 %v1946
      %3635 = vmatpush.msra.mxu0 %v1938
      %3636 = vmatpush.msra.mxu0 %v1930
      %3637 = vmatpush.msra.mxu0 %v1922
      %3638 = vmatmul.f32.gmra.mxu0 %v2858
      %v3639 = vpop.f32.mrf.mxu0
      %v3640 = vadd.f32 %v3620, %v3639
      %3641 = vdwg.mxu0
      %3642 = vmatpush.msra.mxu0 %v2170
      %3643 = vmatpush.msra.mxu0 %v2162
      %3644 = vmatpush.msra.mxu0 %v2154
      %3645 = vmatpush.msra.mxu0 %v2146
      %3646 = vmatpush.msra.mxu0 %v2138
      %3647 = vmatpush.msra.mxu0 %v2130
      %3648 = vmatpush.msra.mxu0 %v2122
      %3649 = vmatpush.msra.mxu0 %v2114
      %3650 = vmatpush.msra.mxu0 %v2106
      %3651 = vmatpush.msra.mxu0 %v2098
      %3652 = vmatpush.msra.mxu0 %v2090
      %3653 = vmatpush.msra.mxu0 %v2082
      %3654 = vmatpush.msra.mxu0 %v2074
      %3655 = vmatpush.msra.mxu0 %v2066
      %3656 = vmatpush.msra.mxu0 %v2058
      %3657 = vmatpush.msra.mxu0 %v2050
      %3658 = vmatmul.f32.gmra.mxu0 %v2955
      %v3659 = vpop.f32.mrf.mxu0
      %v3660 = vadd.f32 %v3640, %v3659
      %3661 = vdwg.mxu0
      %3662 = vmatpush.msra.mxu0 %v2298
      %3663 = vmatpush.msra.mxu0 %v2290
      %3664 = vmatpush.msra.mxu0 %v2282
      %3665 = vmatpush.msra.mxu0 %v2274
      %3666 = vmatpush.msra.mxu0 %v2266
      %3667 = vmatpush.msra.mxu0 %v2258
      %3668 = vmatpush.msra.mxu0 %v2250
      %3669 = vmatpush.msra.mxu0 %v2242
      %3670 = vmatpush.msra.mxu0 %v2234
      %3671 = vmatpush.msra.mxu0 %v2226
      %3672 = vmatpush.msra.mxu0 %v2218
      %3673 = vmatpush.msra.mxu0 %v2210
      %3674 = vmatpush.msra.mxu0 %v2202
      %3675 = vmatpush.msra.mxu0 %v2194
      %3676 = vmatpush.msra.mxu0 %v2186
      %3677 = vmatpush.msra.mxu0 %v2178
      %3678 = vmatmul.f32.gmra.mxu0 %v2975
      %v3679 = vpop.f32.mrf.mxu0
      %v3680 = vadd.f32 %v3660, %v3679
      %3681 = vdwg.mxu0
      %3682 = vmatpush.msra.mxu0 %v2426
      %3683 = vmatpush.msra.mxu0 %v2418
      %3684 = vmatpush.msra.mxu0 %v2410
      %3685 = vmatpush.msra.mxu0 %v2402
      %3686 = vmatpush.msra.mxu0 %v2394
      %3687 = vmatpush.msra.mxu0 %v2386
      %3688 = vmatpush.msra.mxu0 %v2378
      %3689 = vmatpush.msra.mxu0 %v2370
      %3690 = vmatpush.msra.mxu0 %v2362
      %3691 = vmatpush.msra.mxu0 %v2354
      %3692 = vmatpush.msra.mxu0 %v2346
      %3693 = vmatpush.msra.mxu0 %v2338
      %3694 = vmatpush.msra.mxu0 %v2330
      %3695 = vmatpush.msra.mxu0 %v2322
      %3696 = vmatpush.msra.mxu0 %v2314
      %3697 = vmatpush.msra.mxu0 %v2306
      %3698 = vmatmul.f32.gmra.mxu0 %v3060
      %v3699 = vpop.f32.mrf.mxu0
      %v3700 = vadd.f32 %v3680, %v3699
      %3701 = vdwg.mxu0
      %3702 = vmatpush.msra.mxu0 %v2554
      %3703 = vmatpush.msra.mxu0 %v2546
      %3704 = vmatpush.msra.mxu0 %v2538
      %3705 = vmatpush.msra.mxu0 %v2530
      %3706 = vmatpush.msra.mxu0 %v2522
      %3707 = vmatpush.msra.mxu0 %v2514
      %3708 = vmatpush.msra.mxu0 %v2506
      %3709 = vmatpush.msra.mxu0 %v2498
      %3710 = vmatpush.msra.mxu0 %v2490
      %3711 = vmatpush.msra.mxu0 %v2482
      %3712 = vmatpush.msra.mxu0 %v2474
      %3713 = vmatpush.msra.mxu0 %v2466
      %3714 = vmatpush.msra.mxu0 %v2458
      %3715 = vmatpush.msra.mxu0 %v2450
      %3716 = vmatpush.msra.mxu0 %v2442
      %3717 = vmatpush.msra.mxu0 %v2434
      %3718 = vmatmul.f32.gmra.mxu0 %v3080
      %v3719 = vpop.f32.mrf.mxu0
      %v3720 = vadd.f32 %v3700, %v3719
      %3721 = vdwg.mxu0
      %3722 = vmatpush.msra.mxu0 %v2682
      %3723 = vmatpush.msra.mxu0 %v2674
      %3724 = vmatpush.msra.mxu0 %v2666
      %3725 = vmatpush.msra.mxu0 %v2658
      %3726 = vmatpush.msra.mxu0 %v2650
      %3727 = vmatpush.msra.mxu0 %v2642
      %3728 = vmatpush.msra.mxu0 %v2634
      %3729 = vmatpush.msra.mxu0 %v2626
      %3730 = vmatpush.msra.mxu0 %v2618
      %3731 = vmatpush.msra.mxu0 %v2610
      %3732 = vmatpush.msra.mxu0 %v2602
      %3733 = vmatpush.msra.mxu0 %v2594
      %3734 = vmatpush.msra.mxu0 %v2586
      %3735 = vmatpush.msra.mxu0 %v2578
      %3736 = vmatpush.msra.mxu0 %v2570
      %3737 = vmatpush.msra.mxu0 %v2562
      %3738 = vmatmul.f32.gmra.mxu0 %v3275
      %v3739 = vpop.f32.mrf.mxu0
      %v3740 = vadd.f32 %v3720, %v3739
      %3741 = vdwg.mxu0
      %3742 = vmatpush.msra.mxu0 %v2810
      %3743 = vmatpush.msra.mxu0 %v2802
      %3744 = vmatpush.msra.mxu0 %v2794
      %3745 = vmatpush.msra.mxu0 %v2786
      %3746 = vmatpush.msra.mxu0 %v2778
      %3747 = vmatpush.msra.mxu0 %v2770
      %3748 = vmatpush.msra.mxu0 %v2762
      %3749 = vmatpush.msra.mxu0 %v2754
      %3750 = vmatpush.msra.mxu0 %v2746
      %3751 = vmatpush.msra.mxu0 %v2738
      %3752 = vmatpush.msra.mxu0 %v2730
      %3753 = vmatpush.msra.mxu0 %v2722
      %3754 = vmatpush.msra.mxu0 %v2714
      %3755 = vmatpush.msra.mxu0 %v2706
      %3756 = vmatpush.msra.mxu0 %v2698
      %3757 = vmatpush.msra.mxu0 %v2690
      %3758 = vmatmul.f32.gmra.mxu0 %v3276
      %v3759 = vpop.f32.mrf.mxu0
      %v3760 = vadd.f32 %v3740, %v3759
      %3761 = vdwg.mxu0
      %3762 = vmatpush.msra.mxu0 %v1915
      %3763 = vmatpush.msra.mxu0 %v1907
      %3764 = vmatpush.msra.mxu0 %v1899
      %3765 = vmatpush.msra.mxu0 %v1891
      %3766 = vmatpush.msra.mxu0 %v1883
      %3767 = vmatpush.msra.mxu0 %v1875
      %3768 = vmatpush.msra.mxu0 %v1867
      %3769 = vmatpush.msra.mxu0 %v1859
      %3770 = vmatpush.msra.mxu0 %v1851
      %3771 = vmatpush.msra.mxu0 %v1843
      %3772 = vmatpush.msra.mxu0 %v1835
      %3773 = vmatpush.msra.mxu0 %v1827
      %3774 = vmatpush.msra.mxu0 %v1819
      %3775 = vmatpush.msra.mxu0 %v1811
      %3776 = vmatpush.msra.mxu0 %v1803
      %3777 = vmatpush.msra.mxu0 %v1795
      %3778 = vmatmul.f32.gmra.mxu0 %v2838
      %v3779 = vpop.f32.mrf.mxu0
      %v3780 = vadd.f32 %v3280, %v3779
      %3781 = vdwg.mxu0
      %3782 = vmatpush.msra.mxu0 %v2043
      %3783 = vmatpush.msra.mxu0 %v2035
      %3784 = vmatpush.msra.mxu0 %v2027
      %3785 = vmatpush.msra.mxu0 %v2019
      %3786 = vmatpush.msra.mxu0 %v2011
      %3787 = vmatpush.msra.mxu0 %v2003
      %3788 = vmatpush.msra.mxu0 %v1995
      %3789 = vmatpush.msra.mxu0 %v1987
      %3790 = vmatpush.msra.mxu0 %v1979
      %3791 = vmatpush.msra.mxu0 %v1971
      %3792 = vmatpush.msra.mxu0 %v1963
      %3793 = vmatpush.msra.mxu0 %v1955
      %3794 = vmatpush.msra.mxu0 %v1947
      %3795 = vmatpush.msra.mxu0 %v1939
      %3796 = vmatpush.msra.mxu0 %v1931
      %3797 = vmatpush.msra.mxu0 %v1923
      %3798 = vmatmul.f32.gmra.mxu0 %v2858
      %v3799 = vpop.f32.mrf.mxu0
      %v3800 = vadd.f32 %v3780, %v3799
      %3801 = vdwg.mxu0
      %3802 = vmatpush.msra.mxu0 %v2171
      %3803 = vmatpush.msra.mxu0 %v2163
      %3804 = vmatpush.msra.mxu0 %v2155
      %3805 = vmatpush.msra.mxu0 %v2147
      %3806 = vmatpush.msra.mxu0 %v2139
      %3807 = vmatpush.msra.mxu0 %v2131
      %3808 = vmatpush.msra.mxu0 %v2123
      %3809 = vmatpush.msra.mxu0 %v2115
      %3810 = vmatpush.msra.mxu0 %v2107
      %3811 = vmatpush.msra.mxu0 %v2099
      %3812 = vmatpush.msra.mxu0 %v2091
      %3813 = vmatpush.msra.mxu0 %v2083
      %3814 = vmatpush.msra.mxu0 %v2075
      %3815 = vmatpush.msra.mxu0 %v2067
      %3816 = vmatpush.msra.mxu0 %v2059
      %3817 = vmatpush.msra.mxu0 %v2051
      %3818 = vmatmul.f32.gmra.mxu0 %v2955
      %v3819 = vpop.f32.mrf.mxu0
      %v3820 = vadd.f32 %v3800, %v3819
      %3821 = vdwg.mxu0
      %3822 = vmatpush.msra.mxu0 %v2299
      %3823 = vmatpush.msra.mxu0 %v2291
      %3824 = vmatpush.msra.mxu0 %v2283
      %3825 = vmatpush.msra.mxu0 %v2275
      %3826 = vmatpush.msra.mxu0 %v2267
      %3827 = vmatpush.msra.mxu0 %v2259
      %3828 = vmatpush.msra.mxu0 %v2251
      %3829 = vmatpush.msra.mxu0 %v2243
      %3830 = vmatpush.msra.mxu0 %v2235
      %3831 = vmatpush.msra.mxu0 %v2227
      %3832 = vmatpush.msra.mxu0 %v2219
      %3833 = vmatpush.msra.mxu0 %v2211
      %3834 = vmatpush.msra.mxu0 %v2203
      %3835 = vmatpush.msra.mxu0 %v2195
      %3836 = vmatpush.msra.mxu0 %v2187
      %3837 = vmatpush.msra.mxu0 %v2179
      %3838 = vmatmul.f32.gmra.mxu0 %v2975
      %v3839 = vpop.f32.mrf.mxu0
      %v3840 = vadd.f32 %v3820, %v3839
      %3841 = vdwg.mxu0
      %3842 = vmatpush.msra.mxu0 %v2427
      %3843 = vmatpush.msra.mxu0 %v2419
      %3844 = vmatpush.msra.mxu0 %v2411
      %3845 = vmatpush.msra.mxu0 %v2403
      %3846 = vmatpush.msra.mxu0 %v2395
      %3847 = vmatpush.msra.mxu0 %v2387
      %3848 = vmatpush.msra.mxu0 %v2379
      %3849 = vmatpush.msra.mxu0 %v2371
      %3850 = vmatpush.msra.mxu0 %v2363
      %3851 = vmatpush.msra.mxu0 %v2355
      %3852 = vmatpush.msra.mxu0 %v2347
      %3853 = vmatpush.msra.mxu0 %v2339
      %3854 = vmatpush.msra.mxu0 %v2331
      %3855 = vmatpush.msra.mxu0 %v2323
      %3856 = vmatpush.msra.mxu0 %v2315
      %3857 = vmatpush.msra.mxu0 %v2307
      %3858 = vmatmul.f32.gmra.mxu0 %v3060
      %v3859 = vpop.f32.mrf.mxu0
      %v3860 = vadd.f32 %v3840, %v3859
      %3861 = vdwg.mxu0
      %3862 = vmatpush.msra.mxu0 %v2555
      %3863 = vmatpush.msra.mxu0 %v2547
      %3864 = vmatpush.msra.mxu0 %v2539
      %3865 = vmatpush.msra.mxu0 %v2531
      %3866 = vmatpush.msra.mxu0 %v2523
      %3867 = vmatpush.msra.mxu0 %v2515
      %3868 = vmatpush.msra.mxu0 %v2507
      %3869 = vmatpush.msra.mxu0 %v2499
      %3870 = vmatpush.msra.mxu0 %v2491
      %3871 = vmatpush.msra.mxu0 %v2483
      %3872 = vmatpush.msra.mxu0 %v2475
      %3873 = vmatpush.msra.mxu0 %v2467
      %3874 = vmatpush.msra.mxu0 %v2459
      %3875 = vmatpush.msra.mxu0 %v2451
      %3876 = vmatpush.msra.mxu0 %v2443
      %3877 = vmatpush.msra.mxu0 %v2435
      %3878 = vmatmul.f32.gmra.mxu0 %v3080
      %v3879 = vpop.f32.mrf.mxu0
      %v3880 = vadd.f32 %v3860, %v3879
      %3881 = vdwg.mxu0
      %3882 = vmatpush.msra.mxu0 %v2683
      %3883 = vmatpush.msra.mxu0 %v2675
      %3884 = vmatpush.msra.mxu0 %v2667
      %3885 = vmatpush.msra.mxu0 %v2659
      %3886 = vmatpush.msra.mxu0 %v2651
      %3887 = vmatpush.msra.mxu0 %v2643
      %3888 = vmatpush.msra.mxu0 %v2635
      %3889 = vmatpush.msra.mxu0 %v2627
      %3890 = vmatpush.msra.mxu0 %v2619
      %3891 = vmatpush.msra.mxu0 %v2611
      %3892 = vmatpush.msra.mxu0 %v2603
      %3893 = vmatpush.msra.mxu0 %v2595
      %3894 = vmatpush.msra.mxu0 %v2587
      %3895 = vmatpush.msra.mxu0 %v2579
      %3896 = vmatpush.msra.mxu0 %v2571
      %3897 = vmatpush.msra.mxu0 %v2563
      %3898 = vmatmul.f32.gmra.mxu0 %v3275
      %v3899 = vpop.f32.mrf.mxu0
      %v3900 = vadd.f32 %v3880, %v3899
      %3901 = vdwg.mxu0
      %3902 = vmatpush.msra.mxu0 %v2811
      %3903 = vmatpush.msra.mxu0 %v2803
      %3904 = vmatpush.msra.mxu0 %v2795
      %3905 = vmatpush.msra.mxu0 %v2787
      %3906 = vmatpush.msra.mxu0 %v2779
      %3907 = vmatpush.msra.mxu0 %v2771
      %3908 = vmatpush.msra.mxu0 %v2763
      %3909 = vmatpush.msra.mxu0 %v2755
      %3910 = vmatpush.msra.mxu0 %v2747
      %3911 = vmatpush.msra.mxu0 %v2739
      %3912 = vmatpush.msra.mxu0 %v2731
      %3913 = vmatpush.msra.mxu0 %v2723
      %3914 = vmatpush.msra.mxu0 %v2715
      %3915 = vmatpush.msra.mxu0 %v2707
      %3916 = vmatpush.msra.mxu0 %v2699
      %3917 = vmatpush.msra.mxu0 %v2691
      %3918 = vmatmul.f32.gmra.mxu0 %v3276
      %v3919 = vpop.f32.mrf.mxu0
      %v3920 = vadd.f32 %v3900, %v3919
      %3921 = vdwg.mxu0
      %3922 = vmatpush.msra.mxu0 %v1916
      %3923 = vmatpush.msra.mxu0 %v1908
      %3924 = vmatpush.msra.mxu0 %v1900
      %3925 = vmatpush.msra.mxu0 %v1892
      %3926 = vmatpush.msra.mxu0 %v1884
      %3927 = vmatpush.msra.mxu0 %v1876
      %3928 = vmatpush.msra.mxu0 %v1868
      %3929 = vmatpush.msra.mxu0 %v1860
      %3930 = vmatpush.msra.mxu0 %v1852
      %3931 = vmatpush.msra.mxu0 %v1844
      %3932 = vmatpush.msra.mxu0 %v1836
      %3933 = vmatpush.msra.mxu0 %v1828
      %3934 = vmatpush.msra.mxu0 %v1820
      %3935 = vmatpush.msra.mxu0 %v1812
      %3936 = vmatpush.msra.mxu0 %v1804
      %3937 = vmatpush.msra.mxu0 %v1796
      %3938 = vmatmul.f32.gmra.mxu0 %v2838
      %v3939 = vpop.f32.mrf.mxu0
      %v3940 = vadd.f32 %v3280, %v3939
      %3941 = vdwg.mxu0
      %3942 = vmatpush.msra.mxu0 %v2044
      %3943 = vmatpush.msra.mxu0 %v2036
      %3944 = vmatpush.msra.mxu0 %v2028
      %3945 = vmatpush.msra.mxu0 %v2020
      %3946 = vmatpush.msra.mxu0 %v2012
      %3947 = vmatpush.msra.mxu0 %v2004
      %3948 = vmatpush.msra.mxu0 %v1996
      %3949 = vmatpush.msra.mxu0 %v1988
      %3950 = vmatpush.msra.mxu0 %v1980
      %3951 = vmatpush.msra.mxu0 %v1972
      %3952 = vmatpush.msra.mxu0 %v1964
      %3953 = vmatpush.msra.mxu0 %v1956
      %3954 = vmatpush.msra.mxu0 %v1948
      %3955 = vmatpush.msra.mxu0 %v1940
      %3956 = vmatpush.msra.mxu0 %v1932
      %3957 = vmatpush.msra.mxu0 %v1924
      %3958 = vmatmul.f32.gmra.mxu0 %v2858
      %v3959 = vpop.f32.mrf.mxu0
      %v3960 = vadd.f32 %v3940, %v3959
      %3961 = vdwg.mxu0
      %3962 = vmatpush.msra.mxu0 %v2172
      %3963 = vmatpush.msra.mxu0 %v2164
      %3964 = vmatpush.msra.mxu0 %v2156
      %3965 = vmatpush.msra.mxu0 %v2148
      %3966 = vmatpush.msra.mxu0 %v2140
      %3967 = vmatpush.msra.mxu0 %v2132
      %3968 = vmatpush.msra.mxu0 %v2124
      %3969 = vmatpush.msra.mxu0 %v2116
      %3970 = vmatpush.msra.mxu0 %v2108
      %3971 = vmatpush.msra.mxu0 %v2100
      %3972 = vmatpush.msra.mxu0 %v2092
      %3973 = vmatpush.msra.mxu0 %v2084
      %3974 = vmatpush.msra.mxu0 %v2076
      %3975 = vmatpush.msra.mxu0 %v2068
      %3976 = vmatpush.msra.mxu0 %v2060
      %3977 = vmatpush.msra.mxu0 %v2052
      %3978 = vmatmul.f32.gmra.mxu0 %v2955
      %v3979 = vpop.f32.mrf.mxu0
      %v3980 = vadd.f32 %v3960, %v3979
      %3981 = vdwg.mxu0
      %3982 = vmatpush.msra.mxu0 %v2300
      %3983 = vmatpush.msra.mxu0 %v2292
      %3984 = vmatpush.msra.mxu0 %v2284
      %3985 = vmatpush.msra.mxu0 %v2276
      %3986 = vmatpush.msra.mxu0 %v2268
      %3987 = vmatpush.msra.mxu0 %v2260
      %3988 = vmatpush.msra.mxu0 %v2252
      %3989 = vmatpush.msra.mxu0 %v2244
      %3990 = vmatpush.msra.mxu0 %v2236
      %3991 = vmatpush.msra.mxu0 %v2228
      %3992 = vmatpush.msra.mxu0 %v2220
      %3993 = vmatpush.msra.mxu0 %v2212
      %3994 = vmatpush.msra.mxu0 %v2204
      %3995 = vmatpush.msra.mxu0 %v2196
      %3996 = vmatpush.msra.mxu0 %v2188
      %3997 = vmatpush.msra.mxu0 %v2180
      %3998 = vmatmul.f32.gmra.mxu0 %v2975
      %v3999 = vpop.f32.mrf.mxu0
      %v4000 = vadd.f32 %v3980, %v3999
      %4001 = vdwg.mxu0
      %4002 = vmatpush.msra.mxu0 %v2428
      %4003 = vmatpush.msra.mxu0 %v2420
      %4004 = vmatpush.msra.mxu0 %v2412
      %4005 = vmatpush.msra.mxu0 %v2404
      %4006 = vmatpush.msra.mxu0 %v2396
      %4007 = vmatpush.msra.mxu0 %v2388
      %4008 = vmatpush.msra.mxu0 %v2380
      %4009 = vmatpush.msra.mxu0 %v2372
      %4010 = vmatpush.msra.mxu0 %v2364
      %4011 = vmatpush.msra.mxu0 %v2356
      %4012 = vmatpush.msra.mxu0 %v2348
      %4013 = vmatpush.msra.mxu0 %v2340
      %4014 = vmatpush.msra.mxu0 %v2332
      %4015 = vmatpush.msra.mxu0 %v2324
      %4016 = vmatpush.msra.mxu0 %v2316
      %4017 = vmatpush.msra.mxu0 %v2308
      %4018 = vmatmul.f32.gmra.mxu0 %v3060
      %v4019 = vpop.f32.mrf.mxu0
      %v4020 = vadd.f32 %v4000, %v4019
      %4021 = vdwg.mxu0
      %4022 = vmatpush.msra.mxu0 %v2556
      %4023 = vmatpush.msra.mxu0 %v2548
      %4024 = vmatpush.msra.mxu0 %v2540
      %4025 = vmatpush.msra.mxu0 %v2532
      %4026 = vmatpush.msra.mxu0 %v2524
      %4027 = vmatpush.msra.mxu0 %v2516
      %4028 = vmatpush.msra.mxu0 %v2508
      %4029 = vmatpush.msra.mxu0 %v2500
      %4030 = vmatpush.msra.mxu0 %v2492
      %4031 = vmatpush.msra.mxu0 %v2484
      %4032 = vmatpush.msra.mxu0 %v2476
      %4033 = vmatpush.msra.mxu0 %v2468
      %4034 = vmatpush.msra.mxu0 %v2460
      %4035 = vmatpush.msra.mxu0 %v2452
      %4036 = vmatpush.msra.mxu0 %v2444
      %4037 = vmatpush.msra.mxu0 %v2436
      %4038 = vmatmul.f32.gmra.mxu0 %v3080
      %v4039 = vpop.f32.mrf.mxu0
      %v4040 = vadd.f32 %v4020, %v4039
      %4041 = vdwg.mxu0
      %4042 = vmatpush.msra.mxu0 %v2684
      %4043 = vmatpush.msra.mxu0 %v2676
      %4044 = vmatpush.msra.mxu0 %v2668
      %4045 = vmatpush.msra.mxu0 %v2660
      %4046 = vmatpush.msra.mxu0 %v2652
      %4047 = vmatpush.msra.mxu0 %v2644
      %4048 = vmatpush.msra.mxu0 %v2636
      %4049 = vmatpush.msra.mxu0 %v2628
      %4050 = vmatpush.msra.mxu0 %v2620
      %4051 = vmatpush.msra.mxu0 %v2612
      %4052 = vmatpush.msra.mxu0 %v2604
      %4053 = vmatpush.msra.mxu0 %v2596
      %4054 = vmatpush.msra.mxu0 %v2588
      %4055 = vmatpush.msra.mxu0 %v2580
      %4056 = vmatpush.msra.mxu0 %v2572
      %4057 = vmatpush.msra.mxu0 %v2564
      %4058 = vmatmul.f32.gmra.mxu0 %v3275
      %v4059 = vpop.f32.mrf.mxu0
      %v4060 = vadd.f32 %v4040, %v4059
      %4061 = vdwg.mxu0
      %4062 = vmatpush.msra.mxu0 %v2812
      %4063 = vmatpush.msra.mxu0 %v2804
      %4064 = vmatpush.msra.mxu0 %v2796
      %4065 = vmatpush.msra.mxu0 %v2788
      %4066 = vmatpush.msra.mxu0 %v2780
      %4067 = vmatpush.msra.mxu0 %v2772
      %4068 = vmatpush.msra.mxu0 %v2764
      %4069 = vmatpush.msra.mxu0 %v2756
      %4070 = vmatpush.msra.mxu0 %v2748
      %4071 = vmatpush.msra.mxu0 %v2740
      %4072 = vmatpush.msra.mxu0 %v2732
      %4073 = vmatpush.msra.mxu0 %v2724
      %4074 = vmatpush.msra.mxu0 %v2716
      %4075 = vmatpush.msra.mxu0 %v2708
      %4076 = vmatpush.msra.mxu0 %v2700
      %4077 = vmatpush.msra.mxu0 %v2692
      %4078 = vmatmul.f32.gmra.mxu0 %v3276
      %v4079 = vpop.f32.mrf.mxu0
      %v4080 = vadd.f32 %v4060, %v4079
      %4081 = vdwg.mxu0
      %4082 = vmatpush.msra.mxu0 %v1917
      %4083 = vmatpush.msra.mxu0 %v1909
      %4084 = vmatpush.msra.mxu0 %v1901
      %4085 = vmatpush.msra.mxu0 %v1893
      %4086 = vmatpush.msra.mxu0 %v1885
      %4087 = vmatpush.msra.mxu0 %v1877
      %4088 = vmatpush.msra.mxu0 %v1869
      %4089 = vmatpush.msra.mxu0 %v1861
      %4090 = vmatpush.msra.mxu0 %v1853
      %4091 = vmatpush.msra.mxu0 %v1845
      %4092 = vmatpush.msra.mxu0 %v1837
      %4093 = vmatpush.msra.mxu0 %v1829
      %4094 = vmatpush.msra.mxu0 %v1821
      %4095 = vmatpush.msra.mxu0 %v1813
      %4096 = vmatpush.msra.mxu0 %v1805
      %4097 = vmatpush.msra.mxu0 %v1797
      %4098 = vmatmul.f32.gmra.mxu0 %v2838
      %v4099 = vpop.f32.mrf.mxu0
      %v4100 = vadd.f32 %v3280, %v4099
      %4101 = vdwg.mxu0
      %4102 = vmatpush.msra.mxu0 %v2045
      %4103 = vmatpush.msra.mxu0 %v2037
      %4104 = vmatpush.msra.mxu0 %v2029
      %4105 = vmatpush.msra.mxu0 %v2021
      %4106 = vmatpush.msra.mxu0 %v2013
      %4107 = vmatpush.msra.mxu0 %v2005
      %4108 = vmatpush.msra.mxu0 %v1997
      %4109 = vmatpush.msra.mxu0 %v1989
      %4110 = vmatpush.msra.mxu0 %v1981
      %4111 = vmatpush.msra.mxu0 %v1973
      %4112 = vmatpush.msra.mxu0 %v1965
      %4113 = vmatpush.msra.mxu0 %v1957
      %4114 = vmatpush.msra.mxu0 %v1949
      %4115 = vmatpush.msra.mxu0 %v1941
      %4116 = vmatpush.msra.mxu0 %v1933
      %4117 = vmatpush.msra.mxu0 %v1925
      %4118 = vmatmul.f32.gmra.mxu0 %v2858
      %v4119 = vpop.f32.mrf.mxu0
      %v4120 = vadd.f32 %v4100, %v4119
      %4121 = vdwg.mxu0
      %4122 = vmatpush.msra.mxu0 %v2173
      %4123 = vmatpush.msra.mxu0 %v2165
      %4124 = vmatpush.msra.mxu0 %v2157
      %4125 = vmatpush.msra.mxu0 %v2149
      %4126 = vmatpush.msra.mxu0 %v2141
      %4127 = vmatpush.msra.mxu0 %v2133
      %4128 = vmatpush.msra.mxu0 %v2125
      %4129 = vmatpush.msra.mxu0 %v2117
      %4130 = vmatpush.msra.mxu0 %v2109
      %4131 = vmatpush.msra.mxu0 %v2101
      %4132 = vmatpush.msra.mxu0 %v2093
      %4133 = vmatpush.msra.mxu0 %v2085
      %4134 = vmatpush.msra.mxu0 %v2077
      %4135 = vmatpush.msra.mxu0 %v2069
      %4136 = vmatpush.msra.mxu0 %v2061
      %4137 = vmatpush.msra.mxu0 %v2053
      %4138 = vmatmul.f32.gmra.mxu0 %v2955
      %v4139 = vpop.f32.mrf.mxu0
      %v4140 = vadd.f32 %v4120, %v4139
      %4141 = vdwg.mxu0
      %4142 = vmatpush.msra.mxu0 %v2301
      %4143 = vmatpush.msra.mxu0 %v2293
      %4144 = vmatpush.msra.mxu0 %v2285
      %4145 = vmatpush.msra.mxu0 %v2277
      %4146 = vmatpush.msra.mxu0 %v2269
      %4147 = vmatpush.msra.mxu0 %v2261
      %4148 = vmatpush.msra.mxu0 %v2253
      %4149 = vmatpush.msra.mxu0 %v2245
      %4150 = vmatpush.msra.mxu0 %v2237
      %4151 = vmatpush.msra.mxu0 %v2229
      %4152 = vmatpush.msra.mxu0 %v2221
      %4153 = vmatpush.msra.mxu0 %v2213
      %4154 = vmatpush.msra.mxu0 %v2205
      %4155 = vmatpush.msra.mxu0 %v2197
      %4156 = vmatpush.msra.mxu0 %v2189
      %4157 = vmatpush.msra.mxu0 %v2181
      %4158 = vmatmul.f32.gmra.mxu0 %v2975
      %v4159 = vpop.f32.mrf.mxu0
      %v4160 = vadd.f32 %v4140, %v4159
      %4161 = vdwg.mxu0
      %4162 = vmatpush.msra.mxu0 %v2429
      %4163 = vmatpush.msra.mxu0 %v2421
      %4164 = vmatpush.msra.mxu0 %v2413
      %4165 = vmatpush.msra.mxu0 %v2405
      %4166 = vmatpush.msra.mxu0 %v2397
      %4167 = vmatpush.msra.mxu0 %v2389
      %4168 = vmatpush.msra.mxu0 %v2381
      %4169 = vmatpush.msra.mxu0 %v2373
      %4170 = vmatpush.msra.mxu0 %v2365
      %4171 = vmatpush.msra.mxu0 %v2357
      %4172 = vmatpush.msra.mxu0 %v2349
      %4173 = vmatpush.msra.mxu0 %v2341
      %4174 = vmatpush.msra.mxu0 %v2333
      %4175 = vmatpush.msra.mxu0 %v2325
      %4176 = vmatpush.msra.mxu0 %v2317
      %4177 = vmatpush.msra.mxu0 %v2309
      %4178 = vmatmul.f32.gmra.mxu0 %v3060
      %v4179 = vpop.f32.mrf.mxu0
      %v4180 = vadd.f32 %v4160, %v4179
      %4181 = vdwg.mxu0
      %4182 = vmatpush.msra.mxu0 %v2557
      %4183 = vmatpush.msra.mxu0 %v2549
      %4184 = vmatpush.msra.mxu0 %v2541
      %4185 = vmatpush.msra.mxu0 %v2533
      %4186 = vmatpush.msra.mxu0 %v2525
      %4187 = vmatpush.msra.mxu0 %v2517
      %4188 = vmatpush.msra.mxu0 %v2509
      %4189 = vmatpush.msra.mxu0 %v2501
      %4190 = vmatpush.msra.mxu0 %v2493
      %4191 = vmatpush.msra.mxu0 %v2485
      %4192 = vmatpush.msra.mxu0 %v2477
      %4193 = vmatpush.msra.mxu0 %v2469
      %4194 = vmatpush.msra.mxu0 %v2461
      %4195 = vmatpush.msra.mxu0 %v2453
      %4196 = vmatpush.msra.mxu0 %v2445
      %4197 = vmatpush.msra.mxu0 %v2437
      %4198 = vmatmul.f32.gmra.mxu0 %v3080
      %v4199 = vpop.f32.mrf.mxu0
      %v4200 = vadd.f32 %v4180, %v4199
      %4201 = vdwg.mxu0
      %4202 = vmatpush.msra.mxu0 %v2685
      %4203 = vmatpush.msra.mxu0 %v2677
      %4204 = vmatpush.msra.mxu0 %v2669
      %4205 = vmatpush.msra.mxu0 %v2661
      %4206 = vmatpush.msra.mxu0 %v2653
      %4207 = vmatpush.msra.mxu0 %v2645
      %4208 = vmatpush.msra.mxu0 %v2637
      %4209 = vmatpush.msra.mxu0 %v2629
      %4210 = vmatpush.msra.mxu0 %v2621
      %4211 = vmatpush.msra.mxu0 %v2613
      %4212 = vmatpush.msra.mxu0 %v2605
      %4213 = vmatpush.msra.mxu0 %v2597
      %4214 = vmatpush.msra.mxu0 %v2589
      %4215 = vmatpush.msra.mxu0 %v2581
      %4216 = vmatpush.msra.mxu0 %v2573
      %4217 = vmatpush.msra.mxu0 %v2565
      %4218 = vmatmul.f32.gmra.mxu0 %v3275
      %v4219 = vpop.f32.mrf.mxu0
      %v4220 = vadd.f32 %v4200, %v4219
      %4221 = vdwg.mxu0
      %4222 = vmatpush.msra.mxu0 %v2813
      %4223 = vmatpush.msra.mxu0 %v2805
      %4224 = vmatpush.msra.mxu0 %v2797
      %4225 = vmatpush.msra.mxu0 %v2789
      %4226 = vmatpush.msra.mxu0 %v2781
      %4227 = vmatpush.msra.mxu0 %v2773
      %4228 = vmatpush.msra.mxu0 %v2765
      %4229 = vmatpush.msra.mxu0 %v2757
      %4230 = vmatpush.msra.mxu0 %v2749
      %4231 = vmatpush.msra.mxu0 %v2741
      %4232 = vmatpush.msra.mxu0 %v2733
      %4233 = vmatpush.msra.mxu0 %v2725
      %4234 = vmatpush.msra.mxu0 %v2717
      %4235 = vmatpush.msra.mxu0 %v2709
      %4236 = vmatpush.msra.mxu0 %v2701
      %4237 = vmatpush.msra.mxu0 %v2693
      %4238 = vmatmul.f32.gmra.mxu0 %v3276
      %v4239 = vpop.f32.mrf.mxu0
      %v4240 = vadd.f32 %v4220, %v4239
      %4241 = vdwg.mxu0
      %4242 = vmatpush.msra.mxu0 %v1918
      %4243 = vmatpush.msra.mxu0 %v1910
      %4244 = vmatpush.msra.mxu0 %v1902
      %4245 = vmatpush.msra.mxu0 %v1894
      %4246 = vmatpush.msra.mxu0 %v1886
      %4247 = vmatpush.msra.mxu0 %v1878
      %4248 = vmatpush.msra.mxu0 %v1870
      %4249 = vmatpush.msra.mxu0 %v1862
      %4250 = vmatpush.msra.mxu0 %v1854
      %4251 = vmatpush.msra.mxu0 %v1846
      %4252 = vmatpush.msra.mxu0 %v1838
      %4253 = vmatpush.msra.mxu0 %v1830
      %4254 = vmatpush.msra.mxu0 %v1822
      %4255 = vmatpush.msra.mxu0 %v1814
      %4256 = vmatpush.msra.mxu0 %v1806
      %4257 = vmatpush.msra.mxu0 %v1798
      %4258 = vmatmul.f32.gmra.mxu0 %v2838
      %v4259 = vpop.f32.mrf.mxu0
      %v4260 = vadd.f32 %v3280, %v4259
      %4261 = vdwg.mxu0
      %4262 = vmatpush.msra.mxu0 %v2046
      %4263 = vmatpush.msra.mxu0 %v2038
      %4264 = vmatpush.msra.mxu0 %v2030
      %4265 = vmatpush.msra.mxu0 %v2022
      %4266 = vmatpush.msra.mxu0 %v2014
      %4267 = vmatpush.msra.mxu0 %v2006
      %4268 = vmatpush.msra.mxu0 %v1998
      %4269 = vmatpush.msra.mxu0 %v1990
      %4270 = vmatpush.msra.mxu0 %v1982
      %4271 = vmatpush.msra.mxu0 %v1974
      %4272 = vmatpush.msra.mxu0 %v1966
      %4273 = vmatpush.msra.mxu0 %v1958
      %4274 = vmatpush.msra.mxu0 %v1950
      %4275 = vmatpush.msra.mxu0 %v1942
      %4276 = vmatpush.msra.mxu0 %v1934
      %4277 = vmatpush.msra.mxu0 %v1926
      %4278 = vmatmul.f32.gmra.mxu0 %v2858
      %v4279 = vpop.f32.mrf.mxu0
      %v4280 = vadd.f32 %v4260, %v4279
      %4281 = vdwg.mxu0
      %4282 = vmatpush.msra.mxu0 %v2174
      %4283 = vmatpush.msra.mxu0 %v2166
      %4284 = vmatpush.msra.mxu0 %v2158
      %4285 = vmatpush.msra.mxu0 %v2150
      %4286 = vmatpush.msra.mxu0 %v2142
      %4287 = vmatpush.msra.mxu0 %v2134
      %4288 = vmatpush.msra.mxu0 %v2126
      %4289 = vmatpush.msra.mxu0 %v2118
      %4290 = vmatpush.msra.mxu0 %v2110
      %4291 = vmatpush.msra.mxu0 %v2102
      %4292 = vmatpush.msra.mxu0 %v2094
      %4293 = vmatpush.msra.mxu0 %v2086
      %4294 = vmatpush.msra.mxu0 %v2078
      %4295 = vmatpush.msra.mxu0 %v2070
      %4296 = vmatpush.msra.mxu0 %v2062
      %4297 = vmatpush.msra.mxu0 %v2054
      %4298 = vmatmul.f32.gmra.mxu0 %v2955
      %v4299 = vpop.f32.mrf.mxu0
      %v4300 = vadd.f32 %v4280, %v4299
      %4301 = vdwg.mxu0
      %4302 = vmatpush.msra.mxu0 %v2302
      %4303 = vmatpush.msra.mxu0 %v2294
      %4304 = vmatpush.msra.mxu0 %v2286
      %4305 = vmatpush.msra.mxu0 %v2278
      %4306 = vmatpush.msra.mxu0 %v2270
      %4307 = vmatpush.msra.mxu0 %v2262
      %4308 = vmatpush.msra.mxu0 %v2254
      %4309 = vmatpush.msra.mxu0 %v2246
      %4310 = vmatpush.msra.mxu0 %v2238
      %4311 = vmatpush.msra.mxu0 %v2230
      %4312 = vmatpush.msra.mxu0 %v2222
      %4313 = vmatpush.msra.mxu0 %v2214
      %4314 = vmatpush.msra.mxu0 %v2206
      %4315 = vmatpush.msra.mxu0 %v2198
      %4316 = vmatpush.msra.mxu0 %v2190
      %4317 = vmatpush.msra.mxu0 %v2182
      %4318 = vmatmul.f32.gmra.mxu0 %v2975
      %v4319 = vpop.f32.mrf.mxu0
      %v4320 = vadd.f32 %v4300, %v4319
      %4321 = vdwg.mxu0
      %4322 = vmatpush.msra.mxu0 %v2430
      %4323 = vmatpush.msra.mxu0 %v2422
      %4324 = vmatpush.msra.mxu0 %v2414
      %4325 = vmatpush.msra.mxu0 %v2406
      %4326 = vmatpush.msra.mxu0 %v2398
      %4327 = vmatpush.msra.mxu0 %v2390
      %4328 = vmatpush.msra.mxu0 %v2382
      %4329 = vmatpush.msra.mxu0 %v2374
      %4330 = vmatpush.msra.mxu0 %v2366
      %4331 = vmatpush.msra.mxu0 %v2358
      %4332 = vmatpush.msra.mxu0 %v2350
      %4333 = vmatpush.msra.mxu0 %v2342
      %4334 = vmatpush.msra.mxu0 %v2334
      %4335 = vmatpush.msra.mxu0 %v2326
      %4336 = vmatpush.msra.mxu0 %v2318
      %4337 = vmatpush.msra.mxu0 %v2310
      %4338 = vmatmul.f32.gmra.mxu0 %v3060
      %v4339 = vpop.f32.mrf.mxu0
      %v4340 = vadd.f32 %v4320, %v4339
      %4341 = vdwg.mxu0
      %4342 = vmatpush.msra.mxu0 %v2558
      %4343 = vmatpush.msra.mxu0 %v2550
      %4344 = vmatpush.msra.mxu0 %v2542
      %4345 = vmatpush.msra.mxu0 %v2534
      %4346 = vmatpush.msra.mxu0 %v2526
      %4347 = vmatpush.msra.mxu0 %v2518
      %4348 = vmatpush.msra.mxu0 %v2510
      %4349 = vmatpush.msra.mxu0 %v2502
      %4350 = vmatpush.msra.mxu0 %v2494
      %4351 = vmatpush.msra.mxu0 %v2486
      %4352 = vmatpush.msra.mxu0 %v2478
      %4353 = vmatpush.msra.mxu0 %v2470
      %4354 = vmatpush.msra.mxu0 %v2462
      %4355 = vmatpush.msra.mxu0 %v2454
      %4356 = vmatpush.msra.mxu0 %v2446
      %4357 = vmatpush.msra.mxu0 %v2438
      %4358 = vmatmul.f32.gmra.mxu0 %v3080
      %v4359 = vpop.f32.mrf.mxu0
      %v4360 = vadd.f32 %v4340, %v4359
      %4361 = vdwg.mxu0
      %4362 = vmatpush.msra.mxu0 %v2686
      %4363 = vmatpush.msra.mxu0 %v2678
      %4364 = vmatpush.msra.mxu0 %v2670
      %4365 = vmatpush.msra.mxu0 %v2662
      %4366 = vmatpush.msra.mxu0 %v2654
      %4367 = vmatpush.msra.mxu0 %v2646
      %4368 = vmatpush.msra.mxu0 %v2638
      %4369 = vmatpush.msra.mxu0 %v2630
      %4370 = vmatpush.msra.mxu0 %v2622
      %4371 = vmatpush.msra.mxu0 %v2614
      %4372 = vmatpush.msra.mxu0 %v2606
      %4373 = vmatpush.msra.mxu0 %v2598
      %4374 = vmatpush.msra.mxu0 %v2590
      %4375 = vmatpush.msra.mxu0 %v2582
      %4376 = vmatpush.msra.mxu0 %v2574
      %4377 = vmatpush.msra.mxu0 %v2566
      %4378 = vmatmul.f32.gmra.mxu0 %v3275
      %v4379 = vpop.f32.mrf.mxu0
      %v4380 = vadd.f32 %v4360, %v4379
      %4381 = vdwg.mxu0
      %4382 = vmatpush.msra.mxu0 %v2814
      %4383 = vmatpush.msra.mxu0 %v2806
      %4384 = vmatpush.msra.mxu0 %v2798
      %4385 = vmatpush.msra.mxu0 %v2790
      %4386 = vmatpush.msra.mxu0 %v2782
      %4387 = vmatpush.msra.mxu0 %v2774
      %4388 = vmatpush.msra.mxu0 %v2766
      %4389 = vmatpush.msra.mxu0 %v2758
      %4390 = vmatpush.msra.mxu0 %v2750
      %4391 = vmatpush.msra.mxu0 %v2742
      %4392 = vmatpush.msra.mxu0 %v2734
      %4393 = vmatpush.msra.mxu0 %v2726
      %4394 = vmatpush.msra.mxu0 %v2718
      %4395 = vmatpush.msra.mxu0 %v2710
      %4396 = vmatpush.msra.mxu0 %v2702
      %4397 = vmatpush.msra.mxu0 %v2694
      %4398 = vmatmul.f32.gmra.mxu0 %v3276
      %v4399 = vpop.f32.mrf.mxu0
      %v4400 = vadd.f32 %v4380, %v4399
      %4401 = vdwg.mxu0
      %4402 = vmatpush.msra.mxu0 %v1919
      %4403 = vmatpush.msra.mxu0 %v1911
      %4404 = vmatpush.msra.mxu0 %v1903
      %4405 = vmatpush.msra.mxu0 %v1895
      %4406 = vmatpush.msra.mxu0 %v1887
      %4407 = vmatpush.msra.mxu0 %v1879
      %4408 = vmatpush.msra.mxu0 %v1871
      %4409 = vmatpush.msra.mxu0 %v1863
      %4410 = vmatpush.msra.mxu0 %v1855
      %4411 = vmatpush.msra.mxu0 %v1847
      %4412 = vmatpush.msra.mxu0 %v1839
      %4413 = vmatpush.msra.mxu0 %v1831
      %4414 = vmatpush.msra.mxu0 %v1823
      %4415 = vmatpush.msra.mxu0 %v1815
      %4416 = vmatpush.msra.mxu0 %v1807
      %4417 = vmatpush.msra.mxu0 %v1799
      %4418 = vmatmul.f32.gmra.mxu0 %v2838
      %v4419 = vpop.f32.mrf.mxu0
      %v4420 = vadd.f32 %v3280, %v4419
      %4421 = vdwg.mxu0
      %4422 = vmatpush.msra.mxu0 %v2047
      %4423 = vmatpush.msra.mxu0 %v2039
      %4424 = vmatpush.msra.mxu0 %v2031
      %4425 = vmatpush.msra.mxu0 %v2023
      %4426 = vmatpush.msra.mxu0 %v2015
      %4427 = vmatpush.msra.mxu0 %v2007
      %4428 = vmatpush.msra.mxu0 %v1999
      %4429 = vmatpush.msra.mxu0 %v1991
      %4430 = vmatpush.msra.mxu0 %v1983
      %4431 = vmatpush.msra.mxu0 %v1975
      %4432 = vmatpush.msra.mxu0 %v1967
      %4433 = vmatpush.msra.mxu0 %v1959
      %4434 = vmatpush.msra.mxu0 %v1951
      %4435 = vmatpush.msra.mxu0 %v1943
      %4436 = vmatpush.msra.mxu0 %v1935
      %4437 = vmatpush.msra.mxu0 %v1927
      %4438 = vmatmul.f32.gmra.mxu0 %v2858
      %v4439 = vpop.f32.mrf.mxu0
      %v4440 = vadd.f32 %v4420, %v4439
      %4441 = vdwg.mxu0
      %4442 = vmatpush.msra.mxu0 %v2175
      %4443 = vmatpush.msra.mxu0 %v2167
      %4444 = vmatpush.msra.mxu0 %v2159
      %4445 = vmatpush.msra.mxu0 %v2151
      %4446 = vmatpush.msra.mxu0 %v2143
      %4447 = vmatpush.msra.mxu0 %v2135
      %4448 = vmatpush.msra.mxu0 %v2127
      %4449 = vmatpush.msra.mxu0 %v2119
      %4450 = vmatpush.msra.mxu0 %v2111
      %4451 = vmatpush.msra.mxu0 %v2103
      %4452 = vmatpush.msra.mxu0 %v2095
      %4453 = vmatpush.msra.mxu0 %v2087
      %4454 = vmatpush.msra.mxu0 %v2079
      %4455 = vmatpush.msra.mxu0 %v2071
      %4456 = vmatpush.msra.mxu0 %v2063
      %4457 = vmatpush.msra.mxu0 %v2055
      %4458 = vmatmul.f32.gmra.mxu0 %v2955
      %v4459 = vpop.f32.mrf.mxu0
      %v4460 = vadd.f32 %v4440, %v4459
      %4461 = vdwg.mxu0
      %4462 = vmatpush.msra.mxu0 %v2303
      %4463 = vmatpush.msra.mxu0 %v2295
      %4464 = vmatpush.msra.mxu0 %v2287
      %4465 = vmatpush.msra.mxu0 %v2279
      %4466 = vmatpush.msra.mxu0 %v2271
      %4467 = vmatpush.msra.mxu0 %v2263
      %4468 = vmatpush.msra.mxu0 %v2255
      %4469 = vmatpush.msra.mxu0 %v2247
      %4470 = vmatpush.msra.mxu0 %v2239
      %4471 = vmatpush.msra.mxu0 %v2231
      %4472 = vmatpush.msra.mxu0 %v2223
      %4473 = vmatpush.msra.mxu0 %v2215
      %4474 = vmatpush.msra.mxu0 %v2207
      %4475 = vmatpush.msra.mxu0 %v2199
      %4476 = vmatpush.msra.mxu0 %v2191
      %4477 = vmatpush.msra.mxu0 %v2183
      %4478 = vmatmul.f32.gmra.mxu0 %v2975
      %v4479 = vpop.f32.mrf.mxu0
      %v4480 = vadd.f32 %v4460, %v4479
      %4481 = vdwg.mxu0
      %4482 = vmatpush.msra.mxu0 %v2431
      %4483 = vmatpush.msra.mxu0 %v2423
      %4484 = vmatpush.msra.mxu0 %v2415
      %4485 = vmatpush.msra.mxu0 %v2407
      %4486 = vmatpush.msra.mxu0 %v2399
      %4487 = vmatpush.msra.mxu0 %v2391
      %4488 = vmatpush.msra.mxu0 %v2383
      %4489 = vmatpush.msra.mxu0 %v2375
      %4490 = vmatpush.msra.mxu0 %v2367
      %4491 = vmatpush.msra.mxu0 %v2359
      %4492 = vmatpush.msra.mxu0 %v2351
      %4493 = vmatpush.msra.mxu0 %v2343
      %4494 = vmatpush.msra.mxu0 %v2335
      %4495 = vmatpush.msra.mxu0 %v2327
      %4496 = vmatpush.msra.mxu0 %v2319
      %4497 = vmatpush.msra.mxu0 %v2311
      %4498 = vmatmul.f32.gmra.mxu0 %v3060
      %v4499 = vpop.f32.mrf.mxu0
      %v4500 = vadd.f32 %v4480, %v4499
      %4501 = vdwg.mxu0
      %4502 = vmatpush.msra.mxu0 %v2559
      %4503 = vmatpush.msra.mxu0 %v2551
      %4504 = vmatpush.msra.mxu0 %v2543
      %4505 = vmatpush.msra.mxu0 %v2535
      %4506 = vmatpush.msra.mxu0 %v2527
      %4507 = vmatpush.msra.mxu0 %v2519
      %4508 = vmatpush.msra.mxu0 %v2511
      %4509 = vmatpush.msra.mxu0 %v2503
      %4510 = vmatpush.msra.mxu0 %v2495
      %4511 = vmatpush.msra.mxu0 %v2487
      %4512 = vmatpush.msra.mxu0 %v2479
      %4513 = vmatpush.msra.mxu0 %v2471
      %4514 = vmatpush.msra.mxu0 %v2463
      %4515 = vmatpush.msra.mxu0 %v2455
      %4516 = vmatpush.msra.mxu0 %v2447
      %4517 = vmatpush.msra.mxu0 %v2439
      %4518 = vmatmul.f32.gmra.mxu0 %v3080
      %v4519 = vpop.f32.mrf.mxu0
      %v4520 = vadd.f32 %v4500, %v4519
      %4521 = vdwg.mxu0
      %4522 = vmatpush.msra.mxu0 %v2687
      %4523 = vmatpush.msra.mxu0 %v2679
      %4524 = vmatpush.msra.mxu0 %v2671
      %4525 = vmatpush.msra.mxu0 %v2663
      %4526 = vmatpush.msra.mxu0 %v2655
      %4527 = vmatpush.msra.mxu0 %v2647
      %4528 = vmatpush.msra.mxu0 %v2639
      %4529 = vmatpush.msra.mxu0 %v2631
      %4530 = vmatpush.msra.mxu0 %v2623
      %4531 = vmatpush.msra.mxu0 %v2615
      %4532 = vmatpush.msra.mxu0 %v2607
      %4533 = vmatpush.msra.mxu0 %v2599
      %4534 = vmatpush.msra.mxu0 %v2591
      %4535 = vmatpush.msra.mxu0 %v2583
      %4536 = vmatpush.msra.mxu0 %v2575
      %4537 = vmatpush.msra.mxu0 %v2567
      %4538 = vmatmul.f32.gmra.mxu0 %v3275
      %v4539 = vpop.f32.mrf.mxu0
      %v4540 = vadd.f32 %v4520, %v4539
      %4541 = vdwg.mxu0
      %4542 = vmatpush.msra.mxu0 %v2815
      %4543 = vmatpush.msra.mxu0 %v2807
      %4544 = vmatpush.msra.mxu0 %v2799
      %4545 = vmatpush.msra.mxu0 %v2791
      %4546 = vmatpush.msra.mxu0 %v2783
      %4547 = vmatpush.msra.mxu0 %v2775
      %4548 = vmatpush.msra.mxu0 %v2767
      %4549 = vmatpush.msra.mxu0 %v2759
      %4550 = vmatpush.msra.mxu0 %v2751
      %4551 = vmatpush.msra.mxu0 %v2743
      %4552 = vmatpush.msra.mxu0 %v2735
      %4553 = vmatpush.msra.mxu0 %v2727
      %4554 = vmatpush.msra.mxu0 %v2719
      %4555 = vmatpush.msra.mxu0 %v2711
      %4556 = vmatpush.msra.mxu0 %v2703
      %4557 = vmatpush.msra.mxu0 %v2695
      %4558 = vmatmul.f32.gmra.mxu0 %v3276
      %v4559 = vpop.f32.mrf.mxu0
      %v4560 = vadd.f32 %v4540, %v4559
      %4561 = vdwg.mxu0
      %v4562 = vadd.f32 %v3440, %v3600
      %v4563 = vadd.f32 %v4562, %v3760
      %v4564 = vadd.f32 %v4563, %v3920
      %v4565 = vadd.f32 %v4564, %v4080
      %v4566 = vadd.f32 %v4565, %v4240
      %v4567 = vadd.f32 %v4566, %v4400
      %v4568 = vadd.f32 %v4567, %v4560
      %4569 = vadd.xlane.f32.xlu0 %v4568
      %v4570 = vpop.xlane.xlu0 %4569
      %v4571 = vrcp.pop 1024.0
      %v4572 = vmul.f32 1024.0, %v4571
      %v4573 = vsub.f32 1.0, %v4572
      %v4574 = vmul.f32 %v4571, %v4573
      %v4575 = vadd.f32 %v4571, %v4574
      %vm4576 = vweird.f32 %v4571
      %v4577 = vsel %vm4576, %v4571, %v4575
      %v4578 = vmul.f32 %v4570, %v4577
      %v4579 = vsub.f32 %v3440, %v4578
      %v4580 = vsub.f32 %v3600, %v4578
      %v4581 = vsub.f32 %v3760, %v4578
      %v4582 = vsub.f32 %v3920, %v4578
      %v4583 = vsub.f32 %v4080, %v4578
      %v4584 = vsub.f32 %v4240, %v4578
      %v4585 = vsub.f32 %v4400, %v4578
      %v4586 = vsub.f32 %v4560, %v4578
      %v4587 = vmul.f32 %v4579, %v4579
      %v4588 = vmul.f32 %v4580, %v4580
      %v4589 = vmul.f32 %v4581, %v4581
      %v4590 = vmul.f32 %v4582, %v4582
      %v4591 = vmul.f32 %v4583, %v4583
      %v4592 = vmul.f32 %v4584, %v4584
      %v4593 = vmul.f32 %v4585, %v4585
      %v4594 = vmul.f32 %v4586, %v4586
      %v4595 = vadd.f32 %v4587, %v4588
      %v4596 = vadd.f32 %v4595, %v4589
      %v4597 = vadd.f32 %v4596, %v4590
      %v4598 = vadd.f32 %v4597, %v4591
      %v4599 = vadd.f32 %v4598, %v4592
      %v4600 = vadd.f32 %v4599, %v4593
      %v4601 = vadd.f32 %v4600, %v4594
      %4602 = vadd.xlane.f32.xlu0 %v4601
      %v4603 = vpop.xlane.xlu0 %4602
      %v4604 = vmul.f32 %v4603, %v4577
      %v4605 = vadd.f32 %v4604, 1e-05
      %v4606 = vrsqrt.pop %v4605
      %v4607 = vmul.f32 %v4606, %v4605
      %v4608 = vmul.f32 %v4607, %v4606
      %v4609 = vmul.f32 0.5, %v4608
      %v4610 = vsub.f32 1.5, %v4609
      %v4611 = vmul.f32 %v4606, %v4610
      %vm4612 = vweird.f32 %v4605
      %vm4613 = vweird.f32 %v4606
      %vm4614 = vmor %vm4612, %vm4613
      %v4615 = vsel %vm4614, %v4606, %v4611
      %v4616 = vmul.f32 %v4579, %v4615
      %v4617 = vmul.f32 %v4580, %v4615
      %v4618 = vmul.f32 %v4581, %v4615
      %v4619 = vmul.f32 %v4582, %v4615
      %v4620 = vmul.f32 %v4583, %v4615
      %v4621 = vmul.f32 %v4584, %v4615
      %v4622 = vmul.f32 %v4585, %v4615
      %v4623 = vmul.f32 %v4586, %v4615
      %v4624 = vmax.f32 %v4616, 0.0
      %v4625 = vmax.f32 %v4617, 0.0
      %v4626 = vmax.f32 %v4618, 0.0
      %v4627 = vmax.f32 %v4619, 0.0
      %v4628 = vmax.f32 %v4620, 0.0
      %v4629 = vmax.f32 %v4621, 0.0
      %v4630 = vmax.f32 %v4622, 0.0
      %v4631 = vmax.f32 %v4623, 0.0
      %v4632 = vld [vmem:[%s13] sm:$0x77]
      %v4633 = vld [vmem:[%s13 + $0x8] sm:$0x77]
      %v4634 = vld [vmem:[%s14] sm:$0x7]
      %4636 = vrot.lane.b32.xlu0 %v4624, 125
      %v4637 = vpop.permute.xlu0 %4636
      %4639 = vrot.lane.b32.xlu0 %v4624, 127
      %v4640 = vpop.permute.xlu0 %4639
      %4642 = vrot.lane.b32.xlu0 %v4624, 1
      %v4643 = vpop.permute.xlu0 %4642
      %4645 = vrot.lane.b32.xlu0 %v4624, 3
      %v4646 = vpop.permute.xlu0 %4645
      %4648 = vrot.lane.b32.xlu0 %v4624, 5
      %v4649 = vpop.permute.xlu0 %4648
      %4651 = vrot.lane.b32.xlu0 %v4624, 7
      %v4652 = vpop.permute.xlu0 %4651
      %4654 = vrot.lane.b32.xlu0 %v4624, 9
      %v4655 = vpop.permute.xlu0 %4654
      %vm4657 = vcmask 7168
      %v4658 = vsel %vm4657, %v4637, %v4640
      %vm4659 = vcmask 15360
      %v4660 = vsel %vm4659, %v4658, %v4643
      %vm4661 = vcmask 23552
      %v4662 = vsel %vm4661, %v4660, %v4646
      %vm4663 = vcmask 285696
      %v4664 = vsel %vm4663, %v4662, %v4649
      %vm4665 = vcmask 293888
      %v4666 = vsel %vm4665, %v4664, %v4652
      %vm4667 = vcmask 302080
      %v4668 = vsel %vm4667, %v4666, %v4655
      %4669 = vrot.lane.b32.xlu0 %v4624, 93
      %v4670 = vpop.permute.xlu0 %4669
      %4672 = vrot.lane.b32.xlu0 %v4624, 95
      %v4673 = vpop.permute.xlu0 %4672
      %4675 = vrot.lane.b32.xlu0 %v4624, 97
      %v4676 = vpop.permute.xlu0 %4675
      %4678 = vrot.lane.b32.xlu0 %v4624, 99
      %v4679 = vpop.permute.xlu0 %4678
      %4681 = vrot.lane.b32.xlu0 %v4624, 101
      %v4682 = vpop.permute.xlu0 %4681
      %4684 = vrot.lane.b32.xlu0 %v4624, 103
      %v4685 = vpop.permute.xlu0 %4684
      %4687 = vrot.lane.b32.xlu0 %v4624, 105
      %v4688 = vpop.permute.xlu0 %4687
      %v4690 = vsel %vm4657, %v4670, %v4673
      %v4691 = vsel %vm4659, %v4690, %v4676
      %v4692 = vsel %vm4661, %v4691, %v4679
      %v4693 = vsel %vm4663, %v4692, %v4682
      %v4694 = vsel %vm4665, %v4693, %v4685
      %v4695 = vsel %vm4667, %v4694, %v4688
      %4696 = vrot.lane.b32.xlu0 %v4624, 61
      %v4697 = vpop.permute.xlu0 %4696
      %4699 = vrot.lane.b32.xlu0 %v4624, 63
      %v4700 = vpop.permute.xlu0 %4699
      %4702 = vrot.lane.b32.xlu0 %v4624, 65
      %v4703 = vpop.permute.xlu0 %4702
      %4705 = vrot.lane.b32.xlu0 %v4624, 67
      %v4706 = vpop.permute.xlu0 %4705
      %4708 = vrot.lane.b32.xlu0 %v4624, 69
      %v4709 = vpop.permute.xlu0 %4708
      %4711 = vrot.lane.b32.xlu0 %v4624, 71
      %v4712 = vpop.permute.xlu0 %4711
      %4714 = vrot.lane.b32.xlu0 %v4624, 73
      %v4715 = vpop.permute.xlu0 %4714
      %v4717 = vsel %vm4657, %v4697, %v4700
      %v4718 = vsel %vm4659, %v4717, %v4703
      %v4719 = vsel %vm4661, %v4718, %v4706
      %v4720 = vsel %vm4663, %v4719, %v4709
      %v4721 = vsel %vm4665, %v4720, %v4712
      %v4722 = vsel %vm4667, %v4721, %v4715
      %4723 = vrot.lane.b32.xlu0 %v4624, 29
      %v4724 = vpop.permute.xlu0 %4723
      %4726 = vrot.lane.b32.xlu0 %v4624, 31
      %v4727 = vpop.permute.xlu0 %4726
      %4729 = vrot.lane.b32.xlu0 %v4624, 33
      %v4730 = vpop.permute.xlu0 %4729
      %4732 = vrot.lane.b32.xlu0 %v4624, 35
      %v4733 = vpop.permute.xlu0 %4732
      %4735 = vrot.lane.b32.xlu0 %v4624, 37
      %v4736 = vpop.permute.xlu0 %4735
      %4738 = vrot.lane.b32.xlu0 %v4624, 39
      %v4739 = vpop.permute.xlu0 %4738
      %4741 = vrot.lane.b32.xlu0 %v4624, 41
      %v4742 = vpop.permute.xlu0 %4741
      %v4744 = vsel %vm4657, %v4724, %v4727
      %v4745 = vsel %vm4659, %v4744, %v4730
      %v4746 = vsel %vm4661, %v4745, %v4733
      %v4747 = vsel %vm4663, %v4746, %v4736
      %v4748 = vsel %vm4665, %v4747, %v4739
      %v4749 = vsel %vm4667, %v4748, %v4742
      %4751 = vrot.lane.b32.xlu0 %v4625, 125
      %v4752 = vpop.permute.xlu0 %4751
      %4754 = vrot.lane.b32.xlu0 %v4625, 127
      %v4755 = vpop.permute.xlu0 %4754
      %4757 = vrot.lane.b32.xlu0 %v4625, 1
      %v4758 = vpop.permute.xlu0 %4757
      %4760 = vrot.lane.b32.xlu0 %v4625, 3
      %v4761 = vpop.permute.xlu0 %4760
      %4763 = vrot.lane.b32.xlu0 %v4625, 5
      %v4764 = vpop.permute.xlu0 %4763
      %4766 = vrot.lane.b32.xlu0 %v4625, 7
      %v4767 = vpop.permute.xlu0 %4766
      %4769 = vrot.lane.b32.xlu0 %v4625, 9
      %v4770 = vpop.permute.xlu0 %4769
      %v4772 = vsel %vm4657, %v4752, %v4755
      %v4773 = vsel %vm4659, %v4772, %v4758
      %v4774 = vsel %vm4661, %v4773, %v4761
      %v4775 = vsel %vm4663, %v4774, %v4764
      %v4776 = vsel %vm4665, %v4775, %v4767
      %v4777 = vsel %vm4667, %v4776, %v4770
      %4778 = vrot.lane.b32.xlu0 %v4625, 93
      %v4779 = vpop.permute.xlu0 %4778
      %4781 = vrot.lane.b32.xlu0 %v4625, 95
      %v4782 = vpop.permute.xlu0 %4781
      %4784 = vrot.lane.b32.xlu0 %v4625, 97
      %v4785 = vpop.permute.xlu0 %4784
      %4787 = vrot.lane.b32.xlu0 %v4625, 99
      %v4788 = vpop.permute.xlu0 %4787
      %4790 = vrot.lane.b32.xlu0 %v4625, 101
      %v4791 = vpop.permute.xlu0 %4790
      %4793 = vrot.lane.b32.xlu0 %v4625, 103
      %v4794 = vpop.permute.xlu0 %4793
      %4796 = vrot.lane.b32.xlu0 %v4625, 105
      %v4797 = vpop.permute.xlu0 %4796
      %v4799 = vsel %vm4657, %v4779, %v4782
      %v4800 = vsel %vm4659, %v4799, %v4785
      %v4801 = vsel %vm4661, %v4800, %v4788
      %v4802 = vsel %vm4663, %v4801, %v4791
      %v4803 = vsel %vm4665, %v4802, %v4794
      %v4804 = vsel %vm4667, %v4803, %v4797
      %4805 = vrot.lane.b32.xlu0 %v4625, 61
      %v4806 = vpop.permute.xlu0 %4805
      %4808 = vrot.lane.b32.xlu0 %v4625, 63
      %v4809 = vpop.permute.xlu0 %4808
      %4811 = vrot.lane.b32.xlu0 %v4625, 65
      %v4812 = vpop.permute.xlu0 %4811
      %4814 = vrot.lane.b32.xlu0 %v4625, 67
      %v4815 = vpop.permute.xlu0 %4814
      %4817 = vrot.lane.b32.xlu0 %v4625, 69
      %v4818 = vpop.permute.xlu0 %4817
      %4820 = vrot.lane.b32.xlu0 %v4625, 71
      %v4821 = vpop.permute.xlu0 %4820
      %4823 = vrot.lane.b32.xlu0 %v4625, 73
      %v4824 = vpop.permute.xlu0 %4823
      %v4826 = vsel %vm4657, %v4806, %v4809
      %v4827 = vsel %vm4659, %v4826, %v4812
      %v4828 = vsel %vm4661, %v4827, %v4815
      %v4829 = vsel %vm4663, %v4828, %v4818
      %v4830 = vsel %vm4665, %v4829, %v4821
      %v4831 = vsel %vm4667, %v4830, %v4824
      %4832 = vrot.lane.b32.xlu0 %v4625, 29
      %v4833 = vpop.permute.xlu0 %4832
      %4835 = vrot.lane.b32.xlu0 %v4625, 31
      %v4836 = vpop.permute.xlu0 %4835
      %4838 = vrot.lane.b32.xlu0 %v4625, 33
      %v4839 = vpop.permute.xlu0 %4838
      %4841 = vrot.lane.b32.xlu0 %v4625, 35
      %v4842 = vpop.permute.xlu0 %4841
      %4844 = vrot.lane.b32.xlu0 %v4625, 37
      %v4845 = vpop.permute.xlu0 %4844
      %4847 = vrot.lane.b32.xlu0 %v4625, 39
      %v4848 = vpop.permute.xlu0 %4847
      %4850 = vrot.lane.b32.xlu0 %v4625, 41
      %v4851 = vpop.permute.xlu0 %4850
      %v4853 = vsel %vm4657, %v4833, %v4836
      %v4854 = vsel %vm4659, %v4853, %v4839
      %v4855 = vsel %vm4661, %v4854, %v4842
      %v4856 = vsel %vm4663, %v4855, %v4845
      %v4857 = vsel %vm4665, %v4856, %v4848
      %v4858 = vsel %vm4667, %v4857, %v4851
      %4860 = vrot.lane.b32.xlu0 %v4626, 125
      %v4861 = vpop.permute.xlu0 %4860
      %4863 = vrot.lane.b32.xlu0 %v4626, 127
      %v4864 = vpop.permute.xlu0 %4863
      %4866 = vrot.lane.b32.xlu0 %v4626, 1
      %v4867 = vpop.permute.xlu0 %4866
      %4869 = vrot.lane.b32.xlu0 %v4626, 3
      %v4870 = vpop.permute.xlu0 %4869
      %4872 = vrot.lane.b32.xlu0 %v4626, 5
      %v4873 = vpop.permute.xlu0 %4872
      %4875 = vrot.lane.b32.xlu0 %v4626, 7
      %v4876 = vpop.permute.xlu0 %4875
      %4878 = vrot.lane.b32.xlu0 %v4626, 9
      %v4879 = vpop.permute.xlu0 %4878
      %v4881 = vsel %vm4657, %v4861, %v4864
      %v4882 = vsel %vm4659, %v4881, %v4867
      %v4883 = vsel %vm4661, %v4882, %v4870
      %v4884 = vsel %vm4663, %v4883, %v4873
      %v4885 = vsel %vm4665, %v4884, %v4876
      %v4886 = vsel %vm4667, %v4885, %v4879
      %4887 = vrot.lane.b32.xlu0 %v4626, 93
      %v4888 = vpop.permute.xlu0 %4887
      %4890 = vrot.lane.b32.xlu0 %v4626, 95
      %v4891 = vpop.permute.xlu0 %4890
      %4893 = vrot.lane.b32.xlu0 %v4626, 97
      %v4894 = vpop.permute.xlu0 %4893
      %4896 = vrot.lane.b32.xlu0 %v4626, 99
      %v4897 = vpop.permute.xlu0 %4896
      %4899 = vrot.lane.b32.xlu0 %v4626, 101
      %v4900 = vpop.permute.xlu0 %4899
      %4902 = vrot.lane.b32.xlu0 %v4626, 103
      %v4903 = vpop.permute.xlu0 %4902
      %4905 = vrot.lane.b32.xlu0 %v4626, 105
      %v4906 = vpop.permute.xlu0 %4905
      %v4908 = vsel %vm4657, %v4888, %v4891
      %v4909 = vsel %vm4659, %v4908, %v4894
      %v4910 = vsel %vm4661, %v4909, %v4897
      %v4911 = vsel %vm4663, %v4910, %v4900
      %v4912 = vsel %vm4665, %v4911, %v4903
      %v4913 = vsel %vm4667, %v4912, %v4906
      %4914 = vrot.lane.b32.xlu0 %v4626, 61
      %v4915 = vpop.permute.xlu0 %4914
      %4917 = vrot.lane.b32.xlu0 %v4626, 63
      %v4918 = vpop.permute.xlu0 %4917
      %4920 = vrot.lane.b32.xlu0 %v4626, 65
      %v4921 = vpop.permute.xlu0 %4920
      %4923 = vrot.lane.b32.xlu0 %v4626, 67
      %v4924 = vpop.permute.xlu0 %4923
      %4926 = vrot.lane.b32.xlu0 %v4626, 69
      %v4927 = vpop.permute.xlu0 %4926
      %4929 = vrot.lane.b32.xlu0 %v4626, 71
      %v4930 = vpop.permute.xlu0 %4929
      %4932 = vrot.lane.b32.xlu0 %v4626, 73
      %v4933 = vpop.permute.xlu0 %4932
      %v4935 = vsel %vm4657, %v4915, %v4918
      %v4936 = vsel %vm4659, %v4935, %v4921
      %v4937 = vsel %vm4661, %v4936, %v4924
      %v4938 = vsel %vm4663, %v4937, %v4927
      %v4939 = vsel %vm4665, %v4938, %v4930
      %v4940 = vsel %vm4667, %v4939, %v4933
      %4941 = vrot.lane.b32.xlu0 %v4626, 29
      %v4942 = vpop.permute.xlu0 %4941
      %4944 = vrot.lane.b32.xlu0 %v4626, 31
      %v4945 = vpop.permute.xlu0 %4944
      %4947 = vrot.lane.b32.xlu0 %v4626, 33
      %v4948 = vpop.permute.xlu0 %4947
      %4950 = vrot.lane.b32.xlu0 %v4626, 35
      %v4951 = vpop.permute.xlu0 %4950
      %4953 = vrot.lane.b32.xlu0 %v4626, 37
      %v4954 = vpop.permute.xlu0 %4953
      %4956 = vrot.lane.b32.xlu0 %v4626, 39
      %v4957 = vpop.permute.xlu0 %4956
      %4959 = vrot.lane.b32.xlu0 %v4626, 41
      %v4960 = vpop.permute.xlu0 %4959
      %v4962 = vsel %vm4657, %v4942, %v4945
      %v4963 = vsel %vm4659, %v4962, %v4948
      %v4964 = vsel %vm4661, %v4963, %v4951
      %v4965 = vsel %vm4663, %v4964, %v4954
      %v4966 = vsel %vm4665, %v4965, %v4957
      %v4967 = vsel %vm4667, %v4966, %v4960
      %4969 = vrot.lane.b32.xlu0 %v4627, 125
      %v4970 = vpop.permute.xlu0 %4969
      %4972 = vrot.lane.b32.xlu0 %v4627, 127
      %v4973 = vpop.permute.xlu0 %4972
      %4975 = vrot.lane.b32.xlu0 %v4627, 1
      %v4976 = vpop.permute.xlu0 %4975
      %4978 = vrot.lane.b32.xlu0 %v4627, 3
      %v4979 = vpop.permute.xlu0 %4978
      %4981 = vrot.lane.b32.xlu0 %v4627, 5
      %v4982 = vpop.permute.xlu0 %4981
      %4984 = vrot.lane.b32.xlu0 %v4627, 7
      %v4985 = vpop.permute.xlu0 %4984
      %4987 = vrot.lane.b32.xlu0 %v4627, 9
      %v4988 = vpop.permute.xlu0 %4987
      %v4990 = vsel %vm4657, %v4970, %v4973
      %v4991 = vsel %vm4659, %v4990, %v4976
      %v4992 = vsel %vm4661, %v4991, %v4979
      %v4993 = vsel %vm4663, %v4992, %v4982
      %v4994 = vsel %vm4665, %v4993, %v4985
      %v4995 = vsel %vm4667, %v4994, %v4988
      %4996 = vrot.lane.b32.xlu0 %v4627, 93
      %v4997 = vpop.permute.xlu0 %4996
      %4999 = vrot.lane.b32.xlu0 %v4627, 95
      %v5000 = vpop.permute.xlu0 %4999
      %5002 = vrot.lane.b32.xlu0 %v4627, 97
      %v5003 = vpop.permute.xlu0 %5002
      %5005 = vrot.lane.b32.xlu0 %v4627, 99
      %v5006 = vpop.permute.xlu0 %5005
      %5008 = vrot.lane.b32.xlu0 %v4627, 101
      %v5009 = vpop.permute.xlu0 %5008
      %5011 = vrot.lane.b32.xlu0 %v4627, 103
      %v5012 = vpop.permute.xlu0 %5011
      %5014 = vrot.lane.b32.xlu0 %v4627, 105
      %v5015 = vpop.permute.xlu0 %5014
      %v5017 = vsel %vm4657, %v4997, %v5000
      %v5018 = vsel %vm4659, %v5017, %v5003
      %v5019 = vsel %vm4661, %v5018, %v5006
      %v5020 = vsel %vm4663, %v5019, %v5009
      %v5021 = vsel %vm4665, %v5020, %v5012
      %v5022 = vsel %vm4667, %v5021, %v5015
      %5023 = vrot.lane.b32.xlu0 %v4627, 61
      %v5024 = vpop.permute.xlu0 %5023
      %5026 = vrot.lane.b32.xlu0 %v4627, 63
      %v5027 = vpop.permute.xlu0 %5026
      %5029 = vrot.lane.b32.xlu0 %v4627, 65
      %v5030 = vpop.permute.xlu0 %5029
      %5032 = vrot.lane.b32.xlu0 %v4627, 67
      %v5033 = vpop.permute.xlu0 %5032
      %5035 = vrot.lane.b32.xlu0 %v4627, 69
      %v5036 = vpop.permute.xlu0 %5035
      %5038 = vrot.lane.b32.xlu0 %v4627, 71
      %v5039 = vpop.permute.xlu0 %5038
      %5041 = vrot.lane.b32.xlu0 %v4627, 73
      %v5042 = vpop.permute.xlu0 %5041
      %v5044 = vsel %vm4657, %v5024, %v5027
      %v5045 = vsel %vm4659, %v5044, %v5030
      %v5046 = vsel %vm4661, %v5045, %v5033
      %v5047 = vsel %vm4663, %v5046, %v5036
      %v5048 = vsel %vm4665, %v5047, %v5039
      %v5049 = vsel %vm4667, %v5048, %v5042
      %5050 = vrot.lane.b32.xlu0 %v4627, 29
      %v5051 = vpop.permute.xlu0 %5050
      %5053 = vrot.lane.b32.xlu0 %v4627, 31
      %v5054 = vpop.permute.xlu0 %5053
      %5056 = vrot.lane.b32.xlu0 %v4627, 33
      %v5057 = vpop.permute.xlu0 %5056
      %5059 = vrot.lane.b32.xlu0 %v4627, 35
      %v5060 = vpop.permute.xlu0 %5059
      %5062 = vrot.lane.b32.xlu0 %v4627, 37
      %v5063 = vpop.permute.xlu0 %5062
      %5065 = vrot.lane.b32.xlu0 %v4627, 39
      %v5066 = vpop.permute.xlu0 %5065
      %5068 = vrot.lane.b32.xlu0 %v4627, 41
      %v5069 = vpop.permute.xlu0 %5068
      %v5071 = vsel %vm4657, %v5051, %v5054
      %v5072 = vsel %vm4659, %v5071, %v5057
      %v5073 = vsel %vm4661, %v5072, %v5060
      %v5074 = vsel %vm4663, %v5073, %v5063
      %v5075 = vsel %vm4665, %v5074, %v5066
      %v5076 = vsel %vm4667, %v5075, %v5069
      %5078 = vrot.lane.b32.xlu0 %v4628, 125
      %v5079 = vpop.permute.xlu0 %5078
      %5081 = vrot.lane.b32.xlu0 %v4628, 127
      %v5082 = vpop.permute.xlu0 %5081
      %5084 = vrot.lane.b32.xlu0 %v4628, 1
      %v5085 = vpop.permute.xlu0 %5084
      %5087 = vrot.lane.b32.xlu0 %v4628, 3
      %v5088 = vpop.permute.xlu0 %5087
      %5090 = vrot.lane.b32.xlu0 %v4628, 5
      %v5091 = vpop.permute.xlu0 %5090
      %5093 = vrot.lane.b32.xlu0 %v4628, 7
      %v5094 = vpop.permute.xlu0 %5093
      %5096 = vrot.lane.b32.xlu0 %v4628, 9
      %v5097 = vpop.permute.xlu0 %5096
      %v5099 = vsel %vm4657, %v5079, %v5082
      %v5100 = vsel %vm4659, %v5099, %v5085
      %v5101 = vsel %vm4661, %v5100, %v5088
      %v5102 = vsel %vm4663, %v5101, %v5091
      %v5103 = vsel %vm4665, %v5102, %v5094
      %v5104 = vsel %vm4667, %v5103, %v5097
      %5105 = vrot.lane.b32.xlu0 %v4628, 93
      %v5106 = vpop.permute.xlu0 %5105
      %5108 = vrot.lane.b32.xlu0 %v4628, 95
      %v5109 = vpop.permute.xlu0 %5108
      %5111 = vrot.lane.b32.xlu0 %v4628, 97
      %v5112 = vpop.permute.xlu0 %5111
      %5114 = vrot.lane.b32.xlu0 %v4628, 99
      %v5115 = vpop.permute.xlu0 %5114
      %5117 = vrot.lane.b32.xlu0 %v4628, 101
      %v5118 = vpop.permute.xlu0 %5117
      %5120 = vrot.lane.b32.xlu0 %v4628, 103
      %v5121 = vpop.permute.xlu0 %5120
      %5123 = vrot.lane.b32.xlu0 %v4628, 105
      %v5124 = vpop.permute.xlu0 %5123
      %v5126 = vsel %vm4657, %v5106, %v5109
      %v5127 = vsel %vm4659, %v5126, %v5112
      %v5128 = vsel %vm4661, %v5127, %v5115
      %v5129 = vsel %vm4663, %v5128, %v5118
      %v5130 = vsel %vm4665, %v5129, %v5121
      %v5131 = vsel %vm4667, %v5130, %v5124
      %5132 = vrot.lane.b32.xlu0 %v4628, 61
      %v5133 = vpop.permute.xlu0 %5132
      %5135 = vrot.lane.b32.xlu0 %v4628, 63
      %v5136 = vpop.permute.xlu0 %5135
      %5138 = vrot.lane.b32.xlu0 %v4628, 65
      %v5139 = vpop.permute.xlu0 %5138
      %5141 = vrot.lane.b32.xlu0 %v4628, 67
      %v5142 = vpop.permute.xlu0 %5141
      %5144 = vrot.lane.b32.xlu0 %v4628, 69
      %v5145 = vpop.permute.xlu0 %5144
      %5147 = vrot.lane.b32.xlu0 %v4628, 71
      %v5148 = vpop.permute.xlu0 %5147
      %5150 = vrot.lane.b32.xlu0 %v4628, 73
      %v5151 = vpop.permute.xlu0 %5150
      %v5153 = vsel %vm4657, %v5133, %v5136
      %v5154 = vsel %vm4659, %v5153, %v5139
      %v5155 = vsel %vm4661, %v5154, %v5142
      %v5156 = vsel %vm4663, %v5155, %v5145
      %v5157 = vsel %vm4665, %v5156, %v5148
      %v5158 = vsel %vm4667, %v5157, %v5151
      %5159 = vrot.lane.b32.xlu0 %v4628, 29
      %v5160 = vpop.permute.xlu0 %5159
      %5162 = vrot.lane.b32.xlu0 %v4628, 31
      %v5163 = vpop.permute.xlu0 %5162
      %5165 = vrot.lane.b32.xlu0 %v4628, 33
      %v5166 = vpop.permute.xlu0 %5165
      %5168 = vrot.lane.b32.xlu0 %v4628, 35
      %v5169 = vpop.permute.xlu0 %5168
      %5171 = vrot.lane.b32.xlu0 %v4628, 37
      %v5172 = vpop.permute.xlu0 %5171
      %5174 = vrot.lane.b32.xlu0 %v4628, 39
      %v5175 = vpop.permute.xlu0 %5174
      %5177 = vrot.lane.b32.xlu0 %v4628, 41
      %v5178 = vpop.permute.xlu0 %5177
      %v5180 = vsel %vm4657, %v5160, %v5163
      %v5181 = vsel %vm4659, %v5180, %v5166
      %v5182 = vsel %vm4661, %v5181, %v5169
      %v5183 = vsel %vm4663, %v5182, %v5172
      %v5184 = vsel %vm4665, %v5183, %v5175
      %v5185 = vsel %vm4667, %v5184, %v5178
      %5187 = vrot.lane.b32.xlu0 %v4629, 125
      %v5188 = vpop.permute.xlu0 %5187
      %5190 = vrot.lane.b32.xlu0 %v4629, 127
      %v5191 = vpop.permute.xlu0 %5190
      %5193 = vrot.lane.b32.xlu0 %v4629, 1
      %v5194 = vpop.permute.xlu0 %5193
      %5196 = vrot.lane.b32.xlu0 %v4629, 3
      %v5197 = vpop.permute.xlu0 %5196
      %5199 = vrot.lane.b32.xlu0 %v4629, 5
      %v5200 = vpop.permute.xlu0 %5199
      %5202 = vrot.lane.b32.xlu0 %v4629, 7
      %v5203 = vpop.permute.xlu0 %5202
      %5205 = vrot.lane.b32.xlu0 %v4629, 9
      %v5206 = vpop.permute.xlu0 %5205
      %v5208 = vsel %vm4657, %v5188, %v5191
      %v5209 = vsel %vm4659, %v5208, %v5194
      %v5210 = vsel %vm4661, %v5209, %v5197
      %v5211 = vsel %vm4663, %v5210, %v5200
      %v5212 = vsel %vm4665, %v5211, %v5203
      %v5213 = vsel %vm4667, %v5212, %v5206
      %5214 = vrot.lane.b32.xlu0 %v4629, 93
      %v5215 = vpop.permute.xlu0 %5214
      %5217 = vrot.lane.b32.xlu0 %v4629, 95
      %v5218 = vpop.permute.xlu0 %5217
      %5220 = vrot.lane.b32.xlu0 %v4629, 97
      %v5221 = vpop.permute.xlu0 %5220
      %5223 = vrot.lane.b32.xlu0 %v4629, 99
      %v5224 = vpop.permute.xlu0 %5223
      %5226 = vrot.lane.b32.xlu0 %v4629, 101
      %v5227 = vpop.permute.xlu0 %5226
      %5229 = vrot.lane.b32.xlu0 %v4629, 103
      %v5230 = vpop.permute.xlu0 %5229
      %5232 = vrot.lane.b32.xlu0 %v4629, 105
      %v5233 = vpop.permute.xlu0 %5232
      %v5235 = vsel %vm4657, %v5215, %v5218
      %v5236 = vsel %vm4659, %v5235, %v5221
      %v5237 = vsel %vm4661, %v5236, %v5224
      %v5238 = vsel %vm4663, %v5237, %v5227
      %v5239 = vsel %vm4665, %v5238, %v5230
      %v5240 = vsel %vm4667, %v5239, %v5233
      %5241 = vrot.lane.b32.xlu0 %v4629, 61
      %v5242 = vpop.permute.xlu0 %5241
      %5244 = vrot.lane.b32.xlu0 %v4629, 63
      %v5245 = vpop.permute.xlu0 %5244
      %5247 = vrot.lane.b32.xlu0 %v4629, 65
      %v5248 = vpop.permute.xlu0 %5247
      %5250 = vrot.lane.b32.xlu0 %v4629, 67
      %v5251 = vpop.permute.xlu0 %5250
      %5253 = vrot.lane.b32.xlu0 %v4629, 69
      %v5254 = vpop.permute.xlu0 %5253
      %5256 = vrot.lane.b32.xlu0 %v4629, 71
      %v5257 = vpop.permute.xlu0 %5256
      %5259 = vrot.lane.b32.xlu0 %v4629, 73
      %v5260 = vpop.permute.xlu0 %5259
      %v5262 = vsel %vm4657, %v5242, %v5245
      %v5263 = vsel %vm4659, %v5262, %v5248
      %v5264 = vsel %vm4661, %v5263, %v5251
      %v5265 = vsel %vm4663, %v5264, %v5254
      %v5266 = vsel %vm4665, %v5265, %v5257
      %v5267 = vsel %vm4667, %v5266, %v5260
      %5268 = vrot.lane.b32.xlu0 %v4629, 29
      %v5269 = vpop.permute.xlu0 %5268
      %5271 = vrot.lane.b32.xlu0 %v4629, 31
      %v5272 = vpop.permute.xlu0 %5271
      %5274 = vrot.lane.b32.xlu0 %v4629, 33
      %v5275 = vpop.permute.xlu0 %5274
      %5277 = vrot.lane.b32.xlu0 %v4629, 35
      %v5278 = vpop.permute.xlu0 %5277
      %5280 = vrot.lane.b32.xlu0 %v4629, 37
      %v5281 = vpop.permute.xlu0 %5280
      %5283 = vrot.lane.b32.xlu0 %v4629, 39
      %v5284 = vpop.permute.xlu0 %5283
      %5286 = vrot.lane.b32.xlu0 %v4629, 41
      %v5287 = vpop.permute.xlu0 %5286
      %v5289 = vsel %vm4657, %v5269, %v5272
      %v5290 = vsel %vm4659, %v5289, %v5275
      %v5291 = vsel %vm4661, %v5290, %v5278
      %v5292 = vsel %vm4663, %v5291, %v5281
      %v5293 = vsel %vm4665, %v5292, %v5284
      %v5294 = vsel %vm4667, %v5293, %v5287
      %5296 = vrot.lane.b32.xlu0 %v4630, 125
      %v5297 = vpop.permute.xlu0 %5296
      %5299 = vrot.lane.b32.xlu0 %v4630, 127
      %v5300 = vpop.permute.xlu0 %5299
      %5302 = vrot.lane.b32.xlu0 %v4630, 1
      %v5303 = vpop.permute.xlu0 %5302
      %5305 = vrot.lane.b32.xlu0 %v4630, 3
      %v5306 = vpop.permute.xlu0 %5305
      %5308 = vrot.lane.b32.xlu0 %v4630, 5
      %v5309 = vpop.permute.xlu0 %5308
      %5311 = vrot.lane.b32.xlu0 %v4630, 7
      %v5312 = vpop.permute.xlu0 %5311
      %5314 = vrot.lane.b32.xlu0 %v4630, 9
      %v5315 = vpop.permute.xlu0 %5314
      %v5317 = vsel %vm4657, %v5297, %v5300
      %v5318 = vsel %vm4659, %v5317, %v5303
      %v5319 = vsel %vm4661, %v5318, %v5306
      %v5320 = vsel %vm4663, %v5319, %v5309
      %v5321 = vsel %vm4665, %v5320, %v5312
      %v5322 = vsel %vm4667, %v5321, %v5315
      %5323 = vrot.lane.b32.xlu0 %v4630, 93
      %v5324 = vpop.permute.xlu0 %5323
      %5326 = vrot.lane.b32.xlu0 %v4630, 95
      %v5327 = vpop.permute.xlu0 %5326
      %5329 = vrot.lane.b32.xlu0 %v4630, 97
      %v5330 = vpop.permute.xlu0 %5329
      %5332 = vrot.lane.b32.xlu0 %v4630, 99
      %v5333 = vpop.permute.xlu0 %5332
      %5335 = vrot.lane.b32.xlu0 %v4630, 101
      %v5336 = vpop.permute.xlu0 %5335
      %5338 = vrot.lane.b32.xlu0 %v4630, 103
      %v5339 = vpop.permute.xlu0 %5338
      %5341 = vrot.lane.b32.xlu0 %v4630, 105
      %v5342 = vpop.permute.xlu0 %5341
      %v5344 = vsel %vm4657, %v5324, %v5327
      %v5345 = vsel %vm4659, %v5344, %v5330
      %v5346 = vsel %vm4661, %v5345, %v5333
      %v5347 = vsel %vm4663, %v5346, %v5336
      %v5348 = vsel %vm4665, %v5347, %v5339
      %v5349 = vsel %vm4667, %v5348, %v5342
      %5350 = vrot.lane.b32.xlu0 %v4630, 61
      %v5351 = vpop.permute.xlu0 %5350
      %5353 = vrot.lane.b32.xlu0 %v4630, 63
      %v5354 = vpop.permute.xlu0 %5353
      %5356 = vrot.lane.b32.xlu0 %v4630, 65
      %v5357 = vpop.permute.xlu0 %5356
      %5359 = vrot.lane.b32.xlu0 %v4630, 67
      %v5360 = vpop.permute.xlu0 %5359
      %5362 = vrot.lane.b32.xlu0 %v4630, 69
      %v5363 = vpop.permute.xlu0 %5362
      %5365 = vrot.lane.b32.xlu0 %v4630, 71
      %v5366 = vpop.permute.xlu0 %5365
      %5368 = vrot.lane.b32.xlu0 %v4630, 73
      %v5369 = vpop.permute.xlu0 %5368
      %v5371 = vsel %vm4657, %v5351, %v5354
      %v5372 = vsel %vm4659, %v5371, %v5357
      %v5373 = vsel %vm4661, %v5372, %v5360
      %v5374 = vsel %vm4663, %v5373, %v5363
      %v5375 = vsel %vm4665, %v5374, %v5366
      %v5376 = vsel %vm4667, %v5375, %v5369
      %5377 = vrot.lane.b32.xlu0 %v4630, 29
      %v5378 = vpop.permute.xlu0 %5377
      %5380 = vrot.lane.b32.xlu0 %v4630, 31
      %v5381 = vpop.permute.xlu0 %5380
      %5383 = vrot.lane.b32.xlu0 %v4630, 33
      %v5384 = vpop.permute.xlu0 %5383
      %5386 = vrot.lane.b32.xlu0 %v4630, 35
      %v5387 = vpop.permute.xlu0 %5386
      %5389 = vrot.lane.b32.xlu0 %v4630, 37
      %v5390 = vpop.permute.xlu0 %5389
      %5392 = vrot.lane.b32.xlu0 %v4630, 39
      %v5393 = vpop.permute.xlu0 %5392
      %5395 = vrot.lane.b32.xlu0 %v4630, 41
      %v5396 = vpop.permute.xlu0 %5395
      %v5398 = vsel %vm4657, %v5378, %v5381
      %v5399 = vsel %vm4659, %v5398, %v5384
      %v5400 = vsel %vm4661, %v5399, %v5387
      %v5401 = vsel %vm4663, %v5400, %v5390
      %v5402 = vsel %vm4665, %v5401, %v5393
      %v5403 = vsel %vm4667, %v5402, %v5396
      %5405 = vrot.lane.b32.xlu0 %v4631, 125
      %v5406 = vpop.permute.xlu0 %5405
      %5408 = vrot.lane.b32.xlu0 %v4631, 127
      %v5409 = vpop.permute.xlu0 %5408
      %5411 = vrot.lane.b32.xlu0 %v4631, 1
      %v5412 = vpop.permute.xlu0 %5411
      %5414 = vrot.lane.b32.xlu0 %v4631, 3
      %v5415 = vpop.permute.xlu0 %5414
      %5417 = vrot.lane.b32.xlu0 %v4631, 5
      %v5418 = vpop.permute.xlu0 %5417
      %5420 = vrot.lane.b32.xlu0 %v4631, 7
      %v5421 = vpop.permute.xlu0 %5420
      %5423 = vrot.lane.b32.xlu0 %v4631, 9
      %v5424 = vpop.permute.xlu0 %5423
      %v5426 = vsel %vm4657, %v5406, %v5409
      %v5427 = vsel %vm4659, %v5426, %v5412
      %v5428 = vsel %vm4661, %v5427, %v5415
      %v5429 = vsel %vm4663, %v5428, %v5418
      %v5430 = vsel %vm4665, %v5429, %v5421
      %v5431 = vsel %vm4667, %v5430, %v5424
      %5432 = vrot.lane.b32.xlu0 %v4631, 93
      %v5433 = vpop.permute.xlu0 %5432
      %5435 = vrot.lane.b32.xlu0 %v4631, 95
      %v5436 = vpop.permute.xlu0 %5435
      %5438 = vrot.lane.b32.xlu0 %v4631, 97
      %v5439 = vpop.permute.xlu0 %5438
      %5441 = vrot.lane.b32.xlu0 %v4631, 99
      %v5442 = vpop.permute.xlu0 %5441
      %5444 = vrot.lane.b32.xlu0 %v4631, 101
      %v5445 = vpop.permute.xlu0 %5444
      %5447 = vrot.lane.b32.xlu0 %v4631, 103
      %v5448 = vpop.permute.xlu0 %5447
      %5450 = vrot.lane.b32.xlu0 %v4631, 105
      %v5451 = vpop.permute.xlu0 %5450
      %v5453 = vsel %vm4657, %v5433, %v5436
      %v5454 = vsel %vm4659, %v5453, %v5439
      %v5455 = vsel %vm4661, %v5454, %v5442
      %v5456 = vsel %vm4663, %v5455, %v5445
      %v5457 = vsel %vm4665, %v5456, %v5448
      %v5458 = vsel %vm4667, %v5457, %v5451
      %5459 = vrot.lane.b32.xlu0 %v4631, 61
      %v5460 = vpop.permute.xlu0 %5459
      %5462 = vrot.lane.b32.xlu0 %v4631, 63
      %v5463 = vpop.permute.xlu0 %5462
      %5465 = vrot.lane.b32.xlu0 %v4631, 65
      %v5466 = vpop.permute.xlu0 %5465
      %5468 = vrot.lane.b32.xlu0 %v4631, 67
      %v5469 = vpop.permute.xlu0 %5468
      %5471 = vrot.lane.b32.xlu0 %v4631, 69
      %v5472 = vpop.permute.xlu0 %5471
      %5474 = vrot.lane.b32.xlu0 %v4631, 71
      %v5475 = vpop.permute.xlu0 %5474
      %5477 = vrot.lane.b32.xlu0 %v4631, 73
      %v5478 = vpop.permute.xlu0 %5477
      %v5480 = vsel %vm4657, %v5460, %v5463
      %v5481 = vsel %vm4659, %v5480, %v5466
      %v5482 = vsel %vm4661, %v5481, %v5469
      %v5483 = vsel %vm4663, %v5482, %v5472
      %v5484 = vsel %vm4665, %v5483, %v5475
      %v5485 = vsel %vm4667, %v5484, %v5478
      %5486 = vrot.lane.b32.xlu0 %v4631, 29
      %v5487 = vpop.permute.xlu0 %5486
      %5489 = vrot.lane.b32.xlu0 %v4631, 31
      %v5490 = vpop.permute.xlu0 %5489
      %5492 = vrot.lane.b32.xlu0 %v4631, 33
      %v5493 = vpop.permute.xlu0 %5492
      %5495 = vrot.lane.b32.xlu0 %v4631, 35
      %v5496 = vpop.permute.xlu0 %5495
      %5498 = vrot.lane.b32.xlu0 %v4631, 37
      %v5499 = vpop.permute.xlu0 %5498
      %5501 = vrot.lane.b32.xlu0 %v4631, 39
      %v5502 = vpop.permute.xlu0 %5501
      %5504 = vrot.lane.b32.xlu0 %v4631, 41
      %v5505 = vpop.permute.xlu0 %5504
      %v5507 = vsel %vm4657, %v5487, %v5490
      %v5508 = vsel %vm4659, %v5507, %v5493
      %v5509 = vsel %vm4661, %v5508, %v5496
      %v5510 = vsel %vm4663, %v5509, %v5499
      %v5511 = vsel %vm4665, %v5510, %v5502
      %v5512 = vsel %vm4667, %v5511, %v5505
      %5514 = vrot.lane.b32.xlu0 %v4722, 38
      %v5515 = vpop.permute.xlu0 %5514
      %5518 = vrot.lane.b32.xlu0 %v4695, 76
      %v5519 = vpop.permute.xlu0 %5518
      %5522 = vrot.lane.b32.xlu0 %v4668, 114
      %v5523 = vpop.permute.xlu0 %5522
      %5525 = vrot.lane.b32.xlu0 %v4695, 24
      %v5526 = vpop.permute.xlu0 %5525
      %5528 = vrot.lane.b32.xlu0 %v4722, 62
      %v5529 = vpop.permute.xlu0 %5528
      %5532 = vrot.lane.b32.xlu0 %v4749, 100
      %v5533 = vpop.permute.xlu0 %5532
      %5536 = vrot.lane.b32.xlu0 %v4777, 10
      %v5537 = vpop.permute.xlu0 %5536
      %5540 = vrot.lane.b32.xlu0 %v4804, 48
      %v5541 = vpop.permute.xlu0 %5540
      %5544 = vrot.lane.b32.xlu0 %v4831, 86
      %v5545 = vpop.permute.xlu0 %5544
      %5548 = vrot.lane.b32.xlu0 %v4858, 124
      %v5549 = vpop.permute.xlu0 %5548
      %5552 = vrot.lane.b32.xlu0 %v4886, 34
      %v5553 = vpop.permute.xlu0 %5552
      %5556 = vrot.lane.b32.xlu0 %v4913, 72
      %v5557 = vpop.permute.xlu0 %5556
      %5560 = vrot.lane.b32.xlu0 %v4940, 110
      %v5561 = vpop.permute.xlu0 %5560
      %5564 = vrot.lane.b32.xlu0 %v4967, 20
      %v5565 = vpop.permute.xlu0 %5564
      %5568 = vrot.lane.b32.xlu0 %v4995, 58
      %v5569 = vpop.permute.xlu0 %5568
      %vm5571 = vcmask 310272
      %v5572 = vsel %vm5571, %v4749, %v5515
      %vm5573 = vcmask 621568
      %v5574 = vsel %vm5573, %v5572, %v5519
      %vm5575 = vcmask 932864
      %v5576 = vsel %vm5575, %v5574, %v5523
      %vm5577 = vcmask 195584
      %v5578 = vsel %vm5577, %v5523, %v5526
      %vm5579 = vcmask 506880
      %v5580 = vsel %vm5579, %v5578, %v5529
      %vm5581 = vcmask 818176
      %v5582 = vsel %vm5581, %v5580, %v5533
      %vm5583 = vcmask 80896
      %v5584 = vsel %vm5583, %v5533, %v5537
      %vm5585 = vcmask 392192
      %v5586 = vsel %vm5585, %v5584, %v5541
      %vm5587 = vcmask 703488
      %v5588 = vsel %vm5587, %v5586, %v5545
      %vm5589 = vcmask 1014784
      %v5590 = vsel %vm5589, %v5588, %v5549
      %vm5591 = vcmask 277504
      %v5592 = vsel %vm5591, %v5549, %v5553
      %vm5593 = vcmask 588800
      %v5594 = vsel %vm5593, %v5592, %v5557
      %vm5595 = vcmask 900096
      %v5596 = vsel %vm5595, %v5594, %v5561
      %vm5597 = vcmask 162816
      %v5598 = vsel %vm5597, %v5561, %v5565
      %vm5599 = vcmask 474112
      %v5600 = vsel %vm5599, %v5598, %v5569
      %5602 = vrot.lane.b32.xlu0 %v5049, 38
      %v5603 = vpop.permute.xlu0 %5602
      %5606 = vrot.lane.b32.xlu0 %v5076, 76
      %v5607 = vpop.permute.xlu0 %5606
      %5610 = vrot.lane.b32.xlu0 %v5104, 114
      %v5611 = vpop.permute.xlu0 %5610
      %5614 = vrot.lane.b32.xlu0 %v5131, 24
      %v5615 = vpop.permute.xlu0 %5614
      %5618 = vrot.lane.b32.xlu0 %v5158, 62
      %v5619 = vpop.permute.xlu0 %5618
      %5622 = vrot.lane.b32.xlu0 %v5185, 100
      %v5623 = vpop.permute.xlu0 %5622
      %5626 = vrot.lane.b32.xlu0 %v5213, 10
      %v5627 = vpop.permute.xlu0 %5626
      %5630 = vrot.lane.b32.xlu0 %v5240, 48
      %v5631 = vpop.permute.xlu0 %5630
      %5634 = vrot.lane.b32.xlu0 %v5267, 86
      %v5635 = vpop.permute.xlu0 %5634
      %5638 = vrot.lane.b32.xlu0 %v5294, 124
      %v5639 = vpop.permute.xlu0 %5638
      %5642 = vrot.lane.b32.xlu0 %v5322, 34
      %v5643 = vpop.permute.xlu0 %5642
      %5646 = vrot.lane.b32.xlu0 %v5349, 72
      %v5647 = vpop.permute.xlu0 %5646
      %5650 = vrot.lane.b32.xlu0 %v5376, 110
      %v5651 = vpop.permute.xlu0 %5650
      %5654 = vrot.lane.b32.xlu0 %v5403, 20
      %v5655 = vpop.permute.xlu0 %5654
      %5658 = vrot.lane.b32.xlu0 %v5431, 58
      %v5659 = vpop.permute.xlu0 %5658
      %v5661 = vsel %vm5571, %v5022, %v5603
      %v5662 = vsel %vm5573, %v5661, %v5607
      %v5663 = vsel %vm5575, %v5662, %v5611
      %v5664 = vsel %vm5577, %v5611, %v5615
      %v5665 = vsel %vm5579, %v5664, %v5619
      %v5666 = vsel %vm5581, %v5665, %v5623
      %v5667 = vsel %vm5583, %v5623, %v5627
      %v5668 = vsel %vm5585, %v5667, %v5631
      %v5669 = vsel %vm5587, %v5668, %v5635
      %v5670 = vsel %vm5589, %v5669, %v5639
      %v5671 = vsel %vm5591, %v5639, %v5643
      %v5672 = vsel %vm5593, %v5671, %v5647
      %v5673 = vsel %vm5595, %v5672, %v5651
      %v5674 = vsel %vm5597, %v5651, %v5655
      %v5675 = vsel %vm5599, %v5674, %v5659
      %5677 = vrot.lane.b32.xlu0 %v5485, 38
      %v5678 = vpop.permute.xlu0 %5677
      %5681 = vrot.lane.b32.xlu0 %v5512, 76
      %v5682 = vpop.permute.xlu0 %5681
      %5684 = vrot.lane.b32.xlu0 %v5485, 114
      %v5685 = vpop.permute.xlu0 %5684
      %5688 = vrot.lane.b32.xlu0 %v5458, 24
      %v5689 = vpop.permute.xlu0 %5688
      %5691 = vrot.lane.b32.xlu0 %v5431, 62
      %v5692 = vpop.permute.xlu0 %5691
      %v5694 = vsel %vm5571, %v5458, %v5678
      %v5695 = vsel %vm5573, %v5694, %v5682
      %v5696 = vsel %vm5575, %v5695, %v5685
      %v5697 = vsel %vm5577, %v5685, %v5689
      %v5698 = vsel %vm5579, %v5697, %v5692
      %5704 = vrot.lane.b32.xlu0 %v5663, 96
      %v5705 = vpop.permute.xlu0 %5704
      %5706 = vrot.lane.b32.xlu0 %v5666, 96
      %v5707 = vpop.permute.xlu0 %5706
      %5708 = vrot.lane.b32.xlu0 %v5670, 96
      %v5709 = vpop.permute.xlu0 %5708
      %5710 = vrot.lane.b32.xlu0 %v5673, 96
      %v5711 = vpop.permute.xlu0 %5710
      %5712 = vrot.lane.b32.xlu0 %v5675, 96
      %v5713 = vpop.permute.xlu0 %5712
      %vm5714 = vcmask 785408
      %v5715 = vsel %vm5714, %v5705, %v5707
      %v5716 = vsel %vm5714, %v5707, %v5709
      %v5717 = vsel %vm5714, %v5709, %v5711
      %v5718 = vsel %vm5714, %v5711, %v5713
      %5727 = vrot.lane.b32.xlu0 %v5696, 64
      %v5728 = vpop.permute.xlu0 %5727
      %5729 = vrot.lane.b32.xlu0 %v5698, 64
      %v5730 = vpop.permute.xlu0 %5729
      %v5731 = vsel %vm1099, %v5728, %v5730
      %v5734 = vsel %vm5714, %v5600, %v5705
      %v5735 = vsel %vm1099, %v5713, %v5728
      %v5736 = vsel %vm4665, %v5730, 0.0
      %5743 = vrot.lane.b32.xlu0 %v5576, 127
      %v5744 = vpop.permute.xlu0 %5743
      %5745 = vrot.lane.b32.xlu0 %v5582, 127
      %v5746 = vpop.permute.xlu0 %5745
      %5747 = vrot.lane.b32.xlu0 %v5590, 127
      %v5748 = vpop.permute.xlu0 %5747
      %5749 = vrot.lane.b32.xlu0 %v5596, 127
      %v5750 = vpop.permute.xlu0 %5749
      %5751 = vrot.lane.b32.xlu0 %v5734, 127
      %v5752 = vpop.permute.xlu0 %5751
      %5753 = vrot.lane.b32.xlu0 %v5715, 127
      %v5754 = vpop.permute.xlu0 %5753
      %5755 = vrot.lane.b32.xlu0 %v5716, 127
      %v5756 = vpop.permute.xlu0 %5755
      %5757 = vrot.lane.b32.xlu0 %v5717, 127
      %v5758 = vpop.permute.xlu0 %5757
      %5759 = vrot.lane.b32.xlu0 %v5718, 127
      %v5760 = vpop.permute.xlu0 %5759
      %5761 = vrot.lane.b32.xlu0 %v5735, 127
      %v5762 = vpop.permute.xlu0 %5761
      %v5763 = vsel %vm2875, %v5744, %v5746
      %v5764 = vsel %vm2875, %v5746, %v5748
      %v5765 = vsel %vm2875, %v5748, %v5750
      %v5766 = vsel %vm2875, %v5750, %v5752
      %v5767 = vsel %vm2875, %v5752, %v5754
      %v5768 = vsel %vm2875, %v5754, %v5756
      %v5769 = vsel %vm2875, %v5756, %v5758
      %v5770 = vsel %vm2875, %v5758, %v5760
      %v5771 = vsel %vm2875, %v5760, %v5762
      %5782 = vrot.lane.b32.xlu0 %v5576, 126
      %v5783 = vpop.permute.xlu0 %5782
      %5784 = vrot.lane.b32.xlu0 %v5582, 126
      %v5785 = vpop.permute.xlu0 %5784
      %5786 = vrot.lane.b32.xlu0 %v5590, 126
      %v5787 = vpop.permute.xlu0 %5786
      %5788 = vrot.lane.b32.xlu0 %v5596, 126
      %v5789 = vpop.permute.xlu0 %5788
      %5790 = vrot.lane.b32.xlu0 %v5734, 126
      %v5791 = vpop.permute.xlu0 %5790
      %5792 = vrot.lane.b32.xlu0 %v5715, 126
      %v5793 = vpop.permute.xlu0 %5792
      %5794 = vrot.lane.b32.xlu0 %v5716, 126
      %v5795 = vpop.permute.xlu0 %5794
      %5796 = vrot.lane.b32.xlu0 %v5717, 126
      %v5797 = vpop.permute.xlu0 %5796
      %5798 = vrot.lane.b32.xlu0 %v5718, 126
      %v5799 = vpop.permute.xlu0 %5798
      %5800 = vrot.lane.b32.xlu0 %v5735, 126
      %v5801 = vpop.permute.xlu0 %5800
      %vm5802 = vcmask 1031168
      %v5803 = vsel %vm5802, %v5783, %v5785
      %v5804 = vsel %vm5802, %v5785, %v5787
      %v5805 = vsel %vm5802, %v5787, %v5789
      %v5806 = vsel %vm5802, %v5789, %v5791
      %v5807 = vsel %vm5802, %v5791, %v5793
      %v5808 = vsel %vm5802, %v5793, %v5795
      %v5809 = vsel %vm5802, %v5795, %v5797
      %v5810 = vsel %vm5802, %v5797, %v5799
      %v5811 = vsel %vm5802, %v5799, %v5801
      %5822 = vrot.lane.b32.xlu0 %v5576, 125
      %v5823 = vpop.permute.xlu0 %5822
      %5824 = vrot.lane.b32.xlu0 %v5582, 125
      %v5825 = vpop.permute.xlu0 %5824
      %5826 = vrot.lane.b32.xlu0 %v5590, 125
      %v5827 = vpop.permute.xlu0 %5826
      %5828 = vrot.lane.b32.xlu0 %v5596, 125
      %v5829 = vpop.permute.xlu0 %5828
      %5830 = vrot.lane.b32.xlu0 %v5734, 125
      %v5831 = vpop.permute.xlu0 %5830
      %5832 = vrot.lane.b32.xlu0 %v5715, 125
      %v5833 = vpop.permute.xlu0 %5832
      %5834 = vrot.lane.b32.xlu0 %v5716, 125
      %v5835 = vpop.permute.xlu0 %5834
      %5836 = vrot.lane.b32.xlu0 %v5717, 125
      %v5837 = vpop.permute.xlu0 %5836
      %5838 = vrot.lane.b32.xlu0 %v5718, 125
      %v5839 = vpop.permute.xlu0 %5838
      %5840 = vrot.lane.b32.xlu0 %v5735, 125
      %v5841 = vpop.permute.xlu0 %5840
      %vm5842 = vcmask 1022976
      %v5843 = vsel %vm5842, %v5823, %v5825
      %v5844 = vsel %vm5842, %v5825, %v5827
      %v5845 = vsel %vm5842, %v5827, %v5829
      %v5846 = vsel %vm5842, %v5829, %v5831
      %v5847 = vsel %vm5842, %v5831, %v5833
      %v5848 = vsel %vm5842, %v5833, %v5835
      %v5849 = vsel %vm5842, %v5835, %v5837
      %v5850 = vsel %vm5842, %v5837, %v5839
      %v5851 = vsel %vm5842, %v5839, %v5841
      %5862 = vrot.lane.b32.xlu0 %v5576, 124
      %v5863 = vpop.permute.xlu0 %5862
      %5864 = vrot.lane.b32.xlu0 %v5582, 124
      %v5865 = vpop.permute.xlu0 %5864
      %5866 = vrot.lane.b32.xlu0 %v5590, 124
      %v5867 = vpop.permute.xlu0 %5866
      %5868 = vrot.lane.b32.xlu0 %v5596, 124
      %v5869 = vpop.permute.xlu0 %5868
      %5870 = vrot.lane.b32.xlu0 %v5734, 124
      %v5871 = vpop.permute.xlu0 %5870
      %5872 = vrot.lane.b32.xlu0 %v5715, 124
      %v5873 = vpop.permute.xlu0 %5872
      %5874 = vrot.lane.b32.xlu0 %v5716, 124
      %v5875 = vpop.permute.xlu0 %5874
      %5876 = vrot.lane.b32.xlu0 %v5717, 124
      %v5877 = vpop.permute.xlu0 %5876
      %5878 = vrot.lane.b32.xlu0 %v5718, 124
      %v5879 = vpop.permute.xlu0 %5878
      %5880 = vrot.lane.b32.xlu0 %v5735, 124
      %v5881 = vpop.permute.xlu0 %5880
      %v5882 = vsel %vm5589, %v5863, %v5865
      %v5883 = vsel %vm5589, %v5865, %v5867
      %v5884 = vsel %vm5589, %v5867, %v5869
      %v5885 = vsel %vm5589, %v5869, %v5871
      %v5886 = vsel %vm5589, %v5871, %v5873
      %v5887 = vsel %vm5589, %v5873, %v5875
      %v5888 = vsel %vm5589, %v5875, %v5877
      %v5889 = vsel %vm5589, %v5877, %v5879
      %v5890 = vsel %vm5589, %v5879, %v5881
      %5901 = vrot.lane.b32.xlu0 %v5576, 123
      %v5902 = vpop.permute.xlu0 %5901
      %5903 = vrot.lane.b32.xlu0 %v5582, 123
      %v5904 = vpop.permute.xlu0 %5903
      %5905 = vrot.lane.b32.xlu0 %v5590, 123
      %v5906 = vpop.permute.xlu0 %5905
      %5907 = vrot.lane.b32.xlu0 %v5596, 123
      %v5908 = vpop.permute.xlu0 %5907
      %5909 = vrot.lane.b32.xlu0 %v5734, 123
      %v5910 = vpop.permute.xlu0 %5909
      %5911 = vrot.lane.b32.xlu0 %v5715, 123
      %v5912 = vpop.permute.xlu0 %5911
      %5913 = vrot.lane.b32.xlu0 %v5716, 123
      %v5914 = vpop.permute.xlu0 %5913
      %5915 = vrot.lane.b32.xlu0 %v5717, 123
      %v5916 = vpop.permute.xlu0 %5915
      %5917 = vrot.lane.b32.xlu0 %v5718, 123
      %v5918 = vpop.permute.xlu0 %5917
      %5919 = vrot.lane.b32.xlu0 %v5735, 123
      %v5920 = vpop.permute.xlu0 %5919
      %vm5921 = vcmask 1006592
      %v5922 = vsel %vm5921, %v5902, %v5904
      %v5923 = vsel %vm5921, %v5904, %v5906
      %v5924 = vsel %vm5921, %v5906, %v5908
      %v5925 = vsel %vm5921, %v5908, %v5910
      %v5926 = vsel %vm5921, %v5910, %v5912
      %v5927 = vsel %vm5921, %v5912, %v5914
      %v5928 = vsel %vm5921, %v5914, %v5916
      %v5929 = vsel %vm5921, %v5916, %v5918
      %v5930 = vsel %vm5921, %v5918, %v5920
      %5941 = vrot.lane.b32.xlu0 %v5576, 122
      %v5942 = vpop.permute.xlu0 %5941
      %5943 = vrot.lane.b32.xlu0 %v5582, 122
      %v5944 = vpop.permute.xlu0 %5943
      %5945 = vrot.lane.b32.xlu0 %v5590, 122
      %v5946 = vpop.permute.xlu0 %5945
      %5947 = vrot.lane.b32.xlu0 %v5596, 122
      %v5948 = vpop.permute.xlu0 %5947
      %5949 = vrot.lane.b32.xlu0 %v5734, 122
      %v5950 = vpop.permute.xlu0 %5949
      %5951 = vrot.lane.b32.xlu0 %v5715, 122
      %v5952 = vpop.permute.xlu0 %5951
      %5953 = vrot.lane.b32.xlu0 %v5716, 122
      %v5954 = vpop.permute.xlu0 %5953
      %5955 = vrot.lane.b32.xlu0 %v5717, 122
      %v5956 = vpop.permute.xlu0 %5955
      %5957 = vrot.lane.b32.xlu0 %v5718, 122
      %v5958 = vpop.permute.xlu0 %5957
      %5959 = vrot.lane.b32.xlu0 %v5735, 122
      %v5960 = vpop.permute.xlu0 %5959
      %vm5961 = vcmask 998400
      %v5962 = vsel %vm5961, %v5942, %v5944
      %v5963 = vsel %vm5961, %v5944, %v5946
      %v5964 = vsel %vm5961, %v5946, %v5948
      %v5965 = vsel %vm5961, %v5948, %v5950
      %v5966 = vsel %vm5961, %v5950, %v5952
      %v5967 = vsel %vm5961, %v5952, %v5954
      %v5968 = vsel %vm5961, %v5954, %v5956
      %v5969 = vsel %vm5961, %v5956, %v5958
      %v5970 = vsel %vm5961, %v5958, %v5960
      %5981 = vrot.lane.b32.xlu0 %v5576, 90
      %v5982 = vpop.permute.xlu0 %5981
      %5983 = vrot.lane.b32.xlu0 %v5582, 90
      %v5984 = vpop.permute.xlu0 %5983
      %5985 = vrot.lane.b32.xlu0 %v5590, 90
      %v5986 = vpop.permute.xlu0 %5985
      %5987 = vrot.lane.b32.xlu0 %v5596, 90
      %v5988 = vpop.permute.xlu0 %5987
      %5989 = vrot.lane.b32.xlu0 %v5734, 90
      %v5990 = vpop.permute.xlu0 %5989
      %5991 = vrot.lane.b32.xlu0 %v5715, 90
      %v5992 = vpop.permute.xlu0 %5991
      %5993 = vrot.lane.b32.xlu0 %v5716, 90
      %v5994 = vpop.permute.xlu0 %5993
      %5995 = vrot.lane.b32.xlu0 %v5717, 90
      %v5996 = vpop.permute.xlu0 %5995
      %5997 = vrot.lane.b32.xlu0 %v5718, 90
      %v5998 = vpop.permute.xlu0 %5997
      %5999 = vrot.lane.b32.xlu0 %v5735, 90
      %v6000 = vpop.permute.xlu0 %5999
      %vm6001 = vcmask 736256
      %v6002 = vsel %vm6001, %v5982, %v5984
      %v6003 = vsel %vm6001, %v5984, %v5986
      %v6004 = vsel %vm6001, %v5986, %v5988
      %v6005 = vsel %vm6001, %v5988, %v5990
      %v6006 = vsel %vm6001, %v5990, %v5992
      %v6007 = vsel %vm6001, %v5992, %v5994
      %v6008 = vsel %vm6001, %v5994, %v5996
      %v6009 = vsel %vm6001, %v5996, %v5998
      %v6010 = vsel %vm6001, %v5998, %v6000
      %6021 = vrot.lane.b32.xlu0 %v5576, 89
      %v6022 = vpop.permute.xlu0 %6021
      %6023 = vrot.lane.b32.xlu0 %v5582, 89
      %v6024 = vpop.permute.xlu0 %6023
      %6025 = vrot.lane.b32.xlu0 %v5590, 89
      %v6026 = vpop.permute.xlu0 %6025
      %6027 = vrot.lane.b32.xlu0 %v5596, 89
      %v6028 = vpop.permute.xlu0 %6027
      %6029 = vrot.lane.b32.xlu0 %v5734, 89
      %v6030 = vpop.permute.xlu0 %6029
      %6031 = vrot.lane.b32.xlu0 %v5715, 89
      %v6032 = vpop.permute.xlu0 %6031
      %6033 = vrot.lane.b32.xlu0 %v5716, 89
      %v6034 = vpop.permute.xlu0 %6033
      %6035 = vrot.lane.b32.xlu0 %v5717, 89
      %v6036 = vpop.permute.xlu0 %6035
      %6037 = vrot.lane.b32.xlu0 %v5718, 89
      %v6038 = vpop.permute.xlu0 %6037
      %6039 = vrot.lane.b32.xlu0 %v5735, 89
      %v6040 = vpop.permute.xlu0 %6039
      %vm6041 = vcmask 728064
      %v6042 = vsel %vm6041, %v6022, %v6024
      %v6043 = vsel %vm6041, %v6024, %v6026
      %v6044 = vsel %vm6041, %v6026, %v6028
      %v6045 = vsel %vm6041, %v6028, %v6030
      %v6046 = vsel %vm6041, %v6030, %v6032
      %v6047 = vsel %vm6041, %v6032, %v6034
      %v6048 = vsel %vm6041, %v6034, %v6036
      %v6049 = vsel %vm6041, %v6036, %v6038
      %v6050 = vsel %vm6041, %v6038, %v6040
      %6061 = vrot.lane.b32.xlu0 %v5576, 88
      %v6062 = vpop.permute.xlu0 %6061
      %6063 = vrot.lane.b32.xlu0 %v5582, 88
      %v6064 = vpop.permute.xlu0 %6063
      %6065 = vrot.lane.b32.xlu0 %v5590, 88
      %v6066 = vpop.permute.xlu0 %6065
      %6067 = vrot.lane.b32.xlu0 %v5596, 88
      %v6068 = vpop.permute.xlu0 %6067
      %6069 = vrot.lane.b32.xlu0 %v5734, 88
      %v6070 = vpop.permute.xlu0 %6069
      %6071 = vrot.lane.b32.xlu0 %v5715, 88
      %v6072 = vpop.permute.xlu0 %6071
      %6073 = vrot.lane.b32.xlu0 %v5716, 88
      %v6074 = vpop.permute.xlu0 %6073
      %6075 = vrot.lane.b32.xlu0 %v5717, 88
      %v6076 = vpop.permute.xlu0 %6075
      %6077 = vrot.lane.b32.xlu0 %v5718, 88
      %v6078 = vpop.permute.xlu0 %6077
      %6079 = vrot.lane.b32.xlu0 %v5735, 88
      %v6080 = vpop.permute.xlu0 %6079
      %vm6081 = vcmask 719872
      %v6082 = vsel %vm6081, %v6062, %v6064
      %v6083 = vsel %vm6081, %v6064, %v6066
      %v6084 = vsel %vm6081, %v6066, %v6068
      %v6085 = vsel %vm6081, %v6068, %v6070
      %v6086 = vsel %vm6081, %v6070, %v6072
      %v6087 = vsel %vm6081, %v6072, %v6074
      %v6088 = vsel %vm6081, %v6074, %v6076
      %v6089 = vsel %vm6081, %v6076, %v6078
      %v6090 = vsel %vm6081, %v6078, %v6080
      %6101 = vrot.lane.b32.xlu0 %v5576, 87
      %v6102 = vpop.permute.xlu0 %6101
      %6103 = vrot.lane.b32.xlu0 %v5582, 87
      %v6104 = vpop.permute.xlu0 %6103
      %6105 = vrot.lane.b32.xlu0 %v5590, 87
      %v6106 = vpop.permute.xlu0 %6105
      %6107 = vrot.lane.b32.xlu0 %v5596, 87
      %v6108 = vpop.permute.xlu0 %6107
      %6109 = vrot.lane.b32.xlu0 %v5734, 87
      %v6110 = vpop.permute.xlu0 %6109
      %6111 = vrot.lane.b32.xlu0 %v5715, 87
      %v6112 = vpop.permute.xlu0 %6111
      %6113 = vrot.lane.b32.xlu0 %v5716, 87
      %v6114 = vpop.permute.xlu0 %6113
      %6115 = vrot.lane.b32.xlu0 %v5717, 87
      %v6116 = vpop.permute.xlu0 %6115
      %6117 = vrot.lane.b32.xlu0 %v5718, 87
      %v6118 = vpop.permute.xlu0 %6117
      %6119 = vrot.lane.b32.xlu0 %v5735, 87
      %v6120 = vpop.permute.xlu0 %6119
      %vm6121 = vcmask 711680
      %v6122 = vsel %vm6121, %v6102, %v6104
      %v6123 = vsel %vm6121, %v6104, %v6106
      %v6124 = vsel %vm6121, %v6106, %v6108
      %v6125 = vsel %vm6121, %v6108, %v6110
      %v6126 = vsel %vm6121, %v6110, %v6112
      %v6127 = vsel %vm6121, %v6112, %v6114
      %v6128 = vsel %vm6121, %v6114, %v6116
      %v6129 = vsel %vm6121, %v6116, %v6118
      %v6130 = vsel %vm6121, %v6118, %v6120
      %6141 = vrot.lane.b32.xlu0 %v5576, 86
      %v6142 = vpop.permute.xlu0 %6141
      %6143 = vrot.lane.b32.xlu0 %v5582, 86
      %v6144 = vpop.permute.xlu0 %6143
      %6145 = vrot.lane.b32.xlu0 %v5590, 86
      %v6146 = vpop.permute.xlu0 %6145
      %6147 = vrot.lane.b32.xlu0 %v5596, 86
      %v6148 = vpop.permute.xlu0 %6147
      %6149 = vrot.lane.b32.xlu0 %v5734, 86
      %v6150 = vpop.permute.xlu0 %6149
      %6151 = vrot.lane.b32.xlu0 %v5715, 86
      %v6152 = vpop.permute.xlu0 %6151
      %6153 = vrot.lane.b32.xlu0 %v5716, 86
      %v6154 = vpop.permute.xlu0 %6153
      %6155 = vrot.lane.b32.xlu0 %v5717, 86
      %v6156 = vpop.permute.xlu0 %6155
      %6157 = vrot.lane.b32.xlu0 %v5718, 86
      %v6158 = vpop.permute.xlu0 %6157
      %6159 = vrot.lane.b32.xlu0 %v5735, 86
      %v6160 = vpop.permute.xlu0 %6159
      %v6161 = vsel %vm5587, %v6142, %v6144
      %v6162 = vsel %vm5587, %v6144, %v6146
      %v6163 = vsel %vm5587, %v6146, %v6148
      %v6164 = vsel %vm5587, %v6148, %v6150
      %v6165 = vsel %vm5587, %v6150, %v6152
      %v6166 = vsel %vm5587, %v6152, %v6154
      %v6167 = vsel %vm5587, %v6154, %v6156
      %v6168 = vsel %vm5587, %v6156, %v6158
      %v6169 = vsel %vm5587, %v6158, %v6160
      %6180 = vrot.lane.b32.xlu0 %v5576, 85
      %v6181 = vpop.permute.xlu0 %6180
      %6182 = vrot.lane.b32.xlu0 %v5582, 85
      %v6183 = vpop.permute.xlu0 %6182
      %6184 = vrot.lane.b32.xlu0 %v5590, 85
      %v6185 = vpop.permute.xlu0 %6184
      %6186 = vrot.lane.b32.xlu0 %v5596, 85
      %v6187 = vpop.permute.xlu0 %6186
      %6188 = vrot.lane.b32.xlu0 %v5734, 85
      %v6189 = vpop.permute.xlu0 %6188
      %6190 = vrot.lane.b32.xlu0 %v5715, 85
      %v6191 = vpop.permute.xlu0 %6190
      %6192 = vrot.lane.b32.xlu0 %v5716, 85
      %v6193 = vpop.permute.xlu0 %6192
      %6194 = vrot.lane.b32.xlu0 %v5717, 85
      %v6195 = vpop.permute.xlu0 %6194
      %6196 = vrot.lane.b32.xlu0 %v5718, 85
      %v6197 = vpop.permute.xlu0 %6196
      %6198 = vrot.lane.b32.xlu0 %v5735, 85
      %v6199 = vpop.permute.xlu0 %6198
      %vm6200 = vcmask 695296
      %v6201 = vsel %vm6200, %v6181, %v6183
      %v6202 = vsel %vm6200, %v6183, %v6185
      %v6203 = vsel %vm6200, %v6185, %v6187
      %v6204 = vsel %vm6200, %v6187, %v6189
      %v6205 = vsel %vm6200, %v6189, %v6191
      %v6206 = vsel %vm6200, %v6191, %v6193
      %v6207 = vsel %vm6200, %v6193, %v6195
      %v6208 = vsel %vm6200, %v6195, %v6197
      %v6209 = vsel %vm6200, %v6197, %v6199
      %6220 = vrot.lane.b32.xlu0 %v5576, 84
      %v6221 = vpop.permute.xlu0 %6220
      %6222 = vrot.lane.b32.xlu0 %v5582, 84
      %v6223 = vpop.permute.xlu0 %6222
      %6224 = vrot.lane.b32.xlu0 %v5590, 84
      %v6225 = vpop.permute.xlu0 %6224
      %6226 = vrot.lane.b32.xlu0 %v5596, 84
      %v6227 = vpop.permute.xlu0 %6226
      %6228 = vrot.lane.b32.xlu0 %v5734, 84
      %v6229 = vpop.permute.xlu0 %6228
      %6230 = vrot.lane.b32.xlu0 %v5715, 84
      %v6231 = vpop.permute.xlu0 %6230
      %6232 = vrot.lane.b32.xlu0 %v5716, 84
      %v6233 = vpop.permute.xlu0 %6232
      %6234 = vrot.lane.b32.xlu0 %v5717, 84
      %v6235 = vpop.permute.xlu0 %6234
      %6236 = vrot.lane.b32.xlu0 %v5718, 84
      %v6237 = vpop.permute.xlu0 %6236
      %6238 = vrot.lane.b32.xlu0 %v5735, 84
      %v6239 = vpop.permute.xlu0 %6238
      %vm6240 = vcmask 687104
      %v6241 = vsel %vm6240, %v6221, %v6223
      %v6242 = vsel %vm6240, %v6223, %v6225
      %v6243 = vsel %vm6240, %v6225, %v6227
      %v6244 = vsel %vm6240, %v6227, %v6229
      %v6245 = vsel %vm6240, %v6229, %v6231
      %v6246 = vsel %vm6240, %v6231, %v6233
      %v6247 = vsel %vm6240, %v6233, %v6235
      %v6248 = vsel %vm6240, %v6235, %v6237
      %v6249 = vsel %vm6240, %v6237, %v6239
      %6260 = vrot.lane.b32.xlu0 %v5576, 52
      %v6261 = vpop.permute.xlu0 %6260
      %6262 = vrot.lane.b32.xlu0 %v5582, 52
      %v6263 = vpop.permute.xlu0 %6262
      %6264 = vrot.lane.b32.xlu0 %v5590, 52
      %v6265 = vpop.permute.xlu0 %6264
      %6266 = vrot.lane.b32.xlu0 %v5596, 52
      %v6267 = vpop.permute.xlu0 %6266
      %6268 = vrot.lane.b32.xlu0 %v5734, 52
      %v6269 = vpop.permute.xlu0 %6268
      %6270 = vrot.lane.b32.xlu0 %v5715, 52
      %v6271 = vpop.permute.xlu0 %6270
      %6272 = vrot.lane.b32.xlu0 %v5716, 52
      %v6273 = vpop.permute.xlu0 %6272
      %6274 = vrot.lane.b32.xlu0 %v5717, 52
      %v6275 = vpop.permute.xlu0 %6274
      %6276 = vrot.lane.b32.xlu0 %v5718, 52
      %v6277 = vpop.permute.xlu0 %6276
      %6278 = vrot.lane.b32.xlu0 %v5735, 52
      %v6279 = vpop.permute.xlu0 %6278
      %6280 = vrot.lane.b32.xlu0 %v5731, 52
      %v6281 = vpop.permute.xlu0 %6280
      %vm6282 = vcmask 424960
      %v6283 = vsel %vm6282, %v6261, %v6263
      %v6284 = vsel %vm6282, %v6263, %v6265
      %v6285 = vsel %vm6282, %v6265, %v6267
      %v6286 = vsel %vm6282, %v6267, %v6269
      %v6287 = vsel %vm6282, %v6269, %v6271
      %v6288 = vsel %vm6282, %v6271, %v6273
      %v6289 = vsel %vm6282, %v6273, %v6275
      %v6290 = vsel %vm6282, %v6275, %v6277
      %v6291 = vsel %vm6282, %v6277, %v6279
      %v6292 = vsel %vm6282, %v6279, %v6281
      %6303 = vrot.lane.b32.xlu0 %v5576, 51
      %v6304 = vpop.permute.xlu0 %6303
      %6305 = vrot.lane.b32.xlu0 %v5582, 51
      %v6306 = vpop.permute.xlu0 %6305
      %6307 = vrot.lane.b32.xlu0 %v5590, 51
      %v6308 = vpop.permute.xlu0 %6307
      %6309 = vrot.lane.b32.xlu0 %v5596, 51
      %v6310 = vpop.permute.xlu0 %6309
      %6311 = vrot.lane.b32.xlu0 %v5734, 51
      %v6312 = vpop.permute.xlu0 %6311
      %6313 = vrot.lane.b32.xlu0 %v5715, 51
      %v6314 = vpop.permute.xlu0 %6313
      %6315 = vrot.lane.b32.xlu0 %v5716, 51
      %v6316 = vpop.permute.xlu0 %6315
      %6317 = vrot.lane.b32.xlu0 %v5717, 51
      %v6318 = vpop.permute.xlu0 %6317
      %6319 = vrot.lane.b32.xlu0 %v5718, 51
      %v6320 = vpop.permute.xlu0 %6319
      %6321 = vrot.lane.b32.xlu0 %v5735, 51
      %v6322 = vpop.permute.xlu0 %6321
      %6323 = vrot.lane.b32.xlu0 %v5731, 51
      %v6324 = vpop.permute.xlu0 %6323
      %vm6325 = vcmask 416768
      %v6326 = vsel %vm6325, %v6304, %v6306
      %v6327 = vsel %vm6325, %v6306, %v6308
      %v6328 = vsel %vm6325, %v6308, %v6310
      %v6329 = vsel %vm6325, %v6310, %v6312
      %v6330 = vsel %vm6325, %v6312, %v6314
      %v6331 = vsel %vm6325, %v6314, %v6316
      %v6332 = vsel %vm6325, %v6316, %v6318
      %v6333 = vsel %vm6325, %v6318, %v6320
      %v6334 = vsel %vm6325, %v6320, %v6322
      %v6335 = vsel %vm6325, %v6322, %v6324
      %6346 = vrot.lane.b32.xlu0 %v5731, 127
      %v6347 = vpop.permute.xlu0 %6346
      %v6348 = vsel %vm2875, %v5762, %v6347
      %6349 = vrot.lane.b32.xlu0 %v5731, 126
      %v6350 = vpop.permute.xlu0 %6349
      %v6351 = vsel %vm5802, %v5801, %v6350
      %6352 = vrot.lane.b32.xlu0 %v5731, 125
      %v6353 = vpop.permute.xlu0 %6352
      %v6354 = vsel %vm5842, %v5841, %v6353
      %6355 = vrot.lane.b32.xlu0 %v5731, 124
      %v6356 = vpop.permute.xlu0 %6355
      %v6357 = vsel %vm5589, %v5881, %v6356
      %6358 = vrot.lane.b32.xlu0 %v5576, 92
      %v6359 = vpop.permute.xlu0 %6358
      %6360 = vrot.lane.b32.xlu0 %v5582, 92
      %v6361 = vpop.permute.xlu0 %6360
      %6362 = vrot.lane.b32.xlu0 %v5590, 92
      %v6363 = vpop.permute.xlu0 %6362
      %6364 = vrot.lane.b32.xlu0 %v5596, 92
      %v6365 = vpop.permute.xlu0 %6364
      %6366 = vrot.lane.b32.xlu0 %v5734, 92
      %v6367 = vpop.permute.xlu0 %6366
      %6368 = vrot.lane.b32.xlu0 %v5715, 92
      %v6369 = vpop.permute.xlu0 %6368
      %6370 = vrot.lane.b32.xlu0 %v5716, 92
      %v6371 = vpop.permute.xlu0 %6370
      %6372 = vrot.lane.b32.xlu0 %v5717, 92
      %v6373 = vpop.permute.xlu0 %6372
      %6374 = vrot.lane.b32.xlu0 %v5718, 92
      %v6375 = vpop.permute.xlu0 %6374
      %6376 = vrot.lane.b32.xlu0 %v5735, 92
      %v6377 = vpop.permute.xlu0 %6376
      %6378 = vrot.lane.b32.xlu0 %v5731, 92
      %v6379 = vpop.permute.xlu0 %6378
      %vm6380 = vcmask 752640
      %v6381 = vsel %vm6380, %v6359, %v6361
      %v6382 = vsel %vm6380, %v6361, %v6363
      %v6383 = vsel %vm6380, %v6363, %v6365
      %v6384 = vsel %vm6380, %v6365, %v6367
      %v6385 = vsel %vm6380, %v6367, %v6369
      %v6386 = vsel %vm6380, %v6369, %v6371
      %v6387 = vsel %vm6380, %v6371, %v6373
      %v6388 = vsel %vm6380, %v6373, %v6375
      %v6389 = vsel %vm6380, %v6375, %v6377
      %v6390 = vsel %vm6380, %v6377, %v6379
      %6391 = vrot.lane.b32.xlu0 %v5576, 91
      %v6392 = vpop.permute.xlu0 %6391
      %6393 = vrot.lane.b32.xlu0 %v5582, 91
      %v6394 = vpop.permute.xlu0 %6393
      %6395 = vrot.lane.b32.xlu0 %v5590, 91
      %v6396 = vpop.permute.xlu0 %6395
      %6397 = vrot.lane.b32.xlu0 %v5596, 91
      %v6398 = vpop.permute.xlu0 %6397
      %6399 = vrot.lane.b32.xlu0 %v5734, 91
      %v6400 = vpop.permute.xlu0 %6399
      %6401 = vrot.lane.b32.xlu0 %v5715, 91
      %v6402 = vpop.permute.xlu0 %6401
      %6403 = vrot.lane.b32.xlu0 %v5716, 91
      %v6404 = vpop.permute.xlu0 %6403
      %6405 = vrot.lane.b32.xlu0 %v5717, 91
      %v6406 = vpop.permute.xlu0 %6405
      %6407 = vrot.lane.b32.xlu0 %v5718, 91
      %v6408 = vpop.permute.xlu0 %6407
      %6409 = vrot.lane.b32.xlu0 %v5735, 91
      %v6410 = vpop.permute.xlu0 %6409
      %6411 = vrot.lane.b32.xlu0 %v5731, 91
      %v6412 = vpop.permute.xlu0 %6411
      %vm6413 = vcmask 744448
      %v6414 = vsel %vm6413, %v6392, %v6394
      %v6415 = vsel %vm6413, %v6394, %v6396
      %v6416 = vsel %vm6413, %v6396, %v6398
      %v6417 = vsel %vm6413, %v6398, %v6400
      %v6418 = vsel %vm6413, %v6400, %v6402
      %v6419 = vsel %vm6413, %v6402, %v6404
      %v6420 = vsel %vm6413, %v6404, %v6406
      %v6421 = vsel %vm6413, %v6406, %v6408
      %v6422 = vsel %vm6413, %v6408, %v6410
      %v6423 = vsel %vm6413, %v6410, %v6412
      %6424 = vrot.lane.b32.xlu0 %v5731, 90
      %v6425 = vpop.permute.xlu0 %6424
      %v6426 = vsel %vm6001, %v6000, %v6425
      %6427 = vrot.lane.b32.xlu0 %v5731, 89
      %v6428 = vpop.permute.xlu0 %6427
      %v6429 = vsel %vm6041, %v6040, %v6428
      %6430 = vrot.lane.b32.xlu0 %v5731, 88
      %v6431 = vpop.permute.xlu0 %6430
      %v6432 = vsel %vm6081, %v6080, %v6431
      %6433 = vrot.lane.b32.xlu0 %v5731, 87
      %v6434 = vpop.permute.xlu0 %6433
      %v6435 = vsel %vm6121, %v6120, %v6434
      %6436 = vrot.lane.b32.xlu0 %v5731, 86
      %v6437 = vpop.permute.xlu0 %6436
      %v6438 = vsel %vm5587, %v6160, %v6437
      %6439 = vrot.lane.b32.xlu0 %v5582, 54
      %v6440 = vpop.permute.xlu0 %6439
      %6441 = vrot.lane.b32.xlu0 %v5590, 54
      %v6442 = vpop.permute.xlu0 %6441
      %6443 = vrot.lane.b32.xlu0 %v5596, 54
      %v6444 = vpop.permute.xlu0 %6443
      %6445 = vrot.lane.b32.xlu0 %v5734, 54
      %v6446 = vpop.permute.xlu0 %6445
      %6447 = vrot.lane.b32.xlu0 %v5715, 54
      %v6448 = vpop.permute.xlu0 %6447
      %6449 = vrot.lane.b32.xlu0 %v5716, 54
      %v6450 = vpop.permute.xlu0 %6449
      %6451 = vrot.lane.b32.xlu0 %v5717, 54
      %v6452 = vpop.permute.xlu0 %6451
      %6453 = vrot.lane.b32.xlu0 %v5718, 54
      %v6454 = vpop.permute.xlu0 %6453
      %6455 = vrot.lane.b32.xlu0 %v5735, 54
      %v6456 = vpop.permute.xlu0 %6455
      %6457 = vrot.lane.b32.xlu0 %v5731, 54
      %v6458 = vpop.permute.xlu0 %6457
      %vm6459 = vcmask 441344
      %v6460 = vsel %vm6459, %v6440, %v6442
      %v6461 = vsel %vm6459, %v6442, %v6444
      %v6462 = vsel %vm6459, %v6444, %v6446
      %v6463 = vsel %vm6459, %v6446, %v6448
      %v6464 = vsel %vm6459, %v6448, %v6450
      %v6465 = vsel %vm6459, %v6450, %v6452
      %v6466 = vsel %vm6459, %v6452, %v6454
      %v6467 = vsel %vm6459, %v6454, %v6456
      %v6468 = vsel %vm6459, %v6456, %v6458
      %6469 = vrot.lane.b32.xlu0 %v5582, 53
      %v6470 = vpop.permute.xlu0 %6469
      %6471 = vrot.lane.b32.xlu0 %v5590, 53
      %v6472 = vpop.permute.xlu0 %6471
      %6473 = vrot.lane.b32.xlu0 %v5596, 53
      %v6474 = vpop.permute.xlu0 %6473
      %6475 = vrot.lane.b32.xlu0 %v5734, 53
      %v6476 = vpop.permute.xlu0 %6475
      %6477 = vrot.lane.b32.xlu0 %v5715, 53
      %v6478 = vpop.permute.xlu0 %6477
      %6479 = vrot.lane.b32.xlu0 %v5716, 53
      %v6480 = vpop.permute.xlu0 %6479
      %6481 = vrot.lane.b32.xlu0 %v5717, 53
      %v6482 = vpop.permute.xlu0 %6481
      %6483 = vrot.lane.b32.xlu0 %v5718, 53
      %v6484 = vpop.permute.xlu0 %6483
      %6485 = vrot.lane.b32.xlu0 %v5735, 53
      %v6486 = vpop.permute.xlu0 %6485
      %6487 = vrot.lane.b32.xlu0 %v5731, 53
      %v6488 = vpop.permute.xlu0 %6487
      %vm6489 = vcmask 433152
      %v6490 = vsel %vm6489, %v6470, %v6472
      %v6491 = vsel %vm6489, %v6472, %v6474
      %v6492 = vsel %vm6489, %v6474, %v6476
      %v6493 = vsel %vm6489, %v6476, %v6478
      %v6494 = vsel %vm6489, %v6478, %v6480
      %v6495 = vsel %vm6489, %v6480, %v6482
      %v6496 = vsel %vm6489, %v6482, %v6484
      %v6497 = vsel %vm6489, %v6484, %v6486
      %v6498 = vsel %vm6489, %v6486, %v6488
      %6499 = vrot.lane.b32.xlu0 %v5582, 94
      %v6500 = vpop.permute.xlu0 %6499
      %6501 = vrot.lane.b32.xlu0 %v5590, 94
      %v6502 = vpop.permute.xlu0 %6501
      %6503 = vrot.lane.b32.xlu0 %v5596, 94
      %v6504 = vpop.permute.xlu0 %6503
      %6505 = vrot.lane.b32.xlu0 %v5734, 94
      %v6506 = vpop.permute.xlu0 %6505
      %6507 = vrot.lane.b32.xlu0 %v5715, 94
      %v6508 = vpop.permute.xlu0 %6507
      %6509 = vrot.lane.b32.xlu0 %v5716, 94
      %v6510 = vpop.permute.xlu0 %6509
      %6511 = vrot.lane.b32.xlu0 %v5717, 94
      %v6512 = vpop.permute.xlu0 %6511
      %6513 = vrot.lane.b32.xlu0 %v5718, 94
      %v6514 = vpop.permute.xlu0 %6513
      %6515 = vrot.lane.b32.xlu0 %v5735, 94
      %v6516 = vpop.permute.xlu0 %6515
      %6517 = vrot.lane.b32.xlu0 %v5731, 94
      %v6518 = vpop.permute.xlu0 %6517
      %vm6519 = vcmask 769024
      %v6520 = vsel %vm6519, %v6500, %v6502
      %v6521 = vsel %vm6519, %v6502, %v6504
      %v6522 = vsel %vm6519, %v6504, %v6506
      %v6523 = vsel %vm6519, %v6506, %v6508
      %v6524 = vsel %vm6519, %v6508, %v6510
      %v6525 = vsel %vm6519, %v6510, %v6512
      %v6526 = vsel %vm6519, %v6512, %v6514
      %v6527 = vsel %vm6519, %v6514, %v6516
      %v6528 = vsel %vm6519, %v6516, %v6518
      %6529 = vrot.lane.b32.xlu0 %v5582, 93
      %v6530 = vpop.permute.xlu0 %6529
      %6531 = vrot.lane.b32.xlu0 %v5590, 93
      %v6532 = vpop.permute.xlu0 %6531
      %6533 = vrot.lane.b32.xlu0 %v5596, 93
      %v6534 = vpop.permute.xlu0 %6533
      %6535 = vrot.lane.b32.xlu0 %v5734, 93
      %v6536 = vpop.permute.xlu0 %6535
      %6537 = vrot.lane.b32.xlu0 %v5715, 93
      %v6538 = vpop.permute.xlu0 %6537
      %6539 = vrot.lane.b32.xlu0 %v5716, 93
      %v6540 = vpop.permute.xlu0 %6539
      %6541 = vrot.lane.b32.xlu0 %v5717, 93
      %v6542 = vpop.permute.xlu0 %6541
      %6543 = vrot.lane.b32.xlu0 %v5718, 93
      %v6544 = vpop.permute.xlu0 %6543
      %6545 = vrot.lane.b32.xlu0 %v5735, 93
      %v6546 = vpop.permute.xlu0 %6545
      %6547 = vrot.lane.b32.xlu0 %v5731, 93
      %v6548 = vpop.permute.xlu0 %6547
      %vm6549 = vcmask 760832
      %v6550 = vsel %vm6549, %v6530, %v6532
      %v6551 = vsel %vm6549, %v6532, %v6534
      %v6552 = vsel %vm6549, %v6534, %v6536
      %v6553 = vsel %vm6549, %v6536, %v6538
      %v6554 = vsel %vm6549, %v6538, %v6540
      %v6555 = vsel %vm6549, %v6540, %v6542
      %v6556 = vsel %vm6549, %v6542, %v6544
      %v6557 = vsel %vm6549, %v6544, %v6546
      %v6558 = vsel %vm6549, %v6546, %v6548
      %6560 = vrot.lane.b32.xlu0 %v5736, 91
      %v6561 = vpop.permute.xlu0 %6560
      %v6562 = vsel %vm6413, %v6412, %v6561
      %6563 = vrot.lane.b32.xlu0 %v5736, 90
      %v6564 = vpop.permute.xlu0 %6563
      %v6565 = vsel %vm6001, %v6425, %v6564
      %6566 = vrot.lane.b32.xlu0 %v5736, 89
      %v6567 = vpop.permute.xlu0 %6566
      %v6568 = vsel %vm6041, %v6428, %v6567
      %6569 = vrot.lane.b32.xlu0 %v5736, 88
      %v6570 = vpop.permute.xlu0 %6569
      %v6571 = vsel %vm6081, %v6431, %v6570
      %6572 = vrot.lane.b32.xlu0 %v5582, 56
      %v6573 = vpop.permute.xlu0 %6572
      %6574 = vrot.lane.b32.xlu0 %v5590, 56
      %v6575 = vpop.permute.xlu0 %6574
      %6576 = vrot.lane.b32.xlu0 %v5596, 56
      %v6577 = vpop.permute.xlu0 %6576
      %6578 = vrot.lane.b32.xlu0 %v5734, 56
      %v6579 = vpop.permute.xlu0 %6578
      %6580 = vrot.lane.b32.xlu0 %v5715, 56
      %v6581 = vpop.permute.xlu0 %6580
      %6582 = vrot.lane.b32.xlu0 %v5716, 56
      %v6583 = vpop.permute.xlu0 %6582
      %6584 = vrot.lane.b32.xlu0 %v5717, 56
      %v6585 = vpop.permute.xlu0 %6584
      %6586 = vrot.lane.b32.xlu0 %v5718, 56
      %v6587 = vpop.permute.xlu0 %6586
      %6588 = vrot.lane.b32.xlu0 %v5735, 56
      %v6589 = vpop.permute.xlu0 %6588
      %6590 = vrot.lane.b32.xlu0 %v5731, 56
      %v6591 = vpop.permute.xlu0 %6590
      %6592 = vrot.lane.b32.xlu0 %v5736, 56
      %v6593 = vpop.permute.xlu0 %6592
      %vm6594 = vcmask 457728
      %v6595 = vsel %vm6594, %v6573, %v6575
      %v6596 = vsel %vm6594, %v6575, %v6577
      %v6597 = vsel %vm6594, %v6577, %v6579
      %v6598 = vsel %vm6594, %v6579, %v6581
      %v6599 = vsel %vm6594, %v6581, %v6583
      %v6600 = vsel %vm6594, %v6583, %v6585
      %v6601 = vsel %vm6594, %v6585, %v6587
      %v6602 = vsel %vm6594, %v6587, %v6589
      %v6603 = vsel %vm6594, %v6589, %v6591
      %v6604 = vsel %vm6594, %v6591, %v6593
      %6605 = vrot.lane.b32.xlu0 %v5582, 55
      %v6606 = vpop.permute.xlu0 %6605
      %6607 = vrot.lane.b32.xlu0 %v5590, 55
      %v6608 = vpop.permute.xlu0 %6607
      %6609 = vrot.lane.b32.xlu0 %v5596, 55
      %v6610 = vpop.permute.xlu0 %6609
      %6611 = vrot.lane.b32.xlu0 %v5734, 55
      %v6612 = vpop.permute.xlu0 %6611
      %6613 = vrot.lane.b32.xlu0 %v5715, 55
      %v6614 = vpop.permute.xlu0 %6613
      %6615 = vrot.lane.b32.xlu0 %v5716, 55
      %v6616 = vpop.permute.xlu0 %6615
      %6617 = vrot.lane.b32.xlu0 %v5717, 55
      %v6618 = vpop.permute.xlu0 %6617
      %6619 = vrot.lane.b32.xlu0 %v5718, 55
      %v6620 = vpop.permute.xlu0 %6619
      %6621 = vrot.lane.b32.xlu0 %v5735, 55
      %v6622 = vpop.permute.xlu0 %6621
      %6623 = vrot.lane.b32.xlu0 %v5731, 55
      %v6624 = vpop.permute.xlu0 %6623
      %6625 = vrot.lane.b32.xlu0 %v5736, 55
      %v6626 = vpop.permute.xlu0 %6625
      %vm6627 = vcmask 449536
      %v6628 = vsel %vm6627, %v6606, %v6608
      %v6629 = vsel %vm6627, %v6608, %v6610
      %v6630 = vsel %vm6627, %v6610, %v6612
      %v6631 = vsel %vm6627, %v6612, %v6614
      %v6632 = vsel %vm6627, %v6614, %v6616
      %v6633 = vsel %vm6627, %v6616, %v6618
      %v6634 = vsel %vm6627, %v6618, %v6620
      %v6635 = vsel %vm6627, %v6620, %v6622
      %v6636 = vsel %vm6627, %v6622, %v6624
      %v6637 = vsel %vm6627, %v6624, %v6626
      %6638 = vrot.lane.b32.xlu0 %v5736, 54
      %v6639 = vpop.permute.xlu0 %6638
      %v6640 = vsel %vm6459, %v6458, %v6639
      %6641 = vrot.lane.b32.xlu0 %v5736, 53
      %v6642 = vpop.permute.xlu0 %6641
      %v6643 = vsel %vm6489, %v6488, %v6642
      %6644 = vrot.lane.b32.xlu0 %v5736, 52
      %v6645 = vpop.permute.xlu0 %6644
      %v6646 = vsel %vm6282, %v6281, %v6645
      %6647 = vrot.lane.b32.xlu0 %v5736, 51
      %v6648 = vpop.permute.xlu0 %6647
      %v6649 = vsel %vm6325, %v6324, %v6648
      %6650 = vrot.lane.b32.xlu0 %v5576, 50
      %v6651 = vpop.permute.xlu0 %6650
      %6652 = vrot.lane.b32.xlu0 %v5582, 50
      %v6653 = vpop.permute.xlu0 %6652
      %6654 = vrot.lane.b32.xlu0 %v5590, 50
      %v6655 = vpop.permute.xlu0 %6654
      %6656 = vrot.lane.b32.xlu0 %v5596, 50
      %v6657 = vpop.permute.xlu0 %6656
      %6658 = vrot.lane.b32.xlu0 %v5734, 50
      %v6659 = vpop.permute.xlu0 %6658
      %6660 = vrot.lane.b32.xlu0 %v5715, 50
      %v6661 = vpop.permute.xlu0 %6660
      %6662 = vrot.lane.b32.xlu0 %v5716, 50
      %v6663 = vpop.permute.xlu0 %6662
      %6664 = vrot.lane.b32.xlu0 %v5717, 50
      %v6665 = vpop.permute.xlu0 %6664
      %6666 = vrot.lane.b32.xlu0 %v5718, 50
      %v6667 = vpop.permute.xlu0 %6666
      %6668 = vrot.lane.b32.xlu0 %v5735, 50
      %v6669 = vpop.permute.xlu0 %6668
      %6670 = vrot.lane.b32.xlu0 %v5731, 50
      %v6671 = vpop.permute.xlu0 %6670
      %6672 = vrot.lane.b32.xlu0 %v5763, 50
      %v6673 = vpop.permute.xlu0 %6672
      %6674 = vrot.lane.b32.xlu0 %v5764, 50
      %v6675 = vpop.permute.xlu0 %6674
      %6676 = vrot.lane.b32.xlu0 %v5765, 50
      %v6677 = vpop.permute.xlu0 %6676
      %6678 = vrot.lane.b32.xlu0 %v5766, 50
      %v6679 = vpop.permute.xlu0 %6678
      %6680 = vrot.lane.b32.xlu0 %v5767, 50
      %v6681 = vpop.permute.xlu0 %6680
      %6682 = vrot.lane.b32.xlu0 %v5768, 50
      %v6683 = vpop.permute.xlu0 %6682
      %6684 = vrot.lane.b32.xlu0 %v5769, 50
      %v6685 = vpop.permute.xlu0 %6684
      %6686 = vrot.lane.b32.xlu0 %v5770, 50
      %v6687 = vpop.permute.xlu0 %6686
      %6688 = vrot.lane.b32.xlu0 %v5771, 50
      %v6689 = vpop.permute.xlu0 %6688
      %6690 = vrot.lane.b32.xlu0 %v6348, 50
      %v6691 = vpop.permute.xlu0 %6690
      %6692 = vrot.lane.b32.xlu0 %v6347, 50
      %v6693 = vpop.permute.xlu0 %6692
      %6694 = vrot.lane.b32.xlu0 %v5803, 50
      %v6695 = vpop.permute.xlu0 %6694
      %6696 = vrot.lane.b32.xlu0 %v5804, 50
      %v6697 = vpop.permute.xlu0 %6696
      %6698 = vrot.lane.b32.xlu0 %v5805, 50
      %v6699 = vpop.permute.xlu0 %6698
      %6700 = vrot.lane.b32.xlu0 %v5806, 50
      %v6701 = vpop.permute.xlu0 %6700
      %6702 = vrot.lane.b32.xlu0 %v5807, 50
      %v6703 = vpop.permute.xlu0 %6702
      %6704 = vrot.lane.b32.xlu0 %v5808, 50
      %v6705 = vpop.permute.xlu0 %6704
      %6706 = vrot.lane.b32.xlu0 %v5809, 50
      %v6707 = vpop.permute.xlu0 %6706
      %6708 = vrot.lane.b32.xlu0 %v5810, 50
      %v6709 = vpop.permute.xlu0 %6708
      %6710 = vrot.lane.b32.xlu0 %v5811, 50
      %v6711 = vpop.permute.xlu0 %6710
      %6712 = vrot.lane.b32.xlu0 %v6351, 50
      %v6713 = vpop.permute.xlu0 %6712
      %6714 = vrot.lane.b32.xlu0 %v6350, 50
      %v6715 = vpop.permute.xlu0 %6714
      %6716 = vrot.lane.b32.xlu0 %v5843, 50
      %v6717 = vpop.permute.xlu0 %6716
      %6718 = vrot.lane.b32.xlu0 %v5844, 50
      %v6719 = vpop.permute.xlu0 %6718
      %6720 = vrot.lane.b32.xlu0 %v5845, 50
      %v6721 = vpop.permute.xlu0 %6720
      %6722 = vrot.lane.b32.xlu0 %v5846, 50
      %v6723 = vpop.permute.xlu0 %6722
      %6724 = vrot.lane.b32.xlu0 %v5847, 50
      %v6725 = vpop.permute.xlu0 %6724
      %6726 = vrot.lane.b32.xlu0 %v5848, 50
      %v6727 = vpop.permute.xlu0 %6726
      %6728 = vrot.lane.b32.xlu0 %v5849, 50
      %v6729 = vpop.permute.xlu0 %6728
      %6730 = vrot.lane.b32.xlu0 %v5850, 50
      %v6731 = vpop.permute.xlu0 %6730
      %6732 = vrot.lane.b32.xlu0 %v5851, 50
      %v6733 = vpop.permute.xlu0 %6732
      %6734 = vrot.lane.b32.xlu0 %v6354, 50
      %v6735 = vpop.permute.xlu0 %6734
      %6736 = vrot.lane.b32.xlu0 %v6353, 50
      %v6737 = vpop.permute.xlu0 %6736
      %6738 = vrot.lane.b32.xlu0 %v5882, 50
      %v6739 = vpop.permute.xlu0 %6738
      %6740 = vrot.lane.b32.xlu0 %v5883, 50
      %v6741 = vpop.permute.xlu0 %6740
      %6742 = vrot.lane.b32.xlu0 %v5884, 50
      %v6743 = vpop.permute.xlu0 %6742
      %6744 = vrot.lane.b32.xlu0 %v5885, 50
      %v6745 = vpop.permute.xlu0 %6744
      %6746 = vrot.lane.b32.xlu0 %v5886, 50
      %v6747 = vpop.permute.xlu0 %6746
      %6748 = vrot.lane.b32.xlu0 %v5887, 50
      %v6749 = vpop.permute.xlu0 %6748
      %6750 = vrot.lane.b32.xlu0 %v5888, 50
      %v6751 = vpop.permute.xlu0 %6750
      %6752 = vrot.lane.b32.xlu0 %v5889, 50
      %v6753 = vpop.permute.xlu0 %6752
      %6754 = vrot.lane.b32.xlu0 %v5890, 50
      %v6755 = vpop.permute.xlu0 %6754
      %6756 = vrot.lane.b32.xlu0 %v6357, 50
      %v6757 = vpop.permute.xlu0 %6756
      %6758 = vrot.lane.b32.xlu0 %v6356, 50
      %v6759 = vpop.permute.xlu0 %6758
      %6760 = vrot.lane.b32.xlu0 %v6381, 50
      %v6761 = vpop.permute.xlu0 %6760
      %6762 = vrot.lane.b32.xlu0 %v6382, 50
      %v6763 = vpop.permute.xlu0 %6762
      %6764 = vrot.lane.b32.xlu0 %v6383, 50
      %v6765 = vpop.permute.xlu0 %6764
      %6766 = vrot.lane.b32.xlu0 %v6384, 50
      %v6767 = vpop.permute.xlu0 %6766
      %6768 = vrot.lane.b32.xlu0 %v6385, 50
      %v6769 = vpop.permute.xlu0 %6768
      %6770 = vrot.lane.b32.xlu0 %v6386, 50
      %v6771 = vpop.permute.xlu0 %6770
      %6772 = vrot.lane.b32.xlu0 %v6387, 50
      %v6773 = vpop.permute.xlu0 %6772
      %6774 = vrot.lane.b32.xlu0 %v6388, 50
      %v6775 = vpop.permute.xlu0 %6774
      %6776 = vrot.lane.b32.xlu0 %v6389, 50
      %v6777 = vpop.permute.xlu0 %6776
      %6778 = vrot.lane.b32.xlu0 %v6390, 50
      %v6779 = vpop.permute.xlu0 %6778
      %6780 = vrot.lane.b32.xlu0 %v6379, 50
      %v6781 = vpop.permute.xlu0 %6780
      %6782 = vrot.lane.b32.xlu0 %v6414, 50
      %v6783 = vpop.permute.xlu0 %6782
      %6784 = vrot.lane.b32.xlu0 %v6415, 50
      %v6785 = vpop.permute.xlu0 %6784
      %6786 = vrot.lane.b32.xlu0 %v6416, 50
      %v6787 = vpop.permute.xlu0 %6786
      %6788 = vrot.lane.b32.xlu0 %v6417, 50
      %v6789 = vpop.permute.xlu0 %6788
      %6790 = vrot.lane.b32.xlu0 %v6418, 50
      %v6791 = vpop.permute.xlu0 %6790
      %6792 = vrot.lane.b32.xlu0 %v6419, 50
      %v6793 = vpop.permute.xlu0 %6792
      %6794 = vrot.lane.b32.xlu0 %v6420, 50
      %v6795 = vpop.permute.xlu0 %6794
      %6796 = vrot.lane.b32.xlu0 %v6421, 50
      %v6797 = vpop.permute.xlu0 %6796
      %6798 = vrot.lane.b32.xlu0 %v6422, 50
      %v6799 = vpop.permute.xlu0 %6798
      %6800 = vrot.lane.b32.xlu0 %v6423, 50
      %v6801 = vpop.permute.xlu0 %6800
      %6802 = vrot.lane.b32.xlu0 %v6412, 50
      %v6803 = vpop.permute.xlu0 %6802
      %6804 = vrot.lane.b32.xlu0 %v6002, 50
      %v6805 = vpop.permute.xlu0 %6804
      %6806 = vrot.lane.b32.xlu0 %v6003, 50
      %v6807 = vpop.permute.xlu0 %6806
      %6808 = vrot.lane.b32.xlu0 %v6004, 50
      %v6809 = vpop.permute.xlu0 %6808
      %6810 = vrot.lane.b32.xlu0 %v6005, 50
      %v6811 = vpop.permute.xlu0 %6810
      %6812 = vrot.lane.b32.xlu0 %v6006, 50
      %v6813 = vpop.permute.xlu0 %6812
      %6814 = vrot.lane.b32.xlu0 %v6007, 50
      %v6815 = vpop.permute.xlu0 %6814
      %6816 = vrot.lane.b32.xlu0 %v6008, 50
      %v6817 = vpop.permute.xlu0 %6816
      %6818 = vrot.lane.b32.xlu0 %v6009, 50
      %v6819 = vpop.permute.xlu0 %6818
      %6820 = vrot.lane.b32.xlu0 %v6010, 50
      %v6821 = vpop.permute.xlu0 %6820
      %6822 = vrot.lane.b32.xlu0 %v6426, 50
      %v6823 = vpop.permute.xlu0 %6822
      %6824 = vrot.lane.b32.xlu0 %v6425, 50
      %v6825 = vpop.permute.xlu0 %6824
      %6826 = vrot.lane.b32.xlu0 %v6042, 50
      %v6827 = vpop.permute.xlu0 %6826
      %6828 = vrot.lane.b32.xlu0 %v6043, 50
      %v6829 = vpop.permute.xlu0 %6828
      %6830 = vrot.lane.b32.xlu0 %v6044, 50
      %v6831 = vpop.permute.xlu0 %6830
      %6832 = vrot.lane.b32.xlu0 %v6045, 50
      %v6833 = vpop.permute.xlu0 %6832
      %6834 = vrot.lane.b32.xlu0 %v6046, 50
      %v6835 = vpop.permute.xlu0 %6834
      %6836 = vrot.lane.b32.xlu0 %v6047, 50
      %v6837 = vpop.permute.xlu0 %6836
      %6838 = vrot.lane.b32.xlu0 %v6048, 50
      %v6839 = vpop.permute.xlu0 %6838
      %6840 = vrot.lane.b32.xlu0 %v6049, 50
      %v6841 = vpop.permute.xlu0 %6840
      %6842 = vrot.lane.b32.xlu0 %v6050, 50
      %v6843 = vpop.permute.xlu0 %6842
      %6844 = vrot.lane.b32.xlu0 %v6429, 50
      %v6845 = vpop.permute.xlu0 %6844
      %6846 = vrot.lane.b32.xlu0 %v6428, 50
      %v6847 = vpop.permute.xlu0 %6846
      %6848 = vrot.lane.b32.xlu0 %v6082, 50
      %v6849 = vpop.permute.xlu0 %6848
      %6850 = vrot.lane.b32.xlu0 %v6083, 50
      %v6851 = vpop.permute.xlu0 %6850
      %6852 = vrot.lane.b32.xlu0 %v6084, 50
      %v6853 = vpop.permute.xlu0 %6852
      %6854 = vrot.lane.b32.xlu0 %v6085, 50
      %v6855 = vpop.permute.xlu0 %6854
      %6856 = vrot.lane.b32.xlu0 %v6086, 50
      %v6857 = vpop.permute.xlu0 %6856
      %6858 = vrot.lane.b32.xlu0 %v6087, 50
      %v6859 = vpop.permute.xlu0 %6858
      %6860 = vrot.lane.b32.xlu0 %v6088, 50
      %v6861 = vpop.permute.xlu0 %6860
      %6862 = vrot.lane.b32.xlu0 %v6089, 50
      %v6863 = vpop.permute.xlu0 %6862
      %6864 = vrot.lane.b32.xlu0 %v6090, 50
      %v6865 = vpop.permute.xlu0 %6864
      %6866 = vrot.lane.b32.xlu0 %v6432, 50
      %v6867 = vpop.permute.xlu0 %6866
      %6868 = vrot.lane.b32.xlu0 %v6431, 50
      %v6869 = vpop.permute.xlu0 %6868
      %6870 = vrot.lane.b32.xlu0 %v6122, 50
      %v6871 = vpop.permute.xlu0 %6870
      %6872 = vrot.lane.b32.xlu0 %v6123, 50
      %v6873 = vpop.permute.xlu0 %6872
      %6874 = vrot.lane.b32.xlu0 %v6124, 50
      %v6875 = vpop.permute.xlu0 %6874
      %6876 = vrot.lane.b32.xlu0 %v6125, 50
      %v6877 = vpop.permute.xlu0 %6876
      %6878 = vrot.lane.b32.xlu0 %v6126, 50
      %v6879 = vpop.permute.xlu0 %6878
      %6880 = vrot.lane.b32.xlu0 %v6127, 50
      %v6881 = vpop.permute.xlu0 %6880
      %6882 = vrot.lane.b32.xlu0 %v6128, 50
      %v6883 = vpop.permute.xlu0 %6882
      %6884 = vrot.lane.b32.xlu0 %v6129, 50
      %v6885 = vpop.permute.xlu0 %6884
      %6886 = vrot.lane.b32.xlu0 %v6130, 50
      %v6887 = vpop.permute.xlu0 %6886
      %6888 = vrot.lane.b32.xlu0 %v6435, 50
      %v6889 = vpop.permute.xlu0 %6888
      %6890 = vrot.lane.b32.xlu0 %v6434, 50
      %v6891 = vpop.permute.xlu0 %6890
      %6892 = vrot.lane.b32.xlu0 %v6161, 50
      %v6893 = vpop.permute.xlu0 %6892
      %6894 = vrot.lane.b32.xlu0 %v6162, 50
      %v6895 = vpop.permute.xlu0 %6894
      %6896 = vrot.lane.b32.xlu0 %v6163, 50
      %v6897 = vpop.permute.xlu0 %6896
      %6898 = vrot.lane.b32.xlu0 %v6164, 50
      %v6899 = vpop.permute.xlu0 %6898
      %6900 = vrot.lane.b32.xlu0 %v6165, 50
      %v6901 = vpop.permute.xlu0 %6900
      %6902 = vrot.lane.b32.xlu0 %v6166, 50
      %v6903 = vpop.permute.xlu0 %6902
      %6904 = vrot.lane.b32.xlu0 %v6167, 50
      %v6905 = vpop.permute.xlu0 %6904
      %6906 = vrot.lane.b32.xlu0 %v6168, 50
      %v6907 = vpop.permute.xlu0 %6906
      %6908 = vrot.lane.b32.xlu0 %v6169, 50
      %v6909 = vpop.permute.xlu0 %6908
      %6910 = vrot.lane.b32.xlu0 %v6438, 50
      %v6911 = vpop.permute.xlu0 %6910
      %6912 = vrot.lane.b32.xlu0 %v6437, 50
      %v6913 = vpop.permute.xlu0 %6912
      %6914 = vrot.lane.b32.xlu0 %v6440, 50
      %v6915 = vpop.permute.xlu0 %6914
      %6916 = vrot.lane.b32.xlu0 %v6460, 50
      %v6917 = vpop.permute.xlu0 %6916
      %6918 = vrot.lane.b32.xlu0 %v6461, 50
      %v6919 = vpop.permute.xlu0 %6918
      %6920 = vrot.lane.b32.xlu0 %v6462, 50
      %v6921 = vpop.permute.xlu0 %6920
      %6922 = vrot.lane.b32.xlu0 %v6463, 50
      %v6923 = vpop.permute.xlu0 %6922
      %6924 = vrot.lane.b32.xlu0 %v6464, 50
      %v6925 = vpop.permute.xlu0 %6924
      %6926 = vrot.lane.b32.xlu0 %v6465, 50
      %v6927 = vpop.permute.xlu0 %6926
      %6928 = vrot.lane.b32.xlu0 %v6466, 50
      %v6929 = vpop.permute.xlu0 %6928
      %6930 = vrot.lane.b32.xlu0 %v6467, 50
      %v6931 = vpop.permute.xlu0 %6930
      %6932 = vrot.lane.b32.xlu0 %v6468, 50
      %v6933 = vpop.permute.xlu0 %6932
      %6934 = vrot.lane.b32.xlu0 %v6458, 50
      %v6935 = vpop.permute.xlu0 %6934
      %6936 = vrot.lane.b32.xlu0 %v6470, 50
      %v6937 = vpop.permute.xlu0 %6936
      %6938 = vrot.lane.b32.xlu0 %v6490, 50
      %v6939 = vpop.permute.xlu0 %6938
      %6940 = vrot.lane.b32.xlu0 %v6491, 50
      %v6941 = vpop.permute.xlu0 %6940
      %6942 = vrot.lane.b32.xlu0 %v6492, 50
      %v6943 = vpop.permute.xlu0 %6942
      %6944 = vrot.lane.b32.xlu0 %v6493, 50
      %v6945 = vpop.permute.xlu0 %6944
      %6946 = vrot.lane.b32.xlu0 %v6494, 50
      %v6947 = vpop.permute.xlu0 %6946
      %6948 = vrot.lane.b32.xlu0 %v6495, 50
      %v6949 = vpop.permute.xlu0 %6948
      %6950 = vrot.lane.b32.xlu0 %v6496, 50
      %v6951 = vpop.permute.xlu0 %6950
      %6952 = vrot.lane.b32.xlu0 %v6497, 50
      %v6953 = vpop.permute.xlu0 %6952
      %6954 = vrot.lane.b32.xlu0 %v6498, 50
      %v6955 = vpop.permute.xlu0 %6954
      %6956 = vrot.lane.b32.xlu0 %v6488, 50
      %v6957 = vpop.permute.xlu0 %6956
      %6958 = vrot.lane.b32.xlu0 %v6263, 50
      %v6959 = vpop.permute.xlu0 %6958
      %6960 = vrot.lane.b32.xlu0 %v6284, 50
      %v6961 = vpop.permute.xlu0 %6960
      %6962 = vrot.lane.b32.xlu0 %v6285, 50
      %v6963 = vpop.permute.xlu0 %6962
      %6964 = vrot.lane.b32.xlu0 %v6286, 50
      %v6965 = vpop.permute.xlu0 %6964
      %6966 = vrot.lane.b32.xlu0 %v6287, 50
      %v6967 = vpop.permute.xlu0 %6966
      %6968 = vrot.lane.b32.xlu0 %v6288, 50
      %v6969 = vpop.permute.xlu0 %6968
      %6970 = vrot.lane.b32.xlu0 %v6289, 50
      %v6971 = vpop.permute.xlu0 %6970
      %6972 = vrot.lane.b32.xlu0 %v6290, 50
      %v6973 = vpop.permute.xlu0 %6972
      %6974 = vrot.lane.b32.xlu0 %v6291, 50
      %v6975 = vpop.permute.xlu0 %6974
      %6976 = vrot.lane.b32.xlu0 %v6292, 50
      %v6977 = vpop.permute.xlu0 %6976
      %6978 = vrot.lane.b32.xlu0 %v6281, 50
      %v6979 = vpop.permute.xlu0 %6978
      %6980 = vrot.lane.b32.xlu0 %v6306, 50
      %v6981 = vpop.permute.xlu0 %6980
      %6982 = vrot.lane.b32.xlu0 %v6327, 50
      %v6983 = vpop.permute.xlu0 %6982
      %6984 = vrot.lane.b32.xlu0 %v6328, 50
      %v6985 = vpop.permute.xlu0 %6984
      %6986 = vrot.lane.b32.xlu0 %v6329, 50
      %v6987 = vpop.permute.xlu0 %6986
      %6988 = vrot.lane.b32.xlu0 %v6330, 50
      %v6989 = vpop.permute.xlu0 %6988
      %6990 = vrot.lane.b32.xlu0 %v6331, 50
      %v6991 = vpop.permute.xlu0 %6990
      %6992 = vrot.lane.b32.xlu0 %v6332, 50
      %v6993 = vpop.permute.xlu0 %6992
      %6994 = vrot.lane.b32.xlu0 %v6333, 50
      %v6995 = vpop.permute.xlu0 %6994
      %6996 = vrot.lane.b32.xlu0 %v6334, 50
      %v6997 = vpop.permute.xlu0 %6996
      %6998 = vrot.lane.b32.xlu0 %v6335, 50
      %v6999 = vpop.permute.xlu0 %6998
      %7000 = vrot.lane.b32.xlu0 %v6324, 50
      %v7001 = vpop.permute.xlu0 %7000
      %vm7002 = vcmask 408576
      %v7003 = vsel %vm7002, %v6651, %v6653
      %v7004 = vsel %vm7002, %v6653, %v6655
      %v7005 = vsel %vm7002, %v6655, %v6657
      %v7006 = vsel %vm7002, %v6657, %v6659
      %v7007 = vsel %vm7002, %v6659, %v6661
      %v7008 = vsel %vm7002, %v6661, %v6663
      %v7009 = vsel %vm7002, %v6663, %v6665
      %v7010 = vsel %vm7002, %v6665, %v6667
      %v7011 = vsel %vm7002, %v6667, %v6669
      %v7012 = vsel %vm7002, %v6669, %v6671
      %v7013 = vsel %vm7002, %v6673, %v6675
      %v7014 = vsel %vm7002, %v6675, %v6677
      %v7015 = vsel %vm7002, %v6677, %v6679
      %v7016 = vsel %vm7002, %v6679, %v6681
      %v7017 = vsel %vm7002, %v6681, %v6683
      %v7018 = vsel %vm7002, %v6683, %v6685
      %v7019 = vsel %vm7002, %v6685, %v6687
      %v7020 = vsel %vm7002, %v6687, %v6689
      %v7021 = vsel %vm7002, %v6689, %v6691
      %v7022 = vsel %vm7002, %v6691, %v6693
      %v7023 = vsel %vm7002, %v6695, %v6697
      %v7024 = vsel %vm7002, %v6697, %v6699
      %v7025 = vsel %vm7002, %v6699, %v6701
      %v7026 = vsel %vm7002, %v6701, %v6703
      %v7027 = vsel %vm7002, %v6703, %v6705
      %v7028 = vsel %vm7002, %v6705, %v6707
      %v7029 = vsel %vm7002, %v6707, %v6709
      %v7030 = vsel %vm7002, %v6709, %v6711
      %v7031 = vsel %vm7002, %v6711, %v6713
      %v7032 = vsel %vm7002, %v6713, %v6715
      %v7033 = vsel %vm7002, %v6717, %v6719
      %v7034 = vsel %vm7002, %v6719, %v6721
      %v7035 = vsel %vm7002, %v6721, %v6723
      %v7036 = vsel %vm7002, %v6723, %v6725
      %v7037 = vsel %vm7002, %v6725, %v6727
      %v7038 = vsel %vm7002, %v6727, %v6729
      %v7039 = vsel %vm7002, %v6729, %v6731
      %v7040 = vsel %vm7002, %v6731, %v6733
      %v7041 = vsel %vm7002, %v6733, %v6735
      %v7042 = vsel %vm7002, %v6735, %v6737
      %v7043 = vsel %vm7002, %v6739, %v6741
      %v7044 = vsel %vm7002, %v6741, %v6743
      %v7045 = vsel %vm7002, %v6743, %v6745
      %v7046 = vsel %vm7002, %v6745, %v6747
      %v7047 = vsel %vm7002, %v6747, %v6749
      %v7048 = vsel %vm7002, %v6749, %v6751
      %v7049 = vsel %vm7002, %v6751, %v6753
      %v7050 = vsel %vm7002, %v6753, %v6755
      %v7051 = vsel %vm7002, %v6755, %v6757
      %v7052 = vsel %vm7002, %v6757, %v6759
      %v7053 = vsel %vm7002, %v6761, %v6763
      %v7054 = vsel %vm7002, %v6763, %v6765
      %v7055 = vsel %vm7002, %v6765, %v6767
      %v7056 = vsel %vm7002, %v6767, %v6769
      %v7057 = vsel %vm7002, %v6769, %v6771
      %v7058 = vsel %vm7002, %v6771, %v6773
      %v7059 = vsel %vm7002, %v6773, %v6775
      %v7060 = vsel %vm7002, %v6775, %v6777
      %v7061 = vsel %vm7002, %v6777, %v6779
      %v7062 = vsel %vm7002, %v6779, %v6781
      %v7063 = vsel %vm7002, %v6783, %v6785
      %v7064 = vsel %vm7002, %v6785, %v6787
      %v7065 = vsel %vm7002, %v6787, %v6789
      %v7066 = vsel %vm7002, %v6789, %v6791
      %v7067 = vsel %vm7002, %v6791, %v6793
      %v7068 = vsel %vm7002, %v6793, %v6795
      %v7069 = vsel %vm7002, %v6795, %v6797
      %v7070 = vsel %vm7002, %v6797, %v6799
      %v7071 = vsel %vm7002, %v6799, %v6801
      %v7072 = vsel %vm7002, %v6801, %v6803
      %v7073 = vsel %vm7002, %v6805, %v6807
      %v7074 = vsel %vm7002, %v6807, %v6809
      %v7075 = vsel %vm7002, %v6809, %v6811
      %v7076 = vsel %vm7002, %v6811, %v6813
      %v7077 = vsel %vm7002, %v6813, %v6815
      %v7078 = vsel %vm7002, %v6815, %v6817
      %v7079 = vsel %vm7002, %v6817, %v6819
      %v7080 = vsel %vm7002, %v6819, %v6821
      %v7081 = vsel %vm7002, %v6821, %v6823
      %v7082 = vsel %vm7002, %v6823, %v6825
      %v7083 = vsel %vm7002, %v6827, %v6829
      %v7084 = vsel %vm7002, %v6829, %v6831
      %v7085 = vsel %vm7002, %v6831, %v6833
      %v7086 = vsel %vm7002, %v6833, %v6835
      %v7087 = vsel %vm7002, %v6835, %v6837
      %v7088 = vsel %vm7002, %v6837, %v6839
      %v7089 = vsel %vm7002, %v6839, %v6841
      %v7090 = vsel %vm7002, %v6841, %v6843
      %v7091 = vsel %vm7002, %v6843, %v6845
      %v7092 = vsel %vm7002, %v6845, %v6847
      %v7093 = vsel %vm7002, %v6849, %v6851
      %v7094 = vsel %vm7002, %v6851, %v6853
      %v7095 = vsel %vm7002, %v6853, %v6855
      %v7096 = vsel %vm7002, %v6855, %v6857
      %v7097 = vsel %vm7002, %v6857, %v6859
      %v7098 = vsel %vm7002, %v6859, %v6861
      %v7099 = vsel %vm7002, %v6861, %v6863
      %v7100 = vsel %vm7002, %v6863, %v6865
      %v7101 = vsel %vm7002, %v6865, %v6867
      %v7102 = vsel %vm7002, %v6867, %v6869
      %v7103 = vsel %vm7002, %v6871, %v6873
      %v7104 = vsel %vm7002, %v6873, %v6875
      %v7105 = vsel %vm7002, %v6875, %v6877
      %v7106 = vsel %vm7002, %v6877, %v6879
      %v7107 = vsel %vm7002, %v6879, %v6881
      %v7108 = vsel %vm7002, %v6881, %v6883
      %v7109 = vsel %vm7002, %v6883, %v6885
      %v7110 = vsel %vm7002, %v6885, %v6887
      %v7111 = vsel %vm7002, %v6887, %v6889
      %v7112 = vsel %vm7002, %v6889, %v6891
      %v7113 = vsel %vm7002, %v6893, %v6895
      %v7114 = vsel %vm7002, %v6895, %v6897
      %v7115 = vsel %vm7002, %v6897, %v6899
      %v7116 = vsel %vm7002, %v6899, %v6901
      %v7117 = vsel %vm7002, %v6901, %v6903
      %v7118 = vsel %vm7002, %v6903, %v6905
      %v7119 = vsel %vm7002, %v6905, %v6907
      %v7120 = vsel %vm7002, %v6907, %v6909
      %v7121 = vsel %vm7002, %v6909, %v6911
      %v7122 = vsel %vm7002, %v6911, %v6913
      %v7123 = vsel %vm7002, %v6915, %v6917
      %v7124 = vsel %vm7002, %v6917, %v6919
      %v7125 = vsel %vm7002, %v6919, %v6921
      %v7126 = vsel %vm7002, %v6921, %v6923
      %v7127 = vsel %vm7002, %v6923, %v6925
      %v7128 = vsel %vm7002, %v6925, %v6927
      %v7129 = vsel %vm7002, %v6927, %v6929
      %v7130 = vsel %vm7002, %v6929, %v6931
      %v7131 = vsel %vm7002, %v6931, %v6933
      %v7132 = vsel %vm7002, %v6933, %v6935
      %v7133 = vsel %vm7002, %v6937, %v6939
      %v7134 = vsel %vm7002, %v6939, %v6941
      %v7135 = vsel %vm7002, %v6941, %v6943
      %v7136 = vsel %vm7002, %v6943, %v6945
      %v7137 = vsel %vm7002, %v6945, %v6947
      %v7138 = vsel %vm7002, %v6947, %v6949
      %v7139 = vsel %vm7002, %v6949, %v6951
      %v7140 = vsel %vm7002, %v6951, %v6953
      %v7141 = vsel %vm7002, %v6953, %v6955
      %v7142 = vsel %vm7002, %v6955, %v6957
      %v7143 = vsel %vm7002, %v6959, %v6961
      %v7144 = vsel %vm7002, %v6961, %v6963
      %v7145 = vsel %vm7002, %v6963, %v6965
      %v7146 = vsel %vm7002, %v6965, %v6967
      %v7147 = vsel %vm7002, %v6967, %v6969
      %v7148 = vsel %vm7002, %v6969, %v6971
      %v7149 = vsel %vm7002, %v6971, %v6973
      %v7150 = vsel %vm7002, %v6973, %v6975
      %v7151 = vsel %vm7002, %v6975, %v6977
      %v7152 = vsel %vm7002, %v6977, %v6979
      %v7153 = vsel %vm7002, %v6981, %v6983
      %v7154 = vsel %vm7002, %v6983, %v6985
      %v7155 = vsel %vm7002, %v6985, %v6987
      %v7156 = vsel %vm7002, %v6987, %v6989
      %v7157 = vsel %vm7002, %v6989, %v6991
      %v7158 = vsel %vm7002, %v6991, %v6993
      %v7159 = vsel %vm7002, %v6993, %v6995
      %v7160 = vsel %vm7002, %v6995, %v6997
      %v7161 = vsel %vm7002, %v6997, %v6999
      %v7162 = vsel %vm7002, %v6999, %v7001
      %7323 = vrot.lane.b32.xlu0 %v5582, 100
      %v7324 = vpop.permute.xlu0 %7323
      %7325 = vrot.lane.b32.xlu0 %v5590, 100
      %v7326 = vpop.permute.xlu0 %7325
      %7327 = vrot.lane.b32.xlu0 %v5596, 100
      %v7328 = vpop.permute.xlu0 %7327
      %7329 = vrot.lane.b32.xlu0 %v5734, 100
      %v7330 = vpop.permute.xlu0 %7329
      %7331 = vrot.lane.b32.xlu0 %v5715, 100
      %v7332 = vpop.permute.xlu0 %7331
      %7333 = vrot.lane.b32.xlu0 %v5716, 100
      %v7334 = vpop.permute.xlu0 %7333
      %7335 = vrot.lane.b32.xlu0 %v5717, 100
      %v7336 = vpop.permute.xlu0 %7335
      %7337 = vrot.lane.b32.xlu0 %v5718, 100
      %v7338 = vpop.permute.xlu0 %7337
      %7339 = vrot.lane.b32.xlu0 %v5735, 100
      %v7340 = vpop.permute.xlu0 %7339
      %7341 = vrot.lane.b32.xlu0 %v5731, 100
      %v7342 = vpop.permute.xlu0 %7341
      %7343 = vrot.lane.b32.xlu0 %v5764, 100
      %v7344 = vpop.permute.xlu0 %7343
      %7345 = vrot.lane.b32.xlu0 %v5765, 100
      %v7346 = vpop.permute.xlu0 %7345
      %7347 = vrot.lane.b32.xlu0 %v5766, 100
      %v7348 = vpop.permute.xlu0 %7347
      %7349 = vrot.lane.b32.xlu0 %v5767, 100
      %v7350 = vpop.permute.xlu0 %7349
      %7351 = vrot.lane.b32.xlu0 %v5768, 100
      %v7352 = vpop.permute.xlu0 %7351
      %7353 = vrot.lane.b32.xlu0 %v5769, 100
      %v7354 = vpop.permute.xlu0 %7353
      %7355 = vrot.lane.b32.xlu0 %v5770, 100
      %v7356 = vpop.permute.xlu0 %7355
      %7357 = vrot.lane.b32.xlu0 %v5771, 100
      %v7358 = vpop.permute.xlu0 %7357
      %7359 = vrot.lane.b32.xlu0 %v6348, 100
      %v7360 = vpop.permute.xlu0 %7359
      %7361 = vrot.lane.b32.xlu0 %v6347, 100
      %v7362 = vpop.permute.xlu0 %7361
      %7363 = vrot.lane.b32.xlu0 %v5804, 100
      %v7364 = vpop.permute.xlu0 %7363
      %7365 = vrot.lane.b32.xlu0 %v5805, 100
      %v7366 = vpop.permute.xlu0 %7365
      %7367 = vrot.lane.b32.xlu0 %v5806, 100
      %v7368 = vpop.permute.xlu0 %7367
      %7369 = vrot.lane.b32.xlu0 %v5807, 100
      %v7370 = vpop.permute.xlu0 %7369
      %7371 = vrot.lane.b32.xlu0 %v5808, 100
      %v7372 = vpop.permute.xlu0 %7371
      %7373 = vrot.lane.b32.xlu0 %v5809, 100
      %v7374 = vpop.permute.xlu0 %7373
      %7375 = vrot.lane.b32.xlu0 %v5810, 100
      %v7376 = vpop.permute.xlu0 %7375
      %7377 = vrot.lane.b32.xlu0 %v5811, 100
      %v7378 = vpop.permute.xlu0 %7377
      %7379 = vrot.lane.b32.xlu0 %v6351, 100
      %v7380 = vpop.permute.xlu0 %7379
      %7381 = vrot.lane.b32.xlu0 %v6350, 100
      %v7382 = vpop.permute.xlu0 %7381
      %7383 = vrot.lane.b32.xlu0 %v6520, 100
      %v7384 = vpop.permute.xlu0 %7383
      %7385 = vrot.lane.b32.xlu0 %v6521, 100
      %v7386 = vpop.permute.xlu0 %7385
      %7387 = vrot.lane.b32.xlu0 %v6522, 100
      %v7388 = vpop.permute.xlu0 %7387
      %7389 = vrot.lane.b32.xlu0 %v6523, 100
      %v7390 = vpop.permute.xlu0 %7389
      %7391 = vrot.lane.b32.xlu0 %v6524, 100
      %v7392 = vpop.permute.xlu0 %7391
      %7393 = vrot.lane.b32.xlu0 %v6525, 100
      %v7394 = vpop.permute.xlu0 %7393
      %7395 = vrot.lane.b32.xlu0 %v6526, 100
      %v7396 = vpop.permute.xlu0 %7395
      %7397 = vrot.lane.b32.xlu0 %v6527, 100
      %v7398 = vpop.permute.xlu0 %7397
      %7399 = vrot.lane.b32.xlu0 %v6528, 100
      %v7400 = vpop.permute.xlu0 %7399
      %7401 = vrot.lane.b32.xlu0 %v6518, 100
      %v7402 = vpop.permute.xlu0 %7401
      %7403 = vrot.lane.b32.xlu0 %v6550, 100
      %v7404 = vpop.permute.xlu0 %7403
      %7405 = vrot.lane.b32.xlu0 %v6551, 100
      %v7406 = vpop.permute.xlu0 %7405
      %7407 = vrot.lane.b32.xlu0 %v6552, 100
      %v7408 = vpop.permute.xlu0 %7407
      %7409 = vrot.lane.b32.xlu0 %v6553, 100
      %v7410 = vpop.permute.xlu0 %7409
      %7411 = vrot.lane.b32.xlu0 %v6554, 100
      %v7412 = vpop.permute.xlu0 %7411
      %7413 = vrot.lane.b32.xlu0 %v6555, 100
      %v7414 = vpop.permute.xlu0 %7413
      %7415 = vrot.lane.b32.xlu0 %v6556, 100
      %v7416 = vpop.permute.xlu0 %7415
      %7417 = vrot.lane.b32.xlu0 %v6557, 100
      %v7418 = vpop.permute.xlu0 %7417
      %7419 = vrot.lane.b32.xlu0 %v6558, 100
      %v7420 = vpop.permute.xlu0 %7419
      %7421 = vrot.lane.b32.xlu0 %v6548, 100
      %v7422 = vpop.permute.xlu0 %7421
      %7423 = vrot.lane.b32.xlu0 %v6382, 100
      %v7424 = vpop.permute.xlu0 %7423
      %7425 = vrot.lane.b32.xlu0 %v6383, 100
      %v7426 = vpop.permute.xlu0 %7425
      %7427 = vrot.lane.b32.xlu0 %v6384, 100
      %v7428 = vpop.permute.xlu0 %7427
      %7429 = vrot.lane.b32.xlu0 %v6385, 100
      %v7430 = vpop.permute.xlu0 %7429
      %7431 = vrot.lane.b32.xlu0 %v6386, 100
      %v7432 = vpop.permute.xlu0 %7431
      %7433 = vrot.lane.b32.xlu0 %v6387, 100
      %v7434 = vpop.permute.xlu0 %7433
      %7435 = vrot.lane.b32.xlu0 %v6388, 100
      %v7436 = vpop.permute.xlu0 %7435
      %7437 = vrot.lane.b32.xlu0 %v6389, 100
      %v7438 = vpop.permute.xlu0 %7437
      %7439 = vrot.lane.b32.xlu0 %v6390, 100
      %v7440 = vpop.permute.xlu0 %7439
      %7441 = vrot.lane.b32.xlu0 %v6379, 100
      %v7442 = vpop.permute.xlu0 %7441
      %7443 = vrot.lane.b32.xlu0 %v6415, 100
      %v7444 = vpop.permute.xlu0 %7443
      %7445 = vrot.lane.b32.xlu0 %v6416, 100
      %v7446 = vpop.permute.xlu0 %7445
      %7447 = vrot.lane.b32.xlu0 %v6417, 100
      %v7448 = vpop.permute.xlu0 %7447
      %7449 = vrot.lane.b32.xlu0 %v6418, 100
      %v7450 = vpop.permute.xlu0 %7449
      %7451 = vrot.lane.b32.xlu0 %v6419, 100
      %v7452 = vpop.permute.xlu0 %7451
      %7453 = vrot.lane.b32.xlu0 %v6420, 100
      %v7454 = vpop.permute.xlu0 %7453
      %7455 = vrot.lane.b32.xlu0 %v6421, 100
      %v7456 = vpop.permute.xlu0 %7455
      %7457 = vrot.lane.b32.xlu0 %v6422, 100
      %v7458 = vpop.permute.xlu0 %7457
      %7459 = vrot.lane.b32.xlu0 %v6423, 100
      %v7460 = vpop.permute.xlu0 %7459
      %7461 = vrot.lane.b32.xlu0 %v6562, 100
      %v7462 = vpop.permute.xlu0 %7461
      %7463 = vrot.lane.b32.xlu0 %v6003, 100
      %v7464 = vpop.permute.xlu0 %7463
      %7465 = vrot.lane.b32.xlu0 %v6004, 100
      %v7466 = vpop.permute.xlu0 %7465
      %7467 = vrot.lane.b32.xlu0 %v6005, 100
      %v7468 = vpop.permute.xlu0 %7467
      %7469 = vrot.lane.b32.xlu0 %v6006, 100
      %v7470 = vpop.permute.xlu0 %7469
      %7471 = vrot.lane.b32.xlu0 %v6007, 100
      %v7472 = vpop.permute.xlu0 %7471
      %7473 = vrot.lane.b32.xlu0 %v6008, 100
      %v7474 = vpop.permute.xlu0 %7473
      %7475 = vrot.lane.b32.xlu0 %v6009, 100
      %v7476 = vpop.permute.xlu0 %7475
      %7477 = vrot.lane.b32.xlu0 %v6010, 100
      %v7478 = vpop.permute.xlu0 %7477
      %7479 = vrot.lane.b32.xlu0 %v6426, 100
      %v7480 = vpop.permute.xlu0 %7479
      %7481 = vrot.lane.b32.xlu0 %v6565, 100
      %v7482 = vpop.permute.xlu0 %7481
      %7483 = vrot.lane.b32.xlu0 %v6043, 100
      %v7484 = vpop.permute.xlu0 %7483
      %7485 = vrot.lane.b32.xlu0 %v6044, 100
      %v7486 = vpop.permute.xlu0 %7485
      %7487 = vrot.lane.b32.xlu0 %v6045, 100
      %v7488 = vpop.permute.xlu0 %7487
      %7489 = vrot.lane.b32.xlu0 %v6046, 100
      %v7490 = vpop.permute.xlu0 %7489
      %7491 = vrot.lane.b32.xlu0 %v6047, 100
      %v7492 = vpop.permute.xlu0 %7491
      %7493 = vrot.lane.b32.xlu0 %v6048, 100
      %v7494 = vpop.permute.xlu0 %7493
      %7495 = vrot.lane.b32.xlu0 %v6049, 100
      %v7496 = vpop.permute.xlu0 %7495
      %7497 = vrot.lane.b32.xlu0 %v6050, 100
      %v7498 = vpop.permute.xlu0 %7497
      %7499 = vrot.lane.b32.xlu0 %v6429, 100
      %v7500 = vpop.permute.xlu0 %7499
      %7501 = vrot.lane.b32.xlu0 %v6568, 100
      %v7502 = vpop.permute.xlu0 %7501
      %7503 = vrot.lane.b32.xlu0 %v6083, 100
      %v7504 = vpop.permute.xlu0 %7503
      %7505 = vrot.lane.b32.xlu0 %v6084, 100
      %v7506 = vpop.permute.xlu0 %7505
      %7507 = vrot.lane.b32.xlu0 %v6085, 100
      %v7508 = vpop.permute.xlu0 %7507
      %7509 = vrot.lane.b32.xlu0 %v6086, 100
      %v7510 = vpop.permute.xlu0 %7509
      %7511 = vrot.lane.b32.xlu0 %v6087, 100
      %v7512 = vpop.permute.xlu0 %7511
      %7513 = vrot.lane.b32.xlu0 %v6088, 100
      %v7514 = vpop.permute.xlu0 %7513
      %7515 = vrot.lane.b32.xlu0 %v6089, 100
      %v7516 = vpop.permute.xlu0 %7515
      %7517 = vrot.lane.b32.xlu0 %v6090, 100
      %v7518 = vpop.permute.xlu0 %7517
      %7519 = vrot.lane.b32.xlu0 %v6432, 100
      %v7520 = vpop.permute.xlu0 %7519
      %7521 = vrot.lane.b32.xlu0 %v6571, 100
      %v7522 = vpop.permute.xlu0 %7521
      %7523 = vrot.lane.b32.xlu0 %v6595, 100
      %v7524 = vpop.permute.xlu0 %7523
      %7525 = vrot.lane.b32.xlu0 %v6596, 100
      %v7526 = vpop.permute.xlu0 %7525
      %7527 = vrot.lane.b32.xlu0 %v6597, 100
      %v7528 = vpop.permute.xlu0 %7527
      %7529 = vrot.lane.b32.xlu0 %v6598, 100
      %v7530 = vpop.permute.xlu0 %7529
      %7531 = vrot.lane.b32.xlu0 %v6599, 100
      %v7532 = vpop.permute.xlu0 %7531
      %7533 = vrot.lane.b32.xlu0 %v6600, 100
      %v7534 = vpop.permute.xlu0 %7533
      %7535 = vrot.lane.b32.xlu0 %v6601, 100
      %v7536 = vpop.permute.xlu0 %7535
      %7537 = vrot.lane.b32.xlu0 %v6602, 100
      %v7538 = vpop.permute.xlu0 %7537
      %7539 = vrot.lane.b32.xlu0 %v6603, 100
      %v7540 = vpop.permute.xlu0 %7539
      %7541 = vrot.lane.b32.xlu0 %v6604, 100
      %v7542 = vpop.permute.xlu0 %7541
      %7543 = vrot.lane.b32.xlu0 %v6628, 100
      %v7544 = vpop.permute.xlu0 %7543
      %7545 = vrot.lane.b32.xlu0 %v6629, 100
      %v7546 = vpop.permute.xlu0 %7545
      %7547 = vrot.lane.b32.xlu0 %v6630, 100
      %v7548 = vpop.permute.xlu0 %7547
      %7549 = vrot.lane.b32.xlu0 %v6631, 100
      %v7550 = vpop.permute.xlu0 %7549
      %7551 = vrot.lane.b32.xlu0 %v6632, 100
      %v7552 = vpop.permute.xlu0 %7551
      %7553 = vrot.lane.b32.xlu0 %v6633, 100
      %v7554 = vpop.permute.xlu0 %7553
      %7555 = vrot.lane.b32.xlu0 %v6634, 100
      %v7556 = vpop.permute.xlu0 %7555
      %7557 = vrot.lane.b32.xlu0 %v6635, 100
      %v7558 = vpop.permute.xlu0 %7557
      %7559 = vrot.lane.b32.xlu0 %v6636, 100
      %v7560 = vpop.permute.xlu0 %7559
      %7561 = vrot.lane.b32.xlu0 %v6637, 100
      %v7562 = vpop.permute.xlu0 %7561
      %7563 = vrot.lane.b32.xlu0 %v6460, 100
      %v7564 = vpop.permute.xlu0 %7563
      %7565 = vrot.lane.b32.xlu0 %v6461, 100
      %v7566 = vpop.permute.xlu0 %7565
      %7567 = vrot.lane.b32.xlu0 %v6462, 100
      %v7568 = vpop.permute.xlu0 %7567
      %7569 = vrot.lane.b32.xlu0 %v6463, 100
      %v7570 = vpop.permute.xlu0 %7569
      %7571 = vrot.lane.b32.xlu0 %v6464, 100
      %v7572 = vpop.permute.xlu0 %7571
      %7573 = vrot.lane.b32.xlu0 %v6465, 100
      %v7574 = vpop.permute.xlu0 %7573
      %7575 = vrot.lane.b32.xlu0 %v6466, 100
      %v7576 = vpop.permute.xlu0 %7575
      %7577 = vrot.lane.b32.xlu0 %v6467, 100
      %v7578 = vpop.permute.xlu0 %7577
      %7579 = vrot.lane.b32.xlu0 %v6468, 100
      %v7580 = vpop.permute.xlu0 %7579
      %7581 = vrot.lane.b32.xlu0 %v6640, 100
      %v7582 = vpop.permute.xlu0 %7581
      %7583 = vrot.lane.b32.xlu0 %v6490, 100
      %v7584 = vpop.permute.xlu0 %7583
      %7585 = vrot.lane.b32.xlu0 %v6491, 100
      %v7586 = vpop.permute.xlu0 %7585
      %7587 = vrot.lane.b32.xlu0 %v6492, 100
      %v7588 = vpop.permute.xlu0 %7587
      %7589 = vrot.lane.b32.xlu0 %v6493, 100
      %v7590 = vpop.permute.xlu0 %7589
      %7591 = vrot.lane.b32.xlu0 %v6494, 100
      %v7592 = vpop.permute.xlu0 %7591
      %7593 = vrot.lane.b32.xlu0 %v6495, 100
      %v7594 = vpop.permute.xlu0 %7593
      %7595 = vrot.lane.b32.xlu0 %v6496, 100
      %v7596 = vpop.permute.xlu0 %7595
      %7597 = vrot.lane.b32.xlu0 %v6497, 100
      %v7598 = vpop.permute.xlu0 %7597
      %7599 = vrot.lane.b32.xlu0 %v6498, 100
      %v7600 = vpop.permute.xlu0 %7599
      %7601 = vrot.lane.b32.xlu0 %v6643, 100
      %v7602 = vpop.permute.xlu0 %7601
      %7603 = vrot.lane.b32.xlu0 %v6284, 100
      %v7604 = vpop.permute.xlu0 %7603
      %7605 = vrot.lane.b32.xlu0 %v6285, 100
      %v7606 = vpop.permute.xlu0 %7605
      %7607 = vrot.lane.b32.xlu0 %v6286, 100
      %v7608 = vpop.permute.xlu0 %7607
      %7609 = vrot.lane.b32.xlu0 %v6287, 100
      %v7610 = vpop.permute.xlu0 %7609
      %7611 = vrot.lane.b32.xlu0 %v6288, 100
      %v7612 = vpop.permute.xlu0 %7611
      %7613 = vrot.lane.b32.xlu0 %v6289, 100
      %v7614 = vpop.permute.xlu0 %7613
      %7615 = vrot.lane.b32.xlu0 %v6290, 100
      %v7616 = vpop.permute.xlu0 %7615
      %7617 = vrot.lane.b32.xlu0 %v6291, 100
      %v7618 = vpop.permute.xlu0 %7617
      %7619 = vrot.lane.b32.xlu0 %v6292, 100
      %v7620 = vpop.permute.xlu0 %7619
      %7621 = vrot.lane.b32.xlu0 %v6646, 100
      %v7622 = vpop.permute.xlu0 %7621
      %7623 = vrot.lane.b32.xlu0 %v6327, 100
      %v7624 = vpop.permute.xlu0 %7623
      %7625 = vrot.lane.b32.xlu0 %v6328, 100
      %v7626 = vpop.permute.xlu0 %7625
      %7627 = vrot.lane.b32.xlu0 %v6329, 100
      %v7628 = vpop.permute.xlu0 %7627
      %7629 = vrot.lane.b32.xlu0 %v6330, 100
      %v7630 = vpop.permute.xlu0 %7629
      %7631 = vrot.lane.b32.xlu0 %v6331, 100
      %v7632 = vpop.permute.xlu0 %7631
      %7633 = vrot.lane.b32.xlu0 %v6332, 100
      %v7634 = vpop.permute.xlu0 %7633
      %7635 = vrot.lane.b32.xlu0 %v6333, 100
      %v7636 = vpop.permute.xlu0 %7635
      %7637 = vrot.lane.b32.xlu0 %v6334, 100
      %v7638 = vpop.permute.xlu0 %7637
      %7639 = vrot.lane.b32.xlu0 %v6335, 100
      %v7640 = vpop.permute.xlu0 %7639
      %7641 = vrot.lane.b32.xlu0 %v6649, 100
      %v7642 = vpop.permute.xlu0 %7641
      %v7643 = vsel %vm5581, %v7324, %v7326
      %v7644 = vsel %vm5581, %v7326, %v7328
      %v7645 = vsel %vm5581, %v7328, %v7330
      %v7646 = vsel %vm5581, %v7330, %v7332
      %v7647 = vsel %vm5581, %v7332, %v7334
      %v7648 = vsel %vm5581, %v7334, %v7336
      %v7649 = vsel %vm5581, %v7336, %v7338
      %v7650 = vsel %vm5581, %v7338, %v7340
      %v7651 = vsel %vm5581, %v7340, %v7342
      %v7652 = vsel %vm5581, %v7344, %v7346
      %v7653 = vsel %vm5581, %v7346, %v7348
      %v7654 = vsel %vm5581, %v7348, %v7350
      %v7655 = vsel %vm5581, %v7350, %v7352
      %v7656 = vsel %vm5581, %v7352, %v7354
      %v7657 = vsel %vm5581, %v7354, %v7356
      %v7658 = vsel %vm5581, %v7356, %v7358
      %v7659 = vsel %vm5581, %v7358, %v7360
      %v7660 = vsel %vm5581, %v7360, %v7362
      %v7661 = vsel %vm5581, %v7364, %v7366
      %v7662 = vsel %vm5581, %v7366, %v7368
      %v7663 = vsel %vm5581, %v7368, %v7370
      %v7664 = vsel %vm5581, %v7370, %v7372
      %v7665 = vsel %vm5581, %v7372, %v7374
      %v7666 = vsel %vm5581, %v7374, %v7376
      %v7667 = vsel %vm5581, %v7376, %v7378
      %v7668 = vsel %vm5581, %v7378, %v7380
      %v7669 = vsel %vm5581, %v7380, %v7382
      %v7670 = vsel %vm5581, %v7384, %v7386
      %v7671 = vsel %vm5581, %v7386, %v7388
      %v7672 = vsel %vm5581, %v7388, %v7390
      %v7673 = vsel %vm5581, %v7390, %v7392
      %v7674 = vsel %vm5581, %v7392, %v7394
      %v7675 = vsel %vm5581, %v7394, %v7396
      %v7676 = vsel %vm5581, %v7396, %v7398
      %v7677 = vsel %vm5581, %v7398, %v7400
      %v7678 = vsel %vm5581, %v7400, %v7402
      %v7679 = vsel %vm5581, %v7404, %v7406
      %v7680 = vsel %vm5581, %v7406, %v7408
      %v7681 = vsel %vm5581, %v7408, %v7410
      %v7682 = vsel %vm5581, %v7410, %v7412
      %v7683 = vsel %vm5581, %v7412, %v7414
      %v7684 = vsel %vm5581, %v7414, %v7416
      %v7685 = vsel %vm5581, %v7416, %v7418
      %v7686 = vsel %vm5581, %v7418, %v7420
      %v7687 = vsel %vm5581, %v7420, %v7422
      %v7688 = vsel %vm5581, %v7424, %v7426
      %v7689 = vsel %vm5581, %v7426, %v7428
      %v7690 = vsel %vm5581, %v7428, %v7430
      %v7691 = vsel %vm5581, %v7430, %v7432
      %v7692 = vsel %vm5581, %v7432, %v7434
      %v7693 = vsel %vm5581, %v7434, %v7436
      %v7694 = vsel %vm5581, %v7436, %v7438
      %v7695 = vsel %vm5581, %v7438, %v7440
      %v7696 = vsel %vm5581, %v7440, %v7442
      %v7697 = vsel %vm5581, %v7444, %v7446
      %v7698 = vsel %vm5581, %v7446, %v7448
      %v7699 = vsel %vm5581, %v7448, %v7450
      %v7700 = vsel %vm5581, %v7450, %v7452
      %v7701 = vsel %vm5581, %v7452, %v7454
      %v7702 = vsel %vm5581, %v7454, %v7456
      %v7703 = vsel %vm5581, %v7456, %v7458
      %v7704 = vsel %vm5581, %v7458, %v7460
      %v7705 = vsel %vm5581, %v7460, %v7462
      %v7706 = vsel %vm5581, %v7464, %v7466
      %v7707 = vsel %vm5581, %v7466, %v7468
      %v7708 = vsel %vm5581, %v7468, %v7470
      %v7709 = vsel %vm5581, %v7470, %v7472
      %v7710 = vsel %vm5581, %v7472, %v7474
      %v7711 = vsel %vm5581, %v7474, %v7476
      %v7712 = vsel %vm5581, %v7476, %v7478
      %v7713 = vsel %vm5581, %v7478, %v7480
      %v7714 = vsel %vm5581, %v7480, %v7482
      %v7715 = vsel %vm5581, %v7484, %v7486
      %v7716 = vsel %vm5581, %v7486, %v7488
      %v7717 = vsel %vm5581, %v7488, %v7490
      %v7718 = vsel %vm5581, %v7490, %v7492
      %v7719 = vsel %vm5581, %v7492, %v7494
      %v7720 = vsel %vm5581, %v7494, %v7496
      %v7721 = vsel %vm5581, %v7496, %v7498
      %v7722 = vsel %vm5581, %v7498, %v7500
      %v7723 = vsel %vm5581, %v7500, %v7502
      %v7724 = vsel %vm5581, %v7504, %v7506
      %v7725 = vsel %vm5581, %v7506, %v7508
      %v7726 = vsel %vm5581, %v7508, %v7510
      %v7727 = vsel %vm5581, %v7510, %v7512
      %v7728 = vsel %vm5581, %v7512, %v7514
      %v7729 = vsel %vm5581, %v7514, %v7516
      %v7730 = vsel %vm5581, %v7516, %v7518
      %v7731 = vsel %vm5581, %v7518, %v7520
      %v7732 = vsel %vm5581, %v7520, %v7522
      %v7733 = vsel %vm5581, %v7524, %v7526
      %v7734 = vsel %vm5581, %v7526, %v7528
      %v7735 = vsel %vm5581, %v7528, %v7530
      %v7736 = vsel %vm5581, %v7530, %v7532
      %v7737 = vsel %vm5581, %v7532, %v7534
      %v7738 = vsel %vm5581, %v7534, %v7536
      %v7739 = vsel %vm5581, %v7536, %v7538
      %v7740 = vsel %vm5581, %v7538, %v7540
      %v7741 = vsel %vm5581, %v7540, %v7542
      %v7742 = vsel %vm5581, %v7544, %v7546
      %v7743 = vsel %vm5581, %v7546, %v7548
      %v7744 = vsel %vm5581, %v7548, %v7550
      %v7745 = vsel %vm5581, %v7550, %v7552
      %v7746 = vsel %vm5581, %v7552, %v7554
      %v7747 = vsel %vm5581, %v7554, %v7556
      %v7748 = vsel %vm5581, %v7556, %v7558
      %v7749 = vsel %vm5581, %v7558, %v7560
      %v7750 = vsel %vm5581, %v7560, %v7562
      %v7751 = vsel %vm5581, %v7564, %v7566
      %v7752 = vsel %vm5581, %v7566, %v7568
      %v7753 = vsel %vm5581, %v7568, %v7570
      %v7754 = vsel %vm5581, %v7570, %v7572
      %v7755 = vsel %vm5581, %v7572, %v7574
      %v7756 = vsel %vm5581, %v7574, %v7576
      %v7757 = vsel %vm5581, %v7576, %v7578
      %v7758 = vsel %vm5581, %v7578, %v7580
      %v7759 = vsel %vm5581, %v7580, %v7582
      %v7760 = vsel %vm5581, %v7584, %v7586
      %v7761 = vsel %vm5581, %v7586, %v7588
      %v7762 = vsel %vm5581, %v7588, %v7590
      %v7763 = vsel %vm5581, %v7590, %v7592
      %v7764 = vsel %vm5581, %v7592, %v7594
      %v7765 = vsel %vm5581, %v7594, %v7596
      %v7766 = vsel %vm5581, %v7596, %v7598
      %v7767 = vsel %vm5581, %v7598, %v7600
      %v7768 = vsel %vm5581, %v7600, %v7602
      %v7769 = vsel %vm5581, %v7604, %v7606
      %v7770 = vsel %vm5581, %v7606, %v7608
      %v7771 = vsel %vm5581, %v7608, %v7610
      %v7772 = vsel %vm5581, %v7610, %v7612
      %v7773 = vsel %vm5581, %v7612, %v7614
      %v7774 = vsel %vm5581, %v7614, %v7616
      %v7775 = vsel %vm5581, %v7616, %v7618
      %v7776 = vsel %vm5581, %v7618, %v7620
      %v7777 = vsel %vm5581, %v7620, %v7622
      %v7778 = vsel %vm5581, %v7624, %v7626
      %v7779 = vsel %vm5581, %v7626, %v7628
      %v7780 = vsel %vm5581, %v7628, %v7630
      %v7781 = vsel %vm5581, %v7630, %v7632
      %v7782 = vsel %vm5581, %v7632, %v7634
      %v7783 = vsel %vm5581, %v7634, %v7636
      %v7784 = vsel %vm5581, %v7636, %v7638
      %v7785 = vsel %vm5581, %v7638, %v7640
      %v7786 = vsel %vm5581, %v7640, %v7642
      %7947 = vrot.lane.b32.xlu0 %v5582, 22
      %v7948 = vpop.permute.xlu0 %7947
      %7949 = vrot.lane.b32.xlu0 %v5590, 22
      %v7950 = vpop.permute.xlu0 %7949
      %7951 = vrot.lane.b32.xlu0 %v5596, 22
      %v7952 = vpop.permute.xlu0 %7951
      %7953 = vrot.lane.b32.xlu0 %v5734, 22
      %v7954 = vpop.permute.xlu0 %7953
      %7955 = vrot.lane.b32.xlu0 %v5715, 22
      %v7956 = vpop.permute.xlu0 %7955
      %7957 = vrot.lane.b32.xlu0 %v5716, 22
      %v7958 = vpop.permute.xlu0 %7957
      %7959 = vrot.lane.b32.xlu0 %v5717, 22
      %v7960 = vpop.permute.xlu0 %7959
      %7961 = vrot.lane.b32.xlu0 %v5718, 22
      %v7962 = vpop.permute.xlu0 %7961
      %7963 = vrot.lane.b32.xlu0 %v5735, 22
      %v7964 = vpop.permute.xlu0 %7963
      %7965 = vrot.lane.b32.xlu0 %v5731, 22
      %v7966 = vpop.permute.xlu0 %7965
      %7967 = vrot.lane.b32.xlu0 %v5736, 22
      %v7968 = vpop.permute.xlu0 %7967
      %vm7969 = vcmask 179200
      %v7970 = vsel %vm7969, %v7948, %v7950
      %v7971 = vsel %vm7969, %v7950, %v7952
      %v7972 = vsel %vm7969, %v7952, %v7954
      %v7973 = vsel %vm7969, %v7954, %v7956
      %v7974 = vsel %vm7969, %v7956, %v7958
      %v7975 = vsel %vm7969, %v7958, %v7960
      %v7976 = vsel %vm7969, %v7960, %v7962
      %v7977 = vsel %vm7969, %v7962, %v7964
      %v7978 = vsel %vm7969, %v7964, %v7966
      %v7979 = vsel %vm7969, %v7966, %v7968
      %7991 = vset.pattern.permute.xlu0 0
      %7992 = vperm.xlu0 %7991, %v4634
      %v7993 = vpop.permute.xlu0 %7992
      %7997 = vst [vmem:[#allocation1] ss:$2 sm:$0xff] %v4632
      %s7998 = scalar_lea.vmem [#allocation1], 16
      %7999 = vst [vmem:[%s7998] ss:$2 sm:$0xff] %v4633
      %v8000 = vld.sshfl [vmem:[#allocation1] sm:$0xff pattern:$0x75316420]
      %v8001 = vld.sshfl [vmem:[#allocation1 + $0x8] sm:$0xff pattern:$0x75316420]
      %v8002 = vld.sshfl [vmem:[#allocation1 + $0x10] sm:$0xff pattern:$0x75316420]
      %v8003 = vld.sshfl [vmem:[#allocation1 + $0x18] sm:$0xff pattern:$0x75316420]
      %vm8007 = vcmask 64512
      %v8008 = vsel %vm8007, %v8003, 0
      %8010 = vmatpush.msra.mxu0 %v6326
      %8011 = vmatpush.msra.mxu0 %v6283
      %8012 = vmatpush.msra.mxu0 %v6241
      %8013 = vmatpush.msra.mxu0 %v6201
      %8014 = vmatpush.msra.mxu0 %v6161
      %8015 = vmatpush.msra.mxu0 %v6122
      %8016 = vmatpush.msra.mxu0 %v6082
      %8017 = vmatpush.msra.mxu0 %v6042
      %8018 = vmatpush.msra.mxu0 %v6002
      %8019 = vmatpush.msra.mxu0 %v5962
      %8020 = vmatpush.msra.mxu0 %v5922
      %8021 = vmatpush.msra.mxu0 %v5882
      %8022 = vmatpush.msra.mxu0 %v5843
      %8023 = vmatpush.msra.mxu0 %v5803
      %8024 = vmatpush.msra.mxu0 %v5763
      %8025 = vmatpush.msra.mxu0 %v5576
      %8026 = vmatmul.f32.gmra.mxu0 %v8000
      %v8027 = vpop.f32.mrf.mxu0
      %v8028 = vadd.f32 %v7993, %v8027
      %8029 = vdwg.mxu0
      %8030 = vmatpush.msra.mxu0 %v7153
      %8031 = vmatpush.msra.mxu0 %v7143
      %8032 = vmatpush.msra.mxu0 %v7133
      %8033 = vmatpush.msra.mxu0 %v7123
      %8034 = vmatpush.msra.mxu0 %v7113
      %8035 = vmatpush.msra.mxu0 %v7103
      %8036 = vmatpush.msra.mxu0 %v7093
      %8037 = vmatpush.msra.mxu0 %v7083
      %8038 = vmatpush.msra.mxu0 %v7073
      %8039 = vmatpush.msra.mxu0 %v7063
      %8040 = vmatpush.msra.mxu0 %v7053
      %8041 = vmatpush.msra.mxu0 %v7043
      %8042 = vmatpush.msra.mxu0 %v7033
      %8043 = vmatpush.msra.mxu0 %v7023
      %8044 = vmatpush.msra.mxu0 %v7013
      %8045 = vmatpush.msra.mxu0 %v7003
      %8046 = vmatmul.f32.gmra.mxu0 %v8001
      %v8047 = vpop.f32.mrf.mxu0
      %v8048 = vadd.f32 %v8028, %v8047
      %8049 = vdwg.mxu0
      %8050 = vmatpush.msra.mxu0 %v7778
      %8051 = vmatpush.msra.mxu0 %v7769
      %8052 = vmatpush.msra.mxu0 %v7760
      %8053 = vmatpush.msra.mxu0 %v7751
      %8054 = vmatpush.msra.mxu0 %v7742
      %8055 = vmatpush.msra.mxu0 %v7733
      %8056 = vmatpush.msra.mxu0 %v7724
      %8057 = vmatpush.msra.mxu0 %v7715
      %8058 = vmatpush.msra.mxu0 %v7706
      %8059 = vmatpush.msra.mxu0 %v7697
      %8060 = vmatpush.msra.mxu0 %v7688
      %8061 = vmatpush.msra.mxu0 %v7679
      %8062 = vmatpush.msra.mxu0 %v7670
      %8063 = vmatpush.msra.mxu0 %v7661
      %8064 = vmatpush.msra.mxu0 %v7652
      %8065 = vmatpush.msra.mxu0 %v7643
      %8066 = vmatmul.f32.gmra.mxu0 %v8002
      %v8067 = vpop.f32.mrf.mxu0
      %v8068 = vadd.f32 %v8048, %v8067
      %8069 = vdwg.mxu0
      %8070 = vmatpush.msra.mxu0 0.0
      %8071 = vmatpush.msra.mxu0 0.0
      %8072 = vmatpush.msra.mxu0 0.0
      %8073 = vmatpush.msra.mxu0 0.0
      %8074 = vmatpush.msra.mxu0 0.0
      %8075 = vmatpush.msra.mxu0 0.0
      %8076 = vmatpush.msra.mxu0 0.0
      %8077 = vmatpush.msra.mxu0 0.0
      %8078 = vmatpush.msra.mxu0 0.0
      %8079 = vmatpush.msra.mxu0 0.0
      %8080 = vmatpush.msra.mxu0 0.0
      %8081 = vmatpush.msra.mxu0 0.0
      %8082 = vmatpush.msra.mxu0 0.0
      %8083 = vmatpush.msra.mxu0 0.0
      %8084 = vmatpush.msra.mxu0 0.0
      %8085 = vmatpush.msra.mxu0 %v7970
      %8086 = vmatmul.f32.gmra.mxu0 %v8008
      %v8087 = vpop.f32.mrf.mxu0
      %v8088 = vadd.f32 %v8068, %v8087
      %8089 = vdwg.mxu0
      %8090 = vmatpush.msra.mxu0 %v6327
      %8091 = vmatpush.msra.mxu0 %v6284
      %8092 = vmatpush.msra.mxu0 %v6242
      %8093 = vmatpush.msra.mxu0 %v6202
      %8094 = vmatpush.msra.mxu0 %v6162
      %8095 = vmatpush.msra.mxu0 %v6123
      %8096 = vmatpush.msra.mxu0 %v6083
      %8097 = vmatpush.msra.mxu0 %v6043
      %8098 = vmatpush.msra.mxu0 %v6003
      %8099 = vmatpush.msra.mxu0 %v5963
      %8100 = vmatpush.msra.mxu0 %v5923
      %8101 = vmatpush.msra.mxu0 %v5883
      %8102 = vmatpush.msra.mxu0 %v5844
      %8103 = vmatpush.msra.mxu0 %v5804
      %8104 = vmatpush.msra.mxu0 %v5764
      %8105 = vmatpush.msra.mxu0 %v5582
      %8106 = vmatmul.f32.gmra.mxu0 %v8000
      %v8107 = vpop.f32.mrf.mxu0
      %v8108 = vadd.f32 %v7993, %v8107
      %8109 = vdwg.mxu0
      %8110 = vmatpush.msra.mxu0 %v7154
      %8111 = vmatpush.msra.mxu0 %v7144
      %8112 = vmatpush.msra.mxu0 %v7134
      %8113 = vmatpush.msra.mxu0 %v7124
      %8114 = vmatpush.msra.mxu0 %v7114
      %8115 = vmatpush.msra.mxu0 %v7104
      %8116 = vmatpush.msra.mxu0 %v7094
      %8117 = vmatpush.msra.mxu0 %v7084
      %8118 = vmatpush.msra.mxu0 %v7074
      %8119 = vmatpush.msra.mxu0 %v7064
      %8120 = vmatpush.msra.mxu0 %v7054
      %8121 = vmatpush.msra.mxu0 %v7044
      %8122 = vmatpush.msra.mxu0 %v7034
      %8123 = vmatpush.msra.mxu0 %v7024
      %8124 = vmatpush.msra.mxu0 %v7014
      %8125 = vmatpush.msra.mxu0 %v7004
      %8126 = vmatmul.f32.gmra.mxu0 %v8001
      %v8127 = vpop.f32.mrf.mxu0
      %v8128 = vadd.f32 %v8108, %v8127
      %8129 = vdwg.mxu0
      %8130 = vmatpush.msra.mxu0 %v7779
      %8131 = vmatpush.msra.mxu0 %v7770
      %8132 = vmatpush.msra.mxu0 %v7761
      %8133 = vmatpush.msra.mxu0 %v7752
      %8134 = vmatpush.msra.mxu0 %v7743
      %8135 = vmatpush.msra.mxu0 %v7734
      %8136 = vmatpush.msra.mxu0 %v7725
      %8137 = vmatpush.msra.mxu0 %v7716
      %8138 = vmatpush.msra.mxu0 %v7707
      %8139 = vmatpush.msra.mxu0 %v7698
      %8140 = vmatpush.msra.mxu0 %v7689
      %8141 = vmatpush.msra.mxu0 %v7680
      %8142 = vmatpush.msra.mxu0 %v7671
      %8143 = vmatpush.msra.mxu0 %v7662
      %8144 = vmatpush.msra.mxu0 %v7653
      %8145 = vmatpush.msra.mxu0 %v7644
      %8146 = vmatmul.f32.gmra.mxu0 %v8002
      %v8147 = vpop.f32.mrf.mxu0
      %v8148 = vadd.f32 %v8128, %v8147
      %8149 = vdwg.mxu0
      %8150 = vmatpush.msra.mxu0 0.0
      %8151 = vmatpush.msra.mxu0 0.0
      %8152 = vmatpush.msra.mxu0 0.0
      %8153 = vmatpush.msra.mxu0 0.0
      %8154 = vmatpush.msra.mxu0 0.0
      %8155 = vmatpush.msra.mxu0 0.0
      %8156 = vmatpush.msra.mxu0 0.0
      %8157 = vmatpush.msra.mxu0 0.0
      %8158 = vmatpush.msra.mxu0 0.0
      %8159 = vmatpush.msra.mxu0 0.0
      %8160 = vmatpush.msra.mxu0 0.0
      %8161 = vmatpush.msra.mxu0 0.0
      %8162 = vmatpush.msra.mxu0 0.0
      %8163 = vmatpush.msra.mxu0 0.0
      %8164 = vmatpush.msra.mxu0 0.0
      %8165 = vmatpush.msra.mxu0 %v7971
      %8166 = vmatmul.f32.gmra.mxu0 %v8008
      %v8167 = vpop.f32.mrf.mxu0
      %v8168 = vadd.f32 %v8148, %v8167
      %8169 = vdwg.mxu0
      %8170 = vmatpush.msra.mxu0 %v6328
      %8171 = vmatpush.msra.mxu0 %v6285
      %8172 = vmatpush.msra.mxu0 %v6243
      %8173 = vmatpush.msra.mxu0 %v6203
      %8174 = vmatpush.msra.mxu0 %v6163
      %8175 = vmatpush.msra.mxu0 %v6124
      %8176 = vmatpush.msra.mxu0 %v6084
      %8177 = vmatpush.msra.mxu0 %v6044
      %8178 = vmatpush.msra.mxu0 %v6004
      %8179 = vmatpush.msra.mxu0 %v5964
      %8180 = vmatpush.msra.mxu0 %v5924
      %8181 = vmatpush.msra.mxu0 %v5884
      %8182 = vmatpush.msra.mxu0 %v5845
      %8183 = vmatpush.msra.mxu0 %v5805
      %8184 = vmatpush.msra.mxu0 %v5765
      %8185 = vmatpush.msra.mxu0 %v5590
      %8186 = vmatmul.f32.gmra.mxu0 %v8000
      %v8187 = vpop.f32.mrf.mxu0
      %v8188 = vadd.f32 %v7993, %v8187
      %8189 = vdwg.mxu0
      %8190 = vmatpush.msra.mxu0 %v7155
      %8191 = vmatpush.msra.mxu0 %v7145
      %8192 = vmatpush.msra.mxu0 %v7135
      %8193 = vmatpush.msra.mxu0 %v7125
      %8194 = vmatpush.msra.mxu0 %v7115
      %8195 = vmatpush.msra.mxu0 %v7105
      %8196 = vmatpush.msra.mxu0 %v7095
      %8197 = vmatpush.msra.mxu0 %v7085
      %8198 = vmatpush.msra.mxu0 %v7075
      %8199 = vmatpush.msra.mxu0 %v7065
      %8200 = vmatpush.msra.mxu0 %v7055
      %8201 = vmatpush.msra.mxu0 %v7045
      %8202 = vmatpush.msra.mxu0 %v7035
      %8203 = vmatpush.msra.mxu0 %v7025
      %8204 = vmatpush.msra.mxu0 %v7015
      %8205 = vmatpush.msra.mxu0 %v7005
      %8206 = vmatmul.f32.gmra.mxu0 %v8001
      %v8207 = vpop.f32.mrf.mxu0
      %v8208 = vadd.f32 %v8188, %v8207
      %8209 = vdwg.mxu0
      %8210 = vmatpush.msra.mxu0 %v7780
      %8211 = vmatpush.msra.mxu0 %v7771
      %8212 = vmatpush.msra.mxu0 %v7762
      %8213 = vmatpush.msra.mxu0 %v7753
      %8214 = vmatpush.msra.mxu0 %v7744
      %8215 = vmatpush.msra.mxu0 %v7735
      %8216 = vmatpush.msra.mxu0 %v7726
      %8217 = vmatpush.msra.mxu0 %v7717
      %8218 = vmatpush.msra.mxu0 %v7708
      %8219 = vmatpush.msra.mxu0 %v7699
      %8220 = vmatpush.msra.mxu0 %v7690
      %8221 = vmatpush.msra.mxu0 %v7681
      %8222 = vmatpush.msra.mxu0 %v7672
      %8223 = vmatpush.msra.mxu0 %v7663
      %8224 = vmatpush.msra.mxu0 %v7654
      %8225 = vmatpush.msra.mxu0 %v7645
      %8226 = vmatmul.f32.gmra.mxu0 %v8002
      %v8227 = vpop.f32.mrf.mxu0
      %v8228 = vadd.f32 %v8208, %v8227
      %8229 = vdwg.mxu0
      %8230 = vmatpush.msra.mxu0 0.0
      %8231 = vmatpush.msra.mxu0 0.0
      %8232 = vmatpush.msra.mxu0 0.0
      %8233 = vmatpush.msra.mxu0 0.0
      %8234 = vmatpush.msra.mxu0 0.0
      %8235 = vmatpush.msra.mxu0 0.0
      %8236 = vmatpush.msra.mxu0 0.0
      %8237 = vmatpush.msra.mxu0 0.0
      %8238 = vmatpush.msra.mxu0 0.0
      %8239 = vmatpush.msra.mxu0 0.0
      %8240 = vmatpush.msra.mxu0 0.0
      %8241 = vmatpush.msra.mxu0 0.0
      %8242 = vmatpush.msra.mxu0 0.0
      %8243 = vmatpush.msra.mxu0 0.0
      %8244 = vmatpush.msra.mxu0 0.0
      %8245 = vmatpush.msra.mxu0 %v7972
      %8246 = vmatmul.f32.gmra.mxu0 %v8008
      %v8247 = vpop.f32.mrf.mxu0
      %v8248 = vadd.f32 %v8228, %v8247
      %8249 = vdwg.mxu0
      %8250 = vmatpush.msra.mxu0 %v6329
      %8251 = vmatpush.msra.mxu0 %v6286
      %8252 = vmatpush.msra.mxu0 %v6244
      %8253 = vmatpush.msra.mxu0 %v6204
      %8254 = vmatpush.msra.mxu0 %v6164
      %8255 = vmatpush.msra.mxu0 %v6125
      %8256 = vmatpush.msra.mxu0 %v6085
      %8257 = vmatpush.msra.mxu0 %v6045
      %8258 = vmatpush.msra.mxu0 %v6005
      %8259 = vmatpush.msra.mxu0 %v5965
      %8260 = vmatpush.msra.mxu0 %v5925
      %8261 = vmatpush.msra.mxu0 %v5885
      %8262 = vmatpush.msra.mxu0 %v5846
      %8263 = vmatpush.msra.mxu0 %v5806
      %8264 = vmatpush.msra.mxu0 %v5766
      %8265 = vmatpush.msra.mxu0 %v5596
      %8266 = vmatmul.f32.gmra.mxu0 %v8000
      %v8267 = vpop.f32.mrf.mxu0
      %v8268 = vadd.f32 %v7993, %v8267
      %8269 = vdwg.mxu0
      %8270 = vmatpush.msra.mxu0 %v7156
      %8271 = vmatpush.msra.mxu0 %v7146
      %8272 = vmatpush.msra.mxu0 %v7136
      %8273 = vmatpush.msra.mxu0 %v7126
      %8274 = vmatpush.msra.mxu0 %v7116
      %8275 = vmatpush.msra.mxu0 %v7106
      %8276 = vmatpush.msra.mxu0 %v7096
      %8277 = vmatpush.msra.mxu0 %v7086
      %8278 = vmatpush.msra.mxu0 %v7076
      %8279 = vmatpush.msra.mxu0 %v7066
      %8280 = vmatpush.msra.mxu0 %v7056
      %8281 = vmatpush.msra.mxu0 %v7046
      %8282 = vmatpush.msra.mxu0 %v7036
      %8283 = vmatpush.msra.mxu0 %v7026
      %8284 = vmatpush.msra.mxu0 %v7016
      %8285 = vmatpush.msra.mxu0 %v7006
      %8286 = vmatmul.f32.gmra.mxu0 %v8001
      %v8287 = vpop.f32.mrf.mxu0
      %v8288 = vadd.f32 %v8268, %v8287
      %8289 = vdwg.mxu0
      %8290 = vmatpush.msra.mxu0 %v7781
      %8291 = vmatpush.msra.mxu0 %v7772
      %8292 = vmatpush.msra.mxu0 %v7763
      %8293 = vmatpush.msra.mxu0 %v7754
      %8294 = vmatpush.msra.mxu0 %v7745
      %8295 = vmatpush.msra.mxu0 %v7736
      %8296 = vmatpush.msra.mxu0 %v7727
      %8297 = vmatpush.msra.mxu0 %v7718
      %8298 = vmatpush.msra.mxu0 %v7709
      %8299 = vmatpush.msra.mxu0 %v7700
      %8300 = vmatpush.msra.mxu0 %v7691
      %8301 = vmatpush.msra.mxu0 %v7682
      %8302 = vmatpush.msra.mxu0 %v7673
      %8303 = vmatpush.msra.mxu0 %v7664
      %8304 = vmatpush.msra.mxu0 %v7655
      %8305 = vmatpush.msra.mxu0 %v7646
      %8306 = vmatmul.f32.gmra.mxu0 %v8002
      %v8307 = vpop.f32.mrf.mxu0
      %v8308 = vadd.f32 %v8288, %v8307
      %8309 = vdwg.mxu0
      %8310 = vmatpush.msra.mxu0 0.0
      %8311 = vmatpush.msra.mxu0 0.0
      %8312 = vmatpush.msra.mxu0 0.0
      %8313 = vmatpush.msra.mxu0 0.0
      %8314 = vmatpush.msra.mxu0 0.0
      %8315 = vmatpush.msra.mxu0 0.0
      %8316 = vmatpush.msra.mxu0 0.0
      %8317 = vmatpush.msra.mxu0 0.0
      %8318 = vmatpush.msra.mxu0 0.0
      %8319 = vmatpush.msra.mxu0 0.0
      %8320 = vmatpush.msra.mxu0 0.0
      %8321 = vmatpush.msra.mxu0 0.0
      %8322 = vmatpush.msra.mxu0 0.0
      %8323 = vmatpush.msra.mxu0 0.0
      %8324 = vmatpush.msra.mxu0 0.0
      %8325 = vmatpush.msra.mxu0 %v7973
      %8326 = vmatmul.f32.gmra.mxu0 %v8008
      %v8327 = vpop.f32.mrf.mxu0
      %v8328 = vadd.f32 %v8308, %v8327
      %8329 = vdwg.mxu0
      %8330 = vmatpush.msra.mxu0 %v6330
      %8331 = vmatpush.msra.mxu0 %v6287
      %8332 = vmatpush.msra.mxu0 %v6245
      %8333 = vmatpush.msra.mxu0 %v6205
      %8334 = vmatpush.msra.mxu0 %v6165
      %8335 = vmatpush.msra.mxu0 %v6126
      %8336 = vmatpush.msra.mxu0 %v6086
      %8337 = vmatpush.msra.mxu0 %v6046
      %8338 = vmatpush.msra.mxu0 %v6006
      %8339 = vmatpush.msra.mxu0 %v5966
      %8340 = vmatpush.msra.mxu0 %v5926
      %8341 = vmatpush.msra.mxu0 %v5886
      %8342 = vmatpush.msra.mxu0 %v5847
      %8343 = vmatpush.msra.mxu0 %v5807
      %8344 = vmatpush.msra.mxu0 %v5767
      %8345 = vmatpush.msra.mxu0 %v5734
      %8346 = vmatmul.f32.gmra.mxu0 %v8000
      %v8347 = vpop.f32.mrf.mxu0
      %v8348 = vadd.f32 %v7993, %v8347
      %8349 = vdwg.mxu0
      %8350 = vmatpush.msra.mxu0 %v7157
      %8351 = vmatpush.msra.mxu0 %v7147
      %8352 = vmatpush.msra.mxu0 %v7137
      %8353 = vmatpush.msra.mxu0 %v7127
      %8354 = vmatpush.msra.mxu0 %v7117
      %8355 = vmatpush.msra.mxu0 %v7107
      %8356 = vmatpush.msra.mxu0 %v7097
      %8357 = vmatpush.msra.mxu0 %v7087
      %8358 = vmatpush.msra.mxu0 %v7077
      %8359 = vmatpush.msra.mxu0 %v7067
      %8360 = vmatpush.msra.mxu0 %v7057
      %8361 = vmatpush.msra.mxu0 %v7047
      %8362 = vmatpush.msra.mxu0 %v7037
      %8363 = vmatpush.msra.mxu0 %v7027
      %8364 = vmatpush.msra.mxu0 %v7017
      %8365 = vmatpush.msra.mxu0 %v7007
      %8366 = vmatmul.f32.gmra.mxu0 %v8001
      %v8367 = vpop.f32.mrf.mxu0
      %v8368 = vadd.f32 %v8348, %v8367
      %8369 = vdwg.mxu0
      %8370 = vmatpush.msra.mxu0 %v7782
      %8371 = vmatpush.msra.mxu0 %v7773
      %8372 = vmatpush.msra.mxu0 %v7764
      %8373 = vmatpush.msra.mxu0 %v7755
      %8374 = vmatpush.msra.mxu0 %v7746
      %8375 = vmatpush.msra.mxu0 %v7737
      %8376 = vmatpush.msra.mxu0 %v7728
      %8377 = vmatpush.msra.mxu0 %v7719
      %8378 = vmatpush.msra.mxu0 %v7710
      %8379 = vmatpush.msra.mxu0 %v7701
      %8380 = vmatpush.msra.mxu0 %v7692
      %8381 = vmatpush.msra.mxu0 %v7683
      %8382 = vmatpush.msra.mxu0 %v7674
      %8383 = vmatpush.msra.mxu0 %v7665
      %8384 = vmatpush.msra.mxu0 %v7656
      %8385 = vmatpush.msra.mxu0 %v7647
      %8386 = vmatmul.f32.gmra.mxu0 %v8002
      %v8387 = vpop.f32.mrf.mxu0
      %v8388 = vadd.f32 %v8368, %v8387
      %8389 = vdwg.mxu0
      %8390 = vmatpush.msra.mxu0 0.0
      %8391 = vmatpush.msra.mxu0 0.0
      %8392 = vmatpush.msra.mxu0 0.0
      %8393 = vmatpush.msra.mxu0 0.0
      %8394 = vmatpush.msra.mxu0 0.0
      %8395 = vmatpush.msra.mxu0 0.0
      %8396 = vmatpush.msra.mxu0 0.0
      %8397 = vmatpush.msra.mxu0 0.0
      %8398 = vmatpush.msra.mxu0 0.0
      %8399 = vmatpush.msra.mxu0 0.0
      %8400 = vmatpush.msra.mxu0 0.0
      %8401 = vmatpush.msra.mxu0 0.0
      %8402 = vmatpush.msra.mxu0 0.0
      %8403 = vmatpush.msra.mxu0 0.0
      %8404 = vmatpush.msra.mxu0 0.0
      %8405 = vmatpush.msra.mxu0 %v7974
      %8406 = vmatmul.f32.gmra.mxu0 %v8008
      %v8407 = vpop.f32.mrf.mxu0
      %v8408 = vadd.f32 %v8388, %v8407
      %8409 = vdwg.mxu0
      %8410 = vmatpush.msra.mxu0 %v6331
      %8411 = vmatpush.msra.mxu0 %v6288
      %8412 = vmatpush.msra.mxu0 %v6246
      %8413 = vmatpush.msra.mxu0 %v6206
      %8414 = vmatpush.msra.mxu0 %v6166
      %8415 = vmatpush.msra.mxu0 %v6127
      %8416 = vmatpush.msra.mxu0 %v6087
      %8417 = vmatpush.msra.mxu0 %v6047
      %8418 = vmatpush.msra.mxu0 %v6007
      %8419 = vmatpush.msra.mxu0 %v5967
      %8420 = vmatpush.msra.mxu0 %v5927
      %8421 = vmatpush.msra.mxu0 %v5887
      %8422 = vmatpush.msra.mxu0 %v5848
      %8423 = vmatpush.msra.mxu0 %v5808
      %8424 = vmatpush.msra.mxu0 %v5768
      %8425 = vmatpush.msra.mxu0 %v5715
      %8426 = vmatmul.f32.gmra.mxu0 %v8000
      %v8427 = vpop.f32.mrf.mxu0
      %v8428 = vadd.f32 %v7993, %v8427
      %8429 = vdwg.mxu0
      %8430 = vmatpush.msra.mxu0 %v7158
      %8431 = vmatpush.msra.mxu0 %v7148
      %8432 = vmatpush.msra.mxu0 %v7138
      %8433 = vmatpush.msra.mxu0 %v7128
      %8434 = vmatpush.msra.mxu0 %v7118
      %8435 = vmatpush.msra.mxu0 %v7108
      %8436 = vmatpush.msra.mxu0 %v7098
      %8437 = vmatpush.msra.mxu0 %v7088
      %8438 = vmatpush.msra.mxu0 %v7078
      %8439 = vmatpush.msra.mxu0 %v7068
      %8440 = vmatpush.msra.mxu0 %v7058
      %8441 = vmatpush.msra.mxu0 %v7048
      %8442 = vmatpush.msra.mxu0 %v7038
      %8443 = vmatpush.msra.mxu0 %v7028
      %8444 = vmatpush.msra.mxu0 %v7018
      %8445 = vmatpush.msra.mxu0 %v7008
      %8446 = vmatmul.f32.gmra.mxu0 %v8001
      %v8447 = vpop.f32.mrf.mxu0
      %v8448 = vadd.f32 %v8428, %v8447
      %8449 = vdwg.mxu0
      %8450 = vmatpush.msra.mxu0 %v7783
      %8451 = vmatpush.msra.mxu0 %v7774
      %8452 = vmatpush.msra.mxu0 %v7765
      %8453 = vmatpush.msra.mxu0 %v7756
      %8454 = vmatpush.msra.mxu0 %v7747
      %8455 = vmatpush.msra.mxu0 %v7738
      %8456 = vmatpush.msra.mxu0 %v7729
      %8457 = vmatpush.msra.mxu0 %v7720
      %8458 = vmatpush.msra.mxu0 %v7711
      %8459 = vmatpush.msra.mxu0 %v7702
      %8460 = vmatpush.msra.mxu0 %v7693
      %8461 = vmatpush.msra.mxu0 %v7684
      %8462 = vmatpush.msra.mxu0 %v7675
      %8463 = vmatpush.msra.mxu0 %v7666
      %8464 = vmatpush.msra.mxu0 %v7657
      %8465 = vmatpush.msra.mxu0 %v7648
      %8466 = vmatmul.f32.gmra.mxu0 %v8002
      %v8467 = vpop.f32.mrf.mxu0
      %v8468 = vadd.f32 %v8448, %v8467
      %8469 = vdwg.mxu0
      %8470 = vmatpush.msra.mxu0 0.0
      %8471 = vmatpush.msra.mxu0 0.0
      %8472 = vmatpush.msra.mxu0 0.0
      %8473 = vmatpush.msra.mxu0 0.0
      %8474 = vmatpush.msra.mxu0 0.0
      %8475 = vmatpush.msra.mxu0 0.0
      %8476 = vmatpush.msra.mxu0 0.0
      %8477 = vmatpush.msra.mxu0 0.0
      %8478 = vmatpush.msra.mxu0 0.0
      %8479 = vmatpush.msra.mxu0 0.0
      %8480 = vmatpush.msra.mxu0 0.0
      %8481 = vmatpush.msra.mxu0 0.0
      %8482 = vmatpush.msra.mxu0 0.0
      %8483 = vmatpush.msra.mxu0 0.0
      %8484 = vmatpush.msra.mxu0 0.0
      %8485 = vmatpush.msra.mxu0 %v7975
      %8486 = vmatmul.f32.gmra.mxu0 %v8008
      %v8487 = vpop.f32.mrf.mxu0
      %v8488 = vadd.f32 %v8468, %v8487
      %8489 = vdwg.mxu0
      %8490 = vmatpush.msra.mxu0 %v6332
      %8491 = vmatpush.msra.mxu0 %v6289
      %8492 = vmatpush.msra.mxu0 %v6247
      %8493 = vmatpush.msra.mxu0 %v6207
      %8494 = vmatpush.msra.mxu0 %v6167
      %8495 = vmatpush.msra.mxu0 %v6128
      %8496 = vmatpush.msra.mxu0 %v6088
      %8497 = vmatpush.msra.mxu0 %v6048
      %8498 = vmatpush.msra.mxu0 %v6008
      %8499 = vmatpush.msra.mxu0 %v5968
      %8500 = vmatpush.msra.mxu0 %v5928
      %8501 = vmatpush.msra.mxu0 %v5888
      %8502 = vmatpush.msra.mxu0 %v5849
      %8503 = vmatpush.msra.mxu0 %v5809
      %8504 = vmatpush.msra.mxu0 %v5769
      %8505 = vmatpush.msra.mxu0 %v5716
      %8506 = vmatmul.f32.gmra.mxu0 %v8000
      %v8507 = vpop.f32.mrf.mxu0
      %v8508 = vadd.f32 %v7993, %v8507
      %8509 = vdwg.mxu0
      %8510 = vmatpush.msra.mxu0 %v7159
      %8511 = vmatpush.msra.mxu0 %v7149
      %8512 = vmatpush.msra.mxu0 %v7139
      %8513 = vmatpush.msra.mxu0 %v7129
      %8514 = vmatpush.msra.mxu0 %v7119
      %8515 = vmatpush.msra.mxu0 %v7109
      %8516 = vmatpush.msra.mxu0 %v7099
      %8517 = vmatpush.msra.mxu0 %v7089
      %8518 = vmatpush.msra.mxu0 %v7079
      %8519 = vmatpush.msra.mxu0 %v7069
      %8520 = vmatpush.msra.mxu0 %v7059
      %8521 = vmatpush.msra.mxu0 %v7049
      %8522 = vmatpush.msra.mxu0 %v7039
      %8523 = vmatpush.msra.mxu0 %v7029
      %8524 = vmatpush.msra.mxu0 %v7019
      %8525 = vmatpush.msra.mxu0 %v7009
      %8526 = vmatmul.f32.gmra.mxu0 %v8001
      %v8527 = vpop.f32.mrf.mxu0
      %v8528 = vadd.f32 %v8508, %v8527
      %8529 = vdwg.mxu0
      %8530 = vmatpush.msra.mxu0 %v7784
      %8531 = vmatpush.msra.mxu0 %v7775
      %8532 = vmatpush.msra.mxu0 %v7766
      %8533 = vmatpush.msra.mxu0 %v7757
      %8534 = vmatpush.msra.mxu0 %v7748
      %8535 = vmatpush.msra.mxu0 %v7739
      %8536 = vmatpush.msra.mxu0 %v7730
      %8537 = vmatpush.msra.mxu0 %v7721
      %8538 = vmatpush.msra.mxu0 %v7712
      %8539 = vmatpush.msra.mxu0 %v7703
      %8540 = vmatpush.msra.mxu0 %v7694
      %8541 = vmatpush.msra.mxu0 %v7685
      %8542 = vmatpush.msra.mxu0 %v7676
      %8543 = vmatpush.msra.mxu0 %v7667
      %8544 = vmatpush.msra.mxu0 %v7658
      %8545 = vmatpush.msra.mxu0 %v7649
      %8546 = vmatmul.f32.gmra.mxu0 %v8002
      %v8547 = vpop.f32.mrf.mxu0
      %v8548 = vadd.f32 %v8528, %v8547
      %8549 = vdwg.mxu0
      %8550 = vmatpush.msra.mxu0 0.0
      %8551 = vmatpush.msra.mxu0 0.0
      %8552 = vmatpush.msra.mxu0 0.0
      %8553 = vmatpush.msra.mxu0 0.0
      %8554 = vmatpush.msra.mxu0 0.0
      %8555 = vmatpush.msra.mxu0 0.0
      %8556 = vmatpush.msra.mxu0 0.0
      %8557 = vmatpush.msra.mxu0 0.0
      %8558 = vmatpush.msra.mxu0 0.0
      %8559 = vmatpush.msra.mxu0 0.0
      %8560 = vmatpush.msra.mxu0 0.0
      %8561 = vmatpush.msra.mxu0 0.0
      %8562 = vmatpush.msra.mxu0 0.0
      %8563 = vmatpush.msra.mxu0 0.0
      %8564 = vmatpush.msra.mxu0 0.0
      %8565 = vmatpush.msra.mxu0 %v7976
      %8566 = vmatmul.f32.gmra.mxu0 %v8008
      %v8567 = vpop.f32.mrf.mxu0
      %v8568 = vadd.f32 %v8548, %v8567
      %8569 = vdwg.mxu0
      %8570 = vmatpush.msra.mxu0 %v6333
      %8571 = vmatpush.msra.mxu0 %v6290
      %8572 = vmatpush.msra.mxu0 %v6248
      %8573 = vmatpush.msra.mxu0 %v6208
      %8574 = vmatpush.msra.mxu0 %v6168
      %8575 = vmatpush.msra.mxu0 %v6129
      %8576 = vmatpush.msra.mxu0 %v6089
      %8577 = vmatpush.msra.mxu0 %v6049
      %8578 = vmatpush.msra.mxu0 %v6009
      %8579 = vmatpush.msra.mxu0 %v5969
      %8580 = vmatpush.msra.mxu0 %v5929
      %8581 = vmatpush.msra.mxu0 %v5889
      %8582 = vmatpush.msra.mxu0 %v5850
      %8583 = vmatpush.msra.mxu0 %v5810
      %8584 = vmatpush.msra.mxu0 %v5770
      %8585 = vmatpush.msra.mxu0 %v5717
      %8586 = vmatmul.f32.gmra.mxu0 %v8000
      %v8587 = vpop.f32.mrf.mxu0
      %v8588 = vadd.f32 %v7993, %v8587
      %8589 = vdwg.mxu0
      %8590 = vmatpush.msra.mxu0 %v7160
      %8591 = vmatpush.msra.mxu0 %v7150
      %8592 = vmatpush.msra.mxu0 %v7140
      %8593 = vmatpush.msra.mxu0 %v7130
      %8594 = vmatpush.msra.mxu0 %v7120
      %8595 = vmatpush.msra.mxu0 %v7110
      %8596 = vmatpush.msra.mxu0 %v7100
      %8597 = vmatpush.msra.mxu0 %v7090
      %8598 = vmatpush.msra.mxu0 %v7080
      %8599 = vmatpush.msra.mxu0 %v7070
      %8600 = vmatpush.msra.mxu0 %v7060
      %8601 = vmatpush.msra.mxu0 %v7050
      %8602 = vmatpush.msra.mxu0 %v7040
      %8603 = vmatpush.msra.mxu0 %v7030
      %8604 = vmatpush.msra.mxu0 %v7020
      %8605 = vmatpush.msra.mxu0 %v7010
      %8606 = vmatmul.f32.gmra.mxu0 %v8001
      %v8607 = vpop.f32.mrf.mxu0
      %v8608 = vadd.f32 %v8588, %v8607
      %8609 = vdwg.mxu0
      %8610 = vmatpush.msra.mxu0 %v7785
      %8611 = vmatpush.msra.mxu0 %v7776
      %8612 = vmatpush.msra.mxu0 %v7767
      %8613 = vmatpush.msra.mxu0 %v7758
      %8614 = vmatpush.msra.mxu0 %v7749
      %8615 = vmatpush.msra.mxu0 %v7740
      %8616 = vmatpush.msra.mxu0 %v7731
      %8617 = vmatpush.msra.mxu0 %v7722
      %8618 = vmatpush.msra.mxu0 %v7713
      %8619 = vmatpush.msra.mxu0 %v7704
      %8620 = vmatpush.msra.mxu0 %v7695
      %8621 = vmatpush.msra.mxu0 %v7686
      %8622 = vmatpush.msra.mxu0 %v7677
      %8623 = vmatpush.msra.mxu0 %v7668
      %8624 = vmatpush.msra.mxu0 %v7659
      %8625 = vmatpush.msra.mxu0 %v7650
      %8626 = vmatmul.f32.gmra.mxu0 %v8002
      %v8627 = vpop.f32.mrf.mxu0
      %v8628 = vadd.f32 %v8608, %v8627
      %8629 = vdwg.mxu0
      %8630 = vmatpush.msra.mxu0 0.0
      %8631 = vmatpush.msra.mxu0 0.0
      %8632 = vmatpush.msra.mxu0 0.0
      %8633 = vmatpush.msra.mxu0 0.0
      %8634 = vmatpush.msra.mxu0 0.0
      %8635 = vmatpush.msra.mxu0 0.0
      %8636 = vmatpush.msra.mxu0 0.0
      %8637 = vmatpush.msra.mxu0 0.0
      %8638 = vmatpush.msra.mxu0 0.0
      %8639 = vmatpush.msra.mxu0 0.0
      %8640 = vmatpush.msra.mxu0 0.0
      %8641 = vmatpush.msra.mxu0 0.0
      %8642 = vmatpush.msra.mxu0 0.0
      %8643 = vmatpush.msra.mxu0 0.0
      %8644 = vmatpush.msra.mxu0 0.0
      %8645 = vmatpush.msra.mxu0 %v7977
      %8646 = vmatmul.f32.gmra.mxu0 %v8008
      %v8647 = vpop.f32.mrf.mxu0
      %v8648 = vadd.f32 %v8628, %v8647
      %8649 = vdwg.mxu0
      %8650 = vmatpush.msra.mxu0 %v6334
      %8651 = vmatpush.msra.mxu0 %v6291
      %8652 = vmatpush.msra.mxu0 %v6249
      %8653 = vmatpush.msra.mxu0 %v6209
      %8654 = vmatpush.msra.mxu0 %v6169
      %8655 = vmatpush.msra.mxu0 %v6130
      %8656 = vmatpush.msra.mxu0 %v6090
      %8657 = vmatpush.msra.mxu0 %v6050
      %8658 = vmatpush.msra.mxu0 %v6010
      %8659 = vmatpush.msra.mxu0 %v5970
      %8660 = vmatpush.msra.mxu0 %v5930
      %8661 = vmatpush.msra.mxu0 %v5890
      %8662 = vmatpush.msra.mxu0 %v5851
      %8663 = vmatpush.msra.mxu0 %v5811
      %8664 = vmatpush.msra.mxu0 %v5771
      %8665 = vmatpush.msra.mxu0 %v5718
      %8666 = vmatmul.f32.gmra.mxu0 %v8000
      %v8667 = vpop.f32.mrf.mxu0
      %v8668 = vadd.f32 %v7993, %v8667
      %8669 = vdwg.mxu0
      %8670 = vmatpush.msra.mxu0 %v7161
      %8671 = vmatpush.msra.mxu0 %v7151
      %8672 = vmatpush.msra.mxu0 %v7141
      %8673 = vmatpush.msra.mxu0 %v7131
      %8674 = vmatpush.msra.mxu0 %v7121
      %8675 = vmatpush.msra.mxu0 %v7111
      %8676 = vmatpush.msra.mxu0 %v7101
      %8677 = vmatpush.msra.mxu0 %v7091
      %8678 = vmatpush.msra.mxu0 %v7081
      %8679 = vmatpush.msra.mxu0 %v7071
      %8680 = vmatpush.msra.mxu0 %v7061
      %8681 = vmatpush.msra.mxu0 %v7051
      %8682 = vmatpush.msra.mxu0 %v7041
      %8683 = vmatpush.msra.mxu0 %v7031
      %8684 = vmatpush.msra.mxu0 %v7021
      %8685 = vmatpush.msra.mxu0 %v7011
      %8686 = vmatmul.f32.gmra.mxu0 %v8001
      %v8687 = vpop.f32.mrf.mxu0
      %v8688 = vadd.f32 %v8668, %v8687
      %8689 = vdwg.mxu0
      %8690 = vmatpush.msra.mxu0 %v7786
      %8691 = vmatpush.msra.mxu0 %v7777
      %8692 = vmatpush.msra.mxu0 %v7768
      %8693 = vmatpush.msra.mxu0 %v7759
      %8694 = vmatpush.msra.mxu0 %v7750
      %8695 = vmatpush.msra.mxu0 %v7741
      %8696 = vmatpush.msra.mxu0 %v7732
      %8697 = vmatpush.msra.mxu0 %v7723
      %8698 = vmatpush.msra.mxu0 %v7714
      %8699 = vmatpush.msra.mxu0 %v7705
      %8700 = vmatpush.msra.mxu0 %v7696
      %8701 = vmatpush.msra.mxu0 %v7687
      %8702 = vmatpush.msra.mxu0 %v7678
      %8703 = vmatpush.msra.mxu0 %v7669
      %8704 = vmatpush.msra.mxu0 %v7660
      %8705 = vmatpush.msra.mxu0 %v7651
      %8706 = vmatmul.f32.gmra.mxu0 %v8002
      %v8707 = vpop.f32.mrf.mxu0
      %v8708 = vadd.f32 %v8688, %v8707
      %8709 = vdwg.mxu0
      %8710 = vmatpush.msra.mxu0 0.0
      %8711 = vmatpush.msra.mxu0 0.0
      %8712 = vmatpush.msra.mxu0 0.0
      %8713 = vmatpush.msra.mxu0 0.0
      %8714 = vmatpush.msra.mxu0 0.0
      %8715 = vmatpush.msra.mxu0 0.0
      %8716 = vmatpush.msra.mxu0 0.0
      %8717 = vmatpush.msra.mxu0 0.0
      %8718 = vmatpush.msra.mxu0 0.0
      %8719 = vmatpush.msra.mxu0 0.0
      %8720 = vmatpush.msra.mxu0 0.0
      %8721 = vmatpush.msra.mxu0 0.0
      %8722 = vmatpush.msra.mxu0 0.0
      %8723 = vmatpush.msra.mxu0 0.0
      %8724 = vmatpush.msra.mxu0 0.0
      %8725 = vmatpush.msra.mxu0 %v7978
      %8726 = vmatmul.f32.gmra.mxu0 %v8008
      %v8727 = vpop.f32.mrf.mxu0
      %v8728 = vadd.f32 %v8708, %v8727
      %8729 = vdwg.mxu0
      %8730 = vmatpush.msra.mxu0 %v6335
      %8731 = vmatpush.msra.mxu0 %v6292
      %8732 = vmatpush.msra.mxu0 %v6239
      %8733 = vmatpush.msra.mxu0 %v6199
      %8734 = vmatpush.msra.mxu0 %v6160
      %8735 = vmatpush.msra.mxu0 %v6120
      %8736 = vmatpush.msra.mxu0 %v6080
      %8737 = vmatpush.msra.mxu0 %v6040
      %8738 = vmatpush.msra.mxu0 %v6000
      %8739 = vmatpush.msra.mxu0 %v5960
      %8740 = vmatpush.msra.mxu0 %v5920
      %8741 = vmatpush.msra.mxu0 %v5881
      %8742 = vmatpush.msra.mxu0 %v5841
      %8743 = vmatpush.msra.mxu0 %v5801
      %8744 = vmatpush.msra.mxu0 %v5762
      %8745 = vmatpush.msra.mxu0 %v5735
      %8746 = vmatmul.f32.gmra.mxu0 %v8000
      %v8747 = vpop.f32.mrf.mxu0
      %v8748 = vadd.f32 %v7993, %v8747
      %8749 = vdwg.mxu0
      %8750 = vmatpush.msra.mxu0 %v7162
      %8751 = vmatpush.msra.mxu0 %v7152
      %8752 = vmatpush.msra.mxu0 %v7142
      %8753 = vmatpush.msra.mxu0 %v7132
      %8754 = vmatpush.msra.mxu0 %v7122
      %8755 = vmatpush.msra.mxu0 %v7112
      %8756 = vmatpush.msra.mxu0 %v7102
      %8757 = vmatpush.msra.mxu0 %v7092
      %8758 = vmatpush.msra.mxu0 %v7082
      %8759 = vmatpush.msra.mxu0 %v7072
      %8760 = vmatpush.msra.mxu0 %v7062
      %8761 = vmatpush.msra.mxu0 %v7052
      %8762 = vmatpush.msra.mxu0 %v7042
      %8763 = vmatpush.msra.mxu0 %v7032
      %8764 = vmatpush.msra.mxu0 %v7022
      %8765 = vmatpush.msra.mxu0 %v7012
      %8766 = vmatmul.f32.gmra.mxu0 %v8001
      %v8767 = vpop.f32.mrf.mxu0
      %v8768 = vadd.f32 %v8748, %v8767
      %8769 = vdwg.mxu0
      %8770 = vmatpush.msra.mxu0 %v7642
      %8771 = vmatpush.msra.mxu0 %v7622
      %8772 = vmatpush.msra.mxu0 %v7602
      %8773 = vmatpush.msra.mxu0 %v7582
      %8774 = vmatpush.msra.mxu0 %v7562
      %8775 = vmatpush.msra.mxu0 %v7542
      %8776 = vmatpush.msra.mxu0 %v7522
      %8777 = vmatpush.msra.mxu0 %v7502
      %8778 = vmatpush.msra.mxu0 %v7482
      %8779 = vmatpush.msra.mxu0 %v7462
      %8780 = vmatpush.msra.mxu0 %v7442
      %8781 = vmatpush.msra.mxu0 %v7422
      %8782 = vmatpush.msra.mxu0 %v7402
      %8783 = vmatpush.msra.mxu0 %v7382
      %8784 = vmatpush.msra.mxu0 %v7362
      %8785 = vmatpush.msra.mxu0 %v7342
      %8786 = vmatmul.f32.gmra.mxu0 %v8002
      %v8787 = vpop.f32.mrf.mxu0
      %v8788 = vadd.f32 %v8768, %v8787
      %8789 = vdwg.mxu0
      %8790 = vmatpush.msra.mxu0 0.0
      %8791 = vmatpush.msra.mxu0 0.0
      %8792 = vmatpush.msra.mxu0 0.0
      %8793 = vmatpush.msra.mxu0 0.0
      %8794 = vmatpush.msra.mxu0 0.0
      %8795 = vmatpush.msra.mxu0 0.0
      %8796 = vmatpush.msra.mxu0 0.0
      %8797 = vmatpush.msra.mxu0 0.0
      %8798 = vmatpush.msra.mxu0 0.0
      %8799 = vmatpush.msra.mxu0 0.0
      %8800 = vmatpush.msra.mxu0 0.0
      %8801 = vmatpush.msra.mxu0 0.0
      %8802 = vmatpush.msra.mxu0 0.0
      %8803 = vmatpush.msra.mxu0 0.0
      %8804 = vmatpush.msra.mxu0 0.0
      %8805 = vmatpush.msra.mxu0 %v7979
      %8806 = vmatmul.f32.gmra.mxu0 %v8008
      %v8807 = vpop.f32.mrf.mxu0
      %v8808 = vadd.f32 %v8788, %v8807
      %8809 = vdwg.mxu0
      %8811 = vrot.lane.b32.xlu0 %v8088, 122
      %v8812 = vpop.permute.xlu0 %8811
      %8814 = vrot.lane.b32.xlu0 %v8088, 116
      %v8815 = vpop.permute.xlu0 %8814
      %8818 = vrot.lane.b32.xlu0 %v8088, 110
      %v8819 = vpop.permute.xlu0 %8818
      %8820 = vrot.lane.b32.xlu0 %v8168, 110
      %v8821 = vpop.permute.xlu0 %8820
      %v8822 = vsel %vm5595, %v8819, %v8821
      %8824 = vrot.lane.b32.xlu0 %v8168, 104
      %v8825 = vpop.permute.xlu0 %8824
      %8827 = vrot.lane.b32.xlu0 %v8168, 98
      %v8828 = vpop.permute.xlu0 %8827
      %8831 = vrot.lane.b32.xlu0 %v8168, 92
      %v8832 = vpop.permute.xlu0 %8831
      %8833 = vrot.lane.b32.xlu0 %v8248, 92
      %v8834 = vpop.permute.xlu0 %8833
      %v8835 = vsel %vm6380, %v8832, %v8834
      %8837 = vrot.lane.b32.xlu0 %v8248, 86
      %v8838 = vpop.permute.xlu0 %8837
      %8840 = vrot.lane.b32.xlu0 %v8248, 80
      %v8841 = vpop.permute.xlu0 %8840
      %8843 = vrot.lane.b32.xlu0 %v8248, 74
      %v8844 = vpop.permute.xlu0 %8843
      %8847 = vrot.lane.b32.xlu0 %v8248, 68
      %v8848 = vpop.permute.xlu0 %8847
      %8849 = vrot.lane.b32.xlu0 %v8328, 68
      %v8850 = vpop.permute.xlu0 %8849
      %vm8851 = vcmask 556032
      %v8852 = vsel %vm8851, %v8848, %v8850
      %8854 = vrot.lane.b32.xlu0 %v8328, 62
      %v8855 = vpop.permute.xlu0 %8854
      %8857 = vrot.lane.b32.xlu0 %v8328, 56
      %v8858 = vpop.permute.xlu0 %8857
      %8861 = vrot.lane.b32.xlu0 %v8328, 50
      %v8862 = vpop.permute.xlu0 %8861
      %8863 = vrot.lane.b32.xlu0 %v8408, 50
      %v8864 = vpop.permute.xlu0 %8863
      %v8865 = vsel %vm7002, %v8862, %v8864
      %8867 = vrot.lane.b32.xlu0 %v8408, 44
      %v8868 = vpop.permute.xlu0 %8867
      %8870 = vrot.lane.b32.xlu0 %v8408, 38
      %v8871 = vpop.permute.xlu0 %8870
      %v8873 = vsel %vm583, %v8088, %v8812
      %v8874 = vsel %vm1099, %v8873, %v8815
      %v8875 = vsel %vm5714, %v8874, %v8822
      %v8876 = vsel %vm583, %v8825, %v8828
      %v8877 = vsel %vm1099, %v8876, %v8835
      %v8878 = vsel %vm5714, %v8877, %v8838
      %v8879 = vsel %vm583, %v8841, %v8844
      %v8880 = vsel %vm1099, %v8879, %v8852
      %v8881 = vsel %vm5714, %v8880, %v8855
      %v8882 = vsel %vm583, %v8858, %v8865
      %v8883 = vsel %vm1099, %v8882, %v8868
      %v8884 = vsel %vm5714, %v8883, %v8871
      %8885 = vrot.lane.b32.xlu0 %v8408, 32
      %v8886 = vpop.permute.xlu0 %8885
      %8889 = vrot.lane.b32.xlu0 %v8488, 26
      %v8890 = vpop.permute.xlu0 %8889
      %8892 = vrot.lane.b32.xlu0 %v8488, 20
      %v8893 = vpop.permute.xlu0 %8892
      %8895 = vrot.lane.b32.xlu0 %v8488, 14
      %v8896 = vpop.permute.xlu0 %8895
      %8899 = vrot.lane.b32.xlu0 %v8488, 8
      %v8900 = vpop.permute.xlu0 %8899
      %8901 = vrot.lane.b32.xlu0 %v8568, 8
      %v8902 = vpop.permute.xlu0 %8901
      %v8903 = vsel %vm8007, %v8900, %v8902
      %8905 = vrot.lane.b32.xlu0 %v8568, 2
      %v8906 = vpop.permute.xlu0 %8905
      %8908 = vrot.lane.b32.xlu0 %v8568, 124
      %v8909 = vpop.permute.xlu0 %8908
      %8912 = vrot.lane.b32.xlu0 %v8568, 118
      %v8913 = vpop.permute.xlu0 %8912
      %8914 = vrot.lane.b32.xlu0 %v8648, 118
      %v8915 = vpop.permute.xlu0 %8914
      %vm8916 = vcmask 965632
      %v8917 = vsel %vm8916, %v8913, %v8915
      %8919 = vrot.lane.b32.xlu0 %v8648, 112
      %v8920 = vpop.permute.xlu0 %8919
      %8922 = vrot.lane.b32.xlu0 %v8648, 106
      %v8923 = vpop.permute.xlu0 %8922
      %8925 = vrot.lane.b32.xlu0 %v8648, 100
      %v8926 = vpop.permute.xlu0 %8925
      %8929 = vrot.lane.b32.xlu0 %v8728, 94
      %v8930 = vpop.permute.xlu0 %8929
      %8932 = vrot.lane.b32.xlu0 %v8728, 88
      %v8933 = vpop.permute.xlu0 %8932
      %8935 = vrot.lane.b32.xlu0 %v8728, 82
      %v8936 = vpop.permute.xlu0 %8935
      %8939 = vrot.lane.b32.xlu0 %v8728, 76
      %v8940 = vpop.permute.xlu0 %8939
      %8941 = vrot.lane.b32.xlu0 %v8808, 76
      %v8942 = vpop.permute.xlu0 %8941
      %v8943 = vsel %vm5573, %v8940, %v8942
      %8945 = vrot.lane.b32.xlu0 %v8808, 70
      %v8946 = vpop.permute.xlu0 %8945
      %v8948 = vsel %vm583, %v8886, %v8890
      %v8949 = vsel %vm1099, %v8948, %v8893
      %v8950 = vsel %vm5714, %v8949, %v8896
      %v8951 = vsel %vm583, %v8903, %v8906
      %v8952 = vsel %vm1099, %v8951, %v8909
      %v8953 = vsel %vm5714, %v8952, %v8917
      %v8954 = vsel %vm583, %v8920, %v8923
      %v8955 = vsel %vm1099, %v8954, %v8926
      %v8956 = vsel %vm5714, %v8955, %v8930
      %v8957 = vsel %vm583, %v8933, %v8936
      %v8958 = vsel %vm1099, %v8957, %v8943
      %v8959 = vsel %vm5714, %v8958, %v8946
      %v8960 = vxor.u32 %v8875, 2147483648
      %v8961 = vxor.u32 %v8878, 2147483648
      %v8962 = vxor.u32 %v8881, 2147483648
      %v8963 = vxor.u32 %v8884, 2147483648
      %v8964 = vxor.u32 %v8950, 2147483648
      %v8965 = vxor.u32 %v8953, 2147483648
      %v8966 = vxor.u32 %v8956, 2147483648
      %v8967 = vxor.u32 %v8959, 2147483648
      %v8968 = vmul.f32 %v8960, 1.442695
      %v8969 = vpow.pop %v8968
      %v8970 = vmul.f32 %v8961, 1.442695
      %v8971 = vpow.pop %v8970
      %v8972 = vmul.f32 %v8962, 1.442695
      %v8973 = vpow.pop %v8972
      %v8974 = vmul.f32 %v8963, 1.442695
      %v8975 = vpow.pop %v8974
      %v8976 = vmul.f32 %v8964, 1.442695
      %v8977 = vpow.pop %v8976
      %v8978 = vmul.f32 %v8965, 1.442695
      %v8979 = vpow.pop %v8978
      %v8980 = vmul.f32 %v8966, 1.442695
      %v8981 = vpow.pop %v8980
      %v8982 = vmul.f32 %v8967, 1.442695
      %v8983 = vpow.pop %v8982
      %v8984 = vadd.f32 %v8969, 1.0
      %v8985 = vadd.f32 %v8971, 1.0
      %v8986 = vadd.f32 %v8973, 1.0
      %v8987 = vadd.f32 %v8975, 1.0
      %v8988 = vadd.f32 %v8977, 1.0
      %v8989 = vadd.f32 %v8979, 1.0
      %v8990 = vadd.f32 %v8981, 1.0
      %v8991 = vadd.f32 %v8983, 1.0
      %v8992 = vrcp.pop %v8984
      %v8993 = vmul.f32 %v8984, %v8992
      %v8994 = vsub.f32 1.0, %v8993
      %v8995 = vmul.f32 %v8992, %v8994
      %v8996 = vadd.f32 %v8992, %v8995
      %vm8997 = vweird.f32 %v8984
      %vm8998 = vweird.f32 %v8992
      %vm8999 = vmor %vm8997, %vm8998
      %v9000 = vsel %vm8999, %v8992, %v8996
      %v9001 = vand.u32 2147483647, %v8984
      %vm9002 = vcmp.eq.f32.partialorder %v9001, 8.507059e+37
      %v9003 = vand.u32 %v8984, 2147483648
      %v9004 = vor.u32 1.1754944e-38, %v9003
      %v9005 = vsel %vm9002, %v9004, %v9000
      %v9006 = vmul.f32 1.0, %v9005
      %v9007 = vrcp.pop %v8985
      %v9008 = vmul.f32 %v8985, %v9007
      %v9009 = vsub.f32 1.0, %v9008
      %v9010 = vmul.f32 %v9007, %v9009
      %v9011 = vadd.f32 %v9007, %v9010
      %vm9012 = vweird.f32 %v8985
      %vm9013 = vweird.f32 %v9007
      %vm9014 = vmor %vm9012, %vm9013
      %v9015 = vsel %vm9014, %v9007, %v9011
      %v9016 = vand.u32 2147483647, %v8985
      %vm9017 = vcmp.eq.f32.partialorder %v9016, 8.507059e+37
      %v9018 = vand.u32 %v8985, 2147483648
      %v9019 = vor.u32 1.1754944e-38, %v9018
      %v9020 = vsel %vm9017, %v9019, %v9015
      %v9021 = vmul.f32 1.0, %v9020
      %v9022 = vrcp.pop %v8986
      %v9023 = vmul.f32 %v8986, %v9022
      %v9024 = vsub.f32 1.0, %v9023
      %v9025 = vmul.f32 %v9022, %v9024
      %v9026 = vadd.f32 %v9022, %v9025
      %vm9027 = vweird.f32 %v8986
      %vm9028 = vweird.f32 %v9022
      %vm9029 = vmor %vm9027, %vm9028
      %v9030 = vsel %vm9029, %v9022, %v9026
      %v9031 = vand.u32 2147483647, %v8986
      %vm9032 = vcmp.eq.f32.partialorder %v9031, 8.507059e+37
      %v9033 = vand.u32 %v8986, 2147483648
      %v9034 = vor.u32 1.1754944e-38, %v9033
      %v9035 = vsel %vm9032, %v9034, %v9030
      %v9036 = vmul.f32 1.0, %v9035
      %v9037 = vrcp.pop %v8987
      %v9038 = vmul.f32 %v8987, %v9037
      %v9039 = vsub.f32 1.0, %v9038
      %v9040 = vmul.f32 %v9037, %v9039
      %v9041 = vadd.f32 %v9037, %v9040
      %vm9042 = vweird.f32 %v8987
      %vm9043 = vweird.f32 %v9037
      %vm9044 = vmor %vm9042, %vm9043
      %v9045 = vsel %vm9044, %v9037, %v9041
      %v9046 = vand.u32 2147483647, %v8987
      %vm9047 = vcmp.eq.f32.partialorder %v9046, 8.507059e+37
      %v9048 = vand.u32 %v8987, 2147483648
      %v9049 = vor.u32 1.1754944e-38, %v9048
      %v9050 = vsel %vm9047, %v9049, %v9045
      %v9051 = vmul.f32 1.0, %v9050
      %v9052 = vrcp.pop %v8988
      %v9053 = vmul.f32 %v8988, %v9052
      %v9054 = vsub.f32 1.0, %v9053
      %v9055 = vmul.f32 %v9052, %v9054
      %v9056 = vadd.f32 %v9052, %v9055
      %vm9057 = vweird.f32 %v8988
      %vm9058 = vweird.f32 %v9052
      %vm9059 = vmor %vm9057, %vm9058
      %v9060 = vsel %vm9059, %v9052, %v9056
      %v9061 = vand.u32 2147483647, %v8988
      %vm9062 = vcmp.eq.f32.partialorder %v9061, 8.507059e+37
      %v9063 = vand.u32 %v8988, 2147483648
      %v9064 = vor.u32 1.1754944e-38, %v9063
      %v9065 = vsel %vm9062, %v9064, %v9060
      %v9066 = vmul.f32 1.0, %v9065
      %v9067 = vrcp.pop %v8989
      %v9068 = vmul.f32 %v8989, %v9067
      %v9069 = vsub.f32 1.0, %v9068
      %v9070 = vmul.f32 %v9067, %v9069
      %v9071 = vadd.f32 %v9067, %v9070
      %vm9072 = vweird.f32 %v8989
      %vm9073 = vweird.f32 %v9067
      %vm9074 = vmor %vm9072, %vm9073
      %v9075 = vsel %vm9074, %v9067, %v9071
      %v9076 = vand.u32 2147483647, %v8989
      %vm9077 = vcmp.eq.f32.partialorder %v9076, 8.507059e+37
      %v9078 = vand.u32 %v8989, 2147483648
      %v9079 = vor.u32 1.1754944e-38, %v9078
      %v9080 = vsel %vm9077, %v9079, %v9075
      %v9081 = vmul.f32 1.0, %v9080
      %v9082 = vrcp.pop %v8990
      %v9083 = vmul.f32 %v8990, %v9082
      %v9084 = vsub.f32 1.0, %v9083
      %v9085 = vmul.f32 %v9082, %v9084
      %v9086 = vadd.f32 %v9082, %v9085
      %vm9087 = vweird.f32 %v8990
      %vm9088 = vweird.f32 %v9082
      %vm9089 = vmor %vm9087, %vm9088
      %v9090 = vsel %vm9089, %v9082, %v9086
      %v9091 = vand.u32 2147483647, %v8990
      %vm9092 = vcmp.eq.f32.partialorder %v9091, 8.507059e+37
      %v9093 = vand.u32 %v8990, 2147483648
      %v9094 = vor.u32 1.1754944e-38, %v9093
      %v9095 = vsel %vm9092, %v9094, %v9090
      %v9096 = vmul.f32 1.0, %v9095
      %v9097 = vrcp.pop %v8991
      %v9098 = vmul.f32 %v8991, %v9097
      %v9099 = vsub.f32 1.0, %v9098
      %v9100 = vmul.f32 %v9097, %v9099
      %v9101 = vadd.f32 %v9097, %v9100
      %vm9102 = vweird.f32 %v8991
      %vm9103 = vweird.f32 %v9097
      %vm9104 = vmor %vm9102, %vm9103
      %v9105 = vsel %vm9104, %v9097, %v9101
      %v9106 = vand.u32 2147483647, %v8991
      %vm9107 = vcmp.eq.f32.partialorder %v9106, 8.507059e+37
      %v9108 = vand.u32 %v8991, 2147483648
      %v9109 = vor.u32 1.1754944e-38, %v9108
      %v9110 = vsel %vm9107, %v9109, %v9105
      %v9111 = vmul.f32 1.0, %v9110
      %v9120 = vrot.slane %v9021, 4
      %v9121 = vrot.slane %v9051, 4
      %v9122 = vrot.slane %v9081, 4
      %v9123 = vrot.slane %v9111, 4
      %vm9124 = vcmask 1043456
      %v9125 = vsel %vm9124, %v9006, %v9120
      %v9126 = vsel %vm9124, %v9036, %v9121
      %v9127 = vsel %vm9124, %v9066, %v9122
      %v9128 = vsel %vm9124, %v9096, %v9123
      %9133 = vst [vmem:[%s494] sm:$0x77] %v9125
      %9134 = vst [vmem:[%s494 + $0x8] sm:$0x77] %v9126
      %9135 = vst [vmem:[%s494 + $0x10] sm:$0x77] %v9127
      %9136 = vst [vmem:[%s494 + $0x18] sm:$0x77] %v9128
      %p9137 = scmp.lt.s32.totalorder %s26, 1
      %s9138 = scalar_select %p9137, %s26, 1
      %s9139 = smul.addr %s9138, 8
      %s9140 = smul.addr %s9139, 4
      %s9141 = scalar_lea.vmem %s15, %s9140
      // Predicated region
      $region81: #{mask_decoder_forward.1} parent=79 // pred_check
        %p9142 = pneg %p364
      $region82: #{mask_decoder_forward.1} parent=79 // pred_check_branch
        %9144 = sbr.rel (%p9142) target = $region84
      $region83: #{mask_decoder_forward.1} parent=79 // pred_region
        _
      $region84: #{mask_decoder_forward.1} parent=79 // pred_fallthru
        _
    $region80: #{mask_decoder_forward.1} parent=5 // pred_fallthru
      _
    %p9145 = scmp.le.s32.totalorder 2, %s21
    // Predicated region
    $region85: #{mask_decoder_forward.1} parent=5 // pred_check
      %p9146 = pneg %p9145
    $region86: #{mask_decoder_forward.1} parent=5 // pred_check_branch
      %9148 = sbr.rel (%p9146) target = $region88
    $region87: #{mask_decoder_forward.1} parent=5 // pred_region
      %s9149 = ssub.s32 %s21, 2
      // Predicated region
      $region89: #{mask_decoder_forward.1} parent=87 // pred_check
        %p9150 = pneg %p370
      $region90: #{mask_decoder_forward.1} parent=87 // pred_check_branch
        %9152 = sbr.rel (%p9150) target = $region92
      $region91: #{mask_decoder_forward.1} parent=87 // pred_region
        %p9153 = scmp.lt.s32.totalorder %s27, 1
        %s9154 = scalar_select %p9153, %s27, 1
        %s9155 = smul.addr %s9154, 8
        %s9156 = smul.addr %s9155, 4
        %s9157 = scalar_lea.vmem %s15, %s9156
      $region92: #{mask_decoder_forward.1} parent=87 // pred_fallthru
        _
    $region88: #{mask_decoder_forward.1} parent=5 // pred_fallthru
      _
  $region6: #{mask_decoder_forward.1} parent=0 // loop_footer
    %s25 = sadd.s32 1, %s21
  $region7: #{mask_decoder_forward.1} parent=0 // loop_footer_branch
    %20 = sbr.rel target = $region3
  $region8: #{mask_decoder_forward.1} parent=0 // loop_exit
    _

</llo_original>
